<compile_context>
chip_gen: v6e
topology: v6e:2x2x1
jax: 0.10.0
libtpu: 0.0.40
codegen_flags: <defaults>
</compile_context>

<pallas_src>
import functools

import jax
import jax.numpy as jnp
import numpy as np
from jax.experimental import pallas as pl
from jax.experimental.pallas import tpu as pltpu


# ----------------------------------------------------------------------------
# Glue: window partition / reverse (pure reshapes+transposes, done in JAX).
# ----------------------------------------------------------------------------
def window_partition_jax(x, ws):
    B, H, W, C = x.shape
    x = x.reshape(B, H // ws, ws, W // ws, ws, C)
    return x.transpose(0, 1, 3, 2, 4, 5).reshape(-1, ws, ws, C)


def window_reverse_jax(windows, ws, H, W):
    B = windows.shape[0] // (H * W // ws // ws)
    x = windows.reshape(B, H // ws, W // ws, ws, ws, -1)
    return x.transpose(0, 1, 3, 2, 4, 5).reshape(B, H, W, -1)


def build_attn_mask(H, W, ws, shift):
    """Replicates the PyTorch __init__ mask construction (numpy, static)."""
    if shift <= 0:
        return None
    img_mask = np.zeros((1, H, W, 1), np.float32)
    h_slices = (slice(0, -ws), slice(-ws, -shift), slice(-shift, None))
    w_slices = (slice(0, -ws), slice(-ws, -shift), slice(-shift, None))
    cnt = 0
    for h in h_slices:
        for w in w_slices:
            img_mask[:, h, w, :] = cnt
            cnt += 1
    mw = img_mask.reshape(1, H // ws, ws, W // ws, ws, 1)
    mw = mw.transpose(0, 1, 3, 2, 4, 5).reshape(-1, ws * ws)
    attn_mask = mw[:, None, :] - mw[:, :, None]
    attn_mask = np.where(attn_mask != 0, -100.0, 0.0).astype(np.float32)
    return jnp.asarray(attn_mask)  # (num_windows_per_image, N, N)


# ----------------------------------------------------------------------------
# Pallas kernel 1: LN1 + multi-head windowed attention + out projection.
# One grid step processes Wb windows at once.
# ----------------------------------------------------------------------------
def attn_window_kernel(*refs, num_heads, head_dim, has_mask):
    if has_mask:
        (x_ref, mask_ref, g1_ref, b1_ref, wqkv_ref, bqkv_ref,
         wo_ref, bo_ref, o_ref) = refs
    else:
        (x_ref, g1_ref, b1_ref, wqkv_ref, bqkv_ref,
         wo_ref, bo_ref, o_ref) = refs
        mask_ref = None

    Wb, N, C = x_ref.shape
    x = x_ref[...].reshape(Wb * N, C)  # collapse leading dims (cheap)

    # LayerNorm1 (eps = 1e-5, PyTorch default) — per token.
    mu = jnp.mean(x, axis=-1, keepdims=True)
    var = jnp.mean((x - mu) ** 2, axis=-1, keepdims=True)
    xln = (x - mu) * jax.lax.rsqrt(var + 1e-5) * g1_ref[...] + b1_ref[...]

    # Fused QKV projection over all Wb*N rows (MXU M = Wb*N).
    qkv = jnp.dot(xln, wqkv_ref[...], preferred_element_type=jnp.float32)
    qkv = qkv + bqkv_ref[...]

    scale = 1.0 / (float(head_dim) ** 0.5)
    q = (qkv[:, 0 * C:1 * C] * scale).reshape(Wb, N, C)
    k = qkv[:, 1 * C:2 * C].reshape(Wb, N, C)
    v = qkv[:, 2 * C:3 * C].reshape(Wb, N, C)

    if has_mask:
        amask = mask_ref[...]  # (Wb, N, N)

    # Per-head attention with full-width matmuls: masking K (and V) to head h's
    # channels makes q @ k_h^T == Q_h @ K_h^T, avoiding 8-wide lane slices and
    # the concatenate of head outputs. Window dim is a batch dim of the einsum.
    ch = jax.lax.broadcasted_iota(jnp.int32, (1, 1, C), 2)
    out = jnp.zeros((Wb, N, C), jnp.float32)
    for h in range(num_heads):
        hsel = jnp.logical_and(ch >= h * head_dim, ch < (h + 1) * head_dim)
        kh = jnp.where(hsel, k, 0.0)
        vh = jnp.where(hsel, v, 0.0)

        s = jnp.einsum("wqc,wkc->wqk", q, kh,
                       preferred_element_type=jnp.float32)
        if has_mask:
            s = s + amask
        s = s - jnp.max(s, axis=-1, keepdims=True)
        p = jnp.exp(s)
        inv_l = pl.reciprocal(jnp.sum(p, axis=-1, keepdims=True), approx=True)
        p = p * inv_l
        # V is masked to head h's channels, so this accumulates exactly the
        # concatenated multi-head output.
        out = out + jnp.einsum("wqk,wkc->wqc", p, vh,
                               preferred_element_type=jnp.float32)

    # Output projection over all Wb*N rows.
    out2 = out.reshape(Wb * N, C)
    y = jnp.dot(out2, wo_ref[...], preferred_element_type=jnp.float32)
    y = y + bo_ref[...]
    o_ref[...] = y.reshape(Wb, N, C)


def _pick_window_batch(nW_total, nW_img, N, has_mask):
    """Windows per grid step: aim for >=256 matmul rows, keep >=2 grid steps."""
    target = max(1, 256 // N)
    cap = nW_img if has_mask else nW_total
    wb = min(target, cap)
    if nW_total >= 2:
        wb = max(1, min(wb, nW_total // 2))   # >=2 steps (v7x has 2 TCs)
    while wb > 1 and (nW_total % wb or (has_mask and nW_img % wb)):
        wb -= 1
    return max(wb, 1)


def window_attention_pallas(xw, attn_mask, p, num_heads, nW_img):
    nW, N, C = xw.shape
    head_dim = C // num_heads
    has_mask = attn_mask is not None
    Wb = _pick_window_batch(nW, nW_img, N, has_mask)
    assert nW % Wb == 0
    if has_mask:
        assert nW_img % Wb == 0

    kernel = functools.partial(attn_window_kernel, num_heads=num_heads,
                               head_dim=head_dim, has_mask=has_mask)

    x_spec = pl.BlockSpec((Wb, N, C), lambda i: (i, 0, 0))
    weight_specs = [
        pl.BlockSpec((1, C), lambda i: (0, 0)),          # ln1 gamma
        pl.BlockSpec((1, C), lambda i: (0, 0)),          # ln1 beta
        pl.BlockSpec((C, 3 * C), lambda i: (0, 0)),      # Wqkv
        pl.BlockSpec((1, 3 * C), lambda i: (0, 0)),      # bqkv
        pl.BlockSpec((C, C), lambda i: (0, 0)),          # Wo
        pl.BlockSpec((1, C), lambda i: (0, 0)),          # bo
    ]

    args = [xw]
    if has_mask:
        mask_blocks = nW_img // Wb
        mask_spec = pl.BlockSpec((Wb, N, N),
                                 lambda i: (i % mask_blocks, 0, 0))
        in_specs = [x_spec, mask_spec] + weight_specs
        args.append(attn_mask)
    else:
        in_specs = [x_spec] + weight_specs
    args += [p["g1"], p["b1"], p["wqkv"], p["bqkv"], p["wo"], p["bo"]]

    return pl.pallas_call(
        kernel,
        out_shape=jax.ShapeDtypeStruct((nW, N, C), jnp.float32),
        grid=(nW // Wb,),
        in_specs=in_specs,
        out_specs=pl.BlockSpec((Wb, N, C), lambda i: (i, 0, 0)),
        compiler_params=pltpu.CompilerParams(
            dimension_semantics=("parallel",),
            vmem_limit_bytes=32 * 1024 * 1024),
    )(*args)


# ----------------------------------------------------------------------------
# Pallas kernel 2: fused (shortcut + attn) residual, LN2, MLP, second residual.
# ----------------------------------------------------------------------------
def mlp_block_kernel(short_ref, attn_ref, g2_ref, b2_ref, w1_ref, bb1_ref,
                     w2_ref, bb2_ref, o_ref):
    x = short_ref[...] + attn_ref[...]          # fused first residual add
    mu = jnp.mean(x, axis=-1, keepdims=True)
    var = jnp.mean((x - mu) ** 2, axis=-1, keepdims=True)
    xln = (x - mu) * jax.lax.rsqrt(var + 1e-5) * g2_ref[...] + b2_ref[...]

    h = jnp.dot(xln, w1_ref[...], preferred_element_type=jnp.float32)
    h = h + bb1_ref[...]
    # Exact GELU (erf form), same as torch.nn.GELU() default.
    h = 0.5 * h * (1.0 + jax.lax.erf(h * 0.7071067811865475))
    y = jnp.dot(h, w2_ref[...], preferred_element_type=jnp.float32)
    y = y + bb2_ref[...]
    o_ref[...] = x + y


def mlp_residual_pallas(shortcut2d, attn2d, p, tm=None):
    M, C = shortcut2d.shape
    hid = p["w1"].shape[1]
    if tm is None:
        tm = M if M <= 256 else 256            # big tiles; >=2 steps when M>256
        while M % tm:
            tm //= 2
    assert M % tm == 0
    return pl.pallas_call(
        mlp_block_kernel,
        out_shape=jax.ShapeDtypeStruct((M, C), jnp.float32),
        grid=(M // tm,),
        in_specs=[
            pl.BlockSpec((tm, C), lambda i: (i, 0)),     # shortcut tokens
            pl.BlockSpec((tm, C), lambda i: (i, 0)),     # attention output
            pl.BlockSpec((1, C), lambda i: (0, 0)),      # ln2 gamma
            pl.BlockSpec((1, C), lambda i: (0, 0)),      # ln2 beta
            pl.BlockSpec((C, hid), lambda i: (0, 0)),    # W1
            pl.BlockSpec((1, hid), lambda i: (0, 0)),    # b1
            pl.BlockSpec((hid, C), lambda i: (0, 0)),    # W2
            pl.BlockSpec((1, C), lambda i: (0, 0)),      # b2
        ],
        out_specs=pl.BlockSpec((tm, C), lambda i: (i, 0)),
        compiler_params=pltpu.CompilerParams(
            dimension_semantics=("parallel",),
            vmem_limit_bytes=32 * 1024 * 1024),
    )(shortcut2d, attn2d, p["g2"], p["b2"], p["w1"], p["bb1"], p["w2"],
      p["bb2"])


# ----------------------------------------------------------------------------
# Full SwinTransformerBlock forward (Pallas kernels + JAX layout glue).
# ----------------------------------------------------------------------------
def swin_block_forward(x, p, *, H, W, num_heads, window_size, shift_size,
                       attn_mask):
    B, L, C = x.shape
    N = window_size * window_size
    nW_img = (H // window_size) * (W // window_size)

    # LayerNorm1 is per-token, so applying it inside the attention kernel after
    # the roll/window partition is identical to the PyTorch LN-then-partition.
    xv = x.reshape(B, H, W, C)
    if shift_size > 0:
        xv = jnp.roll(xv, shift=(-shift_size, -shift_size), axis=(1, 2))
    xw = window_partition_jax(xv, window_size).reshape(-1, N, C)

    attn_windows = window_attention_pallas(xw, attn_mask, p, num_heads,
                                           nW_img)
    attn_windows = attn_windows.reshape(-1, window_size, window_size, C)
    shifted = window_reverse_jax(attn_windows, window_size, H, W)
    if shift_size > 0:
        shifted = jnp.roll(shifted, shift=(shift_size, shift_size),
                           axis=(1, 2))
    attn_seq = shifted.reshape(B * L, C)

    # First residual add is fused into the MLP kernel.
    out = mlp_residual_pallas(x.reshape(B * L, C), attn_seq, p)
    return out.reshape(B, L, C)


# ----------------------------------------------------------------------------
# Pure-JAX reference (mirrors the PyTorch forward order) for verification.
# ----------------------------------------------------------------------------
def reference_forward(x, p, *, H, W, num_heads, window_size, shift_size,
                      attn_mask):
    B, L, C = x.shape
    N = window_size * window_size
    hd = C // num_heads
    hp = jax.lax.Precision.HIGHEST

    def ln(z, g, b):
        mu = jnp.mean(z, -1, keepdims=True)
        var = jnp.mean((z - mu) ** 2, -1, keepdims=True)
        return (z - mu) / jnp.sqrt(var + 1e-5) * g + b

    shortcut = x
    xn = ln(x, p["g1"][0], p["b1"][0])
    xv = xn.reshape(B, H, W, C)
    if shift_size > 0:
        xv = jnp.roll(xv, shift=(-shift_size, -shift_size), axis=(1, 2))
    xw = window_partition_jax(xv, window_size).reshape(-1, N, C)

    qkv = jnp.dot(xw, p["wqkv"], precision=hp) + p["bqkv"][0]
    q, k, v = qkv[..., :C], qkv[..., C:2 * C], qkv[..., 2 * C:]

    def split_heads(t):  # (nW, N, C) -> (nW, heads, N, hd)
        return t.reshape(-1, N, num_heads, hd).transpose(0, 2, 1, 3)

    qh, kh, vh = split_heads(q), split_heads(k), split_heads(v)
    s = jnp.einsum("whqd,whkd->whqk", qh, kh, precision=hp) / (hd ** 0.5)
    if attn_mask is not None:
        mask_full = jnp.tile(attn_mask, (B, 1, 1))
        s = s + mask_full[:, None, :, :]
    pa = jax.nn.softmax(s, axis=-1)
    o = jnp.einsum("whqk,whkd->whqd", pa, vh, precision=hp)
    o = o.transpose(0, 2, 1, 3).reshape(-1, N, C)
    o = jnp.dot(o, p["wo"], precision=hp) + p["bo"][0]

    o = o.reshape(-1, window_size, window_size, C)
    shifted = window_reverse_jax(o, window_size, H, W)
    if shift_size > 0:
        shifted = jnp.roll(shifted, shift=(shift_size, shift_size),
                           axis=(1, 2))
    x = shortcut + shifted.reshape(B, L, C)

    xn2 = ln(x, p["g2"][0], p["b2"][0])
    h = jnp.dot(xn2, p["w1"], precision=hp) + p["bb1"][0]
    h = 0.5 * h * (1.0 + jax.lax.erf(h * 0.7071067811865475))
    y = jnp.dot(h, p["w2"], precision=hp) + p["bb2"][0]
    return x + y


# ----------------------------------------------------------------------------
# Deterministic parameter init (shapes implied by the module's __init__).
# ----------------------------------------------------------------------------
def init_params(key, dim):
    ks = jax.random.split(key, 8)
    s = 0.1
    return {
        "g1": jnp.ones((1, dim), jnp.float32),
        "b1": jnp.zeros((1, dim), jnp.float32),
        "wqkv": s * jax.random.normal(ks[0], (dim, 3 * dim), jnp.float32),
        "bqkv": s * jax.random.normal(ks[1], (1, 3 * dim), jnp.float32),
        "wo": s * jax.random.normal(ks[2], (dim, dim), jnp.float32),
        "bo": s * jax.random.normal(ks[3], (1, dim), jnp.float32),
        "g2": jnp.ones((1, dim), jnp.float32),
        "b2": jnp.zeros((1, dim), jnp.float32),
        "w1": s * jax.random.normal(ks[4], (dim, 4 * dim), jnp.float32),
        "bb1": s * jax.random.normal(ks[5], (1, 4 * dim), jnp.float32),
        "w2": s * jax.random.normal(ks[6], (4 * dim, dim), jnp.float32),
        "bb2": s * jax.random.normal(ks[7], (1, dim), jnp.float32),
    }


if __name__ == "__main__":
    # Config consistent with the module: dim=32, 16x16 resolution, 4 heads,
    # window_size=8. Test both the shifted (masked) and unshifted (mask-free
    # kernel variant) paths.
    B, dim = 2, 32
    H = W = 16
    num_heads = 4
    window_size = 8
    L = H * W

    key = jax.random.PRNGKey(0)
    kx, kp = jax.random.split(key)
    x = jax.random.normal(kx, (B, L, dim), jnp.float32)
    params = init_params(kp, dim)

    for shift_size in (4, 0):
        attn_mask = build_attn_mask(H, W, window_size, shift_size)

        out = swin_block_forward(x, params, H=H, W=W, num_heads=num_heads,
                                 window_size=window_size,
                                 shift_size=shift_size, attn_mask=attn_mask)
        out = jax.block_until_ready(out)

        ref = reference_forward(x, params, H=H, W=W, num_heads=num_heads,
                                window_size=window_size,
                                shift_size=shift_size, attn_mask=attn_mask)
        ref = jax.block_until_ready(ref)

        assert out.shape == (B, L, dim)
        np.testing.assert_allclose(np.asarray(out), np.asarray(ref),
                                   rtol=3e-3, atol=3e-3)

    # TODO(synk): for real Swin dims (C>=96) pad C to 128 so stores are
    # lane-dense; at C=32 the output restructuring is not worth the relayout.
    print("KERNEL_OK")
</pallas_src>

<mosaic_0001>
module attributes {stable_mosaic.version = 11 : i64} {
  func.func @attn_window_kernel(%arg0: i32, %arg1: memref<4x64x32xf32, #tpu.memory_space<vmem>>, %arg2: memref<4x64x64xf32, #tpu.memory_space<vmem>>, %arg3: memref<1x32xf32, #tpu.memory_space<vmem>>, %arg4: memref<1x32xf32, #tpu.memory_space<vmem>>, %arg5: memref<32x96xf32, #tpu.memory_space<vmem>>, %arg6: memref<1x96xf32, #tpu.memory_space<vmem>>, %arg7: memref<32x32xf32, #tpu.memory_space<vmem>>, %arg8: memref<1x32xf32, #tpu.memory_space<vmem>>, %arg9: memref<4x64x32xf32, #tpu.memory_space<vmem>>) attributes {dimension_semantics = [#tpu.dimension_semantics<parallel>], iteration_bounds = array<i64: 2>, scalar_prefetch = 0 : i64, scratch_operands = 0 : i64, tpu.core_type = #tpu.core_type<tc>, window_params = [{transform_indices = @transform_0, window_bounds = array<i64: 4, 64, 32>}, {transform_indices = @transform_1, window_bounds = array<i64: 4, 64, 64>}, {pipeline_mode = #tpu.pipeline_mode<synchronous>, transform_indices = @transform_2, window_bounds = array<i64: 1, 32>}, {pipeline_mode = #tpu.pipeline_mode<synchronous>, transform_indices = @transform_3, window_bounds = array<i64: 1, 32>}, {pipeline_mode = #tpu.pipeline_mode<synchronous>, transform_indices = @transform_4, window_bounds = array<i64: 32, 96>}, {pipeline_mode = #tpu.pipeline_mode<synchronous>, transform_indices = @transform_5, window_bounds = array<i64: 1, 96>}, {pipeline_mode = #tpu.pipeline_mode<synchronous>, transform_indices = @transform_6, window_bounds = array<i64: 32, 32>}, {pipeline_mode = #tpu.pipeline_mode<synchronous>, transform_indices = @transform_7, window_bounds = array<i64: 1, 32>}, {transform_indices = @transform_8, window_bounds = array<i64: 4, 64, 32>}]} {
    %c0 = arith.constant 0 : index
    %c0_0 = arith.constant 0 : index
    %c0_1 = arith.constant 0 : index
    %0 = vector.load %arg1[%c0, %c0_0, %c0_1] : memref<4x64x32xf32, #tpu.memory_space<vmem>>, vector<4x64x32xf32>
    %1 = vector.shape_cast %0 : vector<4x64x32xf32> to vector<256x32xf32>
    %cst = arith.constant dense<0.000000e+00> : vector<256xf32>
    %2 = vector.multi_reduction <add>, %1, %cst [1] : vector<256x32xf32> to vector<256xf32>
    %3 = vector.shape_cast %2 : vector<256xf32> to vector<256x1xf32>
    %cst_2 = arith.constant 3.200000e+01 : f32
    %4 = vector.broadcast %cst_2 : f32 to vector<256x1xf32>
    %5 = arith.divf %3, %4 : vector<256x1xf32>
    %6 = vector.broadcast %5 : vector<256x1xf32> to vector<256x32xf32>
    %7 = arith.subf %1, %6 : vector<256x32xf32>
    %8 = arith.mulf %7, %7 : vector<256x32xf32>
    %cst_3 = arith.constant dense<0.000000e+00> : vector<256xf32>
    %9 = vector.multi_reduction <add>, %8, %cst_3 [1] : vector<256x32xf32> to vector<256xf32>
    %10 = vector.shape_cast %9 : vector<256xf32> to vector<256x1xf32>
    %cst_4 = arith.constant 3.200000e+01 : f32
    %11 = vector.broadcast %cst_4 : f32 to vector<256x1xf32>
    %12 = arith.divf %10, %11 : vector<256x1xf32>
    %13 = vector.broadcast %5 : vector<256x1xf32> to vector<256x32xf32>
    %14 = arith.subf %1, %13 : vector<256x32xf32>
    %cst_5 = arith.constant 9.99999974E-6 : f32
    %15 = vector.broadcast %cst_5 : f32 to vector<256x1xf32>
    %16 = arith.addf %12, %15 : vector<256x1xf32>
    %17 = math.rsqrt %16 : vector<256x1xf32>
    %18 = vector.broadcast %17 : vector<256x1xf32> to vector<256x32xf32>
    %19 = arith.mulf %14, %18 : vector<256x32xf32>
    %c0_6 = arith.constant 0 : index
    %c0_7 = arith.constant 0 : index
    %20 = vector.load %arg3[%c0_6, %c0_7] : memref<1x32xf32, #tpu.memory_space<vmem>>, vector<1x32xf32>
    %21 = vector.broadcast %20 : vector<1x32xf32> to vector<256x32xf32>
    %22 = arith.mulf %19, %21 : vector<256x32xf32>
    %c0_8 = arith.constant 0 : index
    %c0_9 = arith.constant 0 : index
    %23 = vector.load %arg4[%c0_8, %c0_9] : memref<1x32xf32, #tpu.memory_space<vmem>>, vector<1x32xf32>
    %24 = vector.broadcast %23 : vector<1x32xf32> to vector<256x32xf32>
    %25 = arith.addf %22, %24 : vector<256x32xf32>
    %c0_10 = arith.constant 0 : index
    %c0_11 = arith.constant 0 : index
    %26 = vector.load %arg5[%c0_10, %c0_11] : memref<32x96xf32, #tpu.memory_space<vmem>>, vector<32x96xf32>
    %cst_12 = arith.constant dense<0.000000e+00> : vector<256x96xf32>
    %27 = tpu.matmul %25, %26, %cst_12 {dimension_numbers = #tpu.dot_dimension_numbers<[1], [0], [0], [1], [0, 0, 1, 1], [], []>} : vector<256x32xf32>, vector<32x96xf32>, vector<256x96xf32> -> vector<256x96xf32>
    %c0_13 = arith.constant 0 : index
    %c0_14 = arith.constant 0 : index
    %28 = vector.load %arg6[%c0_13, %c0_14] : memref<1x96xf32, #tpu.memory_space<vmem>>, vector<1x96xf32>
    %29 = vector.broadcast %28 : vector<1x96xf32> to vector<256x96xf32>
    %30 = arith.addf %27, %29 : vector<256x96xf32>
    %31 = vector.extract_strided_slice %30 {offsets = [0, 0], sizes = [256, 32], strides = [1, 1]} : vector<256x96xf32> to vector<256x32xf32>
    %cst_15 = arith.constant 0.353553385 : f32
    %32 = vector.broadcast %cst_15 : f32 to vector<256x32xf32>
    %33 = arith.mulf %31, %32 : vector<256x32xf32>
    %34 = vector.shape_cast %33 : vector<256x32xf32> to vector<4x64x32xf32>
    %35 = vector.extract_strided_slice %30 {offsets = [0, 32], sizes = [256, 32], strides = [1, 1]} : vector<256x96xf32> to vector<256x32xf32>
    %36 = vector.shape_cast %35 : vector<256x32xf32> to vector<4x64x32xf32>
    %37 = vector.extract_strided_slice %30 {offsets = [0, 64], sizes = [256, 32], strides = [1, 1]} : vector<256x96xf32> to vector<256x32xf32>
    %38 = vector.shape_cast %37 : vector<256x32xf32> to vector<4x64x32xf32>
    %c0_16 = arith.constant 0 : index
    %c0_17 = arith.constant 0 : index
    %c0_18 = arith.constant 0 : index
    %39 = vector.load %arg2[%c0_16, %c0_17, %c0_18] : memref<4x64x64xf32, #tpu.memory_space<vmem>>, vector<4x64x64xf32>
    %40 = tpu.iota {dimensions = array<i32: 2>} : vector<1x1x32xi32>
    %cst_19 = arith.constant 0.000000e+00 : f32
    %41 = vector.broadcast %cst_19 : f32 to vector<4x64x32xf32>
    %c0_i32 = arith.constant 0 : i32
    %42 = vector.broadcast %c0_i32 : i32 to vector<1x1x32xi32>
    %43 = arith.cmpi sge, %40, %42 : vector<1x1x32xi32>
    %c8_i32 = arith.constant 8 : i32
    %44 = vector.broadcast %c8_i32 : i32 to vector<1x1x32xi32>
    %45 = arith.cmpi slt, %40, %44 : vector<1x1x32xi32>
    %46 = arith.andi %43, %45 : vector<1x1x32xi1>
    %cst_20 = arith.constant 0.000000e+00 : f32
    %47 = vector.shape_cast %46 : vector<1x1x32xi1> to vector<1x1x32xi1>
    %48 = vector.broadcast %47 : vector<1x1x32xi1> to vector<4x64x32xi1>
    %49 = vector.broadcast %cst_20 : f32 to vector<4x64x32xf32>
    %50 = arith.select %48, %36, %49 : vector<4x64x32xi1>, vector<4x64x32xf32>
    %cst_21 = arith.constant 0.000000e+00 : f32
    %51 = vector.shape_cast %46 : vector<1x1x32xi1> to vector<1x1x32xi1>
    %52 = vector.broadcast %51 : vector<1x1x32xi1> to vector<4x64x32xi1>
    %53 = vector.broadcast %cst_21 : f32 to vector<4x64x32xf32>
    %54 = arith.select %52, %38, %53 : vector<4x64x32xi1>, vector<4x64x32xf32>
    "tpu.trace_start"() <{level = 10 : i32, message = "wqc,wkc->wqk"}> : () -> ()
    %cst_22 = arith.constant dense<0.000000e+00> : vector<4x64x64xf32>
    %55 = tpu.matmul %34, %50, %cst_22 {dimension_numbers = #tpu.dot_dimension_numbers<[2], [2], [1], [1], [0, 0, 0, 1, 1, 1], [0], [0]>} : vector<4x64x32xf32>, vector<4x64x32xf32>, vector<4x64x64xf32> -> vector<4x64x64xf32>
    "tpu.trace_stop"() : () -> ()
    %56 = arith.addf %55, %39 : vector<4x64x64xf32>
    %cst_23 = arith.constant dense<0xFF800000> : vector<4x64xf32>
    %57 = vector.multi_reduction <maximumf>, %56, %cst_23 [2] : vector<4x64x64xf32> to vector<4x64xf32>
    %58 = vector.shape_cast %57 : vector<4x64xf32> to vector<4x64x1xf32>
    %59 = vector.broadcast %58 : vector<4x64x1xf32> to vector<4x64x64xf32>
    %60 = arith.subf %56, %59 : vector<4x64x64xf32>
    %61 = math.exp %60 : vector<4x64x64xf32>
    %cst_24 = arith.constant dense<0.000000e+00> : vector<4x64xf32>
    %62 = vector.multi_reduction <add>, %61, %cst_24 [2] : vector<4x64x64xf32> to vector<4x64xf32>
    %63 = vector.shape_cast %62 : vector<4x64xf32> to vector<4x64x1xf32>
    %64 = tpu.reciprocal %63 {approx = true} : vector<4x64x1xf32> -> vector<4x64x1xf32>
    %65 = vector.broadcast %64 : vector<4x64x1xf32> to vector<4x64x64xf32>
    %66 = arith.mulf %61, %65 : vector<4x64x64xf32>
    "tpu.trace_start"() <{level = 10 : i32, message = "wqk,wkc->wqc"}> : () -> ()
    %cst_25 = arith.constant dense<0.000000e+00> : vector<4x64x32xf32>
    %67 = tpu.matmul %66, %54, %cst_25 {dimension_numbers = #tpu.dot_dimension_numbers<[2], [1], [1], [2], [0, 0, 0, 1, 1, 2], [0], [0]>} : vector<4x64x64xf32>, vector<4x64x32xf32>, vector<4x64x32xf32> -> vector<4x64x32xf32>
    "tpu.trace_stop"() : () -> ()
    %68 = arith.addf %41, %67 : vector<4x64x32xf32>
    %c8_i32_26 = arith.constant 8 : i32
    %69 = vector.broadcast %c8_i32_26 : i32 to vector<1x1x32xi32>
    %70 = arith.cmpi sge, %40, %69 : vector<1x1x32xi32>
    %c16_i32 = arith.constant 16 : i32
    %71 = vector.broadcast %c16_i32 : i32 to vector<1x1x32xi32>
    %72 = arith.cmpi slt, %40, %71 : vector<1x1x32xi32>
    %73 = arith.andi %70, %72 : vector<1x1x32xi1>
    %cst_27 = arith.constant 0.000000e+00 : f32
    %74 = vector.shape_cast %73 : vector<1x1x32xi1> to vector<1x1x32xi1>
    %75 = vector.broadcast %74 : vector<1x1x32xi1> to vector<4x64x32xi1>
    %76 = vector.broadcast %cst_27 : f32 to vector<4x64x32xf32>
    %77 = arith.select %75, %36, %76 : vector<4x64x32xi1>, vector<4x64x32xf32>
    %cst_28 = arith.constant 0.000000e+00 : f32
    %78 = vector.shape_cast %73 : vector<1x1x32xi1> to vector<1x1x32xi1>
    %79 = vector.broadcast %78 : vector<1x1x32xi1> to vector<4x64x32xi1>
    %80 = vector.broadcast %cst_28 : f32 to vector<4x64x32xf32>
    %81 = arith.select %79, %38, %80 : vector<4x64x32xi1>, vector<4x64x32xf32>
    "tpu.trace_start"() <{level = 10 : i32, message = "wqc,wkc->wqk"}> : () -> ()
    %cst_29 = arith.constant dense<0.000000e+00> : vector<4x64x64xf32>
    %82 = tpu.matmul %34, %77, %cst_29 {dimension_numbers = #tpu.dot_dimension_numbers<[2], [2], [1], [1], [0, 0, 0, 1, 1, 1], [0], [0]>} : vector<4x64x32xf32>, vector<4x64x32xf32>, vector<4x64x64xf32> -> vector<4x64x64xf32>
    "tpu.trace_stop"() : () -> ()
    %83 = arith.addf %82, %39 : vector<4x64x64xf32>
    %cst_30 = arith.constant dense<0xFF800000> : vector<4x64xf32>
    %84 = vector.multi_reduction <maximumf>, %83, %cst_30 [2] : vector<4x64x64xf32> to vector<4x64xf32>
    %85 = vector.shape_cast %84 : vector<4x64xf32> to vector<4x64x1xf32>
    %86 = vector.broadcast %85 : vector<4x64x1xf32> to vector<4x64x64xf32>
    %87 = arith.subf %83, %86 : vector<4x64x64xf32>
    %88 = math.exp %87 : vector<4x64x64xf32>
    %cst_31 = arith.constant dense<0.000000e+00> : vector<4x64xf32>
    %89 = vector.multi_reduction <add>, %88, %cst_31 [2] : vector<4x64x64xf32> to vector<4x64xf32>
    %90 = vector.shape_cast %89 : vector<4x64xf32> to vector<4x64x1xf32>
    %91 = tpu.reciprocal %90 {approx = true} : vector<4x64x1xf32> -> vector<4x64x1xf32>
    %92 = vector.broadcast %91 : vector<4x64x1xf32> to vector<4x64x64xf32>
    %93 = arith.mulf %88, %92 : vector<4x64x64xf32>
    "tpu.trace_start"() <{level = 10 : i32, message = "wqk,wkc->wqc"}> : () -> ()
    %cst_32 = arith.constant dense<0.000000e+00> : vector<4x64x32xf32>
    %94 = tpu.matmul %93, %81, %cst_32 {dimension_numbers = #tpu.dot_dimension_numbers<[2], [1], [1], [2], [0, 0, 0, 1, 1, 2], [0], [0]>} : vector<4x64x64xf32>, vector<4x64x32xf32>, vector<4x64x32xf32> -> vector<4x64x32xf32>
    "tpu.trace_stop"() : () -> ()
    %95 = arith.addf %68, %94 : vector<4x64x32xf32>
    %c16_i32_33 = arith.constant 16 : i32
    %96 = vector.broadcast %c16_i32_33 : i32 to vector<1x1x32xi32>
    %97 = arith.cmpi sge, %40, %96 : vector<1x1x32xi32>
    %c24_i32 = arith.constant 24 : i32
    %98 = vector.broadcast %c24_i32 : i32 to vector<1x1x32xi32>
    %99 = arith.cmpi slt, %40, %98 : vector<1x1x32xi32>
    %100 = arith.andi %97, %99 : vector<1x1x32xi1>
    %cst_34 = arith.constant 0.000000e+00 : f32
    %101 = vector.shape_cast %100 : vector<1x1x32xi1> to vector<1x1x32xi1>
    %102 = vector.broadcast %101 : vector<1x1x32xi1> to vector<4x64x32xi1>
    %103 = vector.broadcast %cst_34 : f32 to vector<4x64x32xf32>
    %104 = arith.select %102, %36, %103 : vector<4x64x32xi1>, vector<4x64x32xf32>
    %cst_35 = arith.constant 0.000000e+00 : f32
    %105 = vector.shape_cast %100 : vector<1x1x32xi1> to vector<1x1x32xi1>
    %106 = vector.broadcast %105 : vector<1x1x32xi1> to vector<4x64x32xi1>
    %107 = vector.broadcast %cst_35 : f32 to vector<4x64x32xf32>
    %108 = arith.select %106, %38, %107 : vector<4x64x32xi1>, vector<4x64x32xf32>
    "tpu.trace_start"() <{level = 10 : i32, message = "wqc,wkc->wqk"}> : () -> ()
    %cst_36 = arith.constant dense<0.000000e+00> : vector<4x64x64xf32>
    %109 = tpu.matmul %34, %104, %cst_36 {dimension_numbers = #tpu.dot_dimension_numbers<[2], [2], [1], [1], [0, 0, 0, 1, 1, 1], [0], [0]>} : vector<4x64x32xf32>, vector<4x64x32xf32>, vector<4x64x64xf32> -> vector<4x64x64xf32>
    "tpu.trace_stop"() : () -> ()
    %110 = arith.addf %109, %39 : vector<4x64x64xf32>
    %cst_37 = arith.constant dense<0xFF800000> : vector<4x64xf32>
    %111 = vector.multi_reduction <maximumf>, %110, %cst_37 [2] : vector<4x64x64xf32> to vector<4x64xf32>
    %112 = vector.shape_cast %111 : vector<4x64xf32> to vector<4x64x1xf32>
    %113 = vector.broadcast %112 : vector<4x64x1xf32> to vector<4x64x64xf32>
    %114 = arith.subf %110, %113 : vector<4x64x64xf32>
    %115 = math.exp %114 : vector<4x64x64xf32>
    %cst_38 = arith.constant dense<0.000000e+00> : vector<4x64xf32>
    %116 = vector.multi_reduction <add>, %115, %cst_38 [2] : vector<4x64x64xf32> to vector<4x64xf32>
    %117 = vector.shape_cast %116 : vector<4x64xf32> to vector<4x64x1xf32>
    %118 = tpu.reciprocal %117 {approx = true} : vector<4x64x1xf32> -> vector<4x64x1xf32>
    %119 = vector.broadcast %118 : vector<4x64x1xf32> to vector<4x64x64xf32>
    %120 = arith.mulf %115, %119 : vector<4x64x64xf32>
    "tpu.trace_start"() <{level = 10 : i32, message = "wqk,wkc->wqc"}> : () -> ()
    %cst_39 = arith.constant dense<0.000000e+00> : vector<4x64x32xf32>
    %121 = tpu.matmul %120, %108, %cst_39 {dimension_numbers = #tpu.dot_dimension_numbers<[2], [1], [1], [2], [0, 0, 0, 1, 1, 2], [0], [0]>} : vector<4x64x64xf32>, vector<4x64x32xf32>, vector<4x64x32xf32> -> vector<4x64x32xf32>
    "tpu.trace_stop"() : () -> ()
    %122 = arith.addf %95, %121 : vector<4x64x32xf32>
    %c24_i32_40 = arith.constant 24 : i32
    %123 = vector.broadcast %c24_i32_40 : i32 to vector<1x1x32xi32>
    %124 = arith.cmpi sge, %40, %123 : vector<1x1x32xi32>
    %c32_i32 = arith.constant 32 : i32
    %125 = vector.broadcast %c32_i32 : i32 to vector<1x1x32xi32>
    %126 = arith.cmpi slt, %40, %125 : vector<1x1x32xi32>
    %127 = arith.andi %124, %126 : vector<1x1x32xi1>
    %cst_41 = arith.constant 0.000000e+00 : f32
    %128 = vector.shape_cast %127 : vector<1x1x32xi1> to vector<1x1x32xi1>
    %129 = vector.broadcast %128 : vector<1x1x32xi1> to vector<4x64x32xi1>
    %130 = vector.broadcast %cst_41 : f32 to vector<4x64x32xf32>
    %131 = arith.select %129, %36, %130 : vector<4x64x32xi1>, vector<4x64x32xf32>
    %cst_42 = arith.constant 0.000000e+00 : f32
    %132 = vector.shape_cast %127 : vector<1x1x32xi1> to vector<1x1x32xi1>
    %133 = vector.broadcast %132 : vector<1x1x32xi1> to vector<4x64x32xi1>
    %134 = vector.broadcast %cst_42 : f32 to vector<4x64x32xf32>
    %135 = arith.select %133, %38, %134 : vector<4x64x32xi1>, vector<4x64x32xf32>
    "tpu.trace_start"() <{level = 10 : i32, message = "wqc,wkc->wqk"}> : () -> ()
    %cst_43 = arith.constant dense<0.000000e+00> : vector<4x64x64xf32>
    %136 = tpu.matmul %34, %131, %cst_43 {dimension_numbers = #tpu.dot_dimension_numbers<[2], [2], [1], [1], [0, 0, 0, 1, 1, 1], [0], [0]>} : vector<4x64x32xf32>, vector<4x64x32xf32>, vector<4x64x64xf32> -> vector<4x64x64xf32>
    "tpu.trace_stop"() : () -> ()
    %137 = arith.addf %136, %39 : vector<4x64x64xf32>
    %cst_44 = arith.constant dense<0xFF800000> : vector<4x64xf32>
    %138 = vector.multi_reduction <maximumf>, %137, %cst_44 [2] : vector<4x64x64xf32> to vector<4x64xf32>
    %139 = vector.shape_cast %138 : vector<4x64xf32> to vector<4x64x1xf32>
    %140 = vector.broadcast %139 : vector<4x64x1xf32> to vector<4x64x64xf32>
    %141 = arith.subf %137, %140 : vector<4x64x64xf32>
    %142 = math.exp %141 : vector<4x64x64xf32>
    %cst_45 = arith.constant dense<0.000000e+00> : vector<4x64xf32>
    %143 = vector.multi_reduction <add>, %142, %cst_45 [2] : vector<4x64x64xf32> to vector<4x64xf32>
    %144 = vector.shape_cast %143 : vector<4x64xf32> to vector<4x64x1xf32>
    %145 = tpu.reciprocal %144 {approx = true} : vector<4x64x1xf32> -> vector<4x64x1xf32>
    %146 = vector.broadcast %145 : vector<4x64x1xf32> to vector<4x64x64xf32>
    %147 = arith.mulf %142, %146 : vector<4x64x64xf32>
    "tpu.trace_start"() <{level = 10 : i32, message = "wqk,wkc->wqc"}> : () -> ()
    %cst_46 = arith.constant dense<0.000000e+00> : vector<4x64x32xf32>
    %148 = tpu.matmul %147, %135, %cst_46 {dimension_numbers = #tpu.dot_dimension_numbers<[2], [1], [1], [2], [0, 0, 0, 1, 1, 2], [0], [0]>} : vector<4x64x64xf32>, vector<4x64x32xf32>, vector<4x64x32xf32> -> vector<4x64x32xf32>
    "tpu.trace_stop"() : () -> ()
    %149 = arith.addf %122, %148 : vector<4x64x32xf32>
    %150 = vector.shape_cast %149 : vector<4x64x32xf32> to vector<256x32xf32>
    %c0_47 = arith.constant 0 : index
    %c0_48 = arith.constant 0 : index
    %151 = vector.load %arg7[%c0_47, %c0_48] : memref<32x32xf32, #tpu.memory_space<vmem>>, vector<32x32xf32>
    %cst_49 = arith.constant dense<0.000000e+00> : vector<256x32xf32>
    %152 = tpu.matmul %150, %151, %cst_49 {dimension_numbers = #tpu.dot_dimension_numbers<[1], [0], [0], [1], [0, 0, 1, 1], [], []>} : vector<256x32xf32>, vector<32x32xf32>, vector<256x32xf32> -> vector<256x32xf32>
    %c0_50 = arith.constant 0 : index
    %c0_51 = arith.constant 0 : index
    %153 = vector.load %arg8[%c0_50, %c0_51] : memref<1x32xf32, #tpu.memory_space<vmem>>, vector<1x32xf32>
    %154 = vector.broadcast %153 : vector<1x32xf32> to vector<256x32xf32>
    %155 = arith.addf %152, %154 : vector<256x32xf32>
    %156 = vector.shape_cast %155 : vector<256x32xf32> to vector<4x64x32xf32>
    %c0_52 = arith.constant 0 : index
    %c0_53 = arith.constant 0 : index
    %c0_54 = arith.constant 0 : index
    %157 = vector.load %arg9[%c0_52, %c0_53, %c0_54] : memref<4x64x32xf32, #tpu.memory_space<vmem>>, vector<4x64x32xf32>
    tpu.vector_store %arg9[%c0_52, %c0_53, %c0_54], %156 {strides = array<i32>} : memref<4x64x32xf32, #tpu.memory_space<vmem>>, vector<4x64x32xf32>,
    return
  }
  func.func @transform_0(%arg0: i32) -> (i32, i32, i32) {
    %c0_i32 = arith.constant 0 : i32
    %c0_i32_0 = arith.constant 0 : i32
    %c0_i32_1 = arith.constant 0 : i32
    return %arg0, %c0_i32, %c0_i32_0 : i32, i32, i32
  }
  func.func @transform_1(%arg0: i32) -> (i32, i32, i32) {
    %c1_i32 = arith.constant 1 : i32
    %c0_i32 = arith.constant 0 : i32
    %0 = arith.cmpi eq, %c1_i32, %c0_i32 : i32
    %c1_i32_0 = arith.constant 1 : i32
    %1 = arith.select %0, %c1_i32_0, %c1_i32 : i32
    %2 = arith.remsi %arg0, %1 : i32
    %c0_i32_1 = arith.constant 0 : i32
    %3 = arith.cmpi ne, %2, %c0_i32_1 : i32
    %c0_i32_2 = arith.constant 0 : i32
    %4 = arith.cmpi slt, %2, %c0_i32_2 : i32
    %c0_i32_3 = arith.constant 0 : i32
    %5 = arith.cmpi slt, %1, %c0_i32_3 : i32
    %6 = arith.xori %4, %5 : i1
    %7 = arith.andi %6, %3 : i1
    %8 = arith.addi %2, %1 : i32
    %9 = arith.select %7, %8, %2 : i32
    %c0_i32_4 = arith.constant 0 : i32
    %c0_i32_5 = arith.constant 0 : i32
    %c0_i32_6 = arith.constant 0 : i32
    return %9, %c0_i32_4, %c0_i32_5 : i32, i32, i32
  }
  func.func @transform_2(%arg0: i32) -> (i32, i32) {
    %c0_i32 = arith.constant 0 : i32
    %c0_i32_0 = arith.constant 0 : i32
    %c0_i32_1 = arith.constant 0 : i32
    return %c0_i32, %c0_i32_0 : i32, i32
  }
  func.func @transform_3(%arg0: i32) -> (i32, i32) {
    %c0_i32 = arith.constant 0 : i32
    %c0_i32_0 = arith.constant 0 : i32
    %c0_i32_1 = arith.constant 0 : i32
    return %c0_i32, %c0_i32_0 : i32, i32
  }
  func.func @transform_4(%arg0: i32) -> (i32, i32) {
    %c0_i32 = arith.constant 0 : i32
    %c0_i32_0 = arith.constant 0 : i32
    %c0_i32_1 = arith.constant 0 : i32
    return %c0_i32, %c0_i32_0 : i32, i32
  }
  func.func @transform_5(%arg0: i32) -> (i32, i32) {
    %c0_i32 = arith.constant 0 : i32
    %c0_i32_0 = arith.constant 0 : i32
    %c0_i32_1 = arith.constant 0 : i32
    return %c0_i32, %c0_i32_0 : i32, i32
  }
  func.func @transform_6(%arg0: i32) -> (i32, i32) {
    %c0_i32 = arith.constant 0 : i32
    %c0_i32_0 = arith.constant 0 : i32
    %c0_i32_1 = arith.constant 0 : i32
    return %c0_i32, %c0_i32_0 : i32, i32
  }
  func.func @transform_7(%arg0: i32) -> (i32, i32) {
    %c0_i32 = arith.constant 0 : i32
    %c0_i32_0 = arith.constant 0 : i32
    %c0_i32_1 = arith.constant 0 : i32
    return %c0_i32, %c0_i32_0 : i32, i32
  }
  func.func @transform_8(%arg0: i32) -> (i32, i32, i32) {
    %c0_i32 = arith.constant 0 : i32
    %c0_i32_0 = arith.constant 0 : i32
    %c0_i32_1 = arith.constant 0 : i32
    return %arg0, %c0_i32, %c0_i32_0 : i32, i32, i32
  }
}

</mosaic_0001>

<llo_original>
// kernel: tpu_custom_call.1
$region0: #{tpu_custom_call.1}
  #allocation0 [shape = 'u32[]', space=smem, size = 0x4, offset = 0x4, fixed_abs, tag = 'smem constant byte address 0x4 - core index']
  #allocation1 [shape = 'u32[144,128]{1,0:T(1,128)}', space=vmem, size = 0x12000, scoped, tag = 'internal scratch']
  %s0 = inlined_call_operand.vmem [shape: f32[8,64,32], index: 0, kind: input, shape index: {}]
  %s1 = inlined_call_operand.vmem [shape: f32[4,64,64], index: 1, kind: input, shape index: {}]
  %s2 = inlined_call_operand.vmem [shape: f32[1,32], index: 2, kind: input, shape index: {}]
  %s3 = inlined_call_operand.vmem [shape: f32[1,32], index: 3, kind: input, shape index: {}]
  %s4 = inlined_call_operand.vmem [shape: f32[32,96], index: 4, kind: input, shape index: {}]
  %s5 = inlined_call_operand.vmem [shape: f32[1,96], index: 5, kind: input, shape index: {}]
  %s6 = inlined_call_operand.vmem [shape: f32[32,32], index: 6, kind: input, shape index: {}]
  %s7 = inlined_call_operand.vmem [shape: f32[1,32], index: 7, kind: input, shape index: {}]
  %s8 = inlined_call_operand.vmem [shape: f32[8,64,32], index: 8, kind: output, shape index: {}]
  %s9 = sld [smem:[#allocation0]]
  $region65: #{tpu_custom_call.1} parent=0
    _
  %s11 = ssub.s32 1, %s9
  %s12 = scalar_select 0, %s11, %s9
  loop: start=0, step=1, limit=4
  $region2: #{tpu_custom_call.1} parent=0 // loop_pre_header
    _
  $region3: #{tpu_custom_call.1} parent=0 // loop_header
    %s14 = sphi 0, %s18
    %p15 = scmp.ge.s32.totalorder %s14, 4
    %s24 = sphi 0, %s26
    %s27 = sphi 0, %s24
    %s28 = sphi 0, %s27
    %s44 = sphi 0, %s28
    %s48 = sphi 0, %s48
    %s50 = sphi 0, %s48
    %s51 = sphi 0, %s50
    %s65 = sphi 0, %s51
    %s69 = sphi 0, %s69
    %s71 = sphi 0, %s69
    %s72 = sphi 0, %s71
    %s86 = sphi 0, %s72
    %s90 = sphi 0, %s90
    %s92 = sphi 0, %s90
    %s93 = sphi 0, %s92
    %s107 = sphi 0, %s93
    %s111 = sphi 0, %s111
    %s113 = sphi 0, %s111
    %s114 = sphi 0, %s113
    %s128 = sphi 0, %s114
    %s132 = sphi 0, %s132
    %s134 = sphi 0, %s132
    %s135 = sphi 0, %s134
    %s149 = sphi 0, %s135
    %s153 = sphi 0, %s153
    %s155 = sphi 0, %s153
    %s156 = sphi 0, %s155
    %s170 = sphi 0, %s156
    %s174 = sphi 0, %s174
    %s176 = sphi 0, %s174
    %s177 = sphi 0, %s176
    %s191 = sphi 0, %s177
    %s197 = sphi 0, %s199
    %s200 = sphi 0, %s197
    %s201 = sphi 0, %s200
    %s217 = sphi 0, %s201
  $region4: #{tpu_custom_call.1} parent=0 // loop_header_branch
    %17 = sbr.rel (%p15) target = $region8
  $region5: #{tpu_custom_call.1} parent=0 // loop_body
    %s19 = ssub.s32 %s14, 1
    %s20 = ssub.s32 %s14, 2
    %s21 = sadd.s32 %s14, 1
    %s22 = ssub.s32 %s14, %s21
    %p23 = scmp.eq.s32.totalorder %s22, 0
    %s25 = sadd.s32 %s24, 1
    %s26 = scalar_select %p23, %s24, %s25
    %p29 = pneg %p23
    %p30 = scmp.eq.s32.totalorder %s14, 1
    %p31 = por %p29, %p30
    %p32 = scmp.ne.s32.totalorder %s24, %s27
    %p33 = scmp.eq.s32.totalorder %s14, 0
    %p34 = por %p32, %p33
    %p35 = scmp.ne.s32.totalorder %s24, %s27
    %p36 = scmp.eq.s32.totalorder %s19, 1
    %p37 = por %p35, %p36
    %p38 = scmp.ne.s32.totalorder %s27, %s28
    %p39 = scmp.eq.s32.totalorder %s19, 0
    %p40 = por %p38, %p39
    %p41 = scmp.ne.s32.totalorder %s27, %s28
    %p42 = scmp.eq.s32.totalorder %s20, 1
    %p43 = por %p41, %p42
    %p45 = scmp.ne.s32.totalorder %s28, %s44
    %p46 = scmp.eq.s32.totalorder %s20, 0
    %p47 = por %p45, %p46
    %s49 = sadd.s32 %s48, 1
    %p52 = scmp.eq.s32.totalorder %s14, 1
    %p53 = scmp.ne.s32.totalorder %s48, %s50
    %p54 = scmp.eq.s32.totalorder %s14, 0
    %p55 = por %p53, %p54
    %p56 = scmp.ne.s32.totalorder %s48, %s50
    %p57 = scmp.eq.s32.totalorder %s19, 1
    %p58 = por %p56, %p57
    %p59 = scmp.ne.s32.totalorder %s50, %s51
    %p60 = scmp.eq.s32.totalorder %s19, 0
    %p61 = por %p59, %p60
    %p62 = scmp.ne.s32.totalorder %s50, %s51
    %p63 = scmp.eq.s32.totalorder %s20, 1
    %p64 = por %p62, %p63
    %p66 = scmp.ne.s32.totalorder %s51, %s65
    %p67 = scmp.eq.s32.totalorder %s20, 0
    %p68 = por %p66, %p67
    %s70 = sadd.s32 %s69, 1
    %p73 = scmp.eq.s32.totalorder %s14, 1
    %p74 = scmp.ne.s32.totalorder %s69, %s71
    %p75 = scmp.eq.s32.totalorder %s14, 0
    %p76 = por %p74, %p75
    %p77 = scmp.ne.s32.totalorder %s69, %s71
    %p78 = scmp.eq.s32.totalorder %s19, 1
    %p79 = por %p77, %p78
    %p80 = scmp.ne.s32.totalorder %s71, %s72
    %p81 = scmp.eq.s32.totalorder %s19, 0
    %p82 = por %p80, %p81
    %p83 = scmp.ne.s32.totalorder %s71, %s72
    %p84 = scmp.eq.s32.totalorder %s20, 1
    %p85 = por %p83, %p84
    %p87 = scmp.ne.s32.totalorder %s72, %s86
    %p88 = scmp.eq.s32.totalorder %s20, 0
    %p89 = por %p87, %p88
    %s91 = sadd.s32 %s90, 1
    %p94 = scmp.eq.s32.totalorder %s14, 1
    %p95 = scmp.ne.s32.totalorder %s90, %s92
    %p96 = scmp.eq.s32.totalorder %s14, 0
    %p97 = por %p95, %p96
    %p98 = scmp.ne.s32.totalorder %s90, %s92
    %p99 = scmp.eq.s32.totalorder %s19, 1
    %p100 = por %p98, %p99
    %p101 = scmp.ne.s32.totalorder %s92, %s93
    %p102 = scmp.eq.s32.totalorder %s19, 0
    %p103 = por %p101, %p102
    %p104 = scmp.ne.s32.totalorder %s92, %s93
    %p105 = scmp.eq.s32.totalorder %s20, 1
    %p106 = por %p104, %p105
    %p108 = scmp.ne.s32.totalorder %s93, %s107
    %p109 = scmp.eq.s32.totalorder %s20, 0
    %p110 = por %p108, %p109
    %s112 = sadd.s32 %s111, 1
    %p115 = scmp.eq.s32.totalorder %s14, 1
    %p116 = scmp.ne.s32.totalorder %s111, %s113
    %p117 = scmp.eq.s32.totalorder %s14, 0
    %p118 = por %p116, %p117
    %p119 = scmp.ne.s32.totalorder %s111, %s113
    %p120 = scmp.eq.s32.totalorder %s19, 1
    %p121 = por %p119, %p120
    %p122 = scmp.ne.s32.totalorder %s113, %s114
    %p123 = scmp.eq.s32.totalorder %s19, 0
    %p124 = por %p122, %p123
    %p125 = scmp.ne.s32.totalorder %s113, %s114
    %p126 = scmp.eq.s32.totalorder %s20, 1
    %p127 = por %p125, %p126
    %p129 = scmp.ne.s32.totalorder %s114, %s128
    %p130 = scmp.eq.s32.totalorder %s20, 0
    %p131 = por %p129, %p130
    %s133 = sadd.s32 %s132, 1
    %p136 = scmp.eq.s32.totalorder %s14, 1
    %p137 = scmp.ne.s32.totalorder %s132, %s134
    %p138 = scmp.eq.s32.totalorder %s14, 0
    %p139 = por %p137, %p138
    %p140 = scmp.ne.s32.totalorder %s132, %s134
    %p141 = scmp.eq.s32.totalorder %s19, 1
    %p142 = por %p140, %p141
    %p143 = scmp.ne.s32.totalorder %s134, %s135
    %p144 = scmp.eq.s32.totalorder %s19, 0
    %p145 = por %p143, %p144
    %p146 = scmp.ne.s32.totalorder %s134, %s135
    %p147 = scmp.eq.s32.totalorder %s20, 1
    %p148 = por %p146, %p147
    %p150 = scmp.ne.s32.totalorder %s135, %s149
    %p151 = scmp.eq.s32.totalorder %s20, 0
    %p152 = por %p150, %p151
    %s154 = sadd.s32 %s153, 1
    %p157 = scmp.eq.s32.totalorder %s14, 1
    %p158 = scmp.ne.s32.totalorder %s153, %s155
    %p159 = scmp.eq.s32.totalorder %s14, 0
    %p160 = por %p158, %p159
    %p161 = scmp.ne.s32.totalorder %s153, %s155
    %p162 = scmp.eq.s32.totalorder %s19, 1
    %p163 = por %p161, %p162
    %p164 = scmp.ne.s32.totalorder %s155, %s156
    %p165 = scmp.eq.s32.totalorder %s19, 0
    %p166 = por %p164, %p165
    %p167 = scmp.ne.s32.totalorder %s155, %s156
    %p168 = scmp.eq.s32.totalorder %s20, 1
    %p169 = por %p167, %p168
    %p171 = scmp.ne.s32.totalorder %s156, %s170
    %p172 = scmp.eq.s32.totalorder %s20, 0
    %p173 = por %p171, %p172
    %s175 = sadd.s32 %s174, 1
    %p178 = scmp.eq.s32.totalorder %s14, 1
    %p179 = scmp.ne.s32.totalorder %s174, %s176
    %p180 = scmp.eq.s32.totalorder %s14, 0
    %p181 = por %p179, %p180
    %p182 = scmp.ne.s32.totalorder %s174, %s176
    %p183 = scmp.eq.s32.totalorder %s19, 1
    %p184 = por %p182, %p183
    %p185 = scmp.ne.s32.totalorder %s176, %s177
    %p186 = scmp.eq.s32.totalorder %s19, 0
    %p187 = por %p185, %p186
    %p188 = scmp.ne.s32.totalorder %s176, %s177
    %p189 = scmp.eq.s32.totalorder %s20, 1
    %p190 = por %p188, %p189
    %p192 = scmp.ne.s32.totalorder %s177, %s191
    %p193 = scmp.eq.s32.totalorder %s20, 0
    %p194 = por %p192, %p193
    %s195 = ssub.s32 %s14, %s21
    %p196 = scmp.eq.s32.totalorder %s195, 0
    %s198 = sadd.s32 %s197, 1
    %s199 = scalar_select %p196, %s197, %s198
    %p202 = pneg %p196
    %p203 = scmp.eq.s32.totalorder %s14, 1
    %p204 = por %p202, %p203
    %p205 = scmp.ne.s32.totalorder %s197, %s200
    %p206 = scmp.eq.s32.totalorder %s14, 0
    %p207 = por %p205, %p206
    %p208 = scmp.ne.s32.totalorder %s197, %s200
    %p209 = scmp.eq.s32.totalorder %s19, 1
    %p210 = por %p208, %p209
    %p211 = scmp.ne.s32.totalorder %s200, %s201
    %p212 = scmp.eq.s32.totalorder %s19, 0
    %p213 = por %p211, %p212
    %p214 = scmp.ne.s32.totalorder %s200, %s201
    %p215 = scmp.eq.s32.totalorder %s20, 1
    %p216 = por %p214, %p215
    %p218 = scmp.ne.s32.totalorder %s201, %s217
    %p219 = scmp.eq.s32.totalorder %s20, 0
    %p220 = por %p218, %p219
    %p221 = scmp.le.s32.totalorder 1, %s14
    %p222 = scmp.lt.s32.totalorder %s14, 3
    %p223 = pnand %p221, %p222
    %p224 = pneg %p223
    // Predicated region
    $region9: #{tpu_custom_call.1} parent=5 // pred_check
      _
    $region10: #{tpu_custom_call.1} parent=5 // pred_check_branch
      %226 = sbr.rel (%p223) target = $region12
    $region11: #{tpu_custom_call.1} parent=5 // pred_region
      %s227 = ssub.s32 %s14, 1
      // Predicated region
      $region13: #{tpu_custom_call.1} parent=11 // pred_check
        %p228 = pneg %p61
      $region14: #{tpu_custom_call.1} parent=11 // pred_check_branch
        %230 = sbr.rel (%p228) target = $region16
      $region15: #{tpu_custom_call.1} parent=11 // pred_region
        _
      $region16: #{tpu_custom_call.1} parent=11 // pred_fallthru
        _
      // Predicated region
      $region17: #{tpu_custom_call.1} parent=11 // pred_check
        %p231 = pneg %p82
      $region18: #{tpu_custom_call.1} parent=11 // pred_check_branch
        %233 = sbr.rel (%p231) target = $region20
      $region19: #{tpu_custom_call.1} parent=11 // pred_region
        _
      $region20: #{tpu_custom_call.1} parent=11 // pred_fallthru
        _
      // Predicated region
      $region21: #{tpu_custom_call.1} parent=11 // pred_check
        %p234 = pneg %p103
      $region22: #{tpu_custom_call.1} parent=11 // pred_check_branch
        %236 = sbr.rel (%p234) target = $region24
      $region23: #{tpu_custom_call.1} parent=11 // pred_region
        _
      $region24: #{tpu_custom_call.1} parent=11 // pred_fallthru
        _
      // Predicated region
      $region25: #{tpu_custom_call.1} parent=11 // pred_check
        %p237 = pneg %p124
      $region26: #{tpu_custom_call.1} parent=11 // pred_check_branch
        %239 = sbr.rel (%p237) target = $region28
      $region27: #{tpu_custom_call.1} parent=11 // pred_region
        _
      $region28: #{tpu_custom_call.1} parent=11 // pred_fallthru
        _
      // Predicated region
      $region29: #{tpu_custom_call.1} parent=11 // pred_check
        %p240 = pneg %p145
      $region30: #{tpu_custom_call.1} parent=11 // pred_check_branch
        %242 = sbr.rel (%p240) target = $region32
      $region31: #{tpu_custom_call.1} parent=11 // pred_region
        _
      $region32: #{tpu_custom_call.1} parent=11 // pred_fallthru
        _
      // Predicated region
      $region33: #{tpu_custom_call.1} parent=11 // pred_check
        %p243 = pneg %p166
      $region34: #{tpu_custom_call.1} parent=11 // pred_check_branch
        %245 = sbr.rel (%p243) target = $region36
      $region35: #{tpu_custom_call.1} parent=11 // pred_region
        _
      $region36: #{tpu_custom_call.1} parent=11 // pred_fallthru
        _
      // Predicated region
      $region37: #{tpu_custom_call.1} parent=11 // pred_check
        %p246 = pneg %p187
      $region38: #{tpu_custom_call.1} parent=11 // pred_check_branch
        %248 = sbr.rel (%p246) target = $region40
      $region39: #{tpu_custom_call.1} parent=11 // pred_region
        _
      $region40: #{tpu_custom_call.1} parent=11 // pred_fallthru
        _
    $region12: #{tpu_custom_call.1} parent=5 // pred_fallthru
      _
    %p249 = scmp.lt.s32.totalorder %s14, 2
    // Predicated region
    $region41: #{tpu_custom_call.1} parent=5 // pred_check
      %p250 = pneg %p249
    $region42: #{tpu_custom_call.1} parent=5 // pred_check_branch
      %252 = sbr.rel (%p250) target = $region44
    $region43: #{tpu_custom_call.1} parent=5 // pred_region
      // Predicated region
      $region45: #{tpu_custom_call.1} parent=43 // pred_check
        %p253 = pneg %p34
      $region46: #{tpu_custom_call.1} parent=43 // pred_check_branch
        %255 = sbr.rel (%p253) target = $region48
      $region47: #{tpu_custom_call.1} parent=43 // pred_region
        %s256 = smul.u32 4, %s14
        %p257 = scmp.lt.s32.totalorder %s256, 7
        %s258 = scalar_select %p257, %s256, 7
        %s259 = smul.addr %s258, 8
        %s260 = smul.addr %s259, 8
        %s261 = scalar_lea.vmem %s0, %s260
        %s262 = smul.u32 4, %s14
      $region48: #{tpu_custom_call.1} parent=43 // pred_fallthru
        _
    $region44: #{tpu_custom_call.1} parent=5 // pred_fallthru
      _
    %p263 = scmp.le.s32.totalorder 1, %s14
    %p264 = scmp.lt.s32.totalorder %s14, 3
    %p265 = pnand %p263, %p264
    %p266 = pneg %p265
    // Predicated region
    $region49: #{tpu_custom_call.1} parent=5 // pred_check
      _
    $region50: #{tpu_custom_call.1} parent=5 // pred_check_branch
      %268 = sbr.rel (%p265) target = $region52
    $region51: #{tpu_custom_call.1} parent=5 // pred_region
      %s269 = ssub.s32 %s14, 1
      %s270 = smul.u32 4, %s19
      %p271 = scmp.lt.s32.totalorder %s270, 7
      %s272 = scalar_select %p271, %s270, 7
      %s273 = smul.addr %s272, 8
      %s274 = smul.addr %s273, 8
      %s275 = scalar_lea.vmem %s0, %s274
      %p276 = pneg %p40
      %p277 = pneg %p37
      %p278 = pneg %p61
      %p279 = pneg %p58
      %p280 = pneg %p82
      %p281 = pneg %p79
      %p282 = pneg %p103
      %p283 = pneg %p100
      %p284 = pneg %p124
      %p285 = pneg %p121
      %p286 = pneg %p145
      %p287 = pneg %p142
      %p288 = pneg %p166
      %p289 = pneg %p163
      %p290 = pneg %p187
      %p291 = pneg %p184
      %p292 = pneg %p213
      %p293 = pneg %p210
      %s294 = smul.u32 4, %s19
      %p295 = scmp.lt.s32.totalorder %s294, 7
      %s296 = scalar_select %p295, %s294, 7
      %s297 = smul.addr %s296, 8
      %s298 = smul.addr %s297, 8
      %s299 = scalar_lea.vmem %s8, %s298
      %s300 = smul.u32 4, %s19
      %p301 = scmp.lt.s32.totalorder %s300, 7
      %s302 = scalar_select %p301, %s300, 7
      %s303 = smul.addr %s302, 8
      %s304 = smul.addr %s303, 8
      %s305 = scalar_lea.vmem %s0, %s304
      %s306 = smul.u32 4, %s19
      %s307 = smul.u32 4, %s19
      %p308 = scmp.lt.s32.totalorder %s307, 7
      %s309 = scalar_select %p308, %s307, 7
      %s310 = smul.addr %s309, 8
      %s311 = smul.addr %s310, 8
      %s312 = scalar_lea.vmem %s8, %s311
      %s313 = smul.u32 4, %s19
      %v314 = vld [vmem:[%s305] sm:$0xff]
      %v315 = vld [vmem:[%s305 + $0x8] sm:$0xff]
      %v316 = vld [vmem:[%s305 + $0x10] sm:$0xff]
      %v317 = vld [vmem:[%s305 + $0x18] sm:$0xff]
      %v318 = vld [vmem:[%s305 + $0x20] sm:$0xff]
      %v319 = vld [vmem:[%s305 + $0x28] sm:$0xff]
      %v320 = vld [vmem:[%s305 + $0x30] sm:$0xff]
      %v321 = vld [vmem:[%s305 + $0x38] sm:$0xff]
      %v322 = vld [vmem:[%s305 + $0x40] sm:$0xff]
      %v323 = vld [vmem:[%s305 + $0x48] sm:$0xff]
      %v324 = vld [vmem:[%s305 + $0x50] sm:$0xff]
      %v325 = vld [vmem:[%s305 + $0x58] sm:$0xff]
      %v326 = vld [vmem:[%s305 + $0x60] sm:$0xff]
      %v327 = vld [vmem:[%s305 + $0x68] sm:$0xff]
      %v328 = vld [vmem:[%s305 + $0x70] sm:$0xff]
      %v329 = vld [vmem:[%s305 + $0x78] sm:$0xff]
      %v330 = vld [vmem:[%s305 + $0x80] sm:$0xff]
      %v331 = vld [vmem:[%s305 + $0x88] sm:$0xff]
      %v332 = vld [vmem:[%s305 + $0x90] sm:$0xff]
      %v333 = vld [vmem:[%s305 + $0x98] sm:$0xff]
      %v334 = vld [vmem:[%s305 + $0xa0] sm:$0xff]
      %v335 = vld [vmem:[%s305 + $0xa8] sm:$0xff]
      %v336 = vld [vmem:[%s305 + $0xb0] sm:$0xff]
      %v337 = vld [vmem:[%s305 + $0xb8] sm:$0xff]
      %v338 = vld [vmem:[%s305 + $0xc0] sm:$0xff]
      %v339 = vld [vmem:[%s305 + $0xc8] sm:$0xff]
      %v340 = vld [vmem:[%s305 + $0xd0] sm:$0xff]
      %v341 = vld [vmem:[%s305 + $0xd8] sm:$0xff]
      %v342 = vld [vmem:[%s305 + $0xe0] sm:$0xff]
      %v343 = vld [vmem:[%s305 + $0xe8] sm:$0xff]
      %v344 = vld [vmem:[%s305 + $0xf0] sm:$0xff]
      %v345 = vld [vmem:[%s305 + $0xf8] sm:$0xff]
      %vm346 = vcmask 261120
      %v347 = vsel %vm346, %v314, 0.0
      %348 = vadd.xlane.f32.xlu0 %v347
      %v349 = vpop.xlane.xlu0 %348
      %v350 = vsel %vm346, %v315, 0.0
      %351 = vadd.xlane.f32.xlu0 %v350
      %v352 = vpop.xlane.xlu0 %351
      %v353 = vsel %vm346, %v316, 0.0
      %354 = vadd.xlane.f32.xlu0 %v353
      %v355 = vpop.xlane.xlu0 %354
      %v356 = vsel %vm346, %v317, 0.0
      %357 = vadd.xlane.f32.xlu0 %v356
      %v358 = vpop.xlane.xlu0 %357
      %v359 = vsel %vm346, %v318, 0.0
      %360 = vadd.xlane.f32.xlu0 %v359
      %v361 = vpop.xlane.xlu0 %360
      %v362 = vsel %vm346, %v319, 0.0
      %363 = vadd.xlane.f32.xlu0 %v362
      %v364 = vpop.xlane.xlu0 %363
      %v365 = vsel %vm346, %v320, 0.0
      %366 = vadd.xlane.f32.xlu0 %v365
      %v367 = vpop.xlane.xlu0 %366
      %v368 = vsel %vm346, %v321, 0.0
      %369 = vadd.xlane.f32.xlu0 %v368
      %v370 = vpop.xlane.xlu0 %369
      %v371 = vsel %vm346, %v322, 0.0
      %372 = vadd.xlane.f32.xlu0 %v371
      %v373 = vpop.xlane.xlu0 %372
      %v374 = vsel %vm346, %v323, 0.0
      %375 = vadd.xlane.f32.xlu0 %v374
      %v376 = vpop.xlane.xlu0 %375
      %v377 = vsel %vm346, %v324, 0.0
      %378 = vadd.xlane.f32.xlu0 %v377
      %v379 = vpop.xlane.xlu0 %378
      %v380 = vsel %vm346, %v325, 0.0
      %381 = vadd.xlane.f32.xlu0 %v380
      %v382 = vpop.xlane.xlu0 %381
      %v383 = vsel %vm346, %v326, 0.0
      %384 = vadd.xlane.f32.xlu0 %v383
      %v385 = vpop.xlane.xlu0 %384
      %v386 = vsel %vm346, %v327, 0.0
      %387 = vadd.xlane.f32.xlu0 %v386
      %v388 = vpop.xlane.xlu0 %387
      %v389 = vsel %vm346, %v328, 0.0
      %390 = vadd.xlane.f32.xlu0 %v389
      %v391 = vpop.xlane.xlu0 %390
      %v392 = vsel %vm346, %v329, 0.0
      %393 = vadd.xlane.f32.xlu0 %v392
      %v394 = vpop.xlane.xlu0 %393
      %v395 = vsel %vm346, %v330, 0.0
      %396 = vadd.xlane.f32.xlu0 %v395
      %v397 = vpop.xlane.xlu0 %396
      %v398 = vsel %vm346, %v331, 0.0
      %399 = vadd.xlane.f32.xlu0 %v398
      %v400 = vpop.xlane.xlu0 %399
      %v401 = vsel %vm346, %v332, 0.0
      %402 = vadd.xlane.f32.xlu0 %v401
      %v403 = vpop.xlane.xlu0 %402
      %v404 = vsel %vm346, %v333, 0.0
      %405 = vadd.xlane.f32.xlu0 %v404
      %v406 = vpop.xlane.xlu0 %405
      %v407 = vsel %vm346, %v334, 0.0
      %408 = vadd.xlane.f32.xlu0 %v407
      %v409 = vpop.xlane.xlu0 %408
      %v410 = vsel %vm346, %v335, 0.0
      %411 = vadd.xlane.f32.xlu0 %v410
      %v412 = vpop.xlane.xlu0 %411
      %v413 = vsel %vm346, %v336, 0.0
      %414 = vadd.xlane.f32.xlu0 %v413
      %v415 = vpop.xlane.xlu0 %414
      %v416 = vsel %vm346, %v337, 0.0
      %417 = vadd.xlane.f32.xlu0 %v416
      %v418 = vpop.xlane.xlu0 %417
      %v419 = vsel %vm346, %v338, 0.0
      %420 = vadd.xlane.f32.xlu0 %v419
      %v421 = vpop.xlane.xlu0 %420
      %v422 = vsel %vm346, %v339, 0.0
      %423 = vadd.xlane.f32.xlu0 %v422
      %v424 = vpop.xlane.xlu0 %423
      %v425 = vsel %vm346, %v340, 0.0
      %426 = vadd.xlane.f32.xlu0 %v425
      %v427 = vpop.xlane.xlu0 %426
      %v428 = vsel %vm346, %v341, 0.0
      %429 = vadd.xlane.f32.xlu0 %v428
      %v430 = vpop.xlane.xlu0 %429
      %v431 = vsel %vm346, %v342, 0.0
      %432 = vadd.xlane.f32.xlu0 %v431
      %v433 = vpop.xlane.xlu0 %432
      %v434 = vsel %vm346, %v343, 0.0
      %435 = vadd.xlane.f32.xlu0 %v434
      %v436 = vpop.xlane.xlu0 %435
      %v437 = vsel %vm346, %v344, 0.0
      %438 = vadd.xlane.f32.xlu0 %v437
      %v439 = vpop.xlane.xlu0 %438
      %v440 = vsel %vm346, %v345, 0.0
      %441 = vadd.xlane.f32.xlu0 %v440
      %v442 = vpop.xlane.xlu0 %441
      %v443 = vrcp.pop 32.0
      %v444 = vmul.f32 %v349, %v443
      %v445 = vmul.f32 %v352, %v443
      %v446 = vmul.f32 %v355, %v443
      %v447 = vmul.f32 %v358, %v443
      %v448 = vmul.f32 %v361, %v443
      %v449 = vmul.f32 %v364, %v443
      %v450 = vmul.f32 %v367, %v443
      %v451 = vmul.f32 %v370, %v443
      %v452 = vmul.f32 %v373, %v443
      %v453 = vmul.f32 %v376, %v443
      %v454 = vmul.f32 %v379, %v443
      %v455 = vmul.f32 %v382, %v443
      %v456 = vmul.f32 %v385, %v443
      %v457 = vmul.f32 %v388, %v443
      %v458 = vmul.f32 %v391, %v443
      %v459 = vmul.f32 %v394, %v443
      %v460 = vmul.f32 %v397, %v443
      %v461 = vmul.f32 %v400, %v443
      %v462 = vmul.f32 %v403, %v443
      %v463 = vmul.f32 %v406, %v443
      %v464 = vmul.f32 %v409, %v443
      %v465 = vmul.f32 %v412, %v443
      %v466 = vmul.f32 %v415, %v443
      %v467 = vmul.f32 %v418, %v443
      %v468 = vmul.f32 %v421, %v443
      %v469 = vmul.f32 %v424, %v443
      %v470 = vmul.f32 %v427, %v443
      %v471 = vmul.f32 %v430, %v443
      %v472 = vmul.f32 %v433, %v443
      %v473 = vmul.f32 %v436, %v443
      %v474 = vmul.f32 %v439, %v443
      %v475 = vmul.f32 %v442, %v443
      %v476 = vsub.f32 %v314, %v444
      %v477 = vsub.f32 %v315, %v445
      %v478 = vsub.f32 %v316, %v446
      %v479 = vsub.f32 %v317, %v447
      %v480 = vsub.f32 %v318, %v448
      %v481 = vsub.f32 %v319, %v449
      %v482 = vsub.f32 %v320, %v450
      %v483 = vsub.f32 %v321, %v451
      %v484 = vsub.f32 %v322, %v452
      %v485 = vsub.f32 %v323, %v453
      %v486 = vsub.f32 %v324, %v454
      %v487 = vsub.f32 %v325, %v455
      %v488 = vsub.f32 %v326, %v456
      %v489 = vsub.f32 %v327, %v457
      %v490 = vsub.f32 %v328, %v458
      %v491 = vsub.f32 %v329, %v459
      %v492 = vsub.f32 %v330, %v460
      %v493 = vsub.f32 %v331, %v461
      %v494 = vsub.f32 %v332, %v462
      %v495 = vsub.f32 %v333, %v463
      %v496 = vsub.f32 %v334, %v464
      %v497 = vsub.f32 %v335, %v465
      %v498 = vsub.f32 %v336, %v466
      %v499 = vsub.f32 %v337, %v467
      %v500 = vsub.f32 %v338, %v468
      %v501 = vsub.f32 %v339, %v469
      %v502 = vsub.f32 %v340, %v470
      %v503 = vsub.f32 %v341, %v471
      %v504 = vsub.f32 %v342, %v472
      %v505 = vsub.f32 %v343, %v473
      %v506 = vsub.f32 %v344, %v474
      %v507 = vsub.f32 %v345, %v475
      %v508 = vmul.f32 %v476, %v476
      %v509 = vmul.f32 %v477, %v477
      %v510 = vmul.f32 %v478, %v478
      %v511 = vmul.f32 %v479, %v479
      %v512 = vmul.f32 %v480, %v480
      %v513 = vmul.f32 %v481, %v481
      %v514 = vmul.f32 %v482, %v482
      %v515 = vmul.f32 %v483, %v483
      %v516 = vmul.f32 %v484, %v484
      %v517 = vmul.f32 %v485, %v485
      %v518 = vmul.f32 %v486, %v486
      %v519 = vmul.f32 %v487, %v487
      %v520 = vmul.f32 %v488, %v488
      %v521 = vmul.f32 %v489, %v489
      %v522 = vmul.f32 %v490, %v490
      %v523 = vmul.f32 %v491, %v491
      %v524 = vmul.f32 %v492, %v492
      %v525 = vmul.f32 %v493, %v493
      %v526 = vmul.f32 %v494, %v494
      %v527 = vmul.f32 %v495, %v495
      %v528 = vmul.f32 %v496, %v496
      %v529 = vmul.f32 %v497, %v497
      %v530 = vmul.f32 %v498, %v498
      %v531 = vmul.f32 %v499, %v499
      %v532 = vmul.f32 %v500, %v500
      %v533 = vmul.f32 %v501, %v501
      %v534 = vmul.f32 %v502, %v502
      %v535 = vmul.f32 %v503, %v503
      %v536 = vmul.f32 %v504, %v504
      %v537 = vmul.f32 %v505, %v505
      %v538 = vmul.f32 %v506, %v506
      %v539 = vmul.f32 %v507, %v507
      %v540 = vsel %vm346, %v508, 0.0
      %541 = vadd.xlane.f32.xlu0 %v540
      %v542 = vpop.xlane.xlu0 %541
      %v543 = vsel %vm346, %v509, 0.0
      %544 = vadd.xlane.f32.xlu0 %v543
      %v545 = vpop.xlane.xlu0 %544
      %v546 = vsel %vm346, %v510, 0.0
      %547 = vadd.xlane.f32.xlu0 %v546
      %v548 = vpop.xlane.xlu0 %547
      %v549 = vsel %vm346, %v511, 0.0
      %550 = vadd.xlane.f32.xlu0 %v549
      %v551 = vpop.xlane.xlu0 %550
      %v552 = vsel %vm346, %v512, 0.0
      %553 = vadd.xlane.f32.xlu0 %v552
      %v554 = vpop.xlane.xlu0 %553
      %v555 = vsel %vm346, %v513, 0.0
      %556 = vadd.xlane.f32.xlu0 %v555
      %v557 = vpop.xlane.xlu0 %556
      %v558 = vsel %vm346, %v514, 0.0
      %559 = vadd.xlane.f32.xlu0 %v558
      %v560 = vpop.xlane.xlu0 %559
      %v561 = vsel %vm346, %v515, 0.0
      %562 = vadd.xlane.f32.xlu0 %v561
      %v563 = vpop.xlane.xlu0 %562
      %v564 = vsel %vm346, %v516, 0.0
      %565 = vadd.xlane.f32.xlu0 %v564
      %v566 = vpop.xlane.xlu0 %565
      %v567 = vsel %vm346, %v517, 0.0
      %568 = vadd.xlane.f32.xlu0 %v567
      %v569 = vpop.xlane.xlu0 %568
      %v570 = vsel %vm346, %v518, 0.0
      %571 = vadd.xlane.f32.xlu0 %v570
      %v572 = vpop.xlane.xlu0 %571
      %v573 = vsel %vm346, %v519, 0.0
      %574 = vadd.xlane.f32.xlu0 %v573
      %v575 = vpop.xlane.xlu0 %574
      %v576 = vsel %vm346, %v520, 0.0
      %577 = vadd.xlane.f32.xlu0 %v576
      %v578 = vpop.xlane.xlu0 %577
      %v579 = vsel %vm346, %v521, 0.0
      %580 = vadd.xlane.f32.xlu0 %v579
      %v581 = vpop.xlane.xlu0 %580
      %v582 = vsel %vm346, %v522, 0.0
      %583 = vadd.xlane.f32.xlu0 %v582
      %v584 = vpop.xlane.xlu0 %583
      %v585 = vsel %vm346, %v523, 0.0
      %586 = vadd.xlane.f32.xlu0 %v585
      %v587 = vpop.xlane.xlu0 %586
      %v588 = vsel %vm346, %v524, 0.0
      %589 = vadd.xlane.f32.xlu0 %v588
      %v590 = vpop.xlane.xlu0 %589
      %v591 = vsel %vm346, %v525, 0.0
      %592 = vadd.xlane.f32.xlu0 %v591
      %v593 = vpop.xlane.xlu0 %592
      %v594 = vsel %vm346, %v526, 0.0
      %595 = vadd.xlane.f32.xlu0 %v594
      %v596 = vpop.xlane.xlu0 %595
      %v597 = vsel %vm346, %v527, 0.0
      %598 = vadd.xlane.f32.xlu0 %v597
      %v599 = vpop.xlane.xlu0 %598
      %v600 = vsel %vm346, %v528, 0.0
      %601 = vadd.xlane.f32.xlu0 %v600
      %v602 = vpop.xlane.xlu0 %601
      %v603 = vsel %vm346, %v529, 0.0
      %604 = vadd.xlane.f32.xlu0 %v603
      %v605 = vpop.xlane.xlu0 %604
      %v606 = vsel %vm346, %v530, 0.0
      %607 = vadd.xlane.f32.xlu0 %v606
      %v608 = vpop.xlane.xlu0 %607
      %v609 = vsel %vm346, %v531, 0.0
      %610 = vadd.xlane.f32.xlu0 %v609
      %v611 = vpop.xlane.xlu0 %610
      %v612 = vsel %vm346, %v532, 0.0
      %613 = vadd.xlane.f32.xlu0 %v612
      %v614 = vpop.xlane.xlu0 %613
      %v615 = vsel %vm346, %v533, 0.0
      %616 = vadd.xlane.f32.xlu0 %v615
      %v617 = vpop.xlane.xlu0 %616
      %v618 = vsel %vm346, %v534, 0.0
      %619 = vadd.xlane.f32.xlu0 %v618
      %v620 = vpop.xlane.xlu0 %619
      %v621 = vsel %vm346, %v535, 0.0
      %622 = vadd.xlane.f32.xlu0 %v621
      %v623 = vpop.xlane.xlu0 %622
      %v624 = vsel %vm346, %v536, 0.0
      %625 = vadd.xlane.f32.xlu0 %v624
      %v626 = vpop.xlane.xlu0 %625
      %v627 = vsel %vm346, %v537, 0.0
      %628 = vadd.xlane.f32.xlu0 %v627
      %v629 = vpop.xlane.xlu0 %628
      %v630 = vsel %vm346, %v538, 0.0
      %631 = vadd.xlane.f32.xlu0 %v630
      %v632 = vpop.xlane.xlu0 %631
      %v633 = vsel %vm346, %v539, 0.0
      %634 = vadd.xlane.f32.xlu0 %v633
      %v635 = vpop.xlane.xlu0 %634
      %v636 = vmul.f32 %v542, %v443
      %v637 = vmul.f32 %v545, %v443
      %v638 = vmul.f32 %v548, %v443
      %v639 = vmul.f32 %v551, %v443
      %v640 = vmul.f32 %v554, %v443
      %v641 = vmul.f32 %v557, %v443
      %v642 = vmul.f32 %v560, %v443
      %v643 = vmul.f32 %v563, %v443
      %v644 = vmul.f32 %v566, %v443
      %v645 = vmul.f32 %v569, %v443
      %v646 = vmul.f32 %v572, %v443
      %v647 = vmul.f32 %v575, %v443
      %v648 = vmul.f32 %v578, %v443
      %v649 = vmul.f32 %v581, %v443
      %v650 = vmul.f32 %v584, %v443
      %v651 = vmul.f32 %v587, %v443
      %v652 = vmul.f32 %v590, %v443
      %v653 = vmul.f32 %v593, %v443
      %v654 = vmul.f32 %v596, %v443
      %v655 = vmul.f32 %v599, %v443
      %v656 = vmul.f32 %v602, %v443
      %v657 = vmul.f32 %v605, %v443
      %v658 = vmul.f32 %v608, %v443
      %v659 = vmul.f32 %v611, %v443
      %v660 = vmul.f32 %v614, %v443
      %v661 = vmul.f32 %v617, %v443
      %v662 = vmul.f32 %v620, %v443
      %v663 = vmul.f32 %v623, %v443
      %v664 = vmul.f32 %v626, %v443
      %v665 = vmul.f32 %v629, %v443
      %v666 = vmul.f32 %v632, %v443
      %v667 = vmul.f32 %v635, %v443
      %v668 = vadd.f32 %v636, 1e-05
      %v669 = vadd.f32 %v637, 1e-05
      %v670 = vadd.f32 %v638, 1e-05
      %v671 = vadd.f32 %v639, 1e-05
      %v672 = vadd.f32 %v640, 1e-05
      %v673 = vadd.f32 %v641, 1e-05
      %v674 = vadd.f32 %v642, 1e-05
      %v675 = vadd.f32 %v643, 1e-05
      %v676 = vadd.f32 %v644, 1e-05
      %v677 = vadd.f32 %v645, 1e-05
      %v678 = vadd.f32 %v646, 1e-05
      %v679 = vadd.f32 %v647, 1e-05
      %v680 = vadd.f32 %v648, 1e-05
      %v681 = vadd.f32 %v649, 1e-05
      %v682 = vadd.f32 %v650, 1e-05
      %v683 = vadd.f32 %v651, 1e-05
      %v684 = vadd.f32 %v652, 1e-05
      %v685 = vadd.f32 %v653, 1e-05
      %v686 = vadd.f32 %v654, 1e-05
      %v687 = vadd.f32 %v655, 1e-05
      %v688 = vadd.f32 %v656, 1e-05
      %v689 = vadd.f32 %v657, 1e-05
      %v690 = vadd.f32 %v658, 1e-05
      %v691 = vadd.f32 %v659, 1e-05
      %v692 = vadd.f32 %v660, 1e-05
      %v693 = vadd.f32 %v661, 1e-05
      %v694 = vadd.f32 %v662, 1e-05
      %v695 = vadd.f32 %v663, 1e-05
      %v696 = vadd.f32 %v664, 1e-05
      %v697 = vadd.f32 %v665, 1e-05
      %v698 = vadd.f32 %v666, 1e-05
      %v699 = vadd.f32 %v667, 1e-05
      %v700 = vrsqrt.pop %v668
      %v701 = vrsqrt.pop %v669
      %v702 = vrsqrt.pop %v670
      %v703 = vrsqrt.pop %v671
      %v704 = vrsqrt.pop %v672
      %v705 = vrsqrt.pop %v673
      %v706 = vrsqrt.pop %v674
      %v707 = vrsqrt.pop %v675
      %v708 = vrsqrt.pop %v676
      %v709 = vrsqrt.pop %v677
      %v710 = vrsqrt.pop %v678
      %v711 = vrsqrt.pop %v679
      %v712 = vrsqrt.pop %v680
      %v713 = vrsqrt.pop %v681
      %v714 = vrsqrt.pop %v682
      %v715 = vrsqrt.pop %v683
      %v716 = vrsqrt.pop %v684
      %v717 = vrsqrt.pop %v685
      %v718 = vrsqrt.pop %v686
      %v719 = vrsqrt.pop %v687
      %v720 = vrsqrt.pop %v688
      %v721 = vrsqrt.pop %v689
      %v722 = vrsqrt.pop %v690
      %v723 = vrsqrt.pop %v691
      %v724 = vrsqrt.pop %v692
      %v725 = vrsqrt.pop %v693
      %v726 = vrsqrt.pop %v694
      %v727 = vrsqrt.pop %v695
      %v728 = vrsqrt.pop %v696
      %v729 = vrsqrt.pop %v697
      %v730 = vrsqrt.pop %v698
      %v731 = vrsqrt.pop %v699
      %v732 = vmul.f32 %v476, %v700
      %v733 = vmul.f32 %v477, %v701
      %v734 = vmul.f32 %v478, %v702
      %v735 = vmul.f32 %v479, %v703
      %v736 = vmul.f32 %v480, %v704
      %v737 = vmul.f32 %v481, %v705
      %v738 = vmul.f32 %v482, %v706
      %v739 = vmul.f32 %v483, %v707
      %v740 = vmul.f32 %v484, %v708
      %v741 = vmul.f32 %v485, %v709
      %v742 = vmul.f32 %v486, %v710
      %v743 = vmul.f32 %v487, %v711
      %v744 = vmul.f32 %v488, %v712
      %v745 = vmul.f32 %v489, %v713
      %v746 = vmul.f32 %v490, %v714
      %v747 = vmul.f32 %v491, %v715
      %v748 = vmul.f32 %v492, %v716
      %v749 = vmul.f32 %v493, %v717
      %v750 = vmul.f32 %v494, %v718
      %v751 = vmul.f32 %v495, %v719
      %v752 = vmul.f32 %v496, %v720
      %v753 = vmul.f32 %v497, %v721
      %v754 = vmul.f32 %v498, %v722
      %v755 = vmul.f32 %v499, %v723
      %v756 = vmul.f32 %v500, %v724
      %v757 = vmul.f32 %v501, %v725
      %v758 = vmul.f32 %v502, %v726
      %v759 = vmul.f32 %v503, %v727
      %v760 = vmul.f32 %v504, %v728
      %v761 = vmul.f32 %v505, %v729
      %v762 = vmul.f32 %v506, %v730
      %v763 = vmul.f32 %v507, %v731
      %v764 = vld [vmem:[%s2] sm:$0x1]
      %v766 = vlaneseq
      %v767 = vshrl.u32 %v766, 7
      %v768 = vsub.s32 0, %v767
      %v769 = vrot.slane %v764, %v768
      %v771 = vmul.f32 %v732, %v769
      %v772 = vmul.f32 %v733, %v769
      %v773 = vmul.f32 %v734, %v769
      %v774 = vmul.f32 %v735, %v769
      %v775 = vmul.f32 %v736, %v769
      %v776 = vmul.f32 %v737, %v769
      %v777 = vmul.f32 %v738, %v769
      %v778 = vmul.f32 %v739, %v769
      %v779 = vmul.f32 %v740, %v769
      %v780 = vmul.f32 %v741, %v769
      %v781 = vmul.f32 %v742, %v769
      %v782 = vmul.f32 %v743, %v769
      %v783 = vmul.f32 %v744, %v769
      %v784 = vmul.f32 %v745, %v769
      %v785 = vmul.f32 %v746, %v769
      %v786 = vmul.f32 %v747, %v769
      %v787 = vmul.f32 %v748, %v769
      %v788 = vmul.f32 %v749, %v769
      %v789 = vmul.f32 %v750, %v769
      %v790 = vmul.f32 %v751, %v769
      %v791 = vmul.f32 %v752, %v769
      %v792 = vmul.f32 %v753, %v769
      %v793 = vmul.f32 %v754, %v769
      %v794 = vmul.f32 %v755, %v769
      %v795 = vmul.f32 %v756, %v769
      %v796 = vmul.f32 %v757, %v769
      %v797 = vmul.f32 %v758, %v769
      %v798 = vmul.f32 %v759, %v769
      %v799 = vmul.f32 %v760, %v769
      %v800 = vmul.f32 %v761, %v769
      %v801 = vmul.f32 %v762, %v769
      %v802 = vmul.f32 %v763, %v769
      %v803 = vld [vmem:[%s3] sm:$0x1]
      %v805 = vlaneseq
      %v806 = vshrl.u32 %v805, 7
      %v807 = vsub.s32 0, %v806
      %v808 = vrot.slane %v803, %v807
      %v810 = vadd.f32 %v771, %v808
      %v811 = vadd.f32 %v772, %v808
      %v812 = vadd.f32 %v773, %v808
      %v813 = vadd.f32 %v774, %v808
      %v814 = vadd.f32 %v775, %v808
      %v815 = vadd.f32 %v776, %v808
      %v816 = vadd.f32 %v777, %v808
      %v817 = vadd.f32 %v778, %v808
      %v818 = vadd.f32 %v779, %v808
      %v819 = vadd.f32 %v780, %v808
      %v820 = vadd.f32 %v781, %v808
      %v821 = vadd.f32 %v782, %v808
      %v822 = vadd.f32 %v783, %v808
      %v823 = vadd.f32 %v784, %v808
      %v824 = vadd.f32 %v785, %v808
      %v825 = vadd.f32 %v786, %v808
      %v826 = vadd.f32 %v787, %v808
      %v827 = vadd.f32 %v788, %v808
      %v828 = vadd.f32 %v789, %v808
      %v829 = vadd.f32 %v790, %v808
      %v830 = vadd.f32 %v791, %v808
      %v831 = vadd.f32 %v792, %v808
      %v832 = vadd.f32 %v793, %v808
      %v833 = vadd.f32 %v794, %v808
      %v834 = vadd.f32 %v795, %v808
      %v835 = vadd.f32 %v796, %v808
      %v836 = vadd.f32 %v797, %v808
      %v837 = vadd.f32 %v798, %v808
      %v838 = vadd.f32 %v799, %v808
      %v839 = vadd.f32 %v800, %v808
      %v840 = vadd.f32 %v801, %v808
      %v841 = vadd.f32 %v802, %v808
      %v842 = vld [vmem:[%s4] sm:$0xff]
      %v843 = vld [vmem:[%s4 + $0x8] sm:$0xff]
      %v844 = vld [vmem:[%s4 + $0x10] sm:$0xff]
      %v845 = vld [vmem:[%s4 + $0x18] sm:$0xff]
      %v846 = vld [vmem:[%s5] sm:$0x1]
      %v848 = vlaneseq
      %v849 = vshrl.u32 %v848, 7
      %v850 = vsub.s32 0, %v849
      %v851 = vrot.slane %v846, %v850
      %v854 = vsel %vm346, %v810, 0
      %v857 = vsel %vm346, %v811, 0
      %v860 = vsel %vm346, %v812, 0
      %v863 = vsel %vm346, %v813, 0
      %v866 = vsel %vm346, %v814, 0
      %v869 = vsel %vm346, %v815, 0
      %v872 = vsel %vm346, %v816, 0
      %v875 = vsel %vm346, %v817, 0
      %v878 = vsel %vm346, %v818, 0
      %v881 = vsel %vm346, %v819, 0
      %v884 = vsel %vm346, %v820, 0
      %v887 = vsel %vm346, %v821, 0
      %v890 = vsel %vm346, %v822, 0
      %v893 = vsel %vm346, %v823, 0
      %v896 = vsel %vm346, %v824, 0
      %v899 = vsel %vm346, %v825, 0
      %v902 = vsel %vm346, %v826, 0
      %v905 = vsel %vm346, %v827, 0
      %v908 = vsel %vm346, %v828, 0
      %v911 = vsel %vm346, %v829, 0
      %v914 = vsel %vm346, %v830, 0
      %v917 = vsel %vm346, %v831, 0
      %v920 = vsel %vm346, %v832, 0
      %v923 = vsel %vm346, %v833, 0
      %v926 = vsel %vm346, %v834, 0
      %v929 = vsel %vm346, %v835, 0
      %v932 = vsel %vm346, %v836, 0
      %v935 = vsel %vm346, %v837, 0
      %v938 = vsel %vm346, %v838, 0
      %v941 = vsel %vm346, %v839, 0
      %v944 = vsel %vm346, %v840, 0
      %v947 = vsel %vm346, %v841, 0
      %949 = vmatprep.subr.mxu0 0.0
      %950 = vmatpush1.msra.mxu0 0.0
      %951 = vmatprep.subr.mxu0 0.0
      %952 = vmatpush1.msra.mxu0 0.0
      %953 = vmatprep.subr.mxu0 0.0
      %954 = vmatpush1.msra.mxu0 0.0
      %955 = vmatprep.subr.mxu0 0.0
      %956 = vmatpush1.msra.mxu0 0.0
      %957 = vmatprep.subr.mxu0 0.0
      %958 = vmatpush1.msra.mxu0 0.0
      %959 = vmatprep.subr.mxu0 0.0
      %960 = vmatpush1.msra.mxu0 0.0
      %961 = vmatprep.subr.mxu0 0.0
      %962 = vmatpush1.msra.mxu0 0.0
      %963 = vmatprep.subr.mxu0 0.0
      %964 = vmatpush1.msra.mxu0 0.0
      %965 = vmatprep.subr.mxu0 0.0
      %966 = vmatpush1.msra.mxu0 0.0
      %967 = vmatprep.subr.mxu0 0.0
      %968 = vmatpush1.msra.mxu0 0.0
      %969 = vmatprep.subr.mxu0 0.0
      %970 = vmatpush1.msra.mxu0 0.0
      %971 = vmatprep.subr.mxu0 0.0
      %972 = vmatpush1.msra.mxu0 0.0
      %973 = vmatprep.subr.mxu0 0.0
      %974 = vmatpush1.msra.mxu0 %v845
      %975 = vmatprep.subr.mxu0 0.0
      %976 = vmatpush1.msra.mxu0 %v844
      %977 = vmatprep.subr.mxu0 0.0
      %978 = vmatpush1.msra.mxu0 %v843
      %979 = vmatprep.subr.mxu0 0.0
      %980 = vmatpush1.msra.mxu0 %v842
      %981 = vmatprep.subr.mxu0 0.0
      %982 = vmatpush2.msra.mxu0 0.0
      %983 = vmatprep.subr.mxu0 0.0
      %984 = vmatpush2.msra.mxu0 0.0
      %985 = vmatprep.subr.mxu0 0.0
      %986 = vmatpush2.msra.mxu0 0.0
      %987 = vmatprep.subr.mxu0 0.0
      %988 = vmatpush2.msra.mxu0 0.0
      %989 = vmatprep.subr.mxu0 0.0
      %990 = vmatpush2.msra.mxu0 0.0
      %991 = vmatprep.subr.mxu0 0.0
      %992 = vmatpush2.msra.mxu0 0.0
      %993 = vmatprep.subr.mxu0 0.0
      %994 = vmatpush2.msra.mxu0 0.0
      %995 = vmatprep.subr.mxu0 0.0
      %996 = vmatpush2.msra.mxu0 0.0
      %997 = vmatprep.subr.mxu0 0.0
      %998 = vmatpush2.msra.mxu0 0.0
      %999 = vmatprep.subr.mxu0 0.0
      %1000 = vmatpush2.msra.mxu0 0.0
      %1001 = vmatprep.subr.mxu0 0.0
      %1002 = vmatpush2.msra.mxu0 0.0
      %1003 = vmatprep.subr.mxu0 0.0
      %1004 = vmatpush2.msra.mxu0 0.0
      %1005 = vmatprep.subr.mxu0 0.0
      %1006 = vmatpush2.msra.mxu0 0.0
      %1007 = vmatprep.subr.mxu0 0.0
      %1008 = vmatpush2.msra.mxu0 0.0
      %1009 = vmatprep.subr.mxu0 0.0
      %1010 = vmatpush2.msra.mxu0 0.0
      %1011 = vmatprep.subr.mxu0 0.0
      %1012 = vmatpush2.msra.mxu0 0.0
      %1013 = vmatprep.mubr.f32.mxu0 0.0
      %1014 = vmatmul.mubr.f32.gmra.mxu0 %v854
      %v1015 = vpop.f32.mrf.mxu0
      %v1016 = vadd.f32 %v851, %v1015
      %v1017 = vpop.f32.mrf.mxu0
      %1018 = vmatprep.mubr.f32.mxu0 0.0
      %1019 = vmatmul.mubr.f32.gmra.mxu0 %v857
      %v1020 = vpop.f32.mrf.mxu0
      %v1021 = vadd.f32 %v851, %v1020
      %v1022 = vpop.f32.mrf.mxu0
      %1023 = vmatprep.mubr.f32.mxu0 0.0
      %1024 = vmatmul.mubr.f32.gmra.mxu0 %v860
      %v1025 = vpop.f32.mrf.mxu0
      %v1026 = vadd.f32 %v851, %v1025
      %v1027 = vpop.f32.mrf.mxu0
      %1028 = vmatprep.mubr.f32.mxu0 0.0
      %1029 = vmatmul.mubr.f32.gmra.mxu0 %v863
      %v1030 = vpop.f32.mrf.mxu0
      %v1031 = vadd.f32 %v851, %v1030
      %v1032 = vpop.f32.mrf.mxu0
      %1033 = vmatprep.mubr.f32.mxu0 0.0
      %1034 = vmatmul.mubr.f32.gmra.mxu0 %v866
      %v1035 = vpop.f32.mrf.mxu0
      %v1036 = vadd.f32 %v851, %v1035
      %v1037 = vpop.f32.mrf.mxu0
      %1038 = vmatprep.mubr.f32.mxu0 0.0
      %1039 = vmatmul.mubr.f32.gmra.mxu0 %v869
      %v1040 = vpop.f32.mrf.mxu0
      %v1041 = vadd.f32 %v851, %v1040
      %v1042 = vpop.f32.mrf.mxu0
      %1043 = vmatprep.mubr.f32.mxu0 0.0
      %1044 = vmatmul.mubr.f32.gmra.mxu0 %v872
      %v1045 = vpop.f32.mrf.mxu0
      %v1046 = vadd.f32 %v851, %v1045
      %v1047 = vpop.f32.mrf.mxu0
      %1048 = vmatprep.mubr.f32.mxu0 0.0
      %1049 = vmatmul.mubr.f32.gmra.mxu0 %v875
      %v1050 = vpop.f32.mrf.mxu0
      %v1051 = vadd.f32 %v851, %v1050
      %v1052 = vpop.f32.mrf.mxu0
      %1053 = vmatprep.mubr.f32.mxu0 0.0
      %1054 = vmatmul.mubr.f32.gmra.mxu0 %v878
      %v1055 = vpop.f32.mrf.mxu0
      %v1056 = vadd.f32 %v851, %v1055
      %v1057 = vpop.f32.mrf.mxu0
      %1058 = vmatprep.mubr.f32.mxu0 0.0
      %1059 = vmatmul.mubr.f32.gmra.mxu0 %v881
      %v1060 = vpop.f32.mrf.mxu0
      %v1061 = vadd.f32 %v851, %v1060
      %v1062 = vpop.f32.mrf.mxu0
      %1063 = vmatprep.mubr.f32.mxu0 0.0
      %1064 = vmatmul.mubr.f32.gmra.mxu0 %v884
      %v1065 = vpop.f32.mrf.mxu0
      %v1066 = vadd.f32 %v851, %v1065
      %v1067 = vpop.f32.mrf.mxu0
      %1068 = vmatprep.mubr.f32.mxu0 0.0
      %1069 = vmatmul.mubr.f32.gmra.mxu0 %v887
      %v1070 = vpop.f32.mrf.mxu0
      %v1071 = vadd.f32 %v851, %v1070
      %v1072 = vpop.f32.mrf.mxu0
      %1073 = vmatprep.mubr.f32.mxu0 0.0
      %1074 = vmatmul.mubr.f32.gmra.mxu0 %v890
      %v1075 = vpop.f32.mrf.mxu0
      %v1076 = vadd.f32 %v851, %v1075
      %v1077 = vpop.f32.mrf.mxu0
      %1078 = vmatprep.mubr.f32.mxu0 0.0
      %1079 = vmatmul.mubr.f32.gmra.mxu0 %v893
      %v1080 = vpop.f32.mrf.mxu0
      %v1081 = vadd.f32 %v851, %v1080
      %v1082 = vpop.f32.mrf.mxu0
      %1083 = vmatprep.mubr.f32.mxu0 0.0
      %1084 = vmatmul.mubr.f32.gmra.mxu0 %v896
      %v1085 = vpop.f32.mrf.mxu0
      %v1086 = vadd.f32 %v851, %v1085
      %v1087 = vpop.f32.mrf.mxu0
      %1088 = vmatprep.mubr.f32.mxu0 0.0
      %1089 = vmatmul.mubr.f32.gmra.mxu0 %v899
      %v1090 = vpop.f32.mrf.mxu0
      %v1091 = vadd.f32 %v851, %v1090
      %v1092 = vpop.f32.mrf.mxu0
      %1093 = vmatprep.mubr.f32.mxu0 0.0
      %1094 = vmatmul.mubr.f32.gmra.mxu0 %v902
      %v1095 = vpop.f32.mrf.mxu0
      %v1096 = vadd.f32 %v851, %v1095
      %v1097 = vpop.f32.mrf.mxu0
      %1098 = vmatprep.mubr.f32.mxu0 0.0
      %1099 = vmatmul.mubr.f32.gmra.mxu0 %v905
      %v1100 = vpop.f32.mrf.mxu0
      %v1101 = vadd.f32 %v851, %v1100
      %v1102 = vpop.f32.mrf.mxu0
      %1103 = vmatprep.mubr.f32.mxu0 0.0
      %1104 = vmatmul.mubr.f32.gmra.mxu0 %v908
      %v1105 = vpop.f32.mrf.mxu0
      %v1106 = vadd.f32 %v851, %v1105
      %v1107 = vpop.f32.mrf.mxu0
      %1108 = vmatprep.mubr.f32.mxu0 0.0
      %1109 = vmatmul.mubr.f32.gmra.mxu0 %v911
      %v1110 = vpop.f32.mrf.mxu0
      %v1111 = vadd.f32 %v851, %v1110
      %v1112 = vpop.f32.mrf.mxu0
      %1113 = vmatprep.mubr.f32.mxu0 0.0
      %1114 = vmatmul.mubr.f32.gmra.mxu0 %v914
      %v1115 = vpop.f32.mrf.mxu0
      %v1116 = vadd.f32 %v851, %v1115
      %v1117 = vpop.f32.mrf.mxu0
      %1118 = vmatprep.mubr.f32.mxu0 0.0
      %1119 = vmatmul.mubr.f32.gmra.mxu0 %v917
      %v1120 = vpop.f32.mrf.mxu0
      %v1121 = vadd.f32 %v851, %v1120
      %v1122 = vpop.f32.mrf.mxu0
      %1123 = vmatprep.mubr.f32.mxu0 0.0
      %1124 = vmatmul.mubr.f32.gmra.mxu0 %v920
      %v1125 = vpop.f32.mrf.mxu0
      %v1126 = vadd.f32 %v851, %v1125
      %v1127 = vpop.f32.mrf.mxu0
      %1128 = vmatprep.mubr.f32.mxu0 0.0
      %1129 = vmatmul.mubr.f32.gmra.mxu0 %v923
      %v1130 = vpop.f32.mrf.mxu0
      %v1131 = vadd.f32 %v851, %v1130
      %v1132 = vpop.f32.mrf.mxu0
      %1133 = vmatprep.mubr.f32.mxu0 0.0
      %1134 = vmatmul.mubr.f32.gmra.mxu0 %v926
      %v1135 = vpop.f32.mrf.mxu0
      %v1136 = vadd.f32 %v851, %v1135
      %v1137 = vpop.f32.mrf.mxu0
      %1138 = vmatprep.mubr.f32.mxu0 0.0
      %1139 = vmatmul.mubr.f32.gmra.mxu0 %v929
      %v1140 = vpop.f32.mrf.mxu0
      %v1141 = vadd.f32 %v851, %v1140
      %v1142 = vpop.f32.mrf.mxu0
      %1143 = vmatprep.mubr.f32.mxu0 0.0
      %1144 = vmatmul.mubr.f32.gmra.mxu0 %v932
      %v1145 = vpop.f32.mrf.mxu0
      %v1146 = vadd.f32 %v851, %v1145
      %v1147 = vpop.f32.mrf.mxu0
      %1148 = vmatprep.mubr.f32.mxu0 0.0
      %1149 = vmatmul.mubr.f32.gmra.mxu0 %v935
      %v1150 = vpop.f32.mrf.mxu0
      %v1151 = vadd.f32 %v851, %v1150
      %v1152 = vpop.f32.mrf.mxu0
      %1153 = vmatprep.mubr.f32.mxu0 0.0
      %1154 = vmatmul.mubr.f32.gmra.mxu0 %v938
      %v1155 = vpop.f32.mrf.mxu0
      %v1156 = vadd.f32 %v851, %v1155
      %v1157 = vpop.f32.mrf.mxu0
      %1158 = vmatprep.mubr.f32.mxu0 0.0
      %1159 = vmatmul.mubr.f32.gmra.mxu0 %v941
      %v1160 = vpop.f32.mrf.mxu0
      %v1161 = vadd.f32 %v851, %v1160
      %v1162 = vpop.f32.mrf.mxu0
      %1163 = vmatprep.mubr.f32.mxu0 0.0
      %1164 = vmatmul.mubr.f32.gmra.mxu0 %v944
      %v1165 = vpop.f32.mrf.mxu0
      %v1166 = vadd.f32 %v851, %v1165
      %v1167 = vpop.f32.mrf.mxu0
      %1168 = vmatprep.mubr.f32.mxu0 0.0
      %1169 = vmatmul.mubr.f32.gmra.mxu0 %v947
      %v1170 = vpop.f32.mrf.mxu0
      %v1171 = vadd.f32 %v851, %v1170
      %v1172 = vpop.f32.mrf.mxu0
      %1173 = vdwg.mxu0
      %v1174 = vmul.f32 %v1016, 0.35355338
      %v1175 = vmul.f32 %v1021, 0.35355338
      %v1176 = vmul.f32 %v1026, 0.35355338
      %v1177 = vmul.f32 %v1031, 0.35355338
      %v1178 = vmul.f32 %v1036, 0.35355338
      %v1179 = vmul.f32 %v1041, 0.35355338
      %v1180 = vmul.f32 %v1046, 0.35355338
      %v1181 = vmul.f32 %v1051, 0.35355338
      %v1182 = vmul.f32 %v1056, 0.35355338
      %v1183 = vmul.f32 %v1061, 0.35355338
      %v1184 = vmul.f32 %v1066, 0.35355338
      %v1185 = vmul.f32 %v1071, 0.35355338
      %v1186 = vmul.f32 %v1076, 0.35355338
      %v1187 = vmul.f32 %v1081, 0.35355338
      %v1188 = vmul.f32 %v1086, 0.35355338
      %v1189 = vmul.f32 %v1091, 0.35355338
      %v1190 = vmul.f32 %v1096, 0.35355338
      %v1191 = vmul.f32 %v1101, 0.35355338
      %v1192 = vmul.f32 %v1106, 0.35355338
      %v1193 = vmul.f32 %v1111, 0.35355338
      %v1194 = vmul.f32 %v1116, 0.35355338
      %v1195 = vmul.f32 %v1121, 0.35355338
      %v1196 = vmul.f32 %v1126, 0.35355338
      %v1197 = vmul.f32 %v1131, 0.35355338
      %v1198 = vmul.f32 %v1136, 0.35355338
      %v1199 = vmul.f32 %v1141, 0.35355338
      %v1200 = vmul.f32 %v1146, 0.35355338
      %v1201 = vmul.f32 %v1151, 0.35355338
      %v1202 = vmul.f32 %v1156, 0.35355338
      %v1203 = vmul.f32 %v1161, 0.35355338
      %v1204 = vmul.f32 %v1166, 0.35355338
      %v1205 = vmul.f32 %v1171, 0.35355338
      %v1206 = vld [vmem:[%s1] sm:$0xff]
      %v1207 = vld [vmem:[%s1 + $0x8] sm:$0xff]
      %v1208 = vld [vmem:[%s1 + $0x10] sm:$0xff]
      %v1209 = vld [vmem:[%s1 + $0x18] sm:$0xff]
      %v1210 = vld [vmem:[%s1 + $0x20] sm:$0xff]
      %v1211 = vld [vmem:[%s1 + $0x28] sm:$0xff]
      %v1212 = vld [vmem:[%s1 + $0x30] sm:$0xff]
      %v1213 = vld [vmem:[%s1 + $0x38] sm:$0xff]
      %v1214 = vld [vmem:[%s1 + $0x40] sm:$0xff]
      %v1215 = vld [vmem:[%s1 + $0x48] sm:$0xff]
      %v1216 = vld [vmem:[%s1 + $0x50] sm:$0xff]
      %v1217 = vld [vmem:[%s1 + $0x58] sm:$0xff]
      %v1218 = vld [vmem:[%s1 + $0x60] sm:$0xff]
      %v1219 = vld [vmem:[%s1 + $0x68] sm:$0xff]
      %v1220 = vld [vmem:[%s1 + $0x70] sm:$0xff]
      %v1221 = vld [vmem:[%s1 + $0x78] sm:$0xff]
      %v1222 = vld [vmem:[%s1 + $0x80] sm:$0xff]
      %v1223 = vld [vmem:[%s1 + $0x88] sm:$0xff]
      %v1224 = vld [vmem:[%s1 + $0x90] sm:$0xff]
      %v1225 = vld [vmem:[%s1 + $0x98] sm:$0xff]
      %v1226 = vld [vmem:[%s1 + $0xa0] sm:$0xff]
      %v1227 = vld [vmem:[%s1 + $0xa8] sm:$0xff]
      %v1228 = vld [vmem:[%s1 + $0xb0] sm:$0xff]
      %v1229 = vld [vmem:[%s1 + $0xb8] sm:$0xff]
      %v1230 = vld [vmem:[%s1 + $0xc0] sm:$0xff]
      %v1231 = vld [vmem:[%s1 + $0xc8] sm:$0xff]
      %v1232 = vld [vmem:[%s1 + $0xd0] sm:$0xff]
      %v1233 = vld [vmem:[%s1 + $0xd8] sm:$0xff]
      %v1234 = vld [vmem:[%s1 + $0xe0] sm:$0xff]
      %v1235 = vld [vmem:[%s1 + $0xe8] sm:$0xff]
      %v1236 = vld [vmem:[%s1 + $0xf0] sm:$0xff]
      %v1237 = vld [vmem:[%s1 + $0xf8] sm:$0xff]
      %v1238 = vlaneseq
      %v1239 = vand.u32 %v1238, 127
      %vm1240 = vcmp.ge.s32.totalorder %v1239, 0
      %vm1241 = vcmp.lt.s32.totalorder %v1239, 8
      %vm1242 = vmand %vm1240, %vm1241
      %v1243 = vsel %vm1242, 1, 0
      %vm1244 = vcmp.eq.s32.totalorder %v1243, 1
      %1277 = vrot.lane.b32.xlu0 %v1016, 96
      %v1278 = vpop.permute.xlu0 %1277
      %1279 = vrot.lane.b32.xlu0 %v1021, 96
      %v1280 = vpop.permute.xlu0 %1279
      %1281 = vrot.lane.b32.xlu0 %v1026, 96
      %v1282 = vpop.permute.xlu0 %1281
      %1283 = vrot.lane.b32.xlu0 %v1031, 96
      %v1284 = vpop.permute.xlu0 %1283
      %1285 = vrot.lane.b32.xlu0 %v1036, 96
      %v1286 = vpop.permute.xlu0 %1285
      %1287 = vrot.lane.b32.xlu0 %v1041, 96
      %v1288 = vpop.permute.xlu0 %1287
      %1289 = vrot.lane.b32.xlu0 %v1046, 96
      %v1290 = vpop.permute.xlu0 %1289
      %1291 = vrot.lane.b32.xlu0 %v1051, 96
      %v1292 = vpop.permute.xlu0 %1291
      %1293 = vrot.lane.b32.xlu0 %v1056, 96
      %v1294 = vpop.permute.xlu0 %1293
      %1295 = vrot.lane.b32.xlu0 %v1061, 96
      %v1296 = vpop.permute.xlu0 %1295
      %1297 = vrot.lane.b32.xlu0 %v1066, 96
      %v1298 = vpop.permute.xlu0 %1297
      %1299 = vrot.lane.b32.xlu0 %v1071, 96
      %v1300 = vpop.permute.xlu0 %1299
      %1301 = vrot.lane.b32.xlu0 %v1076, 96
      %v1302 = vpop.permute.xlu0 %1301
      %1303 = vrot.lane.b32.xlu0 %v1081, 96
      %v1304 = vpop.permute.xlu0 %1303
      %1305 = vrot.lane.b32.xlu0 %v1086, 96
      %v1306 = vpop.permute.xlu0 %1305
      %1307 = vrot.lane.b32.xlu0 %v1091, 96
      %v1308 = vpop.permute.xlu0 %1307
      %1309 = vrot.lane.b32.xlu0 %v1096, 96
      %v1310 = vpop.permute.xlu0 %1309
      %1311 = vrot.lane.b32.xlu0 %v1101, 96
      %v1312 = vpop.permute.xlu0 %1311
      %1313 = vrot.lane.b32.xlu0 %v1106, 96
      %v1314 = vpop.permute.xlu0 %1313
      %1315 = vrot.lane.b32.xlu0 %v1111, 96
      %v1316 = vpop.permute.xlu0 %1315
      %1317 = vrot.lane.b32.xlu0 %v1116, 96
      %v1318 = vpop.permute.xlu0 %1317
      %1319 = vrot.lane.b32.xlu0 %v1121, 96
      %v1320 = vpop.permute.xlu0 %1319
      %1321 = vrot.lane.b32.xlu0 %v1126, 96
      %v1322 = vpop.permute.xlu0 %1321
      %1323 = vrot.lane.b32.xlu0 %v1131, 96
      %v1324 = vpop.permute.xlu0 %1323
      %1325 = vrot.lane.b32.xlu0 %v1136, 96
      %v1326 = vpop.permute.xlu0 %1325
      %1327 = vrot.lane.b32.xlu0 %v1141, 96
      %v1328 = vpop.permute.xlu0 %1327
      %1329 = vrot.lane.b32.xlu0 %v1146, 96
      %v1330 = vpop.permute.xlu0 %1329
      %1331 = vrot.lane.b32.xlu0 %v1151, 96
      %v1332 = vpop.permute.xlu0 %1331
      %1333 = vrot.lane.b32.xlu0 %v1156, 96
      %v1334 = vpop.permute.xlu0 %1333
      %1335 = vrot.lane.b32.xlu0 %v1161, 96
      %v1336 = vpop.permute.xlu0 %1335
      %1337 = vrot.lane.b32.xlu0 %v1166, 96
      %v1338 = vpop.permute.xlu0 %1337
      %1339 = vrot.lane.b32.xlu0 %v1171, 96
      %v1340 = vpop.permute.xlu0 %1339
      %v1373 = vsel %vm1244, %v1278, 0.0
      %v1374 = vsel %vm1244, %v1280, 0.0
      %v1375 = vsel %vm1244, %v1282, 0.0
      %v1376 = vsel %vm1244, %v1284, 0.0
      %v1377 = vsel %vm1244, %v1286, 0.0
      %v1378 = vsel %vm1244, %v1288, 0.0
      %v1379 = vsel %vm1244, %v1290, 0.0
      %v1380 = vsel %vm1244, %v1292, 0.0
      %v1381 = vsel %vm1244, %v1294, 0.0
      %v1382 = vsel %vm1244, %v1296, 0.0
      %v1383 = vsel %vm1244, %v1298, 0.0
      %v1384 = vsel %vm1244, %v1300, 0.0
      %v1385 = vsel %vm1244, %v1302, 0.0
      %v1386 = vsel %vm1244, %v1304, 0.0
      %v1387 = vsel %vm1244, %v1306, 0.0
      %v1388 = vsel %vm1244, %v1308, 0.0
      %v1389 = vsel %vm1244, %v1310, 0.0
      %v1390 = vsel %vm1244, %v1312, 0.0
      %v1391 = vsel %vm1244, %v1314, 0.0
      %v1392 = vsel %vm1244, %v1316, 0.0
      %v1393 = vsel %vm1244, %v1318, 0.0
      %v1394 = vsel %vm1244, %v1320, 0.0
      %v1395 = vsel %vm1244, %v1322, 0.0
      %v1396 = vsel %vm1244, %v1324, 0.0
      %v1397 = vsel %vm1244, %v1326, 0.0
      %v1398 = vsel %vm1244, %v1328, 0.0
      %v1399 = vsel %vm1244, %v1330, 0.0
      %v1400 = vsel %vm1244, %v1332, 0.0
      %v1401 = vsel %vm1244, %v1334, 0.0
      %v1402 = vsel %vm1244, %v1336, 0.0
      %v1403 = vsel %vm1244, %v1338, 0.0
      %v1404 = vsel %vm1244, %v1340, 0.0
      %1405 = vrot.lane.b32.xlu0 %v1016, 64
      %v1406 = vpop.permute.xlu0 %1405
      %1407 = vrot.lane.b32.xlu0 %v1021, 64
      %v1408 = vpop.permute.xlu0 %1407
      %1409 = vrot.lane.b32.xlu0 %v1026, 64
      %v1410 = vpop.permute.xlu0 %1409
      %1411 = vrot.lane.b32.xlu0 %v1031, 64
      %v1412 = vpop.permute.xlu0 %1411
      %1413 = vrot.lane.b32.xlu0 %v1036, 64
      %v1414 = vpop.permute.xlu0 %1413
      %1415 = vrot.lane.b32.xlu0 %v1041, 64
      %v1416 = vpop.permute.xlu0 %1415
      %1417 = vrot.lane.b32.xlu0 %v1046, 64
      %v1418 = vpop.permute.xlu0 %1417
      %1419 = vrot.lane.b32.xlu0 %v1051, 64
      %v1420 = vpop.permute.xlu0 %1419
      %1421 = vrot.lane.b32.xlu0 %v1056, 64
      %v1422 = vpop.permute.xlu0 %1421
      %1423 = vrot.lane.b32.xlu0 %v1061, 64
      %v1424 = vpop.permute.xlu0 %1423
      %1425 = vrot.lane.b32.xlu0 %v1066, 64
      %v1426 = vpop.permute.xlu0 %1425
      %1427 = vrot.lane.b32.xlu0 %v1071, 64
      %v1428 = vpop.permute.xlu0 %1427
      %1429 = vrot.lane.b32.xlu0 %v1076, 64
      %v1430 = vpop.permute.xlu0 %1429
      %1431 = vrot.lane.b32.xlu0 %v1081, 64
      %v1432 = vpop.permute.xlu0 %1431
      %1433 = vrot.lane.b32.xlu0 %v1086, 64
      %v1434 = vpop.permute.xlu0 %1433
      %1435 = vrot.lane.b32.xlu0 %v1091, 64
      %v1436 = vpop.permute.xlu0 %1435
      %1437 = vrot.lane.b32.xlu0 %v1096, 64
      %v1438 = vpop.permute.xlu0 %1437
      %1439 = vrot.lane.b32.xlu0 %v1101, 64
      %v1440 = vpop.permute.xlu0 %1439
      %1441 = vrot.lane.b32.xlu0 %v1106, 64
      %v1442 = vpop.permute.xlu0 %1441
      %1443 = vrot.lane.b32.xlu0 %v1111, 64
      %v1444 = vpop.permute.xlu0 %1443
      %1445 = vrot.lane.b32.xlu0 %v1116, 64
      %v1446 = vpop.permute.xlu0 %1445
      %1447 = vrot.lane.b32.xlu0 %v1121, 64
      %v1448 = vpop.permute.xlu0 %1447
      %1449 = vrot.lane.b32.xlu0 %v1126, 64
      %v1450 = vpop.permute.xlu0 %1449
      %1451 = vrot.lane.b32.xlu0 %v1131, 64
      %v1452 = vpop.permute.xlu0 %1451
      %1453 = vrot.lane.b32.xlu0 %v1136, 64
      %v1454 = vpop.permute.xlu0 %1453
      %1455 = vrot.lane.b32.xlu0 %v1141, 64
      %v1456 = vpop.permute.xlu0 %1455
      %1457 = vrot.lane.b32.xlu0 %v1146, 64
      %v1458 = vpop.permute.xlu0 %1457
      %1459 = vrot.lane.b32.xlu0 %v1151, 64
      %v1460 = vpop.permute.xlu0 %1459
      %1461 = vrot.lane.b32.xlu0 %v1156, 64
      %v1462 = vpop.permute.xlu0 %1461
      %1463 = vrot.lane.b32.xlu0 %v1161, 64
      %v1464 = vpop.permute.xlu0 %1463
      %1465 = vrot.lane.b32.xlu0 %v1166, 64
      %v1466 = vpop.permute.xlu0 %1465
      %1467 = vrot.lane.b32.xlu0 %v1171, 64
      %v1468 = vpop.permute.xlu0 %1467
      %v1501 = vsel %vm1244, %v1406, 0.0
      %v1502 = vsel %vm1244, %v1408, 0.0
      %v1503 = vsel %vm1244, %v1410, 0.0
      %v1504 = vsel %vm1244, %v1412, 0.0
      %v1505 = vsel %vm1244, %v1414, 0.0
      %v1506 = vsel %vm1244, %v1416, 0.0
      %v1507 = vsel %vm1244, %v1418, 0.0
      %v1508 = vsel %vm1244, %v1420, 0.0
      %v1509 = vsel %vm1244, %v1422, 0.0
      %v1510 = vsel %vm1244, %v1424, 0.0
      %v1511 = vsel %vm1244, %v1426, 0.0
      %v1512 = vsel %vm1244, %v1428, 0.0
      %v1513 = vsel %vm1244, %v1430, 0.0
      %v1514 = vsel %vm1244, %v1432, 0.0
      %v1515 = vsel %vm1244, %v1434, 0.0
      %v1516 = vsel %vm1244, %v1436, 0.0
      %v1517 = vsel %vm1244, %v1438, 0.0
      %v1518 = vsel %vm1244, %v1440, 0.0
      %v1519 = vsel %vm1244, %v1442, 0.0
      %v1520 = vsel %vm1244, %v1444, 0.0
      %v1521 = vsel %vm1244, %v1446, 0.0
      %v1522 = vsel %vm1244, %v1448, 0.0
      %v1523 = vsel %vm1244, %v1450, 0.0
      %v1524 = vsel %vm1244, %v1452, 0.0
      %v1525 = vsel %vm1244, %v1454, 0.0
      %v1526 = vsel %vm1244, %v1456, 0.0
      %v1527 = vsel %vm1244, %v1458, 0.0
      %v1528 = vsel %vm1244, %v1460, 0.0
      %v1529 = vsel %vm1244, %v1462, 0.0
      %v1530 = vsel %vm1244, %v1464, 0.0
      %v1531 = vsel %vm1244, %v1466, 0.0
      %v1532 = vsel %vm1244, %v1468, 0.0
      %v1534 = vsel %vm346, %v1174, 0
      %v1537 = vsel %vm346, %v1175, 0
      %v1540 = vsel %vm346, %v1176, 0
      %v1543 = vsel %vm346, %v1177, 0
      %v1546 = vsel %vm346, %v1178, 0
      %v1549 = vsel %vm346, %v1179, 0
      %v1552 = vsel %vm346, %v1180, 0
      %v1555 = vsel %vm346, %v1181, 0
      %v1558 = vsel %vm346, %v1373, 0
      %v1561 = vsel %vm346, %v1374, 0
      %v1564 = vsel %vm346, %v1375, 0
      %v1567 = vsel %vm346, %v1376, 0
      %v1570 = vsel %vm346, %v1377, 0
      %v1573 = vsel %vm346, %v1378, 0
      %v1576 = vsel %vm346, %v1379, 0
      %v1579 = vsel %vm346, %v1380, 0
      %1581 = vmatprep.subr.mxu0 0.0
      %1582 = vmatpush1.xpose.msra.mxu0 0.0
      %1583 = vmatprep.subr.mxu0 0.0
      %1584 = vmatpush1.xpose.msra.mxu0 0.0
      %1585 = vmatprep.subr.mxu0 0.0
      %1586 = vmatpush1.xpose.msra.mxu0 0.0
      %1587 = vmatprep.subr.mxu0 0.0
      %1588 = vmatpush1.xpose.msra.mxu0 0.0
      %1589 = vmatprep.subr.mxu0 0.0
      %1590 = vmatpush1.xpose.msra.mxu0 0.0
      %1591 = vmatprep.subr.mxu0 0.0
      %1592 = vmatpush1.xpose.msra.mxu0 0.0
      %1593 = vmatprep.subr.mxu0 0.0
      %1594 = vmatpush1.xpose.msra.mxu0 0.0
      %1595 = vmatprep.subr.mxu0 0.0
      %1596 = vmatpush1.xpose.msra.mxu0 0.0
      %1597 = vmatprep.subr.mxu0 0.0
      %1598 = vmatpush1.xpose.msra.mxu0 %v1579
      %1599 = vmatprep.subr.mxu0 0.0
      %1600 = vmatpush1.xpose.msra.mxu0 %v1576
      %1601 = vmatprep.subr.mxu0 0.0
      %1602 = vmatpush1.xpose.msra.mxu0 %v1573
      %1603 = vmatprep.subr.mxu0 0.0
      %1604 = vmatpush1.xpose.msra.mxu0 %v1570
      %1605 = vmatprep.subr.mxu0 0.0
      %1606 = vmatpush1.xpose.msra.mxu0 %v1567
      %1607 = vmatprep.subr.mxu0 0.0
      %1608 = vmatpush1.xpose.msra.mxu0 %v1564
      %1609 = vmatprep.subr.mxu0 0.0
      %1610 = vmatpush1.xpose.msra.mxu0 %v1561
      %1611 = vmatprep.subr.mxu0 0.0
      %1612 = vmatpush1.xpose.msra.mxu0 %v1558
      %1613 = vmatprep.subr.mxu0 0.0
      %1614 = vmatpush2.xpose.msra.mxu0 0.0
      %1615 = vmatprep.subr.mxu0 0.0
      %1616 = vmatpush2.xpose.msra.mxu0 0.0
      %1617 = vmatprep.subr.mxu0 0.0
      %1618 = vmatpush2.xpose.msra.mxu0 0.0
      %1619 = vmatprep.subr.mxu0 0.0
      %1620 = vmatpush2.xpose.msra.mxu0 0.0
      %1621 = vmatprep.subr.mxu0 0.0
      %1622 = vmatpush2.xpose.msra.mxu0 0.0
      %1623 = vmatprep.subr.mxu0 0.0
      %1624 = vmatpush2.xpose.msra.mxu0 0.0
      %1625 = vmatprep.subr.mxu0 0.0
      %1626 = vmatpush2.xpose.msra.mxu0 0.0
      %1627 = vmatprep.subr.mxu0 0.0
      %1628 = vmatpush2.xpose.msra.mxu0 0.0
      %1629 = vmatprep.subr.mxu0 0.0
      %1630 = vmatpush2.xpose.msra.mxu0 0.0
      %1631 = vmatprep.subr.mxu0 0.0
      %1632 = vmatpush2.xpose.msra.mxu0 0.0
      %1633 = vmatprep.subr.mxu0 0.0
      %1634 = vmatpush2.xpose.msra.mxu0 0.0
      %1635 = vmatprep.subr.mxu0 0.0
      %1636 = vmatpush2.xpose.msra.mxu0 0.0
      %1637 = vmatprep.subr.mxu0 0.0
      %1638 = vmatpush2.xpose.msra.mxu0 0.0
      %1639 = vmatprep.subr.mxu0 0.0
      %1640 = vmatpush2.xpose.msra.mxu0 0.0
      %1641 = vmatprep.subr.mxu0 0.0
      %1642 = vmatpush2.xpose.msra.mxu0 0.0
      %1643 = vmatprep.subr.mxu0 0.0
      %1644 = vmatpush2.xpose.msra.mxu0 0.0
      %1645 = vmatprep.mubr.f32.mxu0 0.0
      %1646 = vmatmul.mubr.f32.gmra.mxu0 %v1534
      %v1647 = vpop.f32.mrf.mxu0
      %v1648 = vadd.f32 %v1206, %v1647
      %v1649 = vpop.f32.mrf.mxu0
      %1650 = vmatprep.mubr.f32.mxu0 0.0
      %1651 = vmatmul.mubr.f32.gmra.mxu0 %v1537
      %v1652 = vpop.f32.mrf.mxu0
      %v1653 = vadd.f32 %v1207, %v1652
      %v1654 = vpop.f32.mrf.mxu0
      %1655 = vmatprep.mubr.f32.mxu0 0.0
      %1656 = vmatmul.mubr.f32.gmra.mxu0 %v1540
      %v1657 = vpop.f32.mrf.mxu0
      %v1658 = vadd.f32 %v1208, %v1657
      %v1659 = vpop.f32.mrf.mxu0
      %1660 = vmatprep.mubr.f32.mxu0 0.0
      %1661 = vmatmul.mubr.f32.gmra.mxu0 %v1543
      %v1662 = vpop.f32.mrf.mxu0
      %v1663 = vadd.f32 %v1209, %v1662
      %v1664 = vpop.f32.mrf.mxu0
      %1665 = vmatprep.mubr.f32.mxu0 0.0
      %1666 = vmatmul.mubr.f32.gmra.mxu0 %v1546
      %v1667 = vpop.f32.mrf.mxu0
      %v1668 = vadd.f32 %v1210, %v1667
      %v1669 = vpop.f32.mrf.mxu0
      %1670 = vmatprep.mubr.f32.mxu0 0.0
      %1671 = vmatmul.mubr.f32.gmra.mxu0 %v1549
      %v1672 = vpop.f32.mrf.mxu0
      %v1673 = vadd.f32 %v1211, %v1672
      %v1674 = vpop.f32.mrf.mxu0
      %1675 = vmatprep.mubr.f32.mxu0 0.0
      %1676 = vmatmul.mubr.f32.gmra.mxu0 %v1552
      %v1677 = vpop.f32.mrf.mxu0
      %v1678 = vadd.f32 %v1212, %v1677
      %v1679 = vpop.f32.mrf.mxu0
      %1680 = vmatprep.mubr.f32.mxu0 0.0
      %1681 = vmatmul.mubr.f32.gmra.mxu0 %v1555
      %v1682 = vpop.f32.mrf.mxu0
      %v1683 = vadd.f32 %v1213, %v1682
      %v1684 = vpop.f32.mrf.mxu0
      %1685 = vdwg.mxu0
      %v1687 = vsel %vm346, %v1182, 0
      %v1690 = vsel %vm346, %v1183, 0
      %v1693 = vsel %vm346, %v1184, 0
      %v1696 = vsel %vm346, %v1185, 0
      %v1699 = vsel %vm346, %v1186, 0
      %v1702 = vsel %vm346, %v1187, 0
      %v1705 = vsel %vm346, %v1188, 0
      %v1708 = vsel %vm346, %v1189, 0
      %v1711 = vsel %vm346, %v1381, 0
      %v1714 = vsel %vm346, %v1382, 0
      %v1717 = vsel %vm346, %v1383, 0
      %v1720 = vsel %vm346, %v1384, 0
      %v1723 = vsel %vm346, %v1385, 0
      %v1726 = vsel %vm346, %v1386, 0
      %v1729 = vsel %vm346, %v1387, 0
      %v1732 = vsel %vm346, %v1388, 0
      %1734 = vmatprep.subr.mxu0 0.0
      %1735 = vmatpush1.xpose.msra.mxu0 0.0
      %1736 = vmatprep.subr.mxu0 0.0
      %1737 = vmatpush1.xpose.msra.mxu0 0.0
      %1738 = vmatprep.subr.mxu0 0.0
      %1739 = vmatpush1.xpose.msra.mxu0 0.0
      %1740 = vmatprep.subr.mxu0 0.0
      %1741 = vmatpush1.xpose.msra.mxu0 0.0
      %1742 = vmatprep.subr.mxu0 0.0
      %1743 = vmatpush1.xpose.msra.mxu0 0.0
      %1744 = vmatprep.subr.mxu0 0.0
      %1745 = vmatpush1.xpose.msra.mxu0 0.0
      %1746 = vmatprep.subr.mxu0 0.0
      %1747 = vmatpush1.xpose.msra.mxu0 0.0
      %1748 = vmatprep.subr.mxu0 0.0
      %1749 = vmatpush1.xpose.msra.mxu0 0.0
      %1750 = vmatprep.subr.mxu0 0.0
      %1751 = vmatpush1.xpose.msra.mxu0 %v1732
      %1752 = vmatprep.subr.mxu0 0.0
      %1753 = vmatpush1.xpose.msra.mxu0 %v1729
      %1754 = vmatprep.subr.mxu0 0.0
      %1755 = vmatpush1.xpose.msra.mxu0 %v1726
      %1756 = vmatprep.subr.mxu0 0.0
      %1757 = vmatpush1.xpose.msra.mxu0 %v1723
      %1758 = vmatprep.subr.mxu0 0.0
      %1759 = vmatpush1.xpose.msra.mxu0 %v1720
      %1760 = vmatprep.subr.mxu0 0.0
      %1761 = vmatpush1.xpose.msra.mxu0 %v1717
      %1762 = vmatprep.subr.mxu0 0.0
      %1763 = vmatpush1.xpose.msra.mxu0 %v1714
      %1764 = vmatprep.subr.mxu0 0.0
      %1765 = vmatpush1.xpose.msra.mxu0 %v1711
      %1766 = vmatprep.subr.mxu0 0.0
      %1767 = vmatpush2.xpose.msra.mxu0 0.0
      %1768 = vmatprep.subr.mxu0 0.0
      %1769 = vmatpush2.xpose.msra.mxu0 0.0
      %1770 = vmatprep.subr.mxu0 0.0
      %1771 = vmatpush2.xpose.msra.mxu0 0.0
      %1772 = vmatprep.subr.mxu0 0.0
      %1773 = vmatpush2.xpose.msra.mxu0 0.0
      %1774 = vmatprep.subr.mxu0 0.0
      %1775 = vmatpush2.xpose.msra.mxu0 0.0
      %1776 = vmatprep.subr.mxu0 0.0
      %1777 = vmatpush2.xpose.msra.mxu0 0.0
      %1778 = vmatprep.subr.mxu0 0.0
      %1779 = vmatpush2.xpose.msra.mxu0 0.0
      %1780 = vmatprep.subr.mxu0 0.0
      %1781 = vmatpush2.xpose.msra.mxu0 0.0
      %1782 = vmatprep.subr.mxu0 0.0
      %1783 = vmatpush2.xpose.msra.mxu0 0.0
      %1784 = vmatprep.subr.mxu0 0.0
      %1785 = vmatpush2.xpose.msra.mxu0 0.0
      %1786 = vmatprep.subr.mxu0 0.0
      %1787 = vmatpush2.xpose.msra.mxu0 0.0
      %1788 = vmatprep.subr.mxu0 0.0
      %1789 = vmatpush2.xpose.msra.mxu0 0.0
      %1790 = vmatprep.subr.mxu0 0.0
      %1791 = vmatpush2.xpose.msra.mxu0 0.0
      %1792 = vmatprep.subr.mxu0 0.0
      %1793 = vmatpush2.xpose.msra.mxu0 0.0
      %1794 = vmatprep.subr.mxu0 0.0
      %1795 = vmatpush2.xpose.msra.mxu0 0.0
      %1796 = vmatprep.subr.mxu0 0.0
      %1797 = vmatpush2.xpose.msra.mxu0 0.0
      %1798 = vmatprep.mubr.f32.mxu0 0.0
      %1799 = vmatmul.mubr.f32.gmra.mxu0 %v1687
      %v1800 = vpop.f32.mrf.mxu0
      %v1801 = vadd.f32 %v1214, %v1800
      %v1802 = vpop.f32.mrf.mxu0
      %1803 = vmatprep.mubr.f32.mxu0 0.0
      %1804 = vmatmul.mubr.f32.gmra.mxu0 %v1690
      %v1805 = vpop.f32.mrf.mxu0
      %v1806 = vadd.f32 %v1215, %v1805
      %v1807 = vpop.f32.mrf.mxu0
      %1808 = vmatprep.mubr.f32.mxu0 0.0
      %1809 = vmatmul.mubr.f32.gmra.mxu0 %v1693
      %v1810 = vpop.f32.mrf.mxu0
      %v1811 = vadd.f32 %v1216, %v1810
      %v1812 = vpop.f32.mrf.mxu0
      %1813 = vmatprep.mubr.f32.mxu0 0.0
      %1814 = vmatmul.mubr.f32.gmra.mxu0 %v1696
      %v1815 = vpop.f32.mrf.mxu0
      %v1816 = vadd.f32 %v1217, %v1815
      %v1817 = vpop.f32.mrf.mxu0
      %1818 = vmatprep.mubr.f32.mxu0 0.0
      %1819 = vmatmul.mubr.f32.gmra.mxu0 %v1699
      %v1820 = vpop.f32.mrf.mxu0
      %v1821 = vadd.f32 %v1218, %v1820
      %v1822 = vpop.f32.mrf.mxu0
      %1823 = vmatprep.mubr.f32.mxu0 0.0
      %1824 = vmatmul.mubr.f32.gmra.mxu0 %v1702
      %v1825 = vpop.f32.mrf.mxu0
      %v1826 = vadd.f32 %v1219, %v1825
      %v1827 = vpop.f32.mrf.mxu0
      %1828 = vmatprep.mubr.f32.mxu0 0.0
      %1829 = vmatmul.mubr.f32.gmra.mxu0 %v1705
      %v1830 = vpop.f32.mrf.mxu0
      %v1831 = vadd.f32 %v1220, %v1830
      %v1832 = vpop.f32.mrf.mxu0
      %1833 = vmatprep.mubr.f32.mxu0 0.0
      %1834 = vmatmul.mubr.f32.gmra.mxu0 %v1708
      %v1835 = vpop.f32.mrf.mxu0
      %v1836 = vadd.f32 %v1221, %v1835
      %v1837 = vpop.f32.mrf.mxu0
      %1838 = vdwg.mxu0
      %v1840 = vsel %vm346, %v1190, 0
      %v1843 = vsel %vm346, %v1191, 0
      %v1846 = vsel %vm346, %v1192, 0
      %v1849 = vsel %vm346, %v1193, 0
      %v1852 = vsel %vm346, %v1194, 0
      %v1855 = vsel %vm346, %v1195, 0
      %v1858 = vsel %vm346, %v1196, 0
      %v1861 = vsel %vm346, %v1197, 0
      %v1864 = vsel %vm346, %v1389, 0
      %v1867 = vsel %vm346, %v1390, 0
      %v1870 = vsel %vm346, %v1391, 0
      %v1873 = vsel %vm346, %v1392, 0
      %v1876 = vsel %vm346, %v1393, 0
      %v1879 = vsel %vm346, %v1394, 0
      %v1882 = vsel %vm346, %v1395, 0
      %v1885 = vsel %vm346, %v1396, 0
      %1887 = vmatprep.subr.mxu0 0.0
      %1888 = vmatpush1.xpose.msra.mxu0 0.0
      %1889 = vmatprep.subr.mxu0 0.0
      %1890 = vmatpush1.xpose.msra.mxu0 0.0
      %1891 = vmatprep.subr.mxu0 0.0
      %1892 = vmatpush1.xpose.msra.mxu0 0.0
      %1893 = vmatprep.subr.mxu0 0.0
      %1894 = vmatpush1.xpose.msra.mxu0 0.0
      %1895 = vmatprep.subr.mxu0 0.0
      %1896 = vmatpush1.xpose.msra.mxu0 0.0
      %1897 = vmatprep.subr.mxu0 0.0
      %1898 = vmatpush1.xpose.msra.mxu0 0.0
      %1899 = vmatprep.subr.mxu0 0.0
      %1900 = vmatpush1.xpose.msra.mxu0 0.0
      %1901 = vmatprep.subr.mxu0 0.0
      %1902 = vmatpush1.xpose.msra.mxu0 0.0
      %1903 = vmatprep.subr.mxu0 0.0
      %1904 = vmatpush1.xpose.msra.mxu0 %v1885
      %1905 = vmatprep.subr.mxu0 0.0
      %1906 = vmatpush1.xpose.msra.mxu0 %v1882
      %1907 = vmatprep.subr.mxu0 0.0
      %1908 = vmatpush1.xpose.msra.mxu0 %v1879
      %1909 = vmatprep.subr.mxu0 0.0
      %1910 = vmatpush1.xpose.msra.mxu0 %v1876
      %1911 = vmatprep.subr.mxu0 0.0
      %1912 = vmatpush1.xpose.msra.mxu0 %v1873
      %1913 = vmatprep.subr.mxu0 0.0
      %1914 = vmatpush1.xpose.msra.mxu0 %v1870
      %1915 = vmatprep.subr.mxu0 0.0
      %1916 = vmatpush1.xpose.msra.mxu0 %v1867
      %1917 = vmatprep.subr.mxu0 0.0
      %1918 = vmatpush1.xpose.msra.mxu0 %v1864
      %1919 = vmatprep.subr.mxu0 0.0
      %1920 = vmatpush2.xpose.msra.mxu0 0.0
      %1921 = vmatprep.subr.mxu0 0.0
      %1922 = vmatpush2.xpose.msra.mxu0 0.0
      %1923 = vmatprep.subr.mxu0 0.0
      %1924 = vmatpush2.xpose.msra.mxu0 0.0
      %1925 = vmatprep.subr.mxu0 0.0
      %1926 = vmatpush2.xpose.msra.mxu0 0.0
      %1927 = vmatprep.subr.mxu0 0.0
      %1928 = vmatpush2.xpose.msra.mxu0 0.0
      %1929 = vmatprep.subr.mxu0 0.0
      %1930 = vmatpush2.xpose.msra.mxu0 0.0
      %1931 = vmatprep.subr.mxu0 0.0
      %1932 = vmatpush2.xpose.msra.mxu0 0.0
      %1933 = vmatprep.subr.mxu0 0.0
      %1934 = vmatpush2.xpose.msra.mxu0 0.0
      %1935 = vmatprep.subr.mxu0 0.0
      %1936 = vmatpush2.xpose.msra.mxu0 0.0
      %1937 = vmatprep.subr.mxu0 0.0
      %1938 = vmatpush2.xpose.msra.mxu0 0.0
      %1939 = vmatprep.subr.mxu0 0.0
      %1940 = vmatpush2.xpose.msra.mxu0 0.0
      %1941 = vmatprep.subr.mxu0 0.0
      %1942 = vmatpush2.xpose.msra.mxu0 0.0
      %1943 = vmatprep.subr.mxu0 0.0
      %1944 = vmatpush2.xpose.msra.mxu0 0.0
      %1945 = vmatprep.subr.mxu0 0.0
      %1946 = vmatpush2.xpose.msra.mxu0 0.0
      %1947 = vmatprep.subr.mxu0 0.0
      %1948 = vmatpush2.xpose.msra.mxu0 0.0
      %1949 = vmatprep.subr.mxu0 0.0
      %1950 = vmatpush2.xpose.msra.mxu0 0.0
      %1951 = vmatprep.mubr.f32.mxu0 0.0
      %1952 = vmatmul.mubr.f32.gmra.mxu0 %v1840
      %v1953 = vpop.f32.mrf.mxu0
      %v1954 = vadd.f32 %v1222, %v1953
      %v1955 = vpop.f32.mrf.mxu0
      %1956 = vmatprep.mubr.f32.mxu0 0.0
      %1957 = vmatmul.mubr.f32.gmra.mxu0 %v1843
      %v1958 = vpop.f32.mrf.mxu0
      %v1959 = vadd.f32 %v1223, %v1958
      %v1960 = vpop.f32.mrf.mxu0
      %1961 = vmatprep.mubr.f32.mxu0 0.0
      %1962 = vmatmul.mubr.f32.gmra.mxu0 %v1846
      %v1963 = vpop.f32.mrf.mxu0
      %v1964 = vadd.f32 %v1224, %v1963
      %v1965 = vpop.f32.mrf.mxu0
      %1966 = vmatprep.mubr.f32.mxu0 0.0
      %1967 = vmatmul.mubr.f32.gmra.mxu0 %v1849
      %v1968 = vpop.f32.mrf.mxu0
      %v1969 = vadd.f32 %v1225, %v1968
      %v1970 = vpop.f32.mrf.mxu0
      %1971 = vmatprep.mubr.f32.mxu0 0.0
      %1972 = vmatmul.mubr.f32.gmra.mxu0 %v1852
      %v1973 = vpop.f32.mrf.mxu0
      %v1974 = vadd.f32 %v1226, %v1973
      %v1975 = vpop.f32.mrf.mxu0
      %1976 = vmatprep.mubr.f32.mxu0 0.0
      %1977 = vmatmul.mubr.f32.gmra.mxu0 %v1855
      %v1978 = vpop.f32.mrf.mxu0
      %v1979 = vadd.f32 %v1227, %v1978
      %v1980 = vpop.f32.mrf.mxu0
      %1981 = vmatprep.mubr.f32.mxu0 0.0
      %1982 = vmatmul.mubr.f32.gmra.mxu0 %v1858
      %v1983 = vpop.f32.mrf.mxu0
      %v1984 = vadd.f32 %v1228, %v1983
      %v1985 = vpop.f32.mrf.mxu0
      %1986 = vmatprep.mubr.f32.mxu0 0.0
      %1987 = vmatmul.mubr.f32.gmra.mxu0 %v1861
      %v1988 = vpop.f32.mrf.mxu0
      %v1989 = vadd.f32 %v1229, %v1988
      %v1990 = vpop.f32.mrf.mxu0
      %1991 = vdwg.mxu0
      %v1993 = vsel %vm346, %v1198, 0
      %v1996 = vsel %vm346, %v1199, 0
      %v1999 = vsel %vm346, %v1200, 0
      %v2002 = vsel %vm346, %v1201, 0
      %v2005 = vsel %vm346, %v1202, 0
      %v2008 = vsel %vm346, %v1203, 0
      %v2011 = vsel %vm346, %v1204, 0
      %v2014 = vsel %vm346, %v1205, 0
      %v2017 = vsel %vm346, %v1397, 0
      %v2020 = vsel %vm346, %v1398, 0
      %v2023 = vsel %vm346, %v1399, 0
      %v2026 = vsel %vm346, %v1400, 0
      %v2029 = vsel %vm346, %v1401, 0
      %v2032 = vsel %vm346, %v1402, 0
      %v2035 = vsel %vm346, %v1403, 0
      %v2038 = vsel %vm346, %v1404, 0
      %2040 = vmatprep.subr.mxu0 0.0
      %2041 = vmatpush1.xpose.msra.mxu0 0.0
      %2042 = vmatprep.subr.mxu0 0.0
      %2043 = vmatpush1.xpose.msra.mxu0 0.0
      %2044 = vmatprep.subr.mxu0 0.0
      %2045 = vmatpush1.xpose.msra.mxu0 0.0
      %2046 = vmatprep.subr.mxu0 0.0
      %2047 = vmatpush1.xpose.msra.mxu0 0.0
      %2048 = vmatprep.subr.mxu0 0.0
      %2049 = vmatpush1.xpose.msra.mxu0 0.0
      %2050 = vmatprep.subr.mxu0 0.0
      %2051 = vmatpush1.xpose.msra.mxu0 0.0
      %2052 = vmatprep.subr.mxu0 0.0
      %2053 = vmatpush1.xpose.msra.mxu0 0.0
      %2054 = vmatprep.subr.mxu0 0.0
      %2055 = vmatpush1.xpose.msra.mxu0 0.0
      %2056 = vmatprep.subr.mxu0 0.0
      %2057 = vmatpush1.xpose.msra.mxu0 %v2038
      %2058 = vmatprep.subr.mxu0 0.0
      %2059 = vmatpush1.xpose.msra.mxu0 %v2035
      %2060 = vmatprep.subr.mxu0 0.0
      %2061 = vmatpush1.xpose.msra.mxu0 %v2032
      %2062 = vmatprep.subr.mxu0 0.0
      %2063 = vmatpush1.xpose.msra.mxu0 %v2029
      %2064 = vmatprep.subr.mxu0 0.0
      %2065 = vmatpush1.xpose.msra.mxu0 %v2026
      %2066 = vmatprep.subr.mxu0 0.0
      %2067 = vmatpush1.xpose.msra.mxu0 %v2023
      %2068 = vmatprep.subr.mxu0 0.0
      %2069 = vmatpush1.xpose.msra.mxu0 %v2020
      %2070 = vmatprep.subr.mxu0 0.0
      %2071 = vmatpush1.xpose.msra.mxu0 %v2017
      %2072 = vmatprep.subr.mxu0 0.0
      %2073 = vmatpush2.xpose.msra.mxu0 0.0
      %2074 = vmatprep.subr.mxu0 0.0
      %2075 = vmatpush2.xpose.msra.mxu0 0.0
      %2076 = vmatprep.subr.mxu0 0.0
      %2077 = vmatpush2.xpose.msra.mxu0 0.0
      %2078 = vmatprep.subr.mxu0 0.0
      %2079 = vmatpush2.xpose.msra.mxu0 0.0
      %2080 = vmatprep.subr.mxu0 0.0
      %2081 = vmatpush2.xpose.msra.mxu0 0.0
      %2082 = vmatprep.subr.mxu0 0.0
      %2083 = vmatpush2.xpose.msra.mxu0 0.0
      %2084 = vmatprep.subr.mxu0 0.0
      %2085 = vmatpush2.xpose.msra.mxu0 0.0
      %2086 = vmatprep.subr.mxu0 0.0
      %2087 = vmatpush2.xpose.msra.mxu0 0.0
      %2088 = vmatprep.subr.mxu0 0.0
      %2089 = vmatpush2.xpose.msra.mxu0 0.0
      %2090 = vmatprep.subr.mxu0 0.0
      %2091 = vmatpush2.xpose.msra.mxu0 0.0
      %2092 = vmatprep.subr.mxu0 0.0
      %2093 = vmatpush2.xpose.msra.mxu0 0.0
      %2094 = vmatprep.subr.mxu0 0.0
      %2095 = vmatpush2.xpose.msra.mxu0 0.0
      %2096 = vmatprep.subr.mxu0 0.0
      %2097 = vmatpush2.xpose.msra.mxu0 0.0
      %2098 = vmatprep.subr.mxu0 0.0
      %2099 = vmatpush2.xpose.msra.mxu0 0.0
      %2100 = vmatprep.subr.mxu0 0.0
      %2101 = vmatpush2.xpose.msra.mxu0 0.0
      %2102 = vmatprep.subr.mxu0 0.0
      %2103 = vmatpush2.xpose.msra.mxu0 0.0
      %2104 = vmatprep.mubr.f32.mxu0 0.0
      %2105 = vmatmul.mubr.f32.gmra.mxu0 %v1993
      %v2106 = vpop.f32.mrf.mxu0
      %v2107 = vadd.f32 %v1230, %v2106
      %v2108 = vpop.f32.mrf.mxu0
      %2109 = vmatprep.mubr.f32.mxu0 0.0
      %2110 = vmatmul.mubr.f32.gmra.mxu0 %v1996
      %v2111 = vpop.f32.mrf.mxu0
      %v2112 = vadd.f32 %v1231, %v2111
      %v2113 = vpop.f32.mrf.mxu0
      %2114 = vmatprep.mubr.f32.mxu0 0.0
      %2115 = vmatmul.mubr.f32.gmra.mxu0 %v1999
      %v2116 = vpop.f32.mrf.mxu0
      %v2117 = vadd.f32 %v1232, %v2116
      %v2118 = vpop.f32.mrf.mxu0
      %2119 = vmatprep.mubr.f32.mxu0 0.0
      %2120 = vmatmul.mubr.f32.gmra.mxu0 %v2002
      %v2121 = vpop.f32.mrf.mxu0
      %v2122 = vadd.f32 %v1233, %v2121
      %v2123 = vpop.f32.mrf.mxu0
      %2124 = vmatprep.mubr.f32.mxu0 0.0
      %2125 = vmatmul.mubr.f32.gmra.mxu0 %v2005
      %v2126 = vpop.f32.mrf.mxu0
      %v2127 = vadd.f32 %v1234, %v2126
      %v2128 = vpop.f32.mrf.mxu0
      %2129 = vmatprep.mubr.f32.mxu0 0.0
      %2130 = vmatmul.mubr.f32.gmra.mxu0 %v2008
      %v2131 = vpop.f32.mrf.mxu0
      %v2132 = vadd.f32 %v1235, %v2131
      %v2133 = vpop.f32.mrf.mxu0
      %2134 = vmatprep.mubr.f32.mxu0 0.0
      %2135 = vmatmul.mubr.f32.gmra.mxu0 %v2011
      %v2136 = vpop.f32.mrf.mxu0
      %v2137 = vadd.f32 %v1236, %v2136
      %v2138 = vpop.f32.mrf.mxu0
      %2139 = vmatprep.mubr.f32.mxu0 0.0
      %2140 = vmatmul.mubr.f32.gmra.mxu0 %v2014
      %v2141 = vpop.f32.mrf.mxu0
      %v2142 = vadd.f32 %v1237, %v2141
      %v2143 = vpop.f32.mrf.mxu0
      %2144 = vdwg.mxu0
      %vm2145 = vcmask 523264
      %v2146 = vsel %vm2145, %v1648, -inf
      %2147 = vmax.xlane.f32.xlu0 %v2146
      %v2148 = vpop.xlane.xlu0 %2147
      %v2149 = vsel %vm2145, %v1653, -inf
      %2150 = vmax.xlane.f32.xlu0 %v2149
      %v2151 = vpop.xlane.xlu0 %2150
      %v2152 = vsel %vm2145, %v1658, -inf
      %2153 = vmax.xlane.f32.xlu0 %v2152
      %v2154 = vpop.xlane.xlu0 %2153
      %v2155 = vsel %vm2145, %v1663, -inf
      %2156 = vmax.xlane.f32.xlu0 %v2155
      %v2157 = vpop.xlane.xlu0 %2156
      %v2158 = vsel %vm2145, %v1668, -inf
      %2159 = vmax.xlane.f32.xlu0 %v2158
      %v2160 = vpop.xlane.xlu0 %2159
      %v2161 = vsel %vm2145, %v1673, -inf
      %2162 = vmax.xlane.f32.xlu0 %v2161
      %v2163 = vpop.xlane.xlu0 %2162
      %v2164 = vsel %vm2145, %v1678, -inf
      %2165 = vmax.xlane.f32.xlu0 %v2164
      %v2166 = vpop.xlane.xlu0 %2165
      %v2167 = vsel %vm2145, %v1683, -inf
      %2168 = vmax.xlane.f32.xlu0 %v2167
      %v2169 = vpop.xlane.xlu0 %2168
      %v2170 = vsel %vm2145, %v1801, -inf
      %2171 = vmax.xlane.f32.xlu0 %v2170
      %v2172 = vpop.xlane.xlu0 %2171
      %v2173 = vsel %vm2145, %v1806, -inf
      %2174 = vmax.xlane.f32.xlu0 %v2173
      %v2175 = vpop.xlane.xlu0 %2174
      %v2176 = vsel %vm2145, %v1811, -inf
      %2177 = vmax.xlane.f32.xlu0 %v2176
      %v2178 = vpop.xlane.xlu0 %2177
      %v2179 = vsel %vm2145, %v1816, -inf
      %2180 = vmax.xlane.f32.xlu0 %v2179
      %v2181 = vpop.xlane.xlu0 %2180
      %v2182 = vsel %vm2145, %v1821, -inf
      %2183 = vmax.xlane.f32.xlu0 %v2182
      %v2184 = vpop.xlane.xlu0 %2183
      %v2185 = vsel %vm2145, %v1826, -inf
      %2186 = vmax.xlane.f32.xlu0 %v2185
      %v2187 = vpop.xlane.xlu0 %2186
      %v2188 = vsel %vm2145, %v1831, -inf
      %2189 = vmax.xlane.f32.xlu0 %v2188
      %v2190 = vpop.xlane.xlu0 %2189
      %v2191 = vsel %vm2145, %v1836, -inf
      %2192 = vmax.xlane.f32.xlu0 %v2191
      %v2193 = vpop.xlane.xlu0 %2192
      %v2194 = vsel %vm2145, %v1954, -inf
      %2195 = vmax.xlane.f32.xlu0 %v2194
      %v2196 = vpop.xlane.xlu0 %2195
      %v2197 = vsel %vm2145, %v1959, -inf
      %2198 = vmax.xlane.f32.xlu0 %v2197
      %v2199 = vpop.xlane.xlu0 %2198
      %v2200 = vsel %vm2145, %v1964, -inf
      %2201 = vmax.xlane.f32.xlu0 %v2200
      %v2202 = vpop.xlane.xlu0 %2201
      %v2203 = vsel %vm2145, %v1969, -inf
      %2204 = vmax.xlane.f32.xlu0 %v2203
      %v2205 = vpop.xlane.xlu0 %2204
      %v2206 = vsel %vm2145, %v1974, -inf
      %2207 = vmax.xlane.f32.xlu0 %v2206
      %v2208 = vpop.xlane.xlu0 %2207
      %v2209 = vsel %vm2145, %v1979, -inf
      %2210 = vmax.xlane.f32.xlu0 %v2209
      %v2211 = vpop.xlane.xlu0 %2210
      %v2212 = vsel %vm2145, %v1984, -inf
      %2213 = vmax.xlane.f32.xlu0 %v2212
      %v2214 = vpop.xlane.xlu0 %2213
      %v2215 = vsel %vm2145, %v1989, -inf
      %2216 = vmax.xlane.f32.xlu0 %v2215
      %v2217 = vpop.xlane.xlu0 %2216
      %v2218 = vsel %vm2145, %v2107, -inf
      %2219 = vmax.xlane.f32.xlu0 %v2218
      %v2220 = vpop.xlane.xlu0 %2219
      %v2221 = vsel %vm2145, %v2112, -inf
      %2222 = vmax.xlane.f32.xlu0 %v2221
      %v2223 = vpop.xlane.xlu0 %2222
      %v2224 = vsel %vm2145, %v2117, -inf
      %2225 = vmax.xlane.f32.xlu0 %v2224
      %v2226 = vpop.xlane.xlu0 %2225
      %v2227 = vsel %vm2145, %v2122, -inf
      %2228 = vmax.xlane.f32.xlu0 %v2227
      %v2229 = vpop.xlane.xlu0 %2228
      %v2230 = vsel %vm2145, %v2127, -inf
      %2231 = vmax.xlane.f32.xlu0 %v2230
      %v2232 = vpop.xlane.xlu0 %2231
      %v2233 = vsel %vm2145, %v2132, -inf
      %2234 = vmax.xlane.f32.xlu0 %v2233
      %v2235 = vpop.xlane.xlu0 %2234
      %v2236 = vsel %vm2145, %v2137, -inf
      %2237 = vmax.xlane.f32.xlu0 %v2236
      %v2238 = vpop.xlane.xlu0 %2237
      %v2239 = vsel %vm2145, %v2142, -inf
      %2240 = vmax.xlane.f32.xlu0 %v2239
      %v2241 = vpop.xlane.xlu0 %2240
      %v2242 = vsub.f32 %v1648, %v2148
      %v2243 = vsub.f32 %v1653, %v2151
      %v2244 = vsub.f32 %v1658, %v2154
      %v2245 = vsub.f32 %v1663, %v2157
      %v2246 = vsub.f32 %v1668, %v2160
      %v2247 = vsub.f32 %v1673, %v2163
      %v2248 = vsub.f32 %v1678, %v2166
      %v2249 = vsub.f32 %v1683, %v2169
      %v2250 = vsub.f32 %v1801, %v2172
      %v2251 = vsub.f32 %v1806, %v2175
      %v2252 = vsub.f32 %v1811, %v2178
      %v2253 = vsub.f32 %v1816, %v2181
      %v2254 = vsub.f32 %v1821, %v2184
      %v2255 = vsub.f32 %v1826, %v2187
      %v2256 = vsub.f32 %v1831, %v2190
      %v2257 = vsub.f32 %v1836, %v2193
      %v2258 = vsub.f32 %v1954, %v2196
      %v2259 = vsub.f32 %v1959, %v2199
      %v2260 = vsub.f32 %v1964, %v2202
      %v2261 = vsub.f32 %v1969, %v2205
      %v2262 = vsub.f32 %v1974, %v2208
      %v2263 = vsub.f32 %v1979, %v2211
      %v2264 = vsub.f32 %v1984, %v2214
      %v2265 = vsub.f32 %v1989, %v2217
      %v2266 = vsub.f32 %v2107, %v2220
      %v2267 = vsub.f32 %v2112, %v2223
      %v2268 = vsub.f32 %v2117, %v2226
      %v2269 = vsub.f32 %v2122, %v2229
      %v2270 = vsub.f32 %v2127, %v2232
      %v2271 = vsub.f32 %v2132, %v2235
      %v2272 = vsub.f32 %v2137, %v2238
      %v2273 = vsub.f32 %v2142, %v2241
      %v2274 = vmul.f32 %v2242, 1.442695
      %v2275 = vpow.pop %v2274
      %v2276 = vmul.f32 %v2243, 1.442695
      %v2277 = vpow.pop %v2276
      %v2278 = vmul.f32 %v2244, 1.442695
      %v2279 = vpow.pop %v2278
      %v2280 = vmul.f32 %v2245, 1.442695
      %v2281 = vpow.pop %v2280
      %v2282 = vmul.f32 %v2246, 1.442695
      %v2283 = vpow.pop %v2282
      %v2284 = vmul.f32 %v2247, 1.442695
      %v2285 = vpow.pop %v2284
      %v2286 = vmul.f32 %v2248, 1.442695
      %v2287 = vpow.pop %v2286
      %v2288 = vmul.f32 %v2249, 1.442695
      %v2289 = vpow.pop %v2288
      %v2290 = vmul.f32 %v2250, 1.442695
      %v2291 = vpow.pop %v2290
      %v2292 = vmul.f32 %v2251, 1.442695
      %v2293 = vpow.pop %v2292
      %v2294 = vmul.f32 %v2252, 1.442695
      %v2295 = vpow.pop %v2294
      %v2296 = vmul.f32 %v2253, 1.442695
      %v2297 = vpow.pop %v2296
      %v2298 = vmul.f32 %v2254, 1.442695
      %v2299 = vpow.pop %v2298
      %v2300 = vmul.f32 %v2255, 1.442695
      %v2301 = vpow.pop %v2300
      %v2302 = vmul.f32 %v2256, 1.442695
      %v2303 = vpow.pop %v2302
      %v2304 = vmul.f32 %v2257, 1.442695
      %v2305 = vpow.pop %v2304
      %v2306 = vmul.f32 %v2258, 1.442695
      %v2307 = vpow.pop %v2306
      %v2308 = vmul.f32 %v2259, 1.442695
      %v2309 = vpow.pop %v2308
      %v2310 = vmul.f32 %v2260, 1.442695
      %v2311 = vpow.pop %v2310
      %v2312 = vmul.f32 %v2261, 1.442695
      %v2313 = vpow.pop %v2312
      %v2314 = vmul.f32 %v2262, 1.442695
      %v2315 = vpow.pop %v2314
      %v2316 = vmul.f32 %v2263, 1.442695
      %v2317 = vpow.pop %v2316
      %v2318 = vmul.f32 %v2264, 1.442695
      %v2319 = vpow.pop %v2318
      %v2320 = vmul.f32 %v2265, 1.442695
      %v2321 = vpow.pop %v2320
      %v2322 = vmul.f32 %v2266, 1.442695
      %v2323 = vpow.pop %v2322
      %v2324 = vmul.f32 %v2267, 1.442695
      %v2325 = vpow.pop %v2324
      %v2326 = vmul.f32 %v2268, 1.442695
      %v2327 = vpow.pop %v2326
      %v2328 = vmul.f32 %v2269, 1.442695
      %v2329 = vpow.pop %v2328
      %v2330 = vmul.f32 %v2270, 1.442695
      %v2331 = vpow.pop %v2330
      %v2332 = vmul.f32 %v2271, 1.442695
      %v2333 = vpow.pop %v2332
      %v2334 = vmul.f32 %v2272, 1.442695
      %v2335 = vpow.pop %v2334
      %v2336 = vmul.f32 %v2273, 1.442695
      %v2337 = vpow.pop %v2336
      %v2338 = vsel %vm2145, %v2275, 0.0
      %2339 = vadd.xlane.f32.xlu0 %v2338
      %v2340 = vpop.xlane.xlu0 %2339
      %v2341 = vsel %vm2145, %v2277, 0.0
      %2342 = vadd.xlane.f32.xlu0 %v2341
      %v2343 = vpop.xlane.xlu0 %2342
      %v2344 = vsel %vm2145, %v2279, 0.0
      %2345 = vadd.xlane.f32.xlu0 %v2344
      %v2346 = vpop.xlane.xlu0 %2345
      %v2347 = vsel %vm2145, %v2281, 0.0
      %2348 = vadd.xlane.f32.xlu0 %v2347
      %v2349 = vpop.xlane.xlu0 %2348
      %v2350 = vsel %vm2145, %v2283, 0.0
      %2351 = vadd.xlane.f32.xlu0 %v2350
      %v2352 = vpop.xlane.xlu0 %2351
      %v2353 = vsel %vm2145, %v2285, 0.0
      %2354 = vadd.xlane.f32.xlu0 %v2353
      %v2355 = vpop.xlane.xlu0 %2354
      %v2356 = vsel %vm2145, %v2287, 0.0
      %2357 = vadd.xlane.f32.xlu0 %v2356
      %v2358 = vpop.xlane.xlu0 %2357
      %v2359 = vsel %vm2145, %v2289, 0.0
      %2360 = vadd.xlane.f32.xlu0 %v2359
      %v2361 = vpop.xlane.xlu0 %2360
      %v2362 = vsel %vm2145, %v2291, 0.0
      %2363 = vadd.xlane.f32.xlu0 %v2362
      %v2364 = vpop.xlane.xlu0 %2363
      %v2365 = vsel %vm2145, %v2293, 0.0
      %2366 = vadd.xlane.f32.xlu0 %v2365
      %v2367 = vpop.xlane.xlu0 %2366
      %v2368 = vsel %vm2145, %v2295, 0.0
      %2369 = vadd.xlane.f32.xlu0 %v2368
      %v2370 = vpop.xlane.xlu0 %2369
      %v2371 = vsel %vm2145, %v2297, 0.0
      %2372 = vadd.xlane.f32.xlu0 %v2371
      %v2373 = vpop.xlane.xlu0 %2372
      %v2374 = vsel %vm2145, %v2299, 0.0
      %2375 = vadd.xlane.f32.xlu0 %v2374
      %v2376 = vpop.xlane.xlu0 %2375
      %v2377 = vsel %vm2145, %v2301, 0.0
      %2378 = vadd.xlane.f32.xlu0 %v2377
      %v2379 = vpop.xlane.xlu0 %2378
      %v2380 = vsel %vm2145, %v2303, 0.0
      %2381 = vadd.xlane.f32.xlu0 %v2380
      %v2382 = vpop.xlane.xlu0 %2381
      %v2383 = vsel %vm2145, %v2305, 0.0
      %2384 = vadd.xlane.f32.xlu0 %v2383
      %v2385 = vpop.xlane.xlu0 %2384
      %v2386 = vsel %vm2145, %v2307, 0.0
      %2387 = vadd.xlane.f32.xlu0 %v2386
      %v2388 = vpop.xlane.xlu0 %2387
      %v2389 = vsel %vm2145, %v2309, 0.0
      %2390 = vadd.xlane.f32.xlu0 %v2389
      %v2391 = vpop.xlane.xlu0 %2390
      %v2392 = vsel %vm2145, %v2311, 0.0
      %2393 = vadd.xlane.f32.xlu0 %v2392
      %v2394 = vpop.xlane.xlu0 %2393
      %v2395 = vsel %vm2145, %v2313, 0.0
      %2396 = vadd.xlane.f32.xlu0 %v2395
      %v2397 = vpop.xlane.xlu0 %2396
      %v2398 = vsel %vm2145, %v2315, 0.0
      %2399 = vadd.xlane.f32.xlu0 %v2398
      %v2400 = vpop.xlane.xlu0 %2399
      %v2401 = vsel %vm2145, %v2317, 0.0
      %2402 = vadd.xlane.f32.xlu0 %v2401
      %v2403 = vpop.xlane.xlu0 %2402
      %v2404 = vsel %vm2145, %v2319, 0.0
      %2405 = vadd.xlane.f32.xlu0 %v2404
      %v2406 = vpop.xlane.xlu0 %2405
      %v2407 = vsel %vm2145, %v2321, 0.0
      %2408 = vadd.xlane.f32.xlu0 %v2407
      %v2409 = vpop.xlane.xlu0 %2408
      %v2410 = vsel %vm2145, %v2323, 0.0
      %2411 = vadd.xlane.f32.xlu0 %v2410
      %v2412 = vpop.xlane.xlu0 %2411
      %v2413 = vsel %vm2145, %v2325, 0.0
      %2414 = vadd.xlane.f32.xlu0 %v2413
      %v2415 = vpop.xlane.xlu0 %2414
      %v2416 = vsel %vm2145, %v2327, 0.0
      %2417 = vadd.xlane.f32.xlu0 %v2416
      %v2418 = vpop.xlane.xlu0 %2417
      %v2419 = vsel %vm2145, %v2329, 0.0
      %2420 = vadd.xlane.f32.xlu0 %v2419
      %v2421 = vpop.xlane.xlu0 %2420
      %v2422 = vsel %vm2145, %v2331, 0.0
      %2423 = vadd.xlane.f32.xlu0 %v2422
      %v2424 = vpop.xlane.xlu0 %2423
      %v2425 = vsel %vm2145, %v2333, 0.0
      %2426 = vadd.xlane.f32.xlu0 %v2425
      %v2427 = vpop.xlane.xlu0 %2426
      %v2428 = vsel %vm2145, %v2335, 0.0
      %2429 = vadd.xlane.f32.xlu0 %v2428
      %v2430 = vpop.xlane.xlu0 %2429
      %v2431 = vsel %vm2145, %v2337, 0.0
      %2432 = vadd.xlane.f32.xlu0 %v2431
      %v2433 = vpop.xlane.xlu0 %2432
      %v2434 = vrcp.pop %v2340
      %v2435 = vrcp.pop %v2343
      %v2436 = vrcp.pop %v2346
      %v2437 = vrcp.pop %v2349
      %v2438 = vrcp.pop %v2352
      %v2439 = vrcp.pop %v2355
      %v2440 = vrcp.pop %v2358
      %v2441 = vrcp.pop %v2361
      %v2442 = vrcp.pop %v2364
      %v2443 = vrcp.pop %v2367
      %v2444 = vrcp.pop %v2370
      %v2445 = vrcp.pop %v2373
      %v2446 = vrcp.pop %v2376
      %v2447 = vrcp.pop %v2379
      %v2448 = vrcp.pop %v2382
      %v2449 = vrcp.pop %v2385
      %v2450 = vrcp.pop %v2388
      %v2451 = vrcp.pop %v2391
      %v2452 = vrcp.pop %v2394
      %v2453 = vrcp.pop %v2397
      %v2454 = vrcp.pop %v2400
      %v2455 = vrcp.pop %v2403
      %v2456 = vrcp.pop %v2406
      %v2457 = vrcp.pop %v2409
      %v2458 = vrcp.pop %v2412
      %v2459 = vrcp.pop %v2415
      %v2460 = vrcp.pop %v2418
      %v2461 = vrcp.pop %v2421
      %v2462 = vrcp.pop %v2424
      %v2463 = vrcp.pop %v2427
      %v2464 = vrcp.pop %v2430
      %v2465 = vrcp.pop %v2433
      %v2466 = vmul.f32 %v2275, %v2434
      %v2467 = vmul.f32 %v2277, %v2435
      %v2468 = vmul.f32 %v2279, %v2436
      %v2469 = vmul.f32 %v2281, %v2437
      %v2470 = vmul.f32 %v2283, %v2438
      %v2471 = vmul.f32 %v2285, %v2439
      %v2472 = vmul.f32 %v2287, %v2440
      %v2473 = vmul.f32 %v2289, %v2441
      %v2474 = vmul.f32 %v2291, %v2442
      %v2475 = vmul.f32 %v2293, %v2443
      %v2476 = vmul.f32 %v2295, %v2444
      %v2477 = vmul.f32 %v2297, %v2445
      %v2478 = vmul.f32 %v2299, %v2446
      %v2479 = vmul.f32 %v2301, %v2447
      %v2480 = vmul.f32 %v2303, %v2448
      %v2481 = vmul.f32 %v2305, %v2449
      %v2482 = vmul.f32 %v2307, %v2450
      %v2483 = vmul.f32 %v2309, %v2451
      %v2484 = vmul.f32 %v2311, %v2452
      %v2485 = vmul.f32 %v2313, %v2453
      %v2486 = vmul.f32 %v2315, %v2454
      %v2487 = vmul.f32 %v2317, %v2455
      %v2488 = vmul.f32 %v2319, %v2456
      %v2489 = vmul.f32 %v2321, %v2457
      %v2490 = vmul.f32 %v2323, %v2458
      %v2491 = vmul.f32 %v2325, %v2459
      %v2492 = vmul.f32 %v2327, %v2460
      %v2493 = vmul.f32 %v2329, %v2461
      %v2494 = vmul.f32 %v2331, %v2462
      %v2495 = vmul.f32 %v2333, %v2463
      %v2496 = vmul.f32 %v2335, %v2464
      %v2497 = vmul.f32 %v2337, %v2465
      %vm2498 = vcmp.ge.s32.totalorder %v1239, 8
      %vm2499 = vcmp.lt.s32.totalorder %v1239, 16
      %vm2500 = vmand %vm2498, %vm2499
      %v2501 = vsel %vm2500, 1, 0
      %vm2502 = vcmp.eq.s32.totalorder %v2501, 1
      %v2503 = vsel %vm2502, %v1278, 0.0
      %v2504 = vsel %vm2502, %v1280, 0.0
      %v2505 = vsel %vm2502, %v1282, 0.0
      %v2506 = vsel %vm2502, %v1284, 0.0
      %v2507 = vsel %vm2502, %v1286, 0.0
      %v2508 = vsel %vm2502, %v1288, 0.0
      %v2509 = vsel %vm2502, %v1290, 0.0
      %v2510 = vsel %vm2502, %v1292, 0.0
      %v2511 = vsel %vm2502, %v1294, 0.0
      %v2512 = vsel %vm2502, %v1296, 0.0
      %v2513 = vsel %vm2502, %v1298, 0.0
      %v2514 = vsel %vm2502, %v1300, 0.0
      %v2515 = vsel %vm2502, %v1302, 0.0
      %v2516 = vsel %vm2502, %v1304, 0.0
      %v2517 = vsel %vm2502, %v1306, 0.0
      %v2518 = vsel %vm2502, %v1308, 0.0
      %v2519 = vsel %vm2502, %v1310, 0.0
      %v2520 = vsel %vm2502, %v1312, 0.0
      %v2521 = vsel %vm2502, %v1314, 0.0
      %v2522 = vsel %vm2502, %v1316, 0.0
      %v2523 = vsel %vm2502, %v1318, 0.0
      %v2524 = vsel %vm2502, %v1320, 0.0
      %v2525 = vsel %vm2502, %v1322, 0.0
      %v2526 = vsel %vm2502, %v1324, 0.0
      %v2527 = vsel %vm2502, %v1326, 0.0
      %v2528 = vsel %vm2502, %v1328, 0.0
      %v2529 = vsel %vm2502, %v1330, 0.0
      %v2530 = vsel %vm2502, %v1332, 0.0
      %v2531 = vsel %vm2502, %v1334, 0.0
      %v2532 = vsel %vm2502, %v1336, 0.0
      %v2533 = vsel %vm2502, %v1338, 0.0
      %v2534 = vsel %vm2502, %v1340, 0.0
      %v2535 = vsel %vm2502, %v1406, 0.0
      %v2536 = vsel %vm2502, %v1408, 0.0
      %v2537 = vsel %vm2502, %v1410, 0.0
      %v2538 = vsel %vm2502, %v1412, 0.0
      %v2539 = vsel %vm2502, %v1414, 0.0
      %v2540 = vsel %vm2502, %v1416, 0.0
      %v2541 = vsel %vm2502, %v1418, 0.0
      %v2542 = vsel %vm2502, %v1420, 0.0
      %v2543 = vsel %vm2502, %v1422, 0.0
      %v2544 = vsel %vm2502, %v1424, 0.0
      %v2545 = vsel %vm2502, %v1426, 0.0
      %v2546 = vsel %vm2502, %v1428, 0.0
      %v2547 = vsel %vm2502, %v1430, 0.0
      %v2548 = vsel %vm2502, %v1432, 0.0
      %v2549 = vsel %vm2502, %v1434, 0.0
      %v2550 = vsel %vm2502, %v1436, 0.0
      %v2551 = vsel %vm2502, %v1438, 0.0
      %v2552 = vsel %vm2502, %v1440, 0.0
      %v2553 = vsel %vm2502, %v1442, 0.0
      %v2554 = vsel %vm2502, %v1444, 0.0
      %v2555 = vsel %vm2502, %v1446, 0.0
      %v2556 = vsel %vm2502, %v1448, 0.0
      %v2557 = vsel %vm2502, %v1450, 0.0
      %v2558 = vsel %vm2502, %v1452, 0.0
      %v2559 = vsel %vm2502, %v1454, 0.0
      %v2560 = vsel %vm2502, %v1456, 0.0
      %v2561 = vsel %vm2502, %v1458, 0.0
      %v2562 = vsel %vm2502, %v1460, 0.0
      %v2563 = vsel %vm2502, %v1462, 0.0
      %v2564 = vsel %vm2502, %v1464, 0.0
      %v2565 = vsel %vm2502, %v1466, 0.0
      %v2566 = vsel %vm2502, %v1468, 0.0
      %v2568 = vsel %vm346, %v2503, 0
      %v2571 = vsel %vm346, %v2504, 0
      %v2574 = vsel %vm346, %v2505, 0
      %v2577 = vsel %vm346, %v2506, 0
      %v2580 = vsel %vm346, %v2507, 0
      %v2583 = vsel %vm346, %v2508, 0
      %v2586 = vsel %vm346, %v2509, 0
      %v2589 = vsel %vm346, %v2510, 0
      %2591 = vmatprep.subr.mxu0 0.0
      %2592 = vmatpush1.xpose.msra.mxu0 0.0
      %2593 = vmatprep.subr.mxu0 0.0
      %2594 = vmatpush1.xpose.msra.mxu0 0.0
      %2595 = vmatprep.subr.mxu0 0.0
      %2596 = vmatpush1.xpose.msra.mxu0 0.0
      %2597 = vmatprep.subr.mxu0 0.0
      %2598 = vmatpush1.xpose.msra.mxu0 0.0
      %2599 = vmatprep.subr.mxu0 0.0
      %2600 = vmatpush1.xpose.msra.mxu0 0.0
      %2601 = vmatprep.subr.mxu0 0.0
      %2602 = vmatpush1.xpose.msra.mxu0 0.0
      %2603 = vmatprep.subr.mxu0 0.0
      %2604 = vmatpush1.xpose.msra.mxu0 0.0
      %2605 = vmatprep.subr.mxu0 0.0
      %2606 = vmatpush1.xpose.msra.mxu0 0.0
      %2607 = vmatprep.subr.mxu0 0.0
      %2608 = vmatpush1.xpose.msra.mxu0 %v2589
      %2609 = vmatprep.subr.mxu0 0.0
      %2610 = vmatpush1.xpose.msra.mxu0 %v2586
      %2611 = vmatprep.subr.mxu0 0.0
      %2612 = vmatpush1.xpose.msra.mxu0 %v2583
      %2613 = vmatprep.subr.mxu0 0.0
      %2614 = vmatpush1.xpose.msra.mxu0 %v2580
      %2615 = vmatprep.subr.mxu0 0.0
      %2616 = vmatpush1.xpose.msra.mxu0 %v2577
      %2617 = vmatprep.subr.mxu0 0.0
      %2618 = vmatpush1.xpose.msra.mxu0 %v2574
      %2619 = vmatprep.subr.mxu0 0.0
      %2620 = vmatpush1.xpose.msra.mxu0 %v2571
      %2621 = vmatprep.subr.mxu0 0.0
      %2622 = vmatpush1.xpose.msra.mxu0 %v2568
      %2623 = vmatprep.subr.mxu0 0.0
      %2624 = vmatpush2.xpose.msra.mxu0 0.0
      %2625 = vmatprep.subr.mxu0 0.0
      %2626 = vmatpush2.xpose.msra.mxu0 0.0
      %2627 = vmatprep.subr.mxu0 0.0
      %2628 = vmatpush2.xpose.msra.mxu0 0.0
      %2629 = vmatprep.subr.mxu0 0.0
      %2630 = vmatpush2.xpose.msra.mxu0 0.0
      %2631 = vmatprep.subr.mxu0 0.0
      %2632 = vmatpush2.xpose.msra.mxu0 0.0
      %2633 = vmatprep.subr.mxu0 0.0
      %2634 = vmatpush2.xpose.msra.mxu0 0.0
      %2635 = vmatprep.subr.mxu0 0.0
      %2636 = vmatpush2.xpose.msra.mxu0 0.0
      %2637 = vmatprep.subr.mxu0 0.0
      %2638 = vmatpush2.xpose.msra.mxu0 0.0
      %2639 = vmatprep.subr.mxu0 0.0
      %2640 = vmatpush2.xpose.msra.mxu0 0.0
      %2641 = vmatprep.subr.mxu0 0.0
      %2642 = vmatpush2.xpose.msra.mxu0 0.0
      %2643 = vmatprep.subr.mxu0 0.0
      %2644 = vmatpush2.xpose.msra.mxu0 0.0
      %2645 = vmatprep.subr.mxu0 0.0
      %2646 = vmatpush2.xpose.msra.mxu0 0.0
      %2647 = vmatprep.subr.mxu0 0.0
      %2648 = vmatpush2.xpose.msra.mxu0 0.0
      %2649 = vmatprep.subr.mxu0 0.0
      %2650 = vmatpush2.xpose.msra.mxu0 0.0
      %2651 = vmatprep.subr.mxu0 0.0
      %2652 = vmatpush2.xpose.msra.mxu0 0.0
      %2653 = vmatprep.subr.mxu0 0.0
      %2654 = vmatpush2.xpose.msra.mxu0 0.0
      %2655 = vmatprep.mubr.f32.mxu0 0.0
      %2656 = vmatmul.mubr.f32.gmra.mxu0 %v1534
      %v2657 = vpop.f32.mrf.mxu0
      %v2658 = vadd.f32 %v1206, %v2657
      %v2659 = vpop.f32.mrf.mxu0
      %2660 = vmatprep.mubr.f32.mxu0 0.0
      %2661 = vmatmul.mubr.f32.gmra.mxu0 %v1537
      %v2662 = vpop.f32.mrf.mxu0
      %v2663 = vadd.f32 %v1207, %v2662
      %v2664 = vpop.f32.mrf.mxu0
      %2665 = vmatprep.mubr.f32.mxu0 0.0
      %2666 = vmatmul.mubr.f32.gmra.mxu0 %v1540
      %v2667 = vpop.f32.mrf.mxu0
      %v2668 = vadd.f32 %v1208, %v2667
      %v2669 = vpop.f32.mrf.mxu0
      %2670 = vmatprep.mubr.f32.mxu0 0.0
      %2671 = vmatmul.mubr.f32.gmra.mxu0 %v1543
      %v2672 = vpop.f32.mrf.mxu0
      %v2673 = vadd.f32 %v1209, %v2672
      %v2674 = vpop.f32.mrf.mxu0
      %2675 = vmatprep.mubr.f32.mxu0 0.0
      %2676 = vmatmul.mubr.f32.gmra.mxu0 %v1546
      %v2677 = vpop.f32.mrf.mxu0
      %v2678 = vadd.f32 %v1210, %v2677
      %v2679 = vpop.f32.mrf.mxu0
      %2680 = vmatprep.mubr.f32.mxu0 0.0
      %2681 = vmatmul.mubr.f32.gmra.mxu0 %v1549
      %v2682 = vpop.f32.mrf.mxu0
      %v2683 = vadd.f32 %v1211, %v2682
      %v2684 = vpop.f32.mrf.mxu0
      %2685 = vmatprep.mubr.f32.mxu0 0.0
      %2686 = vmatmul.mubr.f32.gmra.mxu0 %v1552
      %v2687 = vpop.f32.mrf.mxu0
      %v2688 = vadd.f32 %v1212, %v2687
      %v2689 = vpop.f32.mrf.mxu0
      %2690 = vmatprep.mubr.f32.mxu0 0.0
      %2691 = vmatmul.mubr.f32.gmra.mxu0 %v1555
      %v2692 = vpop.f32.mrf.mxu0
      %v2693 = vadd.f32 %v1213, %v2692
      %v2694 = vpop.f32.mrf.mxu0
      %2695 = vdwg.mxu0
      %v2697 = vsel %vm346, %v2511, 0
      %v2700 = vsel %vm346, %v2512, 0
      %v2703 = vsel %vm346, %v2513, 0
      %v2706 = vsel %vm346, %v2514, 0
      %v2709 = vsel %vm346, %v2515, 0
      %v2712 = vsel %vm346, %v2516, 0
      %v2715 = vsel %vm346, %v2517, 0
      %v2718 = vsel %vm346, %v2518, 0
      %2720 = vmatprep.subr.mxu0 0.0
      %2721 = vmatpush1.xpose.msra.mxu0 0.0
      %2722 = vmatprep.subr.mxu0 0.0
      %2723 = vmatpush1.xpose.msra.mxu0 0.0
      %2724 = vmatprep.subr.mxu0 0.0
      %2725 = vmatpush1.xpose.msra.mxu0 0.0
      %2726 = vmatprep.subr.mxu0 0.0
      %2727 = vmatpush1.xpose.msra.mxu0 0.0
      %2728 = vmatprep.subr.mxu0 0.0
      %2729 = vmatpush1.xpose.msra.mxu0 0.0
      %2730 = vmatprep.subr.mxu0 0.0
      %2731 = vmatpush1.xpose.msra.mxu0 0.0
      %2732 = vmatprep.subr.mxu0 0.0
      %2733 = vmatpush1.xpose.msra.mxu0 0.0
      %2734 = vmatprep.subr.mxu0 0.0
      %2735 = vmatpush1.xpose.msra.mxu0 0.0
      %2736 = vmatprep.subr.mxu0 0.0
      %2737 = vmatpush1.xpose.msra.mxu0 %v2718
      %2738 = vmatprep.subr.mxu0 0.0
      %2739 = vmatpush1.xpose.msra.mxu0 %v2715
      %2740 = vmatprep.subr.mxu0 0.0
      %2741 = vmatpush1.xpose.msra.mxu0 %v2712
      %2742 = vmatprep.subr.mxu0 0.0
      %2743 = vmatpush1.xpose.msra.mxu0 %v2709
      %2744 = vmatprep.subr.mxu0 0.0
      %2745 = vmatpush1.xpose.msra.mxu0 %v2706
      %2746 = vmatprep.subr.mxu0 0.0
      %2747 = vmatpush1.xpose.msra.mxu0 %v2703
      %2748 = vmatprep.subr.mxu0 0.0
      %2749 = vmatpush1.xpose.msra.mxu0 %v2700
      %2750 = vmatprep.subr.mxu0 0.0
      %2751 = vmatpush1.xpose.msra.mxu0 %v2697
      %2752 = vmatprep.subr.mxu0 0.0
      %2753 = vmatpush2.xpose.msra.mxu0 0.0
      %2754 = vmatprep.subr.mxu0 0.0
      %2755 = vmatpush2.xpose.msra.mxu0 0.0
      %2756 = vmatprep.subr.mxu0 0.0
      %2757 = vmatpush2.xpose.msra.mxu0 0.0
      %2758 = vmatprep.subr.mxu0 0.0
      %2759 = vmatpush2.xpose.msra.mxu0 0.0
      %2760 = vmatprep.subr.mxu0 0.0
      %2761 = vmatpush2.xpose.msra.mxu0 0.0
      %2762 = vmatprep.subr.mxu0 0.0
      %2763 = vmatpush2.xpose.msra.mxu0 0.0
      %2764 = vmatprep.subr.mxu0 0.0
      %2765 = vmatpush2.xpose.msra.mxu0 0.0
      %2766 = vmatprep.subr.mxu0 0.0
      %2767 = vmatpush2.xpose.msra.mxu0 0.0
      %2768 = vmatprep.subr.mxu0 0.0
      %2769 = vmatpush2.xpose.msra.mxu0 0.0
      %2770 = vmatprep.subr.mxu0 0.0
      %2771 = vmatpush2.xpose.msra.mxu0 0.0
      %2772 = vmatprep.subr.mxu0 0.0
      %2773 = vmatpush2.xpose.msra.mxu0 0.0
      %2774 = vmatprep.subr.mxu0 0.0
      %2775 = vmatpush2.xpose.msra.mxu0 0.0
      %2776 = vmatprep.subr.mxu0 0.0
      %2777 = vmatpush2.xpose.msra.mxu0 0.0
      %2778 = vmatprep.subr.mxu0 0.0
      %2779 = vmatpush2.xpose.msra.mxu0 0.0
      %2780 = vmatprep.subr.mxu0 0.0
      %2781 = vmatpush2.xpose.msra.mxu0 0.0
      %2782 = vmatprep.subr.mxu0 0.0
      %2783 = vmatpush2.xpose.msra.mxu0 0.0
      %2784 = vmatprep.mubr.f32.mxu0 0.0
      %2785 = vmatmul.mubr.f32.gmra.mxu0 %v1687
      %v2786 = vpop.f32.mrf.mxu0
      %v2787 = vadd.f32 %v1214, %v2786
      %v2788 = vpop.f32.mrf.mxu0
      %2789 = vmatprep.mubr.f32.mxu0 0.0
      %2790 = vmatmul.mubr.f32.gmra.mxu0 %v1690
      %v2791 = vpop.f32.mrf.mxu0
      %v2792 = vadd.f32 %v1215, %v2791
      %v2793 = vpop.f32.mrf.mxu0
      %2794 = vmatprep.mubr.f32.mxu0 0.0
      %2795 = vmatmul.mubr.f32.gmra.mxu0 %v1693
      %v2796 = vpop.f32.mrf.mxu0
      %v2797 = vadd.f32 %v1216, %v2796
      %v2798 = vpop.f32.mrf.mxu0
      %2799 = vmatprep.mubr.f32.mxu0 0.0
      %2800 = vmatmul.mubr.f32.gmra.mxu0 %v1696
      %v2801 = vpop.f32.mrf.mxu0
      %v2802 = vadd.f32 %v1217, %v2801
      %v2803 = vpop.f32.mrf.mxu0
      %2804 = vmatprep.mubr.f32.mxu0 0.0
      %2805 = vmatmul.mubr.f32.gmra.mxu0 %v1699
      %v2806 = vpop.f32.mrf.mxu0
      %v2807 = vadd.f32 %v1218, %v2806
      %v2808 = vpop.f32.mrf.mxu0
      %2809 = vmatprep.mubr.f32.mxu0 0.0
      %2810 = vmatmul.mubr.f32.gmra.mxu0 %v1702
      %v2811 = vpop.f32.mrf.mxu0
      %v2812 = vadd.f32 %v1219, %v2811
      %v2813 = vpop.f32.mrf.mxu0
      %2814 = vmatprep.mubr.f32.mxu0 0.0
      %2815 = vmatmul.mubr.f32.gmra.mxu0 %v1705
      %v2816 = vpop.f32.mrf.mxu0
      %v2817 = vadd.f32 %v1220, %v2816
      %v2818 = vpop.f32.mrf.mxu0
      %2819 = vmatprep.mubr.f32.mxu0 0.0
      %2820 = vmatmul.mubr.f32.gmra.mxu0 %v1708
      %v2821 = vpop.f32.mrf.mxu0
      %v2822 = vadd.f32 %v1221, %v2821
      %v2823 = vpop.f32.mrf.mxu0
      %2824 = vdwg.mxu0
      %v2826 = vsel %vm346, %v2519, 0
      %v2829 = vsel %vm346, %v2520, 0
      %v2832 = vsel %vm346, %v2521, 0
      %v2835 = vsel %vm346, %v2522, 0
      %v2838 = vsel %vm346, %v2523, 0
      %v2841 = vsel %vm346, %v2524, 0
      %v2844 = vsel %vm346, %v2525, 0
      %v2847 = vsel %vm346, %v2526, 0
      %2849 = vmatprep.subr.mxu0 0.0
      %2850 = vmatpush1.xpose.msra.mxu0 0.0
      %2851 = vmatprep.subr.mxu0 0.0
      %2852 = vmatpush1.xpose.msra.mxu0 0.0
      %2853 = vmatprep.subr.mxu0 0.0
      %2854 = vmatpush1.xpose.msra.mxu0 0.0
      %2855 = vmatprep.subr.mxu0 0.0
      %2856 = vmatpush1.xpose.msra.mxu0 0.0
      %2857 = vmatprep.subr.mxu0 0.0
      %2858 = vmatpush1.xpose.msra.mxu0 0.0
      %2859 = vmatprep.subr.mxu0 0.0
      %2860 = vmatpush1.xpose.msra.mxu0 0.0
      %2861 = vmatprep.subr.mxu0 0.0
      %2862 = vmatpush1.xpose.msra.mxu0 0.0
      %2863 = vmatprep.subr.mxu0 0.0
      %2864 = vmatpush1.xpose.msra.mxu0 0.0
      %2865 = vmatprep.subr.mxu0 0.0
      %2866 = vmatpush1.xpose.msra.mxu0 %v2847
      %2867 = vmatprep.subr.mxu0 0.0
      %2868 = vmatpush1.xpose.msra.mxu0 %v2844
      %2869 = vmatprep.subr.mxu0 0.0
      %2870 = vmatpush1.xpose.msra.mxu0 %v2841
      %2871 = vmatprep.subr.mxu0 0.0
      %2872 = vmatpush1.xpose.msra.mxu0 %v2838
      %2873 = vmatprep.subr.mxu0 0.0
      %2874 = vmatpush1.xpose.msra.mxu0 %v2835
      %2875 = vmatprep.subr.mxu0 0.0
      %2876 = vmatpush1.xpose.msra.mxu0 %v2832
      %2877 = vmatprep.subr.mxu0 0.0
      %2878 = vmatpush1.xpose.msra.mxu0 %v2829
      %2879 = vmatprep.subr.mxu0 0.0
      %2880 = vmatpush1.xpose.msra.mxu0 %v2826
      %2881 = vmatprep.subr.mxu0 0.0
      %2882 = vmatpush2.xpose.msra.mxu0 0.0
      %2883 = vmatprep.subr.mxu0 0.0
      %2884 = vmatpush2.xpose.msra.mxu0 0.0
      %2885 = vmatprep.subr.mxu0 0.0
      %2886 = vmatpush2.xpose.msra.mxu0 0.0
      %2887 = vmatprep.subr.mxu0 0.0
      %2888 = vmatpush2.xpose.msra.mxu0 0.0
      %2889 = vmatprep.subr.mxu0 0.0
      %2890 = vmatpush2.xpose.msra.mxu0 0.0
      %2891 = vmatprep.subr.mxu0 0.0
      %2892 = vmatpush2.xpose.msra.mxu0 0.0
      %2893 = vmatprep.subr.mxu0 0.0
      %2894 = vmatpush2.xpose.msra.mxu0 0.0
      %2895 = vmatprep.subr.mxu0 0.0
      %2896 = vmatpush2.xpose.msra.mxu0 0.0
      %2897 = vmatprep.subr.mxu0 0.0
      %2898 = vmatpush2.xpose.msra.mxu0 0.0
      %2899 = vmatprep.subr.mxu0 0.0
      %2900 = vmatpush2.xpose.msra.mxu0 0.0
      %2901 = vmatprep.subr.mxu0 0.0
      %2902 = vmatpush2.xpose.msra.mxu0 0.0
      %2903 = vmatprep.subr.mxu0 0.0
      %2904 = vmatpush2.xpose.msra.mxu0 0.0
      %2905 = vmatprep.subr.mxu0 0.0
      %2906 = vmatpush2.xpose.msra.mxu0 0.0
      %2907 = vmatprep.subr.mxu0 0.0
      %2908 = vmatpush2.xpose.msra.mxu0 0.0
      %2909 = vmatprep.subr.mxu0 0.0
      %2910 = vmatpush2.xpose.msra.mxu0 0.0
      %2911 = vmatprep.subr.mxu0 0.0
      %2912 = vmatpush2.xpose.msra.mxu0 0.0
      %2913 = vmatprep.mubr.f32.mxu0 0.0
      %2914 = vmatmul.mubr.f32.gmra.mxu0 %v1840
      %v2915 = vpop.f32.mrf.mxu0
      %v2916 = vadd.f32 %v1222, %v2915
      %v2917 = vpop.f32.mrf.mxu0
      %2918 = vmatprep.mubr.f32.mxu0 0.0
      %2919 = vmatmul.mubr.f32.gmra.mxu0 %v1843
      %v2920 = vpop.f32.mrf.mxu0
      %v2921 = vadd.f32 %v1223, %v2920
      %v2922 = vpop.f32.mrf.mxu0
      %2923 = vmatprep.mubr.f32.mxu0 0.0
      %2924 = vmatmul.mubr.f32.gmra.mxu0 %v1846
      %v2925 = vpop.f32.mrf.mxu0
      %v2926 = vadd.f32 %v1224, %v2925
      %v2927 = vpop.f32.mrf.mxu0
      %2928 = vmatprep.mubr.f32.mxu0 0.0
      %2929 = vmatmul.mubr.f32.gmra.mxu0 %v1849
      %v2930 = vpop.f32.mrf.mxu0
      %v2931 = vadd.f32 %v1225, %v2930
      %v2932 = vpop.f32.mrf.mxu0
      %2933 = vmatprep.mubr.f32.mxu0 0.0
      %2934 = vmatmul.mubr.f32.gmra.mxu0 %v1852
      %v2935 = vpop.f32.mrf.mxu0
      %v2936 = vadd.f32 %v1226, %v2935
      %v2937 = vpop.f32.mrf.mxu0
      %2938 = vmatprep.mubr.f32.mxu0 0.0
      %2939 = vmatmul.mubr.f32.gmra.mxu0 %v1855
      %v2940 = vpop.f32.mrf.mxu0
      %v2941 = vadd.f32 %v1227, %v2940
      %v2942 = vpop.f32.mrf.mxu0
      %2943 = vmatprep.mubr.f32.mxu0 0.0
      %2944 = vmatmul.mubr.f32.gmra.mxu0 %v1858
      %v2945 = vpop.f32.mrf.mxu0
      %v2946 = vadd.f32 %v1228, %v2945
      %v2947 = vpop.f32.mrf.mxu0
      %2948 = vmatprep.mubr.f32.mxu0 0.0
      %2949 = vmatmul.mubr.f32.gmra.mxu0 %v1861
      %v2950 = vpop.f32.mrf.mxu0
      %v2951 = vadd.f32 %v1229, %v2950
      %v2952 = vpop.f32.mrf.mxu0
      %2953 = vdwg.mxu0
      %v2955 = vsel %vm346, %v2527, 0
      %v2958 = vsel %vm346, %v2528, 0
      %v2961 = vsel %vm346, %v2529, 0
      %v2964 = vsel %vm346, %v2530, 0
      %v2967 = vsel %vm346, %v2531, 0
      %v2970 = vsel %vm346, %v2532, 0
      %v2973 = vsel %vm346, %v2533, 0
      %v2976 = vsel %vm346, %v2534, 0
      %2978 = vmatprep.subr.mxu0 0.0
      %2979 = vmatpush1.xpose.msra.mxu0 0.0
      %2980 = vmatprep.subr.mxu0 0.0
      %2981 = vmatpush1.xpose.msra.mxu0 0.0
      %2982 = vmatprep.subr.mxu0 0.0
      %2983 = vmatpush1.xpose.msra.mxu0 0.0
      %2984 = vmatprep.subr.mxu0 0.0
      %2985 = vmatpush1.xpose.msra.mxu0 0.0
      %2986 = vmatprep.subr.mxu0 0.0
      %2987 = vmatpush1.xpose.msra.mxu0 0.0
      %2988 = vmatprep.subr.mxu0 0.0
      %2989 = vmatpush1.xpose.msra.mxu0 0.0
      %2990 = vmatprep.subr.mxu0 0.0
      %2991 = vmatpush1.xpose.msra.mxu0 0.0
      %2992 = vmatprep.subr.mxu0 0.0
      %2993 = vmatpush1.xpose.msra.mxu0 0.0
      %2994 = vmatprep.subr.mxu0 0.0
      %2995 = vmatpush1.xpose.msra.mxu0 %v2976
      %2996 = vmatprep.subr.mxu0 0.0
      %2997 = vmatpush1.xpose.msra.mxu0 %v2973
      %2998 = vmatprep.subr.mxu0 0.0
      %2999 = vmatpush1.xpose.msra.mxu0 %v2970
      %3000 = vmatprep.subr.mxu0 0.0
      %3001 = vmatpush1.xpose.msra.mxu0 %v2967
      %3002 = vmatprep.subr.mxu0 0.0
      %3003 = vmatpush1.xpose.msra.mxu0 %v2964
      %3004 = vmatprep.subr.mxu0 0.0
      %3005 = vmatpush1.xpose.msra.mxu0 %v2961
      %3006 = vmatprep.subr.mxu0 0.0
      %3007 = vmatpush1.xpose.msra.mxu0 %v2958
      %3008 = vmatprep.subr.mxu0 0.0
      %3009 = vmatpush1.xpose.msra.mxu0 %v2955
      %3010 = vmatprep.subr.mxu0 0.0
      %3011 = vmatpush2.xpose.msra.mxu0 0.0
      %3012 = vmatprep.subr.mxu0 0.0
      %3013 = vmatpush2.xpose.msra.mxu0 0.0
      %3014 = vmatprep.subr.mxu0 0.0
      %3015 = vmatpush2.xpose.msra.mxu0 0.0
      %3016 = vmatprep.subr.mxu0 0.0
      %3017 = vmatpush2.xpose.msra.mxu0 0.0
      %3018 = vmatprep.subr.mxu0 0.0
      %3019 = vmatpush2.xpose.msra.mxu0 0.0
      %3020 = vmatprep.subr.mxu0 0.0
      %3021 = vmatpush2.xpose.msra.mxu0 0.0
      %3022 = vmatprep.subr.mxu0 0.0
      %3023 = vmatpush2.xpose.msra.mxu0 0.0
      %3024 = vmatprep.subr.mxu0 0.0
      %3025 = vmatpush2.xpose.msra.mxu0 0.0
      %3026 = vmatprep.subr.mxu0 0.0
      %3027 = vmatpush2.xpose.msra.mxu0 0.0
      %3028 = vmatprep.subr.mxu0 0.0
      %3029 = vmatpush2.xpose.msra.mxu0 0.0
      %3030 = vmatprep.subr.mxu0 0.0
      %3031 = vmatpush2.xpose.msra.mxu0 0.0
      %3032 = vmatprep.subr.mxu0 0.0
      %3033 = vmatpush2.xpose.msra.mxu0 0.0
      %3034 = vmatprep.subr.mxu0 0.0
      %3035 = vmatpush2.xpose.msra.mxu0 0.0
      %3036 = vmatprep.subr.mxu0 0.0
      %3037 = vmatpush2.xpose.msra.mxu0 0.0
      %3038 = vmatprep.subr.mxu0 0.0
      %3039 = vmatpush2.xpose.msra.mxu0 0.0
      %3040 = vmatprep.subr.mxu0 0.0
      %3041 = vmatpush2.xpose.msra.mxu0 0.0
      %3042 = vmatprep.mubr.f32.mxu0 0.0
      %3043 = vmatmul.mubr.f32.gmra.mxu0 %v1993
      %v3044 = vpop.f32.mrf.mxu0
      %v3045 = vadd.f32 %v1230, %v3044
      %v3046 = vpop.f32.mrf.mxu0
      %3047 = vmatprep.mubr.f32.mxu0 0.0
      %3048 = vmatmul.mubr.f32.gmra.mxu0 %v1996
      %v3049 = vpop.f32.mrf.mxu0
      %v3050 = vadd.f32 %v1231, %v3049
      %v3051 = vpop.f32.mrf.mxu0
      %3052 = vmatprep.mubr.f32.mxu0 0.0
      %3053 = vmatmul.mubr.f32.gmra.mxu0 %v1999
      %v3054 = vpop.f32.mrf.mxu0
      %v3055 = vadd.f32 %v1232, %v3054
      %v3056 = vpop.f32.mrf.mxu0
      %3057 = vmatprep.mubr.f32.mxu0 0.0
      %3058 = vmatmul.mubr.f32.gmra.mxu0 %v2002
      %v3059 = vpop.f32.mrf.mxu0
      %v3060 = vadd.f32 %v1233, %v3059
      %v3061 = vpop.f32.mrf.mxu0
      %3062 = vmatprep.mubr.f32.mxu0 0.0
      %3063 = vmatmul.mubr.f32.gmra.mxu0 %v2005
      %v3064 = vpop.f32.mrf.mxu0
      %v3065 = vadd.f32 %v1234, %v3064
      %v3066 = vpop.f32.mrf.mxu0
      %3067 = vmatprep.mubr.f32.mxu0 0.0
      %3068 = vmatmul.mubr.f32.gmra.mxu0 %v2008
      %v3069 = vpop.f32.mrf.mxu0
      %v3070 = vadd.f32 %v1235, %v3069
      %v3071 = vpop.f32.mrf.mxu0
      %3072 = vmatprep.mubr.f32.mxu0 0.0
      %3073 = vmatmul.mubr.f32.gmra.mxu0 %v2011
      %v3074 = vpop.f32.mrf.mxu0
      %v3075 = vadd.f32 %v1236, %v3074
      %v3076 = vpop.f32.mrf.mxu0
      %3077 = vmatprep.mubr.f32.mxu0 0.0
      %3078 = vmatmul.mubr.f32.gmra.mxu0 %v2014
      %v3079 = vpop.f32.mrf.mxu0
      %v3080 = vadd.f32 %v1237, %v3079
      %v3081 = vpop.f32.mrf.mxu0
      %3082 = vdwg.mxu0
      %v3083 = vsel %vm2145, %v2658, -inf
      %3084 = vmax.xlane.f32.xlu0 %v3083
      %v3085 = vpop.xlane.xlu0 %3084
      %v3086 = vsel %vm2145, %v2663, -inf
      %3087 = vmax.xlane.f32.xlu0 %v3086
      %v3088 = vpop.xlane.xlu0 %3087
      %v3089 = vsel %vm2145, %v2668, -inf
      %3090 = vmax.xlane.f32.xlu0 %v3089
      %v3091 = vpop.xlane.xlu0 %3090
      %v3092 = vsel %vm2145, %v2673, -inf
      %3093 = vmax.xlane.f32.xlu0 %v3092
      %v3094 = vpop.xlane.xlu0 %3093
      %v3095 = vsel %vm2145, %v2678, -inf
      %3096 = vmax.xlane.f32.xlu0 %v3095
      %v3097 = vpop.xlane.xlu0 %3096
      %v3098 = vsel %vm2145, %v2683, -inf
      %3099 = vmax.xlane.f32.xlu0 %v3098
      %v3100 = vpop.xlane.xlu0 %3099
      %v3101 = vsel %vm2145, %v2688, -inf
      %3102 = vmax.xlane.f32.xlu0 %v3101
      %v3103 = vpop.xlane.xlu0 %3102
      %v3104 = vsel %vm2145, %v2693, -inf
      %3105 = vmax.xlane.f32.xlu0 %v3104
      %v3106 = vpop.xlane.xlu0 %3105
      %v3107 = vsel %vm2145, %v2787, -inf
      %3108 = vmax.xlane.f32.xlu0 %v3107
      %v3109 = vpop.xlane.xlu0 %3108
      %v3110 = vsel %vm2145, %v2792, -inf
      %3111 = vmax.xlane.f32.xlu0 %v3110
      %v3112 = vpop.xlane.xlu0 %3111
      %v3113 = vsel %vm2145, %v2797, -inf
      %3114 = vmax.xlane.f32.xlu0 %v3113
      %v3115 = vpop.xlane.xlu0 %3114
      %v3116 = vsel %vm2145, %v2802, -inf
      %3117 = vmax.xlane.f32.xlu0 %v3116
      %v3118 = vpop.xlane.xlu0 %3117
      %v3119 = vsel %vm2145, %v2807, -inf
      %3120 = vmax.xlane.f32.xlu0 %v3119
      %v3121 = vpop.xlane.xlu0 %3120
      %v3122 = vsel %vm2145, %v2812, -inf
      %3123 = vmax.xlane.f32.xlu0 %v3122
      %v3124 = vpop.xlane.xlu0 %3123
      %v3125 = vsel %vm2145, %v2817, -inf
      %3126 = vmax.xlane.f32.xlu0 %v3125
      %v3127 = vpop.xlane.xlu0 %3126
      %v3128 = vsel %vm2145, %v2822, -inf
      %3129 = vmax.xlane.f32.xlu0 %v3128
      %v3130 = vpop.xlane.xlu0 %3129
      %v3131 = vsel %vm2145, %v2916, -inf
      %3132 = vmax.xlane.f32.xlu0 %v3131
      %v3133 = vpop.xlane.xlu0 %3132
      %v3134 = vsel %vm2145, %v2921, -inf
      %3135 = vmax.xlane.f32.xlu0 %v3134
      %v3136 = vpop.xlane.xlu0 %3135
      %v3137 = vsel %vm2145, %v2926, -inf
      %3138 = vmax.xlane.f32.xlu0 %v3137
      %v3139 = vpop.xlane.xlu0 %3138
      %v3140 = vsel %vm2145, %v2931, -inf
      %3141 = vmax.xlane.f32.xlu0 %v3140
      %v3142 = vpop.xlane.xlu0 %3141
      %v3143 = vsel %vm2145, %v2936, -inf
      %3144 = vmax.xlane.f32.xlu0 %v3143
      %v3145 = vpop.xlane.xlu0 %3144
      %v3146 = vsel %vm2145, %v2941, -inf
      %3147 = vmax.xlane.f32.xlu0 %v3146
      %v3148 = vpop.xlane.xlu0 %3147
      %v3149 = vsel %vm2145, %v2946, -inf
      %3150 = vmax.xlane.f32.xlu0 %v3149
      %v3151 = vpop.xlane.xlu0 %3150
      %v3152 = vsel %vm2145, %v2951, -inf
      %3153 = vmax.xlane.f32.xlu0 %v3152
      %v3154 = vpop.xlane.xlu0 %3153
      %v3155 = vsel %vm2145, %v3045, -inf
      %3156 = vmax.xlane.f32.xlu0 %v3155
      %v3157 = vpop.xlane.xlu0 %3156
      %v3158 = vsel %vm2145, %v3050, -inf
      %3159 = vmax.xlane.f32.xlu0 %v3158
      %v3160 = vpop.xlane.xlu0 %3159
      %v3161 = vsel %vm2145, %v3055, -inf
      %3162 = vmax.xlane.f32.xlu0 %v3161
      %v3163 = vpop.xlane.xlu0 %3162
      %v3164 = vsel %vm2145, %v3060, -inf
      %3165 = vmax.xlane.f32.xlu0 %v3164
      %v3166 = vpop.xlane.xlu0 %3165
      %v3167 = vsel %vm2145, %v3065, -inf
      %3168 = vmax.xlane.f32.xlu0 %v3167
      %v3169 = vpop.xlane.xlu0 %3168
      %v3170 = vsel %vm2145, %v3070, -inf
      %3171 = vmax.xlane.f32.xlu0 %v3170
      %v3172 = vpop.xlane.xlu0 %3171
      %v3173 = vsel %vm2145, %v3075, -inf
      %3174 = vmax.xlane.f32.xlu0 %v3173
      %v3175 = vpop.xlane.xlu0 %3174
      %v3176 = vsel %vm2145, %v3080, -inf
      %3177 = vmax.xlane.f32.xlu0 %v3176
      %v3178 = vpop.xlane.xlu0 %3177
      %v3179 = vsub.f32 %v2658, %v3085
      %v3180 = vsub.f32 %v2663, %v3088
      %v3181 = vsub.f32 %v2668, %v3091
      %v3182 = vsub.f32 %v2673, %v3094
      %v3183 = vsub.f32 %v2678, %v3097
      %v3184 = vsub.f32 %v2683, %v3100
      %v3185 = vsub.f32 %v2688, %v3103
      %v3186 = vsub.f32 %v2693, %v3106
      %v3187 = vsub.f32 %v2787, %v3109
      %v3188 = vsub.f32 %v2792, %v3112
      %v3189 = vsub.f32 %v2797, %v3115
      %v3190 = vsub.f32 %v2802, %v3118
      %v3191 = vsub.f32 %v2807, %v3121
      %v3192 = vsub.f32 %v2812, %v3124
      %v3193 = vsub.f32 %v2817, %v3127
      %v3194 = vsub.f32 %v2822, %v3130
      %v3195 = vsub.f32 %v2916, %v3133
      %v3196 = vsub.f32 %v2921, %v3136
      %v3197 = vsub.f32 %v2926, %v3139
      %v3198 = vsub.f32 %v2931, %v3142
      %v3199 = vsub.f32 %v2936, %v3145
      %v3200 = vsub.f32 %v2941, %v3148
      %v3201 = vsub.f32 %v2946, %v3151
      %v3202 = vsub.f32 %v2951, %v3154
      %v3203 = vsub.f32 %v3045, %v3157
      %v3204 = vsub.f32 %v3050, %v3160
      %v3205 = vsub.f32 %v3055, %v3163
      %v3206 = vsub.f32 %v3060, %v3166
      %v3207 = vsub.f32 %v3065, %v3169
      %v3208 = vsub.f32 %v3070, %v3172
      %v3209 = vsub.f32 %v3075, %v3175
      %v3210 = vsub.f32 %v3080, %v3178
      %v3211 = vmul.f32 %v3179, 1.442695
      %v3212 = vpow.pop %v3211
      %v3213 = vmul.f32 %v3180, 1.442695
      %v3214 = vpow.pop %v3213
      %v3215 = vmul.f32 %v3181, 1.442695
      %v3216 = vpow.pop %v3215
      %v3217 = vmul.f32 %v3182, 1.442695
      %v3218 = vpow.pop %v3217
      %v3219 = vmul.f32 %v3183, 1.442695
      %v3220 = vpow.pop %v3219
      %v3221 = vmul.f32 %v3184, 1.442695
      %v3222 = vpow.pop %v3221
      %v3223 = vmul.f32 %v3185, 1.442695
      %v3224 = vpow.pop %v3223
      %v3225 = vmul.f32 %v3186, 1.442695
      %v3226 = vpow.pop %v3225
      %v3227 = vmul.f32 %v3187, 1.442695
      %v3228 = vpow.pop %v3227
      %v3229 = vmul.f32 %v3188, 1.442695
      %v3230 = vpow.pop %v3229
      %v3231 = vmul.f32 %v3189, 1.442695
      %v3232 = vpow.pop %v3231
      %v3233 = vmul.f32 %v3190, 1.442695
      %v3234 = vpow.pop %v3233
      %v3235 = vmul.f32 %v3191, 1.442695
      %v3236 = vpow.pop %v3235
      %v3237 = vmul.f32 %v3192, 1.442695
      %v3238 = vpow.pop %v3237
      %v3239 = vmul.f32 %v3193, 1.442695
      %v3240 = vpow.pop %v3239
      %v3241 = vmul.f32 %v3194, 1.442695
      %v3242 = vpow.pop %v3241
      %v3243 = vmul.f32 %v3195, 1.442695
      %v3244 = vpow.pop %v3243
      %v3245 = vmul.f32 %v3196, 1.442695
      %v3246 = vpow.pop %v3245
      %v3247 = vmul.f32 %v3197, 1.442695
      %v3248 = vpow.pop %v3247
      %v3249 = vmul.f32 %v3198, 1.442695
      %v3250 = vpow.pop %v3249
      %v3251 = vmul.f32 %v3199, 1.442695
      %v3252 = vpow.pop %v3251
      %v3253 = vmul.f32 %v3200, 1.442695
      %v3254 = vpow.pop %v3253
      %v3255 = vmul.f32 %v3201, 1.442695
      %v3256 = vpow.pop %v3255
      %v3257 = vmul.f32 %v3202, 1.442695
      %v3258 = vpow.pop %v3257
      %v3259 = vmul.f32 %v3203, 1.442695
      %v3260 = vpow.pop %v3259
      %v3261 = vmul.f32 %v3204, 1.442695
      %v3262 = vpow.pop %v3261
      %v3263 = vmul.f32 %v3205, 1.442695
      %v3264 = vpow.pop %v3263
      %v3265 = vmul.f32 %v3206, 1.442695
      %v3266 = vpow.pop %v3265
      %v3267 = vmul.f32 %v3207, 1.442695
      %v3268 = vpow.pop %v3267
      %v3269 = vmul.f32 %v3208, 1.442695
      %v3270 = vpow.pop %v3269
      %v3271 = vmul.f32 %v3209, 1.442695
      %v3272 = vpow.pop %v3271
      %v3273 = vmul.f32 %v3210, 1.442695
      %v3274 = vpow.pop %v3273
      %v3275 = vsel %vm2145, %v3212, 0.0
      %3276 = vadd.xlane.f32.xlu0 %v3275
      %v3277 = vpop.xlane.xlu0 %3276
      %v3278 = vsel %vm2145, %v3214, 0.0
      %3279 = vadd.xlane.f32.xlu0 %v3278
      %v3280 = vpop.xlane.xlu0 %3279
      %v3281 = vsel %vm2145, %v3216, 0.0
      %3282 = vadd.xlane.f32.xlu0 %v3281
      %v3283 = vpop.xlane.xlu0 %3282
      %v3284 = vsel %vm2145, %v3218, 0.0
      %3285 = vadd.xlane.f32.xlu0 %v3284
      %v3286 = vpop.xlane.xlu0 %3285
      %v3287 = vsel %vm2145, %v3220, 0.0
      %3288 = vadd.xlane.f32.xlu0 %v3287
      %v3289 = vpop.xlane.xlu0 %3288
      %v3290 = vsel %vm2145, %v3222, 0.0
      %3291 = vadd.xlane.f32.xlu0 %v3290
      %v3292 = vpop.xlane.xlu0 %3291
      %v3293 = vsel %vm2145, %v3224, 0.0
      %3294 = vadd.xlane.f32.xlu0 %v3293
      %v3295 = vpop.xlane.xlu0 %3294
      %v3296 = vsel %vm2145, %v3226, 0.0
      %3297 = vadd.xlane.f32.xlu0 %v3296
      %v3298 = vpop.xlane.xlu0 %3297
      %v3299 = vsel %vm2145, %v3228, 0.0
      %3300 = vadd.xlane.f32.xlu0 %v3299
      %v3301 = vpop.xlane.xlu0 %3300
      %v3302 = vsel %vm2145, %v3230, 0.0
      %3303 = vadd.xlane.f32.xlu0 %v3302
      %v3304 = vpop.xlane.xlu0 %3303
      %v3305 = vsel %vm2145, %v3232, 0.0
      %3306 = vadd.xlane.f32.xlu0 %v3305
      %v3307 = vpop.xlane.xlu0 %3306
      %v3308 = vsel %vm2145, %v3234, 0.0
      %3309 = vadd.xlane.f32.xlu0 %v3308
      %v3310 = vpop.xlane.xlu0 %3309
      %v3311 = vsel %vm2145, %v3236, 0.0
      %3312 = vadd.xlane.f32.xlu0 %v3311
      %v3313 = vpop.xlane.xlu0 %3312
      %v3314 = vsel %vm2145, %v3238, 0.0
      %3315 = vadd.xlane.f32.xlu0 %v3314
      %v3316 = vpop.xlane.xlu0 %3315
      %v3317 = vsel %vm2145, %v3240, 0.0
      %3318 = vadd.xlane.f32.xlu0 %v3317
      %v3319 = vpop.xlane.xlu0 %3318
      %v3320 = vsel %vm2145, %v3242, 0.0
      %3321 = vadd.xlane.f32.xlu0 %v3320
      %v3322 = vpop.xlane.xlu0 %3321
      %v3323 = vsel %vm2145, %v3244, 0.0
      %3324 = vadd.xlane.f32.xlu0 %v3323
      %v3325 = vpop.xlane.xlu0 %3324
      %v3326 = vsel %vm2145, %v3246, 0.0
      %3327 = vadd.xlane.f32.xlu0 %v3326
      %v3328 = vpop.xlane.xlu0 %3327
      %v3329 = vsel %vm2145, %v3248, 0.0
      %3330 = vadd.xlane.f32.xlu0 %v3329
      %v3331 = vpop.xlane.xlu0 %3330
      %v3332 = vsel %vm2145, %v3250, 0.0
      %3333 = vadd.xlane.f32.xlu0 %v3332
      %v3334 = vpop.xlane.xlu0 %3333
      %v3335 = vsel %vm2145, %v3252, 0.0
      %3336 = vadd.xlane.f32.xlu0 %v3335
      %v3337 = vpop.xlane.xlu0 %3336
      %v3338 = vsel %vm2145, %v3254, 0.0
      %3339 = vadd.xlane.f32.xlu0 %v3338
      %v3340 = vpop.xlane.xlu0 %3339
      %v3341 = vsel %vm2145, %v3256, 0.0
      %3342 = vadd.xlane.f32.xlu0 %v3341
      %v3343 = vpop.xlane.xlu0 %3342
      %v3344 = vsel %vm2145, %v3258, 0.0
      %3345 = vadd.xlane.f32.xlu0 %v3344
      %v3346 = vpop.xlane.xlu0 %3345
      %v3347 = vsel %vm2145, %v3260, 0.0
      %3348 = vadd.xlane.f32.xlu0 %v3347
      %v3349 = vpop.xlane.xlu0 %3348
      %v3350 = vsel %vm2145, %v3262, 0.0
      %3351 = vadd.xlane.f32.xlu0 %v3350
      %v3352 = vpop.xlane.xlu0 %3351
      %v3353 = vsel %vm2145, %v3264, 0.0
      %3354 = vadd.xlane.f32.xlu0 %v3353
      %v3355 = vpop.xlane.xlu0 %3354
      %v3356 = vsel %vm2145, %v3266, 0.0
      %3357 = vadd.xlane.f32.xlu0 %v3356
      %v3358 = vpop.xlane.xlu0 %3357
      %v3359 = vsel %vm2145, %v3268, 0.0
      %3360 = vadd.xlane.f32.xlu0 %v3359
      %v3361 = vpop.xlane.xlu0 %3360
      %v3362 = vsel %vm2145, %v3270, 0.0
      %3363 = vadd.xlane.f32.xlu0 %v3362
      %v3364 = vpop.xlane.xlu0 %3363
      %v3365 = vsel %vm2145, %v3272, 0.0
      %3366 = vadd.xlane.f32.xlu0 %v3365
      %v3367 = vpop.xlane.xlu0 %3366
      %v3368 = vsel %vm2145, %v3274, 0.0
      %3369 = vadd.xlane.f32.xlu0 %v3368
      %v3370 = vpop.xlane.xlu0 %3369
      %v3371 = vrcp.pop %v3277
      %v3372 = vrcp.pop %v3280
      %v3373 = vrcp.pop %v3283
      %v3374 = vrcp.pop %v3286
      %v3375 = vrcp.pop %v3289
      %v3376 = vrcp.pop %v3292
      %v3377 = vrcp.pop %v3295
      %v3378 = vrcp.pop %v3298
      %v3379 = vrcp.pop %v3301
      %v3380 = vrcp.pop %v3304
      %v3381 = vrcp.pop %v3307
      %v3382 = vrcp.pop %v3310
      %v3383 = vrcp.pop %v3313
      %v3384 = vrcp.pop %v3316
      %v3385 = vrcp.pop %v3319
      %v3386 = vrcp.pop %v3322
      %v3387 = vrcp.pop %v3325
      %v3388 = vrcp.pop %v3328
      %v3389 = vrcp.pop %v3331
      %v3390 = vrcp.pop %v3334
      %v3391 = vrcp.pop %v3337
      %v3392 = vrcp.pop %v3340
      %v3393 = vrcp.pop %v3343
      %v3394 = vrcp.pop %v3346
      %v3395 = vrcp.pop %v3349
      %v3396 = vrcp.pop %v3352
      %v3397 = vrcp.pop %v3355
      %v3398 = vrcp.pop %v3358
      %v3399 = vrcp.pop %v3361
      %v3400 = vrcp.pop %v3364
      %v3401 = vrcp.pop %v3367
      %v3402 = vrcp.pop %v3370
      %v3403 = vmul.f32 %v3212, %v3371
      %v3404 = vmul.f32 %v3214, %v3372
      %v3405 = vmul.f32 %v3216, %v3373
      %v3406 = vmul.f32 %v3218, %v3374
      %v3407 = vmul.f32 %v3220, %v3375
      %v3408 = vmul.f32 %v3222, %v3376
      %v3409 = vmul.f32 %v3224, %v3377
      %v3410 = vmul.f32 %v3226, %v3378
      %v3411 = vmul.f32 %v3228, %v3379
      %v3412 = vmul.f32 %v3230, %v3380
      %v3413 = vmul.f32 %v3232, %v3381
      %v3414 = vmul.f32 %v3234, %v3382
      %v3415 = vmul.f32 %v3236, %v3383
      %v3416 = vmul.f32 %v3238, %v3384
      %v3417 = vmul.f32 %v3240, %v3385
      %v3418 = vmul.f32 %v3242, %v3386
      %v3419 = vmul.f32 %v3244, %v3387
      %v3420 = vmul.f32 %v3246, %v3388
      %v3421 = vmul.f32 %v3248, %v3389
      %v3422 = vmul.f32 %v3250, %v3390
      %v3423 = vmul.f32 %v3252, %v3391
      %v3424 = vmul.f32 %v3254, %v3392
      %v3425 = vmul.f32 %v3256, %v3393
      %v3426 = vmul.f32 %v3258, %v3394
      %v3427 = vmul.f32 %v3260, %v3395
      %v3428 = vmul.f32 %v3262, %v3396
      %v3429 = vmul.f32 %v3264, %v3397
      %v3430 = vmul.f32 %v3266, %v3398
      %v3431 = vmul.f32 %v3268, %v3399
      %v3432 = vmul.f32 %v3270, %v3400
      %v3433 = vmul.f32 %v3272, %v3401
      %v3434 = vmul.f32 %v3274, %v3402
      %v3436 = vsel %vm2145, %v3403, 0
      %v3439 = vsel %vm2145, %v3404, 0
      %v3442 = vsel %vm2145, %v3405, 0
      %v3445 = vsel %vm2145, %v3406, 0
      %v3448 = vsel %vm2145, %v3407, 0
      %v3451 = vsel %vm2145, %v3408, 0
      %v3454 = vsel %vm2145, %v3409, 0
      %v3457 = vsel %vm2145, %v3410, 0
      %3459 = vmatprep.subr.mxu0 0.0
      %3460 = vmatpush1.msra.mxu0 0.0
      %3461 = vmatprep.subr.mxu0 0.0
      %3462 = vmatpush1.msra.mxu0 0.0
      %3463 = vmatprep.subr.mxu0 0.0
      %3464 = vmatpush1.msra.mxu0 0.0
      %3465 = vmatprep.subr.mxu0 0.0
      %3466 = vmatpush1.msra.mxu0 0.0
      %3467 = vmatprep.subr.mxu0 0.0
      %3468 = vmatpush1.msra.mxu0 0.0
      %3469 = vmatprep.subr.mxu0 0.0
      %3470 = vmatpush1.msra.mxu0 0.0
      %3471 = vmatprep.subr.mxu0 0.0
      %3472 = vmatpush1.msra.mxu0 0.0
      %3473 = vmatprep.subr.mxu0 0.0
      %3474 = vmatpush1.msra.mxu0 0.0
      %3475 = vmatprep.subr.mxu0 0.0
      %3476 = vmatpush1.msra.mxu0 %v2542
      %3477 = vmatprep.subr.mxu0 0.0
      %3478 = vmatpush1.msra.mxu0 %v2541
      %3479 = vmatprep.subr.mxu0 0.0
      %3480 = vmatpush1.msra.mxu0 %v2540
      %3481 = vmatprep.subr.mxu0 0.0
      %3482 = vmatpush1.msra.mxu0 %v2539
      %3483 = vmatprep.subr.mxu0 0.0
      %3484 = vmatpush1.msra.mxu0 %v2538
      %3485 = vmatprep.subr.mxu0 0.0
      %3486 = vmatpush1.msra.mxu0 %v2537
      %3487 = vmatprep.subr.mxu0 0.0
      %3488 = vmatpush1.msra.mxu0 %v2536
      %3489 = vmatprep.subr.mxu0 0.0
      %3490 = vmatpush1.msra.mxu0 %v2535
      %3491 = vmatprep.subr.mxu0 0.0
      %3492 = vmatpush2.msra.mxu0 0.0
      %3493 = vmatprep.subr.mxu0 0.0
      %3494 = vmatpush2.msra.mxu0 0.0
      %3495 = vmatprep.subr.mxu0 0.0
      %3496 = vmatpush2.msra.mxu0 0.0
      %3497 = vmatprep.subr.mxu0 0.0
      %3498 = vmatpush2.msra.mxu0 0.0
      %3499 = vmatprep.subr.mxu0 0.0
      %3500 = vmatpush2.msra.mxu0 0.0
      %3501 = vmatprep.subr.mxu0 0.0
      %3502 = vmatpush2.msra.mxu0 0.0
      %3503 = vmatprep.subr.mxu0 0.0
      %3504 = vmatpush2.msra.mxu0 0.0
      %3505 = vmatprep.subr.mxu0 0.0
      %3506 = vmatpush2.msra.mxu0 0.0
      %3507 = vmatprep.subr.mxu0 0.0
      %3508 = vmatpush2.msra.mxu0 0.0
      %3509 = vmatprep.subr.mxu0 0.0
      %3510 = vmatpush2.msra.mxu0 0.0
      %3511 = vmatprep.subr.mxu0 0.0
      %3512 = vmatpush2.msra.mxu0 0.0
      %3513 = vmatprep.subr.mxu0 0.0
      %3514 = vmatpush2.msra.mxu0 0.0
      %3515 = vmatprep.subr.mxu0 0.0
      %3516 = vmatpush2.msra.mxu0 0.0
      %3517 = vmatprep.subr.mxu0 0.0
      %3518 = vmatpush2.msra.mxu0 0.0
      %3519 = vmatprep.subr.mxu0 0.0
      %3520 = vmatpush2.msra.mxu0 0.0
      %3521 = vmatprep.subr.mxu0 0.0
      %3522 = vmatpush2.msra.mxu0 0.0
      %3523 = vmatprep.mubr.f32.mxu0 0.0
      %3524 = vmatmul.mubr.f32.gmra.mxu0 %v3436
      %v3525 = vpop.f32.mrf.mxu0
      %v3526 = vadd.f32 0.0, %v3525
      %v3527 = vpop.f32.mrf.mxu0
      %3528 = vmatprep.mubr.f32.mxu0 0.0
      %3529 = vmatmul.mubr.f32.gmra.mxu0 %v3439
      %v3530 = vpop.f32.mrf.mxu0
      %v3531 = vadd.f32 0.0, %v3530
      %v3532 = vpop.f32.mrf.mxu0
      %3533 = vmatprep.mubr.f32.mxu0 0.0
      %3534 = vmatmul.mubr.f32.gmra.mxu0 %v3442
      %v3535 = vpop.f32.mrf.mxu0
      %v3536 = vadd.f32 0.0, %v3535
      %v3537 = vpop.f32.mrf.mxu0
      %3538 = vmatprep.mubr.f32.mxu0 0.0
      %3539 = vmatmul.mubr.f32.gmra.mxu0 %v3445
      %v3540 = vpop.f32.mrf.mxu0
      %v3541 = vadd.f32 0.0, %v3540
      %v3542 = vpop.f32.mrf.mxu0
      %3543 = vmatprep.mubr.f32.mxu0 0.0
      %3544 = vmatmul.mubr.f32.gmra.mxu0 %v3448
      %v3545 = vpop.f32.mrf.mxu0
      %v3546 = vadd.f32 0.0, %v3545
      %v3547 = vpop.f32.mrf.mxu0
      %3548 = vmatprep.mubr.f32.mxu0 0.0
      %3549 = vmatmul.mubr.f32.gmra.mxu0 %v3451
      %v3550 = vpop.f32.mrf.mxu0
      %v3551 = vadd.f32 0.0, %v3550
      %v3552 = vpop.f32.mrf.mxu0
      %3553 = vmatprep.mubr.f32.mxu0 0.0
      %3554 = vmatmul.mubr.f32.gmra.mxu0 %v3454
      %v3555 = vpop.f32.mrf.mxu0
      %v3556 = vadd.f32 0.0, %v3555
      %v3557 = vpop.f32.mrf.mxu0
      %3558 = vmatprep.mubr.f32.mxu0 0.0
      %3559 = vmatmul.mubr.f32.gmra.mxu0 %v3457
      %v3560 = vpop.f32.mrf.mxu0
      %v3561 = vadd.f32 0.0, %v3560
      %v3562 = vpop.f32.mrf.mxu0
      %3563 = vdwg.mxu0
      %v3565 = vsel %vm2145, %v3411, 0
      %v3568 = vsel %vm2145, %v3412, 0
      %v3571 = vsel %vm2145, %v3413, 0
      %v3574 = vsel %vm2145, %v3414, 0
      %v3577 = vsel %vm2145, %v3415, 0
      %v3580 = vsel %vm2145, %v3416, 0
      %v3583 = vsel %vm2145, %v3417, 0
      %v3586 = vsel %vm2145, %v3418, 0
      %3588 = vmatprep.subr.mxu0 0.0
      %3589 = vmatpush1.msra.mxu0 0.0
      %3590 = vmatprep.subr.mxu0 0.0
      %3591 = vmatpush1.msra.mxu0 0.0
      %3592 = vmatprep.subr.mxu0 0.0
      %3593 = vmatpush1.msra.mxu0 0.0
      %3594 = vmatprep.subr.mxu0 0.0
      %3595 = vmatpush1.msra.mxu0 0.0
      %3596 = vmatprep.subr.mxu0 0.0
      %3597 = vmatpush1.msra.mxu0 0.0
      %3598 = vmatprep.subr.mxu0 0.0
      %3599 = vmatpush1.msra.mxu0 0.0
      %3600 = vmatprep.subr.mxu0 0.0
      %3601 = vmatpush1.msra.mxu0 0.0
      %3602 = vmatprep.subr.mxu0 0.0
      %3603 = vmatpush1.msra.mxu0 0.0
      %3604 = vmatprep.subr.mxu0 0.0
      %3605 = vmatpush1.msra.mxu0 %v2550
      %3606 = vmatprep.subr.mxu0 0.0
      %3607 = vmatpush1.msra.mxu0 %v2549
      %3608 = vmatprep.subr.mxu0 0.0
      %3609 = vmatpush1.msra.mxu0 %v2548
      %3610 = vmatprep.subr.mxu0 0.0
      %3611 = vmatpush1.msra.mxu0 %v2547
      %3612 = vmatprep.subr.mxu0 0.0
      %3613 = vmatpush1.msra.mxu0 %v2546
      %3614 = vmatprep.subr.mxu0 0.0
      %3615 = vmatpush1.msra.mxu0 %v2545
      %3616 = vmatprep.subr.mxu0 0.0
      %3617 = vmatpush1.msra.mxu0 %v2544
      %3618 = vmatprep.subr.mxu0 0.0
      %3619 = vmatpush1.msra.mxu0 %v2543
      %3620 = vmatprep.subr.mxu0 0.0
      %3621 = vmatpush2.msra.mxu0 0.0
      %3622 = vmatprep.subr.mxu0 0.0
      %3623 = vmatpush2.msra.mxu0 0.0
      %3624 = vmatprep.subr.mxu0 0.0
      %3625 = vmatpush2.msra.mxu0 0.0
      %3626 = vmatprep.subr.mxu0 0.0
      %3627 = vmatpush2.msra.mxu0 0.0
      %3628 = vmatprep.subr.mxu0 0.0
      %3629 = vmatpush2.msra.mxu0 0.0
      %3630 = vmatprep.subr.mxu0 0.0
      %3631 = vmatpush2.msra.mxu0 0.0
      %3632 = vmatprep.subr.mxu0 0.0
      %3633 = vmatpush2.msra.mxu0 0.0
      %3634 = vmatprep.subr.mxu0 0.0
      %3635 = vmatpush2.msra.mxu0 0.0
      %3636 = vmatprep.subr.mxu0 0.0
      %3637 = vmatpush2.msra.mxu0 0.0
      %3638 = vmatprep.subr.mxu0 0.0
      %3639 = vmatpush2.msra.mxu0 0.0
      %3640 = vmatprep.subr.mxu0 0.0
      %3641 = vmatpush2.msra.mxu0 0.0
      %3642 = vmatprep.subr.mxu0 0.0
      %3643 = vmatpush2.msra.mxu0 0.0
      %3644 = vmatprep.subr.mxu0 0.0
      %3645 = vmatpush2.msra.mxu0 0.0
      %3646 = vmatprep.subr.mxu0 0.0
      %3647 = vmatpush2.msra.mxu0 0.0
      %3648 = vmatprep.subr.mxu0 0.0
      %3649 = vmatpush2.msra.mxu0 0.0
      %3650 = vmatprep.subr.mxu0 0.0
      %3651 = vmatpush2.msra.mxu0 0.0
      %3652 = vmatprep.mubr.f32.mxu0 0.0
      %3653 = vmatmul.mubr.f32.gmra.mxu0 %v3565
      %v3654 = vpop.f32.mrf.mxu0
      %v3655 = vadd.f32 0.0, %v3654
      %v3656 = vpop.f32.mrf.mxu0
      %3657 = vmatprep.mubr.f32.mxu0 0.0
      %3658 = vmatmul.mubr.f32.gmra.mxu0 %v3568
      %v3659 = vpop.f32.mrf.mxu0
      %v3660 = vadd.f32 0.0, %v3659
      %v3661 = vpop.f32.mrf.mxu0
      %3662 = vmatprep.mubr.f32.mxu0 0.0
      %3663 = vmatmul.mubr.f32.gmra.mxu0 %v3571
      %v3664 = vpop.f32.mrf.mxu0
      %v3665 = vadd.f32 0.0, %v3664
      %v3666 = vpop.f32.mrf.mxu0
      %3667 = vmatprep.mubr.f32.mxu0 0.0
      %3668 = vmatmul.mubr.f32.gmra.mxu0 %v3574
      %v3669 = vpop.f32.mrf.mxu0
      %v3670 = vadd.f32 0.0, %v3669
      %v3671 = vpop.f32.mrf.mxu0
      %3672 = vmatprep.mubr.f32.mxu0 0.0
      %3673 = vmatmul.mubr.f32.gmra.mxu0 %v3577
      %v3674 = vpop.f32.mrf.mxu0
      %v3675 = vadd.f32 0.0, %v3674
      %v3676 = vpop.f32.mrf.mxu0
      %3677 = vmatprep.mubr.f32.mxu0 0.0
      %3678 = vmatmul.mubr.f32.gmra.mxu0 %v3580
      %v3679 = vpop.f32.mrf.mxu0
      %v3680 = vadd.f32 0.0, %v3679
      %v3681 = vpop.f32.mrf.mxu0
      %3682 = vmatprep.mubr.f32.mxu0 0.0
      %3683 = vmatmul.mubr.f32.gmra.mxu0 %v3583
      %v3684 = vpop.f32.mrf.mxu0
      %v3685 = vadd.f32 0.0, %v3684
      %v3686 = vpop.f32.mrf.mxu0
      %3687 = vmatprep.mubr.f32.mxu0 0.0
      %3688 = vmatmul.mubr.f32.gmra.mxu0 %v3586
      %v3689 = vpop.f32.mrf.mxu0
      %v3690 = vadd.f32 0.0, %v3689
      %v3691 = vpop.f32.mrf.mxu0
      %3692 = vdwg.mxu0
      %v3694 = vsel %vm2145, %v3419, 0
      %v3697 = vsel %vm2145, %v3420, 0
      %v3700 = vsel %vm2145, %v3421, 0
      %v3703 = vsel %vm2145, %v3422, 0
      %v3706 = vsel %vm2145, %v3423, 0
      %v3709 = vsel %vm2145, %v3424, 0
      %v3712 = vsel %vm2145, %v3425, 0
      %v3715 = vsel %vm2145, %v3426, 0
      %3717 = vmatprep.subr.mxu0 0.0
      %3718 = vmatpush1.msra.mxu0 0.0
      %3719 = vmatprep.subr.mxu0 0.0
      %3720 = vmatpush1.msra.mxu0 0.0
      %3721 = vmatprep.subr.mxu0 0.0
      %3722 = vmatpush1.msra.mxu0 0.0
      %3723 = vmatprep.subr.mxu0 0.0
      %3724 = vmatpush1.msra.mxu0 0.0
      %3725 = vmatprep.subr.mxu0 0.0
      %3726 = vmatpush1.msra.mxu0 0.0
      %3727 = vmatprep.subr.mxu0 0.0
      %3728 = vmatpush1.msra.mxu0 0.0
      %3729 = vmatprep.subr.mxu0 0.0
      %3730 = vmatpush1.msra.mxu0 0.0
      %3731 = vmatprep.subr.mxu0 0.0
      %3732 = vmatpush1.msra.mxu0 0.0
      %3733 = vmatprep.subr.mxu0 0.0
      %3734 = vmatpush1.msra.mxu0 %v2558
      %3735 = vmatprep.subr.mxu0 0.0
      %3736 = vmatpush1.msra.mxu0 %v2557
      %3737 = vmatprep.subr.mxu0 0.0
      %3738 = vmatpush1.msra.mxu0 %v2556
      %3739 = vmatprep.subr.mxu0 0.0
      %3740 = vmatpush1.msra.mxu0 %v2555
      %3741 = vmatprep.subr.mxu0 0.0
      %3742 = vmatpush1.msra.mxu0 %v2554
      %3743 = vmatprep.subr.mxu0 0.0
      %3744 = vmatpush1.msra.mxu0 %v2553
      %3745 = vmatprep.subr.mxu0 0.0
      %3746 = vmatpush1.msra.mxu0 %v2552
      %3747 = vmatprep.subr.mxu0 0.0
      %3748 = vmatpush1.msra.mxu0 %v2551
      %3749 = vmatprep.subr.mxu0 0.0
      %3750 = vmatpush2.msra.mxu0 0.0
      %3751 = vmatprep.subr.mxu0 0.0
      %3752 = vmatpush2.msra.mxu0 0.0
      %3753 = vmatprep.subr.mxu0 0.0
      %3754 = vmatpush2.msra.mxu0 0.0
      %3755 = vmatprep.subr.mxu0 0.0
      %3756 = vmatpush2.msra.mxu0 0.0
      %3757 = vmatprep.subr.mxu0 0.0
      %3758 = vmatpush2.msra.mxu0 0.0
      %3759 = vmatprep.subr.mxu0 0.0
      %3760 = vmatpush2.msra.mxu0 0.0
      %3761 = vmatprep.subr.mxu0 0.0
      %3762 = vmatpush2.msra.mxu0 0.0
      %3763 = vmatprep.subr.mxu0 0.0
      %3764 = vmatpush2.msra.mxu0 0.0
      %3765 = vmatprep.subr.mxu0 0.0
      %3766 = vmatpush2.msra.mxu0 0.0
      %3767 = vmatprep.subr.mxu0 0.0
      %3768 = vmatpush2.msra.mxu0 0.0
      %3769 = vmatprep.subr.mxu0 0.0
      %3770 = vmatpush2.msra.mxu0 0.0
      %3771 = vmatprep.subr.mxu0 0.0
      %3772 = vmatpush2.msra.mxu0 0.0
      %3773 = vmatprep.subr.mxu0 0.0
      %3774 = vmatpush2.msra.mxu0 0.0
      %3775 = vmatprep.subr.mxu0 0.0
      %3776 = vmatpush2.msra.mxu0 0.0
      %3777 = vmatprep.subr.mxu0 0.0
      %3778 = vmatpush2.msra.mxu0 0.0
      %3779 = vmatprep.subr.mxu0 0.0
      %3780 = vmatpush2.msra.mxu0 0.0
      %3781 = vmatprep.mubr.f32.mxu0 0.0
      %3782 = vmatmul.mubr.f32.gmra.mxu0 %v3694
      %v3783 = vpop.f32.mrf.mxu0
      %v3784 = vadd.f32 0.0, %v3783
      %v3785 = vpop.f32.mrf.mxu0
      %3786 = vmatprep.mubr.f32.mxu0 0.0
      %3787 = vmatmul.mubr.f32.gmra.mxu0 %v3697
      %v3788 = vpop.f32.mrf.mxu0
      %v3789 = vadd.f32 0.0, %v3788
      %v3790 = vpop.f32.mrf.mxu0
      %3791 = vmatprep.mubr.f32.mxu0 0.0
      %3792 = vmatmul.mubr.f32.gmra.mxu0 %v3700
      %v3793 = vpop.f32.mrf.mxu0
      %v3794 = vadd.f32 0.0, %v3793
      %v3795 = vpop.f32.mrf.mxu0
      %3796 = vmatprep.mubr.f32.mxu0 0.0
      %3797 = vmatmul.mubr.f32.gmra.mxu0 %v3703
      %v3798 = vpop.f32.mrf.mxu0
      %v3799 = vadd.f32 0.0, %v3798
      %v3800 = vpop.f32.mrf.mxu0
      %3801 = vmatprep.mubr.f32.mxu0 0.0
      %3802 = vmatmul.mubr.f32.gmra.mxu0 %v3706
      %v3803 = vpop.f32.mrf.mxu0
      %v3804 = vadd.f32 0.0, %v3803
      %v3805 = vpop.f32.mrf.mxu0
      %3806 = vmatprep.mubr.f32.mxu0 0.0
      %3807 = vmatmul.mubr.f32.gmra.mxu0 %v3709
      %v3808 = vpop.f32.mrf.mxu0
      %v3809 = vadd.f32 0.0, %v3808
      %v3810 = vpop.f32.mrf.mxu0
      %3811 = vmatprep.mubr.f32.mxu0 0.0
      %3812 = vmatmul.mubr.f32.gmra.mxu0 %v3712
      %v3813 = vpop.f32.mrf.mxu0
      %v3814 = vadd.f32 0.0, %v3813
      %v3815 = vpop.f32.mrf.mxu0
      %3816 = vmatprep.mubr.f32.mxu0 0.0
      %3817 = vmatmul.mubr.f32.gmra.mxu0 %v3715
      %v3818 = vpop.f32.mrf.mxu0
      %v3819 = vadd.f32 0.0, %v3818
      %v3820 = vpop.f32.mrf.mxu0
      %3821 = vdwg.mxu0
      %v3823 = vsel %vm2145, %v3427, 0
      %v3826 = vsel %vm2145, %v3428, 0
      %v3829 = vsel %vm2145, %v3429, 0
      %v3832 = vsel %vm2145, %v3430, 0
      %v3835 = vsel %vm2145, %v3431, 0
      %v3838 = vsel %vm2145, %v3432, 0
      %v3841 = vsel %vm2145, %v3433, 0
      %v3844 = vsel %vm2145, %v3434, 0
      %3846 = vmatprep.subr.mxu0 0.0
      %3847 = vmatpush1.msra.mxu0 0.0
      %3848 = vmatprep.subr.mxu0 0.0
      %3849 = vmatpush1.msra.mxu0 0.0
      %3850 = vmatprep.subr.mxu0 0.0
      %3851 = vmatpush1.msra.mxu0 0.0
      %3852 = vmatprep.subr.mxu0 0.0
      %3853 = vmatpush1.msra.mxu0 0.0
      %3854 = vmatprep.subr.mxu0 0.0
      %3855 = vmatpush1.msra.mxu0 0.0
      %3856 = vmatprep.subr.mxu0 0.0
      %3857 = vmatpush1.msra.mxu0 0.0
      %3858 = vmatprep.subr.mxu0 0.0
      %3859 = vmatpush1.msra.mxu0 0.0
      %3860 = vmatprep.subr.mxu0 0.0
      %3861 = vmatpush1.msra.mxu0 0.0
      %3862 = vmatprep.subr.mxu0 0.0
      %3863 = vmatpush1.msra.mxu0 %v2566
      %3864 = vmatprep.subr.mxu0 0.0
      %3865 = vmatpush1.msra.mxu0 %v2565
      %3866 = vmatprep.subr.mxu0 0.0
      %3867 = vmatpush1.msra.mxu0 %v2564
      %3868 = vmatprep.subr.mxu0 0.0
      %3869 = vmatpush1.msra.mxu0 %v2563
      %3870 = vmatprep.subr.mxu0 0.0
      %3871 = vmatpush1.msra.mxu0 %v2562
      %3872 = vmatprep.subr.mxu0 0.0
      %3873 = vmatpush1.msra.mxu0 %v2561
      %3874 = vmatprep.subr.mxu0 0.0
      %3875 = vmatpush1.msra.mxu0 %v2560
      %3876 = vmatprep.subr.mxu0 0.0
      %3877 = vmatpush1.msra.mxu0 %v2559
      %3878 = vmatprep.subr.mxu0 0.0
      %3879 = vmatpush2.msra.mxu0 0.0
      %3880 = vmatprep.subr.mxu0 0.0
      %3881 = vmatpush2.msra.mxu0 0.0
      %3882 = vmatprep.subr.mxu0 0.0
      %3883 = vmatpush2.msra.mxu0 0.0
      %3884 = vmatprep.subr.mxu0 0.0
      %3885 = vmatpush2.msra.mxu0 0.0
      %3886 = vmatprep.subr.mxu0 0.0
      %3887 = vmatpush2.msra.mxu0 0.0
      %3888 = vmatprep.subr.mxu0 0.0
      %3889 = vmatpush2.msra.mxu0 0.0
      %3890 = vmatprep.subr.mxu0 0.0
      %3891 = vmatpush2.msra.mxu0 0.0
      %3892 = vmatprep.subr.mxu0 0.0
      %3893 = vmatpush2.msra.mxu0 0.0
      %3894 = vmatprep.subr.mxu0 0.0
      %3895 = vmatpush2.msra.mxu0 0.0
      %3896 = vmatprep.subr.mxu0 0.0
      %3897 = vmatpush2.msra.mxu0 0.0
      %3898 = vmatprep.subr.mxu0 0.0
      %3899 = vmatpush2.msra.mxu0 0.0
      %3900 = vmatprep.subr.mxu0 0.0
      %3901 = vmatpush2.msra.mxu0 0.0
      %3902 = vmatprep.subr.mxu0 0.0
      %3903 = vmatpush2.msra.mxu0 0.0
      %3904 = vmatprep.subr.mxu0 0.0
      %3905 = vmatpush2.msra.mxu0 0.0
      %3906 = vmatprep.subr.mxu0 0.0
      %3907 = vmatpush2.msra.mxu0 0.0
      %3908 = vmatprep.subr.mxu0 0.0
      %3909 = vmatpush2.msra.mxu0 0.0
      %3910 = vmatprep.mubr.f32.mxu0 0.0
      %3911 = vmatmul.mubr.f32.gmra.mxu0 %v3823
      %v3912 = vpop.f32.mrf.mxu0
      %v3913 = vadd.f32 0.0, %v3912
      %v3914 = vpop.f32.mrf.mxu0
      %3915 = vmatprep.mubr.f32.mxu0 0.0
      %3916 = vmatmul.mubr.f32.gmra.mxu0 %v3826
      %v3917 = vpop.f32.mrf.mxu0
      %v3918 = vadd.f32 0.0, %v3917
      %v3919 = vpop.f32.mrf.mxu0
      %3920 = vmatprep.mubr.f32.mxu0 0.0
      %3921 = vmatmul.mubr.f32.gmra.mxu0 %v3829
      %v3922 = vpop.f32.mrf.mxu0
      %v3923 = vadd.f32 0.0, %v3922
      %v3924 = vpop.f32.mrf.mxu0
      %3925 = vmatprep.mubr.f32.mxu0 0.0
      %3926 = vmatmul.mubr.f32.gmra.mxu0 %v3832
      %v3927 = vpop.f32.mrf.mxu0
      %v3928 = vadd.f32 0.0, %v3927
      %v3929 = vpop.f32.mrf.mxu0
      %3930 = vmatprep.mubr.f32.mxu0 0.0
      %3931 = vmatmul.mubr.f32.gmra.mxu0 %v3835
      %v3932 = vpop.f32.mrf.mxu0
      %v3933 = vadd.f32 0.0, %v3932
      %v3934 = vpop.f32.mrf.mxu0
      %3935 = vmatprep.mubr.f32.mxu0 0.0
      %3936 = vmatmul.mubr.f32.gmra.mxu0 %v3838
      %v3937 = vpop.f32.mrf.mxu0
      %v3938 = vadd.f32 0.0, %v3937
      %v3939 = vpop.f32.mrf.mxu0
      %3940 = vmatprep.mubr.f32.mxu0 0.0
      %3941 = vmatmul.mubr.f32.gmra.mxu0 %v3841
      %v3942 = vpop.f32.mrf.mxu0
      %v3943 = vadd.f32 0.0, %v3942
      %v3944 = vpop.f32.mrf.mxu0
      %3945 = vmatprep.mubr.f32.mxu0 0.0
      %3946 = vmatmul.mubr.f32.gmra.mxu0 %v3844
      %v3947 = vpop.f32.mrf.mxu0
      %v3948 = vadd.f32 0.0, %v3947
      %v3949 = vpop.f32.mrf.mxu0
      %3950 = vdwg.mxu0
      %v3952 = vsel %vm2145, %v2466, 0
      %v3955 = vsel %vm2145, %v2467, 0
      %v3958 = vsel %vm2145, %v2468, 0
      %v3961 = vsel %vm2145, %v2469, 0
      %v3964 = vsel %vm2145, %v2470, 0
      %v3967 = vsel %vm2145, %v2471, 0
      %v3970 = vsel %vm2145, %v2472, 0
      %v3973 = vsel %vm2145, %v2473, 0
      %3975 = vmatprep.subr.mxu0 0.0
      %3976 = vmatpush1.msra.mxu0 0.0
      %3977 = vmatprep.subr.mxu0 0.0
      %3978 = vmatpush1.msra.mxu0 0.0
      %3979 = vmatprep.subr.mxu0 0.0
      %3980 = vmatpush1.msra.mxu0 0.0
      %3981 = vmatprep.subr.mxu0 0.0
      %3982 = vmatpush1.msra.mxu0 0.0
      %3983 = vmatprep.subr.mxu0 0.0
      %3984 = vmatpush1.msra.mxu0 0.0
      %3985 = vmatprep.subr.mxu0 0.0
      %3986 = vmatpush1.msra.mxu0 0.0
      %3987 = vmatprep.subr.mxu0 0.0
      %3988 = vmatpush1.msra.mxu0 0.0
      %3989 = vmatprep.subr.mxu0 0.0
      %3990 = vmatpush1.msra.mxu0 0.0
      %3991 = vmatprep.subr.mxu0 0.0
      %3992 = vmatpush1.msra.mxu0 %v1508
      %3993 = vmatprep.subr.mxu0 0.0
      %3994 = vmatpush1.msra.mxu0 %v1507
      %3995 = vmatprep.subr.mxu0 0.0
      %3996 = vmatpush1.msra.mxu0 %v1506
      %3997 = vmatprep.subr.mxu0 0.0
      %3998 = vmatpush1.msra.mxu0 %v1505
      %3999 = vmatprep.subr.mxu0 0.0
      %4000 = vmatpush1.msra.mxu0 %v1504
      %4001 = vmatprep.subr.mxu0 0.0
      %4002 = vmatpush1.msra.mxu0 %v1503
      %4003 = vmatprep.subr.mxu0 0.0
      %4004 = vmatpush1.msra.mxu0 %v1502
      %4005 = vmatprep.subr.mxu0 0.0
      %4006 = vmatpush1.msra.mxu0 %v1501
      %4007 = vmatprep.subr.mxu0 0.0
      %4008 = vmatpush2.msra.mxu0 0.0
      %4009 = vmatprep.subr.mxu0 0.0
      %4010 = vmatpush2.msra.mxu0 0.0
      %4011 = vmatprep.subr.mxu0 0.0
      %4012 = vmatpush2.msra.mxu0 0.0
      %4013 = vmatprep.subr.mxu0 0.0
      %4014 = vmatpush2.msra.mxu0 0.0
      %4015 = vmatprep.subr.mxu0 0.0
      %4016 = vmatpush2.msra.mxu0 0.0
      %4017 = vmatprep.subr.mxu0 0.0
      %4018 = vmatpush2.msra.mxu0 0.0
      %4019 = vmatprep.subr.mxu0 0.0
      %4020 = vmatpush2.msra.mxu0 0.0
      %4021 = vmatprep.subr.mxu0 0.0
      %4022 = vmatpush2.msra.mxu0 0.0
      %4023 = vmatprep.subr.mxu0 0.0
      %4024 = vmatpush2.msra.mxu0 0.0
      %4025 = vmatprep.subr.mxu0 0.0
      %4026 = vmatpush2.msra.mxu0 0.0
      %4027 = vmatprep.subr.mxu0 0.0
      %4028 = vmatpush2.msra.mxu0 0.0
      %4029 = vmatprep.subr.mxu0 0.0
      %4030 = vmatpush2.msra.mxu0 0.0
      %4031 = vmatprep.subr.mxu0 0.0
      %4032 = vmatpush2.msra.mxu0 0.0
      %4033 = vmatprep.subr.mxu0 0.0
      %4034 = vmatpush2.msra.mxu0 0.0
      %4035 = vmatprep.subr.mxu0 0.0
      %4036 = vmatpush2.msra.mxu0 0.0
      %4037 = vmatprep.subr.mxu0 0.0
      %4038 = vmatpush2.msra.mxu0 0.0
      %4039 = vmatprep.mubr.f32.mxu0 0.0
      %4040 = vmatmul.mubr.f32.gmra.mxu0 %v3952
      %v4041 = vpop.f32.mrf.mxu0
      %v4042 = vadd.f32 %v3526, %v4041
      %v4043 = vpop.f32.mrf.mxu0
      %4044 = vmatprep.mubr.f32.mxu0 0.0
      %4045 = vmatmul.mubr.f32.gmra.mxu0 %v3955
      %v4046 = vpop.f32.mrf.mxu0
      %v4047 = vadd.f32 %v3531, %v4046
      %v4048 = vpop.f32.mrf.mxu0
      %4049 = vmatprep.mubr.f32.mxu0 0.0
      %4050 = vmatmul.mubr.f32.gmra.mxu0 %v3958
      %v4051 = vpop.f32.mrf.mxu0
      %v4052 = vadd.f32 %v3536, %v4051
      %v4053 = vpop.f32.mrf.mxu0
      %4054 = vmatprep.mubr.f32.mxu0 0.0
      %4055 = vmatmul.mubr.f32.gmra.mxu0 %v3961
      %v4056 = vpop.f32.mrf.mxu0
      %v4057 = vadd.f32 %v3541, %v4056
      %v4058 = vpop.f32.mrf.mxu0
      %4059 = vmatprep.mubr.f32.mxu0 0.0
      %4060 = vmatmul.mubr.f32.gmra.mxu0 %v3964
      %v4061 = vpop.f32.mrf.mxu0
      %v4062 = vadd.f32 %v3546, %v4061
      %v4063 = vpop.f32.mrf.mxu0
      %4064 = vmatprep.mubr.f32.mxu0 0.0
      %4065 = vmatmul.mubr.f32.gmra.mxu0 %v3967
      %v4066 = vpop.f32.mrf.mxu0
      %v4067 = vadd.f32 %v3551, %v4066
      %v4068 = vpop.f32.mrf.mxu0
      %4069 = vmatprep.mubr.f32.mxu0 0.0
      %4070 = vmatmul.mubr.f32.gmra.mxu0 %v3970
      %v4071 = vpop.f32.mrf.mxu0
      %v4072 = vadd.f32 %v3556, %v4071
      %v4073 = vpop.f32.mrf.mxu0
      %4074 = vmatprep.mubr.f32.mxu0 0.0
      %4075 = vmatmul.mubr.f32.gmra.mxu0 %v3973
      %v4076 = vpop.f32.mrf.mxu0
      %v4077 = vadd.f32 %v3561, %v4076
      %v4078 = vpop.f32.mrf.mxu0
      %4079 = vdwg.mxu0
      %v4081 = vsel %vm2145, %v2474, 0
      %v4084 = vsel %vm2145, %v2475, 0
      %v4087 = vsel %vm2145, %v2476, 0
      %v4090 = vsel %vm2145, %v2477, 0
      %v4093 = vsel %vm2145, %v2478, 0
      %v4096 = vsel %vm2145, %v2479, 0
      %v4099 = vsel %vm2145, %v2480, 0
      %v4102 = vsel %vm2145, %v2481, 0
      %4104 = vmatprep.subr.mxu0 0.0
      %4105 = vmatpush1.msra.mxu0 0.0
      %4106 = vmatprep.subr.mxu0 0.0
      %4107 = vmatpush1.msra.mxu0 0.0
      %4108 = vmatprep.subr.mxu0 0.0
      %4109 = vmatpush1.msra.mxu0 0.0
      %4110 = vmatprep.subr.mxu0 0.0
      %4111 = vmatpush1.msra.mxu0 0.0
      %4112 = vmatprep.subr.mxu0 0.0
      %4113 = vmatpush1.msra.mxu0 0.0
      %4114 = vmatprep.subr.mxu0 0.0
      %4115 = vmatpush1.msra.mxu0 0.0
      %4116 = vmatprep.subr.mxu0 0.0
      %4117 = vmatpush1.msra.mxu0 0.0
      %4118 = vmatprep.subr.mxu0 0.0
      %4119 = vmatpush1.msra.mxu0 0.0
      %4120 = vmatprep.subr.mxu0 0.0
      %4121 = vmatpush1.msra.mxu0 %v1516
      %4122 = vmatprep.subr.mxu0 0.0
      %4123 = vmatpush1.msra.mxu0 %v1515
      %4124 = vmatprep.subr.mxu0 0.0
      %4125 = vmatpush1.msra.mxu0 %v1514
      %4126 = vmatprep.subr.mxu0 0.0
      %4127 = vmatpush1.msra.mxu0 %v1513
      %4128 = vmatprep.subr.mxu0 0.0
      %4129 = vmatpush1.msra.mxu0 %v1512
      %4130 = vmatprep.subr.mxu0 0.0
      %4131 = vmatpush1.msra.mxu0 %v1511
      %4132 = vmatprep.subr.mxu0 0.0
      %4133 = vmatpush1.msra.mxu0 %v1510
      %4134 = vmatprep.subr.mxu0 0.0
      %4135 = vmatpush1.msra.mxu0 %v1509
      %4136 = vmatprep.subr.mxu0 0.0
      %4137 = vmatpush2.msra.mxu0 0.0
      %4138 = vmatprep.subr.mxu0 0.0
      %4139 = vmatpush2.msra.mxu0 0.0
      %4140 = vmatprep.subr.mxu0 0.0
      %4141 = vmatpush2.msra.mxu0 0.0
      %4142 = vmatprep.subr.mxu0 0.0
      %4143 = vmatpush2.msra.mxu0 0.0
      %4144 = vmatprep.subr.mxu0 0.0
      %4145 = vmatpush2.msra.mxu0 0.0
      %4146 = vmatprep.subr.mxu0 0.0
      %4147 = vmatpush2.msra.mxu0 0.0
      %4148 = vmatprep.subr.mxu0 0.0
      %4149 = vmatpush2.msra.mxu0 0.0
      %4150 = vmatprep.subr.mxu0 0.0
      %4151 = vmatpush2.msra.mxu0 0.0
      %4152 = vmatprep.subr.mxu0 0.0
      %4153 = vmatpush2.msra.mxu0 0.0
      %4154 = vmatprep.subr.mxu0 0.0
      %4155 = vmatpush2.msra.mxu0 0.0
      %4156 = vmatprep.subr.mxu0 0.0
      %4157 = vmatpush2.msra.mxu0 0.0
      %4158 = vmatprep.subr.mxu0 0.0
      %4159 = vmatpush2.msra.mxu0 0.0
      %4160 = vmatprep.subr.mxu0 0.0
      %4161 = vmatpush2.msra.mxu0 0.0
      %4162 = vmatprep.subr.mxu0 0.0
      %4163 = vmatpush2.msra.mxu0 0.0
      %4164 = vmatprep.subr.mxu0 0.0
      %4165 = vmatpush2.msra.mxu0 0.0
      %4166 = vmatprep.subr.mxu0 0.0
      %4167 = vmatpush2.msra.mxu0 0.0
      %4168 = vmatprep.mubr.f32.mxu0 0.0
      %4169 = vmatmul.mubr.f32.gmra.mxu0 %v4081
      %v4170 = vpop.f32.mrf.mxu0
      %v4171 = vadd.f32 %v3655, %v4170
      %v4172 = vpop.f32.mrf.mxu0
      %4173 = vmatprep.mubr.f32.mxu0 0.0
      %4174 = vmatmul.mubr.f32.gmra.mxu0 %v4084
      %v4175 = vpop.f32.mrf.mxu0
      %v4176 = vadd.f32 %v3660, %v4175
      %v4177 = vpop.f32.mrf.mxu0
      %4178 = vmatprep.mubr.f32.mxu0 0.0
      %4179 = vmatmul.mubr.f32.gmra.mxu0 %v4087
      %v4180 = vpop.f32.mrf.mxu0
      %v4181 = vadd.f32 %v3665, %v4180
      %v4182 = vpop.f32.mrf.mxu0
      %4183 = vmatprep.mubr.f32.mxu0 0.0
      %4184 = vmatmul.mubr.f32.gmra.mxu0 %v4090
      %v4185 = vpop.f32.mrf.mxu0
      %v4186 = vadd.f32 %v3670, %v4185
      %v4187 = vpop.f32.mrf.mxu0
      %4188 = vmatprep.mubr.f32.mxu0 0.0
      %4189 = vmatmul.mubr.f32.gmra.mxu0 %v4093
      %v4190 = vpop.f32.mrf.mxu0
      %v4191 = vadd.f32 %v3675, %v4190
      %v4192 = vpop.f32.mrf.mxu0
      %4193 = vmatprep.mubr.f32.mxu0 0.0
      %4194 = vmatmul.mubr.f32.gmra.mxu0 %v4096
      %v4195 = vpop.f32.mrf.mxu0
      %v4196 = vadd.f32 %v3680, %v4195
      %v4197 = vpop.f32.mrf.mxu0
      %4198 = vmatprep.mubr.f32.mxu0 0.0
      %4199 = vmatmul.mubr.f32.gmra.mxu0 %v4099
      %v4200 = vpop.f32.mrf.mxu0
      %v4201 = vadd.f32 %v3685, %v4200
      %v4202 = vpop.f32.mrf.mxu0
      %4203 = vmatprep.mubr.f32.mxu0 0.0
      %4204 = vmatmul.mubr.f32.gmra.mxu0 %v4102
      %v4205 = vpop.f32.mrf.mxu0
      %v4206 = vadd.f32 %v3690, %v4205
      %v4207 = vpop.f32.mrf.mxu0
      %4208 = vdwg.mxu0
      %v4210 = vsel %vm2145, %v2482, 0
      %v4213 = vsel %vm2145, %v2483, 0
      %v4216 = vsel %vm2145, %v2484, 0
      %v4219 = vsel %vm2145, %v2485, 0
      %v4222 = vsel %vm2145, %v2486, 0
      %v4225 = vsel %vm2145, %v2487, 0
      %v4228 = vsel %vm2145, %v2488, 0
      %v4231 = vsel %vm2145, %v2489, 0
      %4233 = vmatprep.subr.mxu0 0.0
      %4234 = vmatpush1.msra.mxu0 0.0
      %4235 = vmatprep.subr.mxu0 0.0
      %4236 = vmatpush1.msra.mxu0 0.0
      %4237 = vmatprep.subr.mxu0 0.0
      %4238 = vmatpush1.msra.mxu0 0.0
      %4239 = vmatprep.subr.mxu0 0.0
      %4240 = vmatpush1.msra.mxu0 0.0
      %4241 = vmatprep.subr.mxu0 0.0
      %4242 = vmatpush1.msra.mxu0 0.0
      %4243 = vmatprep.subr.mxu0 0.0
      %4244 = vmatpush1.msra.mxu0 0.0
      %4245 = vmatprep.subr.mxu0 0.0
      %4246 = vmatpush1.msra.mxu0 0.0
      %4247 = vmatprep.subr.mxu0 0.0
      %4248 = vmatpush1.msra.mxu0 0.0
      %4249 = vmatprep.subr.mxu0 0.0
      %4250 = vmatpush1.msra.mxu0 %v1524
      %4251 = vmatprep.subr.mxu0 0.0
      %4252 = vmatpush1.msra.mxu0 %v1523
      %4253 = vmatprep.subr.mxu0 0.0
      %4254 = vmatpush1.msra.mxu0 %v1522
      %4255 = vmatprep.subr.mxu0 0.0
      %4256 = vmatpush1.msra.mxu0 %v1521
      %4257 = vmatprep.subr.mxu0 0.0
      %4258 = vmatpush1.msra.mxu0 %v1520
      %4259 = vmatprep.subr.mxu0 0.0
      %4260 = vmatpush1.msra.mxu0 %v1519
      %4261 = vmatprep.subr.mxu0 0.0
      %4262 = vmatpush1.msra.mxu0 %v1518
      %4263 = vmatprep.subr.mxu0 0.0
      %4264 = vmatpush1.msra.mxu0 %v1517
      %4265 = vmatprep.subr.mxu0 0.0
      %4266 = vmatpush2.msra.mxu0 0.0
      %4267 = vmatprep.subr.mxu0 0.0
      %4268 = vmatpush2.msra.mxu0 0.0
      %4269 = vmatprep.subr.mxu0 0.0
      %4270 = vmatpush2.msra.mxu0 0.0
      %4271 = vmatprep.subr.mxu0 0.0
      %4272 = vmatpush2.msra.mxu0 0.0
      %4273 = vmatprep.subr.mxu0 0.0
      %4274 = vmatpush2.msra.mxu0 0.0
      %4275 = vmatprep.subr.mxu0 0.0
      %4276 = vmatpush2.msra.mxu0 0.0
      %4277 = vmatprep.subr.mxu0 0.0
      %4278 = vmatpush2.msra.mxu0 0.0
      %4279 = vmatprep.subr.mxu0 0.0
      %4280 = vmatpush2.msra.mxu0 0.0
      %4281 = vmatprep.subr.mxu0 0.0
      %4282 = vmatpush2.msra.mxu0 0.0
      %4283 = vmatprep.subr.mxu0 0.0
      %4284 = vmatpush2.msra.mxu0 0.0
      %4285 = vmatprep.subr.mxu0 0.0
      %4286 = vmatpush2.msra.mxu0 0.0
      %4287 = vmatprep.subr.mxu0 0.0
      %4288 = vmatpush2.msra.mxu0 0.0
      %4289 = vmatprep.subr.mxu0 0.0
      %4290 = vmatpush2.msra.mxu0 0.0
      %4291 = vmatprep.subr.mxu0 0.0
      %4292 = vmatpush2.msra.mxu0 0.0
      %4293 = vmatprep.subr.mxu0 0.0
      %4294 = vmatpush2.msra.mxu0 0.0
      %4295 = vmatprep.subr.mxu0 0.0
      %4296 = vmatpush2.msra.mxu0 0.0
      %4297 = vmatprep.mubr.f32.mxu0 0.0
      %4298 = vmatmul.mubr.f32.gmra.mxu0 %v4210
      %v4299 = vpop.f32.mrf.mxu0
      %v4300 = vadd.f32 %v3784, %v4299
      %v4301 = vpop.f32.mrf.mxu0
      %4302 = vmatprep.mubr.f32.mxu0 0.0
      %4303 = vmatmul.mubr.f32.gmra.mxu0 %v4213
      %v4304 = vpop.f32.mrf.mxu0
      %v4305 = vadd.f32 %v3789, %v4304
      %v4306 = vpop.f32.mrf.mxu0
      %4307 = vmatprep.mubr.f32.mxu0 0.0
      %4308 = vmatmul.mubr.f32.gmra.mxu0 %v4216
      %v4309 = vpop.f32.mrf.mxu0
      %v4310 = vadd.f32 %v3794, %v4309
      %v4311 = vpop.f32.mrf.mxu0
      %4312 = vmatprep.mubr.f32.mxu0 0.0
      %4313 = vmatmul.mubr.f32.gmra.mxu0 %v4219
      %v4314 = vpop.f32.mrf.mxu0
      %v4315 = vadd.f32 %v3799, %v4314
      %v4316 = vpop.f32.mrf.mxu0
      %4317 = vmatprep.mubr.f32.mxu0 0.0
      %4318 = vmatmul.mubr.f32.gmra.mxu0 %v4222
      %v4319 = vpop.f32.mrf.mxu0
      %v4320 = vadd.f32 %v3804, %v4319
      %v4321 = vpop.f32.mrf.mxu0
      %4322 = vmatprep.mubr.f32.mxu0 0.0
      %4323 = vmatmul.mubr.f32.gmra.mxu0 %v4225
      %v4324 = vpop.f32.mrf.mxu0
      %v4325 = vadd.f32 %v3809, %v4324
      %v4326 = vpop.f32.mrf.mxu0
      %4327 = vmatprep.mubr.f32.mxu0 0.0
      %4328 = vmatmul.mubr.f32.gmra.mxu0 %v4228
      %v4329 = vpop.f32.mrf.mxu0
      %v4330 = vadd.f32 %v3814, %v4329
      %v4331 = vpop.f32.mrf.mxu0
      %4332 = vmatprep.mubr.f32.mxu0 0.0
      %4333 = vmatmul.mubr.f32.gmra.mxu0 %v4231
      %v4334 = vpop.f32.mrf.mxu0
      %v4335 = vadd.f32 %v3819, %v4334
      %v4336 = vpop.f32.mrf.mxu0
      %4337 = vdwg.mxu0
      %v4339 = vsel %vm2145, %v2490, 0
      %v4342 = vsel %vm2145, %v2491, 0
      %v4345 = vsel %vm2145, %v2492, 0
      %v4348 = vsel %vm2145, %v2493, 0
      %v4351 = vsel %vm2145, %v2494, 0
      %v4354 = vsel %vm2145, %v2495, 0
      %v4357 = vsel %vm2145, %v2496, 0
      %v4360 = vsel %vm2145, %v2497, 0
      %4362 = vmatprep.subr.mxu0 0.0
      %4363 = vmatpush1.msra.mxu0 0.0
      %4364 = vmatprep.subr.mxu0 0.0
      %4365 = vmatpush1.msra.mxu0 0.0
      %4366 = vmatprep.subr.mxu0 0.0
      %4367 = vmatpush1.msra.mxu0 0.0
      %4368 = vmatprep.subr.mxu0 0.0
      %4369 = vmatpush1.msra.mxu0 0.0
      %4370 = vmatprep.subr.mxu0 0.0
      %4371 = vmatpush1.msra.mxu0 0.0
      %4372 = vmatprep.subr.mxu0 0.0
      %4373 = vmatpush1.msra.mxu0 0.0
      %4374 = vmatprep.subr.mxu0 0.0
      %4375 = vmatpush1.msra.mxu0 0.0
      %4376 = vmatprep.subr.mxu0 0.0
      %4377 = vmatpush1.msra.mxu0 0.0
      %4378 = vmatprep.subr.mxu0 0.0
      %4379 = vmatpush1.msra.mxu0 %v1532
      %4380 = vmatprep.subr.mxu0 0.0
      %4381 = vmatpush1.msra.mxu0 %v1531
      %4382 = vmatprep.subr.mxu0 0.0
      %4383 = vmatpush1.msra.mxu0 %v1530
      %4384 = vmatprep.subr.mxu0 0.0
      %4385 = vmatpush1.msra.mxu0 %v1529
      %4386 = vmatprep.subr.mxu0 0.0
      %4387 = vmatpush1.msra.mxu0 %v1528
      %4388 = vmatprep.subr.mxu0 0.0
      %4389 = vmatpush1.msra.mxu0 %v1527
      %4390 = vmatprep.subr.mxu0 0.0
      %4391 = vmatpush1.msra.mxu0 %v1526
      %4392 = vmatprep.subr.mxu0 0.0
      %4393 = vmatpush1.msra.mxu0 %v1525
      %4394 = vmatprep.subr.mxu0 0.0
      %4395 = vmatpush2.msra.mxu0 0.0
      %4396 = vmatprep.subr.mxu0 0.0
      %4397 = vmatpush2.msra.mxu0 0.0
      %4398 = vmatprep.subr.mxu0 0.0
      %4399 = vmatpush2.msra.mxu0 0.0
      %4400 = vmatprep.subr.mxu0 0.0
      %4401 = vmatpush2.msra.mxu0 0.0
      %4402 = vmatprep.subr.mxu0 0.0
      %4403 = vmatpush2.msra.mxu0 0.0
      %4404 = vmatprep.subr.mxu0 0.0
      %4405 = vmatpush2.msra.mxu0 0.0
      %4406 = vmatprep.subr.mxu0 0.0
      %4407 = vmatpush2.msra.mxu0 0.0
      %4408 = vmatprep.subr.mxu0 0.0
      %4409 = vmatpush2.msra.mxu0 0.0
      %4410 = vmatprep.subr.mxu0 0.0
      %4411 = vmatpush2.msra.mxu0 0.0
      %4412 = vmatprep.subr.mxu0 0.0
      %4413 = vmatpush2.msra.mxu0 0.0
      %4414 = vmatprep.subr.mxu0 0.0
      %4415 = vmatpush2.msra.mxu0 0.0
      %4416 = vmatprep.subr.mxu0 0.0
      %4417 = vmatpush2.msra.mxu0 0.0
      %4418 = vmatprep.subr.mxu0 0.0
      %4419 = vmatpush2.msra.mxu0 0.0
      %4420 = vmatprep.subr.mxu0 0.0
      %4421 = vmatpush2.msra.mxu0 0.0
      %4422 = vmatprep.subr.mxu0 0.0
      %4423 = vmatpush2.msra.mxu0 0.0
      %4424 = vmatprep.subr.mxu0 0.0
      %4425 = vmatpush2.msra.mxu0 0.0
      %4426 = vmatprep.mubr.f32.mxu0 0.0
      %4427 = vmatmul.mubr.f32.gmra.mxu0 %v4339
      %v4428 = vpop.f32.mrf.mxu0
      %v4429 = vadd.f32 %v3913, %v4428
      %v4430 = vpop.f32.mrf.mxu0
      %4431 = vmatprep.mubr.f32.mxu0 0.0
      %4432 = vmatmul.mubr.f32.gmra.mxu0 %v4342
      %v4433 = vpop.f32.mrf.mxu0
      %v4434 = vadd.f32 %v3918, %v4433
      %v4435 = vpop.f32.mrf.mxu0
      %4436 = vmatprep.mubr.f32.mxu0 0.0
      %4437 = vmatmul.mubr.f32.gmra.mxu0 %v4345
      %v4438 = vpop.f32.mrf.mxu0
      %v4439 = vadd.f32 %v3923, %v4438
      %v4440 = vpop.f32.mrf.mxu0
      %4441 = vmatprep.mubr.f32.mxu0 0.0
      %4442 = vmatmul.mubr.f32.gmra.mxu0 %v4348
      %v4443 = vpop.f32.mrf.mxu0
      %v4444 = vadd.f32 %v3928, %v4443
      %v4445 = vpop.f32.mrf.mxu0
      %4446 = vmatprep.mubr.f32.mxu0 0.0
      %4447 = vmatmul.mubr.f32.gmra.mxu0 %v4351
      %v4448 = vpop.f32.mrf.mxu0
      %v4449 = vadd.f32 %v3933, %v4448
      %v4450 = vpop.f32.mrf.mxu0
      %4451 = vmatprep.mubr.f32.mxu0 0.0
      %4452 = vmatmul.mubr.f32.gmra.mxu0 %v4354
      %v4453 = vpop.f32.mrf.mxu0
      %v4454 = vadd.f32 %v3938, %v4453
      %v4455 = vpop.f32.mrf.mxu0
      %4456 = vmatprep.mubr.f32.mxu0 0.0
      %4457 = vmatmul.mubr.f32.gmra.mxu0 %v4357
      %v4458 = vpop.f32.mrf.mxu0
      %v4459 = vadd.f32 %v3943, %v4458
      %v4460 = vpop.f32.mrf.mxu0
      %4461 = vmatprep.mubr.f32.mxu0 0.0
      %4462 = vmatmul.mubr.f32.gmra.mxu0 %v4360
      %v4463 = vpop.f32.mrf.mxu0
      %v4464 = vadd.f32 %v3948, %v4463
      %v4465 = vpop.f32.mrf.mxu0
      %4466 = vdwg.mxu0
      %vm4467 = vcmp.ge.s32.totalorder %v1239, 16
      %vm4468 = vcmp.lt.s32.totalorder %v1239, 24
      %vm4469 = vmand %vm4467, %vm4468
      %v4470 = vsel %vm4469, 1, 0
      %vm4471 = vcmp.eq.s32.totalorder %v4470, 1
      %v4472 = vsel %vm4471, %v1278, 0.0
      %v4473 = vsel %vm4471, %v1280, 0.0
      %v4474 = vsel %vm4471, %v1282, 0.0
      %v4475 = vsel %vm4471, %v1284, 0.0
      %v4476 = vsel %vm4471, %v1286, 0.0
      %v4477 = vsel %vm4471, %v1288, 0.0
      %v4478 = vsel %vm4471, %v1290, 0.0
      %v4479 = vsel %vm4471, %v1292, 0.0
      %v4480 = vsel %vm4471, %v1294, 0.0
      %v4481 = vsel %vm4471, %v1296, 0.0
      %v4482 = vsel %vm4471, %v1298, 0.0
      %v4483 = vsel %vm4471, %v1300, 0.0
      %v4484 = vsel %vm4471, %v1302, 0.0
      %v4485 = vsel %vm4471, %v1304, 0.0
      %v4486 = vsel %vm4471, %v1306, 0.0
      %v4487 = vsel %vm4471, %v1308, 0.0
      %v4488 = vsel %vm4471, %v1310, 0.0
      %v4489 = vsel %vm4471, %v1312, 0.0
      %v4490 = vsel %vm4471, %v1314, 0.0
      %v4491 = vsel %vm4471, %v1316, 0.0
      %v4492 = vsel %vm4471, %v1318, 0.0
      %v4493 = vsel %vm4471, %v1320, 0.0
      %v4494 = vsel %vm4471, %v1322, 0.0
      %v4495 = vsel %vm4471, %v1324, 0.0
      %v4496 = vsel %vm4471, %v1326, 0.0
      %v4497 = vsel %vm4471, %v1328, 0.0
      %v4498 = vsel %vm4471, %v1330, 0.0
      %v4499 = vsel %vm4471, %v1332, 0.0
      %v4500 = vsel %vm4471, %v1334, 0.0
      %v4501 = vsel %vm4471, %v1336, 0.0
      %v4502 = vsel %vm4471, %v1338, 0.0
      %v4503 = vsel %vm4471, %v1340, 0.0
      %v4504 = vsel %vm4471, %v1406, 0.0
      %v4505 = vsel %vm4471, %v1408, 0.0
      %v4506 = vsel %vm4471, %v1410, 0.0
      %v4507 = vsel %vm4471, %v1412, 0.0
      %v4508 = vsel %vm4471, %v1414, 0.0
      %v4509 = vsel %vm4471, %v1416, 0.0
      %v4510 = vsel %vm4471, %v1418, 0.0
      %v4511 = vsel %vm4471, %v1420, 0.0
      %v4512 = vsel %vm4471, %v1422, 0.0
      %v4513 = vsel %vm4471, %v1424, 0.0
      %v4514 = vsel %vm4471, %v1426, 0.0
      %v4515 = vsel %vm4471, %v1428, 0.0
      %v4516 = vsel %vm4471, %v1430, 0.0
      %v4517 = vsel %vm4471, %v1432, 0.0
      %v4518 = vsel %vm4471, %v1434, 0.0
      %v4519 = vsel %vm4471, %v1436, 0.0
      %v4520 = vsel %vm4471, %v1438, 0.0
      %v4521 = vsel %vm4471, %v1440, 0.0
      %v4522 = vsel %vm4471, %v1442, 0.0
      %v4523 = vsel %vm4471, %v1444, 0.0
      %v4524 = vsel %vm4471, %v1446, 0.0
      %v4525 = vsel %vm4471, %v1448, 0.0
      %v4526 = vsel %vm4471, %v1450, 0.0
      %v4527 = vsel %vm4471, %v1452, 0.0
      %v4528 = vsel %vm4471, %v1454, 0.0
      %v4529 = vsel %vm4471, %v1456, 0.0
      %v4530 = vsel %vm4471, %v1458, 0.0
      %v4531 = vsel %vm4471, %v1460, 0.0
      %v4532 = vsel %vm4471, %v1462, 0.0
      %v4533 = vsel %vm4471, %v1464, 0.0
      %v4534 = vsel %vm4471, %v1466, 0.0
      %v4535 = vsel %vm4471, %v1468, 0.0
      %v4537 = vsel %vm346, %v4472, 0
      %v4540 = vsel %vm346, %v4473, 0
      %v4543 = vsel %vm346, %v4474, 0
      %v4546 = vsel %vm346, %v4475, 0
      %v4549 = vsel %vm346, %v4476, 0
      %v4552 = vsel %vm346, %v4477, 0
      %v4555 = vsel %vm346, %v4478, 0
      %v4558 = vsel %vm346, %v4479, 0
      %4560 = vmatprep.subr.mxu0 0.0
      %4561 = vmatpush1.xpose.msra.mxu0 0.0
      %4562 = vmatprep.subr.mxu0 0.0
      %4563 = vmatpush1.xpose.msra.mxu0 0.0
      %4564 = vmatprep.subr.mxu0 0.0
      %4565 = vmatpush1.xpose.msra.mxu0 0.0
      %4566 = vmatprep.subr.mxu0 0.0
      %4567 = vmatpush1.xpose.msra.mxu0 0.0
      %4568 = vmatprep.subr.mxu0 0.0
      %4569 = vmatpush1.xpose.msra.mxu0 0.0
      %4570 = vmatprep.subr.mxu0 0.0
      %4571 = vmatpush1.xpose.msra.mxu0 0.0
      %4572 = vmatprep.subr.mxu0 0.0
      %4573 = vmatpush1.xpose.msra.mxu0 0.0
      %4574 = vmatprep.subr.mxu0 0.0
      %4575 = vmatpush1.xpose.msra.mxu0 0.0
      %4576 = vmatprep.subr.mxu0 0.0
      %4577 = vmatpush1.xpose.msra.mxu0 %v4558
      %4578 = vmatprep.subr.mxu0 0.0
      %4579 = vmatpush1.xpose.msra.mxu0 %v4555
      %4580 = vmatprep.subr.mxu0 0.0
      %4581 = vmatpush1.xpose.msra.mxu0 %v4552
      %4582 = vmatprep.subr.mxu0 0.0
      %4583 = vmatpush1.xpose.msra.mxu0 %v4549
      %4584 = vmatprep.subr.mxu0 0.0
      %4585 = vmatpush1.xpose.msra.mxu0 %v4546
      %4586 = vmatprep.subr.mxu0 0.0
      %4587 = vmatpush1.xpose.msra.mxu0 %v4543
      %4588 = vmatprep.subr.mxu0 0.0
      %4589 = vmatpush1.xpose.msra.mxu0 %v4540
      %4590 = vmatprep.subr.mxu0 0.0
      %4591 = vmatpush1.xpose.msra.mxu0 %v4537
      %4592 = vmatprep.subr.mxu0 0.0
      %4593 = vmatpush2.xpose.msra.mxu0 0.0
      %4594 = vmatprep.subr.mxu0 0.0
      %4595 = vmatpush2.xpose.msra.mxu0 0.0
      %4596 = vmatprep.subr.mxu0 0.0
      %4597 = vmatpush2.xpose.msra.mxu0 0.0
      %4598 = vmatprep.subr.mxu0 0.0
      %4599 = vmatpush2.xpose.msra.mxu0 0.0
      %4600 = vmatprep.subr.mxu0 0.0
      %4601 = vmatpush2.xpose.msra.mxu0 0.0
      %4602 = vmatprep.subr.mxu0 0.0
      %4603 = vmatpush2.xpose.msra.mxu0 0.0
      %4604 = vmatprep.subr.mxu0 0.0
      %4605 = vmatpush2.xpose.msra.mxu0 0.0
      %4606 = vmatprep.subr.mxu0 0.0
      %4607 = vmatpush2.xpose.msra.mxu0 0.0
      %4608 = vmatprep.subr.mxu0 0.0
      %4609 = vmatpush2.xpose.msra.mxu0 0.0
      %4610 = vmatprep.subr.mxu0 0.0
      %4611 = vmatpush2.xpose.msra.mxu0 0.0
      %4612 = vmatprep.subr.mxu0 0.0
      %4613 = vmatpush2.xpose.msra.mxu0 0.0
      %4614 = vmatprep.subr.mxu0 0.0
      %4615 = vmatpush2.xpose.msra.mxu0 0.0
      %4616 = vmatprep.subr.mxu0 0.0
      %4617 = vmatpush2.xpose.msra.mxu0 0.0
      %4618 = vmatprep.subr.mxu0 0.0
      %4619 = vmatpush2.xpose.msra.mxu0 0.0
      %4620 = vmatprep.subr.mxu0 0.0
      %4621 = vmatpush2.xpose.msra.mxu0 0.0
      %4622 = vmatprep.subr.mxu0 0.0
      %4623 = vmatpush2.xpose.msra.mxu0 0.0
      %4624 = vmatprep.mubr.f32.mxu0 0.0
      %4625 = vmatmul.mubr.f32.gmra.mxu0 %v1534
      %v4626 = vpop.f32.mrf.mxu0
      %v4627 = vadd.f32 %v1206, %v4626
      %v4628 = vpop.f32.mrf.mxu0
      %4629 = vmatprep.mubr.f32.mxu0 0.0
      %4630 = vmatmul.mubr.f32.gmra.mxu0 %v1537
      %v4631 = vpop.f32.mrf.mxu0
      %v4632 = vadd.f32 %v1207, %v4631
      %v4633 = vpop.f32.mrf.mxu0
      %4634 = vmatprep.mubr.f32.mxu0 0.0
      %4635 = vmatmul.mubr.f32.gmra.mxu0 %v1540
      %v4636 = vpop.f32.mrf.mxu0
      %v4637 = vadd.f32 %v1208, %v4636
      %v4638 = vpop.f32.mrf.mxu0
      %4639 = vmatprep.mubr.f32.mxu0 0.0
      %4640 = vmatmul.mubr.f32.gmra.mxu0 %v1543
      %v4641 = vpop.f32.mrf.mxu0
      %v4642 = vadd.f32 %v1209, %v4641
      %v4643 = vpop.f32.mrf.mxu0
      %4644 = vmatprep.mubr.f32.mxu0 0.0
      %4645 = vmatmul.mubr.f32.gmra.mxu0 %v1546
      %v4646 = vpop.f32.mrf.mxu0
      %v4647 = vadd.f32 %v1210, %v4646
      %v4648 = vpop.f32.mrf.mxu0
      %4649 = vmatprep.mubr.f32.mxu0 0.0
      %4650 = vmatmul.mubr.f32.gmra.mxu0 %v1549
      %v4651 = vpop.f32.mrf.mxu0
      %v4652 = vadd.f32 %v1211, %v4651
      %v4653 = vpop.f32.mrf.mxu0
      %4654 = vmatprep.mubr.f32.mxu0 0.0
      %4655 = vmatmul.mubr.f32.gmra.mxu0 %v1552
      %v4656 = vpop.f32.mrf.mxu0
      %v4657 = vadd.f32 %v1212, %v4656
      %v4658 = vpop.f32.mrf.mxu0
      %4659 = vmatprep.mubr.f32.mxu0 0.0
      %4660 = vmatmul.mubr.f32.gmra.mxu0 %v1555
      %v4661 = vpop.f32.mrf.mxu0
      %v4662 = vadd.f32 %v1213, %v4661
      %v4663 = vpop.f32.mrf.mxu0
      %4664 = vdwg.mxu0
      %v4666 = vsel %vm346, %v4480, 0
      %v4669 = vsel %vm346, %v4481, 0
      %v4672 = vsel %vm346, %v4482, 0
      %v4675 = vsel %vm346, %v4483, 0
      %v4678 = vsel %vm346, %v4484, 0
      %v4681 = vsel %vm346, %v4485, 0
      %v4684 = vsel %vm346, %v4486, 0
      %v4687 = vsel %vm346, %v4487, 0
      %4689 = vmatprep.subr.mxu0 0.0
      %4690 = vmatpush1.xpose.msra.mxu0 0.0
      %4691 = vmatprep.subr.mxu0 0.0
      %4692 = vmatpush1.xpose.msra.mxu0 0.0
      %4693 = vmatprep.subr.mxu0 0.0
      %4694 = vmatpush1.xpose.msra.mxu0 0.0
      %4695 = vmatprep.subr.mxu0 0.0
      %4696 = vmatpush1.xpose.msra.mxu0 0.0
      %4697 = vmatprep.subr.mxu0 0.0
      %4698 = vmatpush1.xpose.msra.mxu0 0.0
      %4699 = vmatprep.subr.mxu0 0.0
      %4700 = vmatpush1.xpose.msra.mxu0 0.0
      %4701 = vmatprep.subr.mxu0 0.0
      %4702 = vmatpush1.xpose.msra.mxu0 0.0
      %4703 = vmatprep.subr.mxu0 0.0
      %4704 = vmatpush1.xpose.msra.mxu0 0.0
      %4705 = vmatprep.subr.mxu0 0.0
      %4706 = vmatpush1.xpose.msra.mxu0 %v4687
      %4707 = vmatprep.subr.mxu0 0.0
      %4708 = vmatpush1.xpose.msra.mxu0 %v4684
      %4709 = vmatprep.subr.mxu0 0.0
      %4710 = vmatpush1.xpose.msra.mxu0 %v4681
      %4711 = vmatprep.subr.mxu0 0.0
      %4712 = vmatpush1.xpose.msra.mxu0 %v4678
      %4713 = vmatprep.subr.mxu0 0.0
      %4714 = vmatpush1.xpose.msra.mxu0 %v4675
      %4715 = vmatprep.subr.mxu0 0.0
      %4716 = vmatpush1.xpose.msra.mxu0 %v4672
      %4717 = vmatprep.subr.mxu0 0.0
      %4718 = vmatpush1.xpose.msra.mxu0 %v4669
      %4719 = vmatprep.subr.mxu0 0.0
      %4720 = vmatpush1.xpose.msra.mxu0 %v4666
      %4721 = vmatprep.subr.mxu0 0.0
      %4722 = vmatpush2.xpose.msra.mxu0 0.0
      %4723 = vmatprep.subr.mxu0 0.0
      %4724 = vmatpush2.xpose.msra.mxu0 0.0
      %4725 = vmatprep.subr.mxu0 0.0
      %4726 = vmatpush2.xpose.msra.mxu0 0.0
      %4727 = vmatprep.subr.mxu0 0.0
      %4728 = vmatpush2.xpose.msra.mxu0 0.0
      %4729 = vmatprep.subr.mxu0 0.0
      %4730 = vmatpush2.xpose.msra.mxu0 0.0
      %4731 = vmatprep.subr.mxu0 0.0
      %4732 = vmatpush2.xpose.msra.mxu0 0.0
      %4733 = vmatprep.subr.mxu0 0.0
      %4734 = vmatpush2.xpose.msra.mxu0 0.0
      %4735 = vmatprep.subr.mxu0 0.0
      %4736 = vmatpush2.xpose.msra.mxu0 0.0
      %4737 = vmatprep.subr.mxu0 0.0
      %4738 = vmatpush2.xpose.msra.mxu0 0.0
      %4739 = vmatprep.subr.mxu0 0.0
      %4740 = vmatpush2.xpose.msra.mxu0 0.0
      %4741 = vmatprep.subr.mxu0 0.0
      %4742 = vmatpush2.xpose.msra.mxu0 0.0
      %4743 = vmatprep.subr.mxu0 0.0
      %4744 = vmatpush2.xpose.msra.mxu0 0.0
      %4745 = vmatprep.subr.mxu0 0.0
      %4746 = vmatpush2.xpose.msra.mxu0 0.0
      %4747 = vmatprep.subr.mxu0 0.0
      %4748 = vmatpush2.xpose.msra.mxu0 0.0
      %4749 = vmatprep.subr.mxu0 0.0
      %4750 = vmatpush2.xpose.msra.mxu0 0.0
      %4751 = vmatprep.subr.mxu0 0.0
      %4752 = vmatpush2.xpose.msra.mxu0 0.0
      %4753 = vmatprep.mubr.f32.mxu0 0.0
      %4754 = vmatmul.mubr.f32.gmra.mxu0 %v1687
      %v4755 = vpop.f32.mrf.mxu0
      %v4756 = vadd.f32 %v1214, %v4755
      %v4757 = vpop.f32.mrf.mxu0
      %4758 = vmatprep.mubr.f32.mxu0 0.0
      %4759 = vmatmul.mubr.f32.gmra.mxu0 %v1690
      %v4760 = vpop.f32.mrf.mxu0
      %v4761 = vadd.f32 %v1215, %v4760
      %v4762 = vpop.f32.mrf.mxu0
      %4763 = vmatprep.mubr.f32.mxu0 0.0
      %4764 = vmatmul.mubr.f32.gmra.mxu0 %v1693
      %v4765 = vpop.f32.mrf.mxu0
      %v4766 = vadd.f32 %v1216, %v4765
      %v4767 = vpop.f32.mrf.mxu0
      %4768 = vmatprep.mubr.f32.mxu0 0.0
      %4769 = vmatmul.mubr.f32.gmra.mxu0 %v1696
      %v4770 = vpop.f32.mrf.mxu0
      %v4771 = vadd.f32 %v1217, %v4770
      %v4772 = vpop.f32.mrf.mxu0
      %4773 = vmatprep.mubr.f32.mxu0 0.0
      %4774 = vmatmul.mubr.f32.gmra.mxu0 %v1699
      %v4775 = vpop.f32.mrf.mxu0
      %v4776 = vadd.f32 %v1218, %v4775
      %v4777 = vpop.f32.mrf.mxu0
      %4778 = vmatprep.mubr.f32.mxu0 0.0
      %4779 = vmatmul.mubr.f32.gmra.mxu0 %v1702
      %v4780 = vpop.f32.mrf.mxu0
      %v4781 = vadd.f32 %v1219, %v4780
      %v4782 = vpop.f32.mrf.mxu0
      %4783 = vmatprep.mubr.f32.mxu0 0.0
      %4784 = vmatmul.mubr.f32.gmra.mxu0 %v1705
      %v4785 = vpop.f32.mrf.mxu0
      %v4786 = vadd.f32 %v1220, %v4785
      %v4787 = vpop.f32.mrf.mxu0
      %4788 = vmatprep.mubr.f32.mxu0 0.0
      %4789 = vmatmul.mubr.f32.gmra.mxu0 %v1708
      %v4790 = vpop.f32.mrf.mxu0
      %v4791 = vadd.f32 %v1221, %v4790
      %v4792 = vpop.f32.mrf.mxu0
      %4793 = vdwg.mxu0
      %v4795 = vsel %vm346, %v4488, 0
      %v4798 = vsel %vm346, %v4489, 0
      %v4801 = vsel %vm346, %v4490, 0
      %v4804 = vsel %vm346, %v4491, 0
      %v4807 = vsel %vm346, %v4492, 0
      %v4810 = vsel %vm346, %v4493, 0
      %v4813 = vsel %vm346, %v4494, 0
      %v4816 = vsel %vm346, %v4495, 0
      %4818 = vmatprep.subr.mxu0 0.0
      %4819 = vmatpush1.xpose.msra.mxu0 0.0
      %4820 = vmatprep.subr.mxu0 0.0
      %4821 = vmatpush1.xpose.msra.mxu0 0.0
      %4822 = vmatprep.subr.mxu0 0.0
      %4823 = vmatpush1.xpose.msra.mxu0 0.0
      %4824 = vmatprep.subr.mxu0 0.0
      %4825 = vmatpush1.xpose.msra.mxu0 0.0
      %4826 = vmatprep.subr.mxu0 0.0
      %4827 = vmatpush1.xpose.msra.mxu0 0.0
      %4828 = vmatprep.subr.mxu0 0.0
      %4829 = vmatpush1.xpose.msra.mxu0 0.0
      %4830 = vmatprep.subr.mxu0 0.0
      %4831 = vmatpush1.xpose.msra.mxu0 0.0
      %4832 = vmatprep.subr.mxu0 0.0
      %4833 = vmatpush1.xpose.msra.mxu0 0.0
      %4834 = vmatprep.subr.mxu0 0.0
      %4835 = vmatpush1.xpose.msra.mxu0 %v4816
      %4836 = vmatprep.subr.mxu0 0.0
      %4837 = vmatpush1.xpose.msra.mxu0 %v4813
      %4838 = vmatprep.subr.mxu0 0.0
      %4839 = vmatpush1.xpose.msra.mxu0 %v4810
      %4840 = vmatprep.subr.mxu0 0.0
      %4841 = vmatpush1.xpose.msra.mxu0 %v4807
      %4842 = vmatprep.subr.mxu0 0.0
      %4843 = vmatpush1.xpose.msra.mxu0 %v4804
      %4844 = vmatprep.subr.mxu0 0.0
      %4845 = vmatpush1.xpose.msra.mxu0 %v4801
      %4846 = vmatprep.subr.mxu0 0.0
      %4847 = vmatpush1.xpose.msra.mxu0 %v4798
      %4848 = vmatprep.subr.mxu0 0.0
      %4849 = vmatpush1.xpose.msra.mxu0 %v4795
      %4850 = vmatprep.subr.mxu0 0.0
      %4851 = vmatpush2.xpose.msra.mxu0 0.0
      %4852 = vmatprep.subr.mxu0 0.0
      %4853 = vmatpush2.xpose.msra.mxu0 0.0
      %4854 = vmatprep.subr.mxu0 0.0
      %4855 = vmatpush2.xpose.msra.mxu0 0.0
      %4856 = vmatprep.subr.mxu0 0.0
      %4857 = vmatpush2.xpose.msra.mxu0 0.0
      %4858 = vmatprep.subr.mxu0 0.0
      %4859 = vmatpush2.xpose.msra.mxu0 0.0
      %4860 = vmatprep.subr.mxu0 0.0
      %4861 = vmatpush2.xpose.msra.mxu0 0.0
      %4862 = vmatprep.subr.mxu0 0.0
      %4863 = vmatpush2.xpose.msra.mxu0 0.0
      %4864 = vmatprep.subr.mxu0 0.0
      %4865 = vmatpush2.xpose.msra.mxu0 0.0
      %4866 = vmatprep.subr.mxu0 0.0
      %4867 = vmatpush2.xpose.msra.mxu0 0.0
      %4868 = vmatprep.subr.mxu0 0.0
      %4869 = vmatpush2.xpose.msra.mxu0 0.0
      %4870 = vmatprep.subr.mxu0 0.0
      %4871 = vmatpush2.xpose.msra.mxu0 0.0
      %4872 = vmatprep.subr.mxu0 0.0
      %4873 = vmatpush2.xpose.msra.mxu0 0.0
      %4874 = vmatprep.subr.mxu0 0.0
      %4875 = vmatpush2.xpose.msra.mxu0 0.0
      %4876 = vmatprep.subr.mxu0 0.0
      %4877 = vmatpush2.xpose.msra.mxu0 0.0
      %4878 = vmatprep.subr.mxu0 0.0
      %4879 = vmatpush2.xpose.msra.mxu0 0.0
      %4880 = vmatprep.subr.mxu0 0.0
      %4881 = vmatpush2.xpose.msra.mxu0 0.0
      %4882 = vmatprep.mubr.f32.mxu0 0.0
      %4883 = vmatmul.mubr.f32.gmra.mxu0 %v1840
      %v4884 = vpop.f32.mrf.mxu0
      %v4885 = vadd.f32 %v1222, %v4884
      %v4886 = vpop.f32.mrf.mxu0
      %4887 = vmatprep.mubr.f32.mxu0 0.0
      %4888 = vmatmul.mubr.f32.gmra.mxu0 %v1843
      %v4889 = vpop.f32.mrf.mxu0
      %v4890 = vadd.f32 %v1223, %v4889
      %v4891 = vpop.f32.mrf.mxu0
      %4892 = vmatprep.mubr.f32.mxu0 0.0
      %4893 = vmatmul.mubr.f32.gmra.mxu0 %v1846
      %v4894 = vpop.f32.mrf.mxu0
      %v4895 = vadd.f32 %v1224, %v4894
      %v4896 = vpop.f32.mrf.mxu0
      %4897 = vmatprep.mubr.f32.mxu0 0.0
      %4898 = vmatmul.mubr.f32.gmra.mxu0 %v1849
      %v4899 = vpop.f32.mrf.mxu0
      %v4900 = vadd.f32 %v1225, %v4899
      %v4901 = vpop.f32.mrf.mxu0
      %4902 = vmatprep.mubr.f32.mxu0 0.0
      %4903 = vmatmul.mubr.f32.gmra.mxu0 %v1852
      %v4904 = vpop.f32.mrf.mxu0
      %v4905 = vadd.f32 %v1226, %v4904
      %v4906 = vpop.f32.mrf.mxu0
      %4907 = vmatprep.mubr.f32.mxu0 0.0
      %4908 = vmatmul.mubr.f32.gmra.mxu0 %v1855
      %v4909 = vpop.f32.mrf.mxu0
      %v4910 = vadd.f32 %v1227, %v4909
      %v4911 = vpop.f32.mrf.mxu0
      %4912 = vmatprep.mubr.f32.mxu0 0.0
      %4913 = vmatmul.mubr.f32.gmra.mxu0 %v1858
      %v4914 = vpop.f32.mrf.mxu0
      %v4915 = vadd.f32 %v1228, %v4914
      %v4916 = vpop.f32.mrf.mxu0
      %4917 = vmatprep.mubr.f32.mxu0 0.0
      %4918 = vmatmul.mubr.f32.gmra.mxu0 %v1861
      %v4919 = vpop.f32.mrf.mxu0
      %v4920 = vadd.f32 %v1229, %v4919
      %v4921 = vpop.f32.mrf.mxu0
      %4922 = vdwg.mxu0
      %v4924 = vsel %vm346, %v4496, 0
      %v4927 = vsel %vm346, %v4497, 0
      %v4930 = vsel %vm346, %v4498, 0
      %v4933 = vsel %vm346, %v4499, 0
      %v4936 = vsel %vm346, %v4500, 0
      %v4939 = vsel %vm346, %v4501, 0
      %v4942 = vsel %vm346, %v4502, 0
      %v4945 = vsel %vm346, %v4503, 0
      %4947 = vmatprep.subr.mxu0 0.0
      %4948 = vmatpush1.xpose.msra.mxu0 0.0
      %4949 = vmatprep.subr.mxu0 0.0
      %4950 = vmatpush1.xpose.msra.mxu0 0.0
      %4951 = vmatprep.subr.mxu0 0.0
      %4952 = vmatpush1.xpose.msra.mxu0 0.0
      %4953 = vmatprep.subr.mxu0 0.0
      %4954 = vmatpush1.xpose.msra.mxu0 0.0
      %4955 = vmatprep.subr.mxu0 0.0
      %4956 = vmatpush1.xpose.msra.mxu0 0.0
      %4957 = vmatprep.subr.mxu0 0.0
      %4958 = vmatpush1.xpose.msra.mxu0 0.0
      %4959 = vmatprep.subr.mxu0 0.0
      %4960 = vmatpush1.xpose.msra.mxu0 0.0
      %4961 = vmatprep.subr.mxu0 0.0
      %4962 = vmatpush1.xpose.msra.mxu0 0.0
      %4963 = vmatprep.subr.mxu0 0.0
      %4964 = vmatpush1.xpose.msra.mxu0 %v4945
      %4965 = vmatprep.subr.mxu0 0.0
      %4966 = vmatpush1.xpose.msra.mxu0 %v4942
      %4967 = vmatprep.subr.mxu0 0.0
      %4968 = vmatpush1.xpose.msra.mxu0 %v4939
      %4969 = vmatprep.subr.mxu0 0.0
      %4970 = vmatpush1.xpose.msra.mxu0 %v4936
      %4971 = vmatprep.subr.mxu0 0.0
      %4972 = vmatpush1.xpose.msra.mxu0 %v4933
      %4973 = vmatprep.subr.mxu0 0.0
      %4974 = vmatpush1.xpose.msra.mxu0 %v4930
      %4975 = vmatprep.subr.mxu0 0.0
      %4976 = vmatpush1.xpose.msra.mxu0 %v4927
      %4977 = vmatprep.subr.mxu0 0.0
      %4978 = vmatpush1.xpose.msra.mxu0 %v4924
      %4979 = vmatprep.subr.mxu0 0.0
      %4980 = vmatpush2.xpose.msra.mxu0 0.0
      %4981 = vmatprep.subr.mxu0 0.0
      %4982 = vmatpush2.xpose.msra.mxu0 0.0
      %4983 = vmatprep.subr.mxu0 0.0
      %4984 = vmatpush2.xpose.msra.mxu0 0.0
      %4985 = vmatprep.subr.mxu0 0.0
      %4986 = vmatpush2.xpose.msra.mxu0 0.0
      %4987 = vmatprep.subr.mxu0 0.0
      %4988 = vmatpush2.xpose.msra.mxu0 0.0
      %4989 = vmatprep.subr.mxu0 0.0
      %4990 = vmatpush2.xpose.msra.mxu0 0.0
      %4991 = vmatprep.subr.mxu0 0.0
      %4992 = vmatpush2.xpose.msra.mxu0 0.0
      %4993 = vmatprep.subr.mxu0 0.0
      %4994 = vmatpush2.xpose.msra.mxu0 0.0
      %4995 = vmatprep.subr.mxu0 0.0
      %4996 = vmatpush2.xpose.msra.mxu0 0.0
      %4997 = vmatprep.subr.mxu0 0.0
      %4998 = vmatpush2.xpose.msra.mxu0 0.0
      %4999 = vmatprep.subr.mxu0 0.0
      %5000 = vmatpush2.xpose.msra.mxu0 0.0
      %5001 = vmatprep.subr.mxu0 0.0
      %5002 = vmatpush2.xpose.msra.mxu0 0.0
      %5003 = vmatprep.subr.mxu0 0.0
      %5004 = vmatpush2.xpose.msra.mxu0 0.0
      %5005 = vmatprep.subr.mxu0 0.0
      %5006 = vmatpush2.xpose.msra.mxu0 0.0
      %5007 = vmatprep.subr.mxu0 0.0
      %5008 = vmatpush2.xpose.msra.mxu0 0.0
      %5009 = vmatprep.subr.mxu0 0.0
      %5010 = vmatpush2.xpose.msra.mxu0 0.0
      %5011 = vmatprep.mubr.f32.mxu0 0.0
      %5012 = vmatmul.mubr.f32.gmra.mxu0 %v1993
      %v5013 = vpop.f32.mrf.mxu0
      %v5014 = vadd.f32 %v1230, %v5013
      %v5015 = vpop.f32.mrf.mxu0
      %5016 = vmatprep.mubr.f32.mxu0 0.0
      %5017 = vmatmul.mubr.f32.gmra.mxu0 %v1996
      %v5018 = vpop.f32.mrf.mxu0
      %v5019 = vadd.f32 %v1231, %v5018
      %v5020 = vpop.f32.mrf.mxu0
      %5021 = vmatprep.mubr.f32.mxu0 0.0
      %5022 = vmatmul.mubr.f32.gmra.mxu0 %v1999
      %v5023 = vpop.f32.mrf.mxu0
      %v5024 = vadd.f32 %v1232, %v5023
      %v5025 = vpop.f32.mrf.mxu0
      %5026 = vmatprep.mubr.f32.mxu0 0.0
      %5027 = vmatmul.mubr.f32.gmra.mxu0 %v2002
      %v5028 = vpop.f32.mrf.mxu0
      %v5029 = vadd.f32 %v1233, %v5028
      %v5030 = vpop.f32.mrf.mxu0
      %5031 = vmatprep.mubr.f32.mxu0 0.0
      %5032 = vmatmul.mubr.f32.gmra.mxu0 %v2005
      %v5033 = vpop.f32.mrf.mxu0
      %v5034 = vadd.f32 %v1234, %v5033
      %v5035 = vpop.f32.mrf.mxu0
      %5036 = vmatprep.mubr.f32.mxu0 0.0
      %5037 = vmatmul.mubr.f32.gmra.mxu0 %v2008
      %v5038 = vpop.f32.mrf.mxu0
      %v5039 = vadd.f32 %v1235, %v5038
      %v5040 = vpop.f32.mrf.mxu0
      %5041 = vmatprep.mubr.f32.mxu0 0.0
      %5042 = vmatmul.mubr.f32.gmra.mxu0 %v2011
      %v5043 = vpop.f32.mrf.mxu0
      %v5044 = vadd.f32 %v1236, %v5043
      %v5045 = vpop.f32.mrf.mxu0
      %5046 = vmatprep.mubr.f32.mxu0 0.0
      %5047 = vmatmul.mubr.f32.gmra.mxu0 %v2014
      %v5048 = vpop.f32.mrf.mxu0
      %v5049 = vadd.f32 %v1237, %v5048
      %v5050 = vpop.f32.mrf.mxu0
      %5051 = vdwg.mxu0
      %v5052 = vsel %vm2145, %v4627, -inf
      %5053 = vmax.xlane.f32.xlu0 %v5052
      %v5054 = vpop.xlane.xlu0 %5053
      %v5055 = vsel %vm2145, %v4632, -inf
      %5056 = vmax.xlane.f32.xlu0 %v5055
      %v5057 = vpop.xlane.xlu0 %5056
      %v5058 = vsel %vm2145, %v4637, -inf
      %5059 = vmax.xlane.f32.xlu0 %v5058
      %v5060 = vpop.xlane.xlu0 %5059
      %v5061 = vsel %vm2145, %v4642, -inf
      %5062 = vmax.xlane.f32.xlu0 %v5061
      %v5063 = vpop.xlane.xlu0 %5062
      %v5064 = vsel %vm2145, %v4647, -inf
      %5065 = vmax.xlane.f32.xlu0 %v5064
      %v5066 = vpop.xlane.xlu0 %5065
      %v5067 = vsel %vm2145, %v4652, -inf
      %5068 = vmax.xlane.f32.xlu0 %v5067
      %v5069 = vpop.xlane.xlu0 %5068
      %v5070 = vsel %vm2145, %v4657, -inf
      %5071 = vmax.xlane.f32.xlu0 %v5070
      %v5072 = vpop.xlane.xlu0 %5071
      %v5073 = vsel %vm2145, %v4662, -inf
      %5074 = vmax.xlane.f32.xlu0 %v5073
      %v5075 = vpop.xlane.xlu0 %5074
      %v5076 = vsel %vm2145, %v4756, -inf
      %5077 = vmax.xlane.f32.xlu0 %v5076
      %v5078 = vpop.xlane.xlu0 %5077
      %v5079 = vsel %vm2145, %v4761, -inf
      %5080 = vmax.xlane.f32.xlu0 %v5079
      %v5081 = vpop.xlane.xlu0 %5080
      %v5082 = vsel %vm2145, %v4766, -inf
      %5083 = vmax.xlane.f32.xlu0 %v5082
      %v5084 = vpop.xlane.xlu0 %5083
      %v5085 = vsel %vm2145, %v4771, -inf
      %5086 = vmax.xlane.f32.xlu0 %v5085
      %v5087 = vpop.xlane.xlu0 %5086
      %v5088 = vsel %vm2145, %v4776, -inf
      %5089 = vmax.xlane.f32.xlu0 %v5088
      %v5090 = vpop.xlane.xlu0 %5089
      %v5091 = vsel %vm2145, %v4781, -inf
      %5092 = vmax.xlane.f32.xlu0 %v5091
      %v5093 = vpop.xlane.xlu0 %5092
      %v5094 = vsel %vm2145, %v4786, -inf
      %5095 = vmax.xlane.f32.xlu0 %v5094
      %v5096 = vpop.xlane.xlu0 %5095
      %v5097 = vsel %vm2145, %v4791, -inf
      %5098 = vmax.xlane.f32.xlu0 %v5097
      %v5099 = vpop.xlane.xlu0 %5098
      %v5100 = vsel %vm2145, %v4885, -inf
      %5101 = vmax.xlane.f32.xlu0 %v5100
      %v5102 = vpop.xlane.xlu0 %5101
      %v5103 = vsel %vm2145, %v4890, -inf
      %5104 = vmax.xlane.f32.xlu0 %v5103
      %v5105 = vpop.xlane.xlu0 %5104
      %v5106 = vsel %vm2145, %v4895, -inf
      %5107 = vmax.xlane.f32.xlu0 %v5106
      %v5108 = vpop.xlane.xlu0 %5107
      %v5109 = vsel %vm2145, %v4900, -inf
      %5110 = vmax.xlane.f32.xlu0 %v5109
      %v5111 = vpop.xlane.xlu0 %5110
      %v5112 = vsel %vm2145, %v4905, -inf
      %5113 = vmax.xlane.f32.xlu0 %v5112
      %v5114 = vpop.xlane.xlu0 %5113
      %v5115 = vsel %vm2145, %v4910, -inf
      %5116 = vmax.xlane.f32.xlu0 %v5115
      %v5117 = vpop.xlane.xlu0 %5116
      %v5118 = vsel %vm2145, %v4915, -inf
      %5119 = vmax.xlane.f32.xlu0 %v5118
      %v5120 = vpop.xlane.xlu0 %5119
      %v5121 = vsel %vm2145, %v4920, -inf
      %5122 = vmax.xlane.f32.xlu0 %v5121
      %v5123 = vpop.xlane.xlu0 %5122
      %v5124 = vsel %vm2145, %v5014, -inf
      %5125 = vmax.xlane.f32.xlu0 %v5124
      %v5126 = vpop.xlane.xlu0 %5125
      %v5127 = vsel %vm2145, %v5019, -inf
      %5128 = vmax.xlane.f32.xlu0 %v5127
      %v5129 = vpop.xlane.xlu0 %5128
      %v5130 = vsel %vm2145, %v5024, -inf
      %5131 = vmax.xlane.f32.xlu0 %v5130
      %v5132 = vpop.xlane.xlu0 %5131
      %v5133 = vsel %vm2145, %v5029, -inf
      %5134 = vmax.xlane.f32.xlu0 %v5133
      %v5135 = vpop.xlane.xlu0 %5134
      %v5136 = vsel %vm2145, %v5034, -inf
      %5137 = vmax.xlane.f32.xlu0 %v5136
      %v5138 = vpop.xlane.xlu0 %5137
      %v5139 = vsel %vm2145, %v5039, -inf
      %5140 = vmax.xlane.f32.xlu0 %v5139
      %v5141 = vpop.xlane.xlu0 %5140
      %v5142 = vsel %vm2145, %v5044, -inf
      %5143 = vmax.xlane.f32.xlu0 %v5142
      %v5144 = vpop.xlane.xlu0 %5143
      %v5145 = vsel %vm2145, %v5049, -inf
      %5146 = vmax.xlane.f32.xlu0 %v5145
      %v5147 = vpop.xlane.xlu0 %5146
      %v5148 = vsub.f32 %v4627, %v5054
      %v5149 = vsub.f32 %v4632, %v5057
      %v5150 = vsub.f32 %v4637, %v5060
      %v5151 = vsub.f32 %v4642, %v5063
      %v5152 = vsub.f32 %v4647, %v5066
      %v5153 = vsub.f32 %v4652, %v5069
      %v5154 = vsub.f32 %v4657, %v5072
      %v5155 = vsub.f32 %v4662, %v5075
      %v5156 = vsub.f32 %v4756, %v5078
      %v5157 = vsub.f32 %v4761, %v5081
      %v5158 = vsub.f32 %v4766, %v5084
      %v5159 = vsub.f32 %v4771, %v5087
      %v5160 = vsub.f32 %v4776, %v5090
      %v5161 = vsub.f32 %v4781, %v5093
      %v5162 = vsub.f32 %v4786, %v5096
      %v5163 = vsub.f32 %v4791, %v5099
      %v5164 = vsub.f32 %v4885, %v5102
      %v5165 = vsub.f32 %v4890, %v5105
      %v5166 = vsub.f32 %v4895, %v5108
      %v5167 = vsub.f32 %v4900, %v5111
      %v5168 = vsub.f32 %v4905, %v5114
      %v5169 = vsub.f32 %v4910, %v5117
      %v5170 = vsub.f32 %v4915, %v5120
      %v5171 = vsub.f32 %v4920, %v5123
      %v5172 = vsub.f32 %v5014, %v5126
      %v5173 = vsub.f32 %v5019, %v5129
      %v5174 = vsub.f32 %v5024, %v5132
      %v5175 = vsub.f32 %v5029, %v5135
      %v5176 = vsub.f32 %v5034, %v5138
      %v5177 = vsub.f32 %v5039, %v5141
      %v5178 = vsub.f32 %v5044, %v5144
      %v5179 = vsub.f32 %v5049, %v5147
      %v5180 = vmul.f32 %v5148, 1.442695
      %v5181 = vpow.pop %v5180
      %v5182 = vmul.f32 %v5149, 1.442695
      %v5183 = vpow.pop %v5182
      %v5184 = vmul.f32 %v5150, 1.442695
      %v5185 = vpow.pop %v5184
      %v5186 = vmul.f32 %v5151, 1.442695
      %v5187 = vpow.pop %v5186
      %v5188 = vmul.f32 %v5152, 1.442695
      %v5189 = vpow.pop %v5188
      %v5190 = vmul.f32 %v5153, 1.442695
      %v5191 = vpow.pop %v5190
      %v5192 = vmul.f32 %v5154, 1.442695
      %v5193 = vpow.pop %v5192
      %v5194 = vmul.f32 %v5155, 1.442695
      %v5195 = vpow.pop %v5194
      %v5196 = vmul.f32 %v5156, 1.442695
      %v5197 = vpow.pop %v5196
      %v5198 = vmul.f32 %v5157, 1.442695
      %v5199 = vpow.pop %v5198
      %v5200 = vmul.f32 %v5158, 1.442695
      %v5201 = vpow.pop %v5200
      %v5202 = vmul.f32 %v5159, 1.442695
      %v5203 = vpow.pop %v5202
      %v5204 = vmul.f32 %v5160, 1.442695
      %v5205 = vpow.pop %v5204
      %v5206 = vmul.f32 %v5161, 1.442695
      %v5207 = vpow.pop %v5206
      %v5208 = vmul.f32 %v5162, 1.442695
      %v5209 = vpow.pop %v5208
      %v5210 = vmul.f32 %v5163, 1.442695
      %v5211 = vpow.pop %v5210
      %v5212 = vmul.f32 %v5164, 1.442695
      %v5213 = vpow.pop %v5212
      %v5214 = vmul.f32 %v5165, 1.442695
      %v5215 = vpow.pop %v5214
      %v5216 = vmul.f32 %v5166, 1.442695
      %v5217 = vpow.pop %v5216
      %v5218 = vmul.f32 %v5167, 1.442695
      %v5219 = vpow.pop %v5218
      %v5220 = vmul.f32 %v5168, 1.442695
      %v5221 = vpow.pop %v5220
      %v5222 = vmul.f32 %v5169, 1.442695
      %v5223 = vpow.pop %v5222
      %v5224 = vmul.f32 %v5170, 1.442695
      %v5225 = vpow.pop %v5224
      %v5226 = vmul.f32 %v5171, 1.442695
      %v5227 = vpow.pop %v5226
      %v5228 = vmul.f32 %v5172, 1.442695
      %v5229 = vpow.pop %v5228
      %v5230 = vmul.f32 %v5173, 1.442695
      %v5231 = vpow.pop %v5230
      %v5232 = vmul.f32 %v5174, 1.442695
      %v5233 = vpow.pop %v5232
      %v5234 = vmul.f32 %v5175, 1.442695
      %v5235 = vpow.pop %v5234
      %v5236 = vmul.f32 %v5176, 1.442695
      %v5237 = vpow.pop %v5236
      %v5238 = vmul.f32 %v5177, 1.442695
      %v5239 = vpow.pop %v5238
      %v5240 = vmul.f32 %v5178, 1.442695
      %v5241 = vpow.pop %v5240
      %v5242 = vmul.f32 %v5179, 1.442695
      %v5243 = vpow.pop %v5242
      %v5244 = vsel %vm2145, %v5181, 0.0
      %5245 = vadd.xlane.f32.xlu0 %v5244
      %v5246 = vpop.xlane.xlu0 %5245
      %v5247 = vsel %vm2145, %v5183, 0.0
      %5248 = vadd.xlane.f32.xlu0 %v5247
      %v5249 = vpop.xlane.xlu0 %5248
      %v5250 = vsel %vm2145, %v5185, 0.0
      %5251 = vadd.xlane.f32.xlu0 %v5250
      %v5252 = vpop.xlane.xlu0 %5251
      %v5253 = vsel %vm2145, %v5187, 0.0
      %5254 = vadd.xlane.f32.xlu0 %v5253
      %v5255 = vpop.xlane.xlu0 %5254
      %v5256 = vsel %vm2145, %v5189, 0.0
      %5257 = vadd.xlane.f32.xlu0 %v5256
      %v5258 = vpop.xlane.xlu0 %5257
      %v5259 = vsel %vm2145, %v5191, 0.0
      %5260 = vadd.xlane.f32.xlu0 %v5259
      %v5261 = vpop.xlane.xlu0 %5260
      %v5262 = vsel %vm2145, %v5193, 0.0
      %5263 = vadd.xlane.f32.xlu0 %v5262
      %v5264 = vpop.xlane.xlu0 %5263
      %v5265 = vsel %vm2145, %v5195, 0.0
      %5266 = vadd.xlane.f32.xlu0 %v5265
      %v5267 = vpop.xlane.xlu0 %5266
      %v5268 = vsel %vm2145, %v5197, 0.0
      %5269 = vadd.xlane.f32.xlu0 %v5268
      %v5270 = vpop.xlane.xlu0 %5269
      %v5271 = vsel %vm2145, %v5199, 0.0
      %5272 = vadd.xlane.f32.xlu0 %v5271
      %v5273 = vpop.xlane.xlu0 %5272
      %v5274 = vsel %vm2145, %v5201, 0.0
      %5275 = vadd.xlane.f32.xlu0 %v5274
      %v5276 = vpop.xlane.xlu0 %5275
      %v5277 = vsel %vm2145, %v5203, 0.0
      %5278 = vadd.xlane.f32.xlu0 %v5277
      %v5279 = vpop.xlane.xlu0 %5278
      %v5280 = vsel %vm2145, %v5205, 0.0
      %5281 = vadd.xlane.f32.xlu0 %v5280
      %v5282 = vpop.xlane.xlu0 %5281
      %v5283 = vsel %vm2145, %v5207, 0.0
      %5284 = vadd.xlane.f32.xlu0 %v5283
      %v5285 = vpop.xlane.xlu0 %5284
      %v5286 = vsel %vm2145, %v5209, 0.0
      %5287 = vadd.xlane.f32.xlu0 %v5286
      %v5288 = vpop.xlane.xlu0 %5287
      %v5289 = vsel %vm2145, %v5211, 0.0
      %5290 = vadd.xlane.f32.xlu0 %v5289
      %v5291 = vpop.xlane.xlu0 %5290
      %v5292 = vsel %vm2145, %v5213, 0.0
      %5293 = vadd.xlane.f32.xlu0 %v5292
      %v5294 = vpop.xlane.xlu0 %5293
      %v5295 = vsel %vm2145, %v5215, 0.0
      %5296 = vadd.xlane.f32.xlu0 %v5295
      %v5297 = vpop.xlane.xlu0 %5296
      %v5298 = vsel %vm2145, %v5217, 0.0
      %5299 = vadd.xlane.f32.xlu0 %v5298
      %v5300 = vpop.xlane.xlu0 %5299
      %v5301 = vsel %vm2145, %v5219, 0.0
      %5302 = vadd.xlane.f32.xlu0 %v5301
      %v5303 = vpop.xlane.xlu0 %5302
      %v5304 = vsel %vm2145, %v5221, 0.0
      %5305 = vadd.xlane.f32.xlu0 %v5304
      %v5306 = vpop.xlane.xlu0 %5305
      %v5307 = vsel %vm2145, %v5223, 0.0
      %5308 = vadd.xlane.f32.xlu0 %v5307
      %v5309 = vpop.xlane.xlu0 %5308
      %v5310 = vsel %vm2145, %v5225, 0.0
      %5311 = vadd.xlane.f32.xlu0 %v5310
      %v5312 = vpop.xlane.xlu0 %5311
      %v5313 = vsel %vm2145, %v5227, 0.0
      %5314 = vadd.xlane.f32.xlu0 %v5313
      %v5315 = vpop.xlane.xlu0 %5314
      %v5316 = vsel %vm2145, %v5229, 0.0
      %5317 = vadd.xlane.f32.xlu0 %v5316
      %v5318 = vpop.xlane.xlu0 %5317
      %v5319 = vsel %vm2145, %v5231, 0.0
      %5320 = vadd.xlane.f32.xlu0 %v5319
      %v5321 = vpop.xlane.xlu0 %5320
      %v5322 = vsel %vm2145, %v5233, 0.0
      %5323 = vadd.xlane.f32.xlu0 %v5322
      %v5324 = vpop.xlane.xlu0 %5323
      %v5325 = vsel %vm2145, %v5235, 0.0
      %5326 = vadd.xlane.f32.xlu0 %v5325
      %v5327 = vpop.xlane.xlu0 %5326
      %v5328 = vsel %vm2145, %v5237, 0.0
      %5329 = vadd.xlane.f32.xlu0 %v5328
      %v5330 = vpop.xlane.xlu0 %5329
      %v5331 = vsel %vm2145, %v5239, 0.0
      %5332 = vadd.xlane.f32.xlu0 %v5331
      %v5333 = vpop.xlane.xlu0 %5332
      %v5334 = vsel %vm2145, %v5241, 0.0
      %5335 = vadd.xlane.f32.xlu0 %v5334
      %v5336 = vpop.xlane.xlu0 %5335
      %v5337 = vsel %vm2145, %v5243, 0.0
      %5338 = vadd.xlane.f32.xlu0 %v5337
      %v5339 = vpop.xlane.xlu0 %5338
      %v5340 = vrcp.pop %v5246
      %v5341 = vrcp.pop %v5249
      %v5342 = vrcp.pop %v5252
      %v5343 = vrcp.pop %v5255
      %v5344 = vrcp.pop %v5258
      %v5345 = vrcp.pop %v5261
      %v5346 = vrcp.pop %v5264
      %v5347 = vrcp.pop %v5267
      %v5348 = vrcp.pop %v5270
      %v5349 = vrcp.pop %v5273
      %v5350 = vrcp.pop %v5276
      %v5351 = vrcp.pop %v5279
      %v5352 = vrcp.pop %v5282
      %v5353 = vrcp.pop %v5285
      %v5354 = vrcp.pop %v5288
      %v5355 = vrcp.pop %v5291
      %v5356 = vrcp.pop %v5294
      %v5357 = vrcp.pop %v5297
      %v5358 = vrcp.pop %v5300
      %v5359 = vrcp.pop %v5303
      %v5360 = vrcp.pop %v5306
      %v5361 = vrcp.pop %v5309
      %v5362 = vrcp.pop %v5312
      %v5363 = vrcp.pop %v5315
      %v5364 = vrcp.pop %v5318
      %v5365 = vrcp.pop %v5321
      %v5366 = vrcp.pop %v5324
      %v5367 = vrcp.pop %v5327
      %v5368 = vrcp.pop %v5330
      %v5369 = vrcp.pop %v5333
      %v5370 = vrcp.pop %v5336
      %v5371 = vrcp.pop %v5339
      %v5372 = vmul.f32 %v5181, %v5340
      %v5373 = vmul.f32 %v5183, %v5341
      %v5374 = vmul.f32 %v5185, %v5342
      %v5375 = vmul.f32 %v5187, %v5343
      %v5376 = vmul.f32 %v5189, %v5344
      %v5377 = vmul.f32 %v5191, %v5345
      %v5378 = vmul.f32 %v5193, %v5346
      %v5379 = vmul.f32 %v5195, %v5347
      %v5380 = vmul.f32 %v5197, %v5348
      %v5381 = vmul.f32 %v5199, %v5349
      %v5382 = vmul.f32 %v5201, %v5350
      %v5383 = vmul.f32 %v5203, %v5351
      %v5384 = vmul.f32 %v5205, %v5352
      %v5385 = vmul.f32 %v5207, %v5353
      %v5386 = vmul.f32 %v5209, %v5354
      %v5387 = vmul.f32 %v5211, %v5355
      %v5388 = vmul.f32 %v5213, %v5356
      %v5389 = vmul.f32 %v5215, %v5357
      %v5390 = vmul.f32 %v5217, %v5358
      %v5391 = vmul.f32 %v5219, %v5359
      %v5392 = vmul.f32 %v5221, %v5360
      %v5393 = vmul.f32 %v5223, %v5361
      %v5394 = vmul.f32 %v5225, %v5362
      %v5395 = vmul.f32 %v5227, %v5363
      %v5396 = vmul.f32 %v5229, %v5364
      %v5397 = vmul.f32 %v5231, %v5365
      %v5398 = vmul.f32 %v5233, %v5366
      %v5399 = vmul.f32 %v5235, %v5367
      %v5400 = vmul.f32 %v5237, %v5368
      %v5401 = vmul.f32 %v5239, %v5369
      %v5402 = vmul.f32 %v5241, %v5370
      %v5403 = vmul.f32 %v5243, %v5371
      %v5405 = vsel %vm2145, %v5372, 0
      %v5408 = vsel %vm2145, %v5373, 0
      %v5411 = vsel %vm2145, %v5374, 0
      %v5414 = vsel %vm2145, %v5375, 0
      %v5417 = vsel %vm2145, %v5376, 0
      %v5420 = vsel %vm2145, %v5377, 0
      %v5423 = vsel %vm2145, %v5378, 0
      %v5426 = vsel %vm2145, %v5379, 0
      %5428 = vmatprep.subr.mxu0 0.0
      %5429 = vmatpush1.msra.mxu0 0.0
      %5430 = vmatprep.subr.mxu0 0.0
      %5431 = vmatpush1.msra.mxu0 0.0
      %5432 = vmatprep.subr.mxu0 0.0
      %5433 = vmatpush1.msra.mxu0 0.0
      %5434 = vmatprep.subr.mxu0 0.0
      %5435 = vmatpush1.msra.mxu0 0.0
      %5436 = vmatprep.subr.mxu0 0.0
      %5437 = vmatpush1.msra.mxu0 0.0
      %5438 = vmatprep.subr.mxu0 0.0
      %5439 = vmatpush1.msra.mxu0 0.0
      %5440 = vmatprep.subr.mxu0 0.0
      %5441 = vmatpush1.msra.mxu0 0.0
      %5442 = vmatprep.subr.mxu0 0.0
      %5443 = vmatpush1.msra.mxu0 0.0
      %5444 = vmatprep.subr.mxu0 0.0
      %5445 = vmatpush1.msra.mxu0 %v4511
      %5446 = vmatprep.subr.mxu0 0.0
      %5447 = vmatpush1.msra.mxu0 %v4510
      %5448 = vmatprep.subr.mxu0 0.0
      %5449 = vmatpush1.msra.mxu0 %v4509
      %5450 = vmatprep.subr.mxu0 0.0
      %5451 = vmatpush1.msra.mxu0 %v4508
      %5452 = vmatprep.subr.mxu0 0.0
      %5453 = vmatpush1.msra.mxu0 %v4507
      %5454 = vmatprep.subr.mxu0 0.0
      %5455 = vmatpush1.msra.mxu0 %v4506
      %5456 = vmatprep.subr.mxu0 0.0
      %5457 = vmatpush1.msra.mxu0 %v4505
      %5458 = vmatprep.subr.mxu0 0.0
      %5459 = vmatpush1.msra.mxu0 %v4504
      %5460 = vmatprep.subr.mxu0 0.0
      %5461 = vmatpush2.msra.mxu0 0.0
      %5462 = vmatprep.subr.mxu0 0.0
      %5463 = vmatpush2.msra.mxu0 0.0
      %5464 = vmatprep.subr.mxu0 0.0
      %5465 = vmatpush2.msra.mxu0 0.0
      %5466 = vmatprep.subr.mxu0 0.0
      %5467 = vmatpush2.msra.mxu0 0.0
      %5468 = vmatprep.subr.mxu0 0.0
      %5469 = vmatpush2.msra.mxu0 0.0
      %5470 = vmatprep.subr.mxu0 0.0
      %5471 = vmatpush2.msra.mxu0 0.0
      %5472 = vmatprep.subr.mxu0 0.0
      %5473 = vmatpush2.msra.mxu0 0.0
      %5474 = vmatprep.subr.mxu0 0.0
      %5475 = vmatpush2.msra.mxu0 0.0
      %5476 = vmatprep.subr.mxu0 0.0
      %5477 = vmatpush2.msra.mxu0 0.0
      %5478 = vmatprep.subr.mxu0 0.0
      %5479 = vmatpush2.msra.mxu0 0.0
      %5480 = vmatprep.subr.mxu0 0.0
      %5481 = vmatpush2.msra.mxu0 0.0
      %5482 = vmatprep.subr.mxu0 0.0
      %5483 = vmatpush2.msra.mxu0 0.0
      %5484 = vmatprep.subr.mxu0 0.0
      %5485 = vmatpush2.msra.mxu0 0.0
      %5486 = vmatprep.subr.mxu0 0.0
      %5487 = vmatpush2.msra.mxu0 0.0
      %5488 = vmatprep.subr.mxu0 0.0
      %5489 = vmatpush2.msra.mxu0 0.0
      %5490 = vmatprep.subr.mxu0 0.0
      %5491 = vmatpush2.msra.mxu0 0.0
      %5492 = vmatprep.mubr.f32.mxu0 0.0
      %5493 = vmatmul.mubr.f32.gmra.mxu0 %v5405
      %v5494 = vpop.f32.mrf.mxu0
      %v5495 = vadd.f32 0.0, %v5494
      %v5496 = vpop.f32.mrf.mxu0
      %5497 = vmatprep.mubr.f32.mxu0 0.0
      %5498 = vmatmul.mubr.f32.gmra.mxu0 %v5408
      %v5499 = vpop.f32.mrf.mxu0
      %v5500 = vadd.f32 0.0, %v5499
      %v5501 = vpop.f32.mrf.mxu0
      %5502 = vmatprep.mubr.f32.mxu0 0.0
      %5503 = vmatmul.mubr.f32.gmra.mxu0 %v5411
      %v5504 = vpop.f32.mrf.mxu0
      %v5505 = vadd.f32 0.0, %v5504
      %v5506 = vpop.f32.mrf.mxu0
      %5507 = vmatprep.mubr.f32.mxu0 0.0
      %5508 = vmatmul.mubr.f32.gmra.mxu0 %v5414
      %v5509 = vpop.f32.mrf.mxu0
      %v5510 = vadd.f32 0.0, %v5509
      %v5511 = vpop.f32.mrf.mxu0
      %5512 = vmatprep.mubr.f32.mxu0 0.0
      %5513 = vmatmul.mubr.f32.gmra.mxu0 %v5417
      %v5514 = vpop.f32.mrf.mxu0
      %v5515 = vadd.f32 0.0, %v5514
      %v5516 = vpop.f32.mrf.mxu0
      %5517 = vmatprep.mubr.f32.mxu0 0.0
      %5518 = vmatmul.mubr.f32.gmra.mxu0 %v5420
      %v5519 = vpop.f32.mrf.mxu0
      %v5520 = vadd.f32 0.0, %v5519
      %v5521 = vpop.f32.mrf.mxu0
      %5522 = vmatprep.mubr.f32.mxu0 0.0
      %5523 = vmatmul.mubr.f32.gmra.mxu0 %v5423
      %v5524 = vpop.f32.mrf.mxu0
      %v5525 = vadd.f32 0.0, %v5524
      %v5526 = vpop.f32.mrf.mxu0
      %5527 = vmatprep.mubr.f32.mxu0 0.0
      %5528 = vmatmul.mubr.f32.gmra.mxu0 %v5426
      %v5529 = vpop.f32.mrf.mxu0
      %v5530 = vadd.f32 0.0, %v5529
      %v5531 = vpop.f32.mrf.mxu0
      %5532 = vdwg.mxu0
      %v5534 = vsel %vm2145, %v5380, 0
      %v5537 = vsel %vm2145, %v5381, 0
      %v5540 = vsel %vm2145, %v5382, 0
      %v5543 = vsel %vm2145, %v5383, 0
      %v5546 = vsel %vm2145, %v5384, 0
      %v5549 = vsel %vm2145, %v5385, 0
      %v5552 = vsel %vm2145, %v5386, 0
      %v5555 = vsel %vm2145, %v5387, 0
      %5557 = vmatprep.subr.mxu0 0.0
      %5558 = vmatpush1.msra.mxu0 0.0
      %5559 = vmatprep.subr.mxu0 0.0
      %5560 = vmatpush1.msra.mxu0 0.0
      %5561 = vmatprep.subr.mxu0 0.0
      %5562 = vmatpush1.msra.mxu0 0.0
      %5563 = vmatprep.subr.mxu0 0.0
      %5564 = vmatpush1.msra.mxu0 0.0
      %5565 = vmatprep.subr.mxu0 0.0
      %5566 = vmatpush1.msra.mxu0 0.0
      %5567 = vmatprep.subr.mxu0 0.0
      %5568 = vmatpush1.msra.mxu0 0.0
      %5569 = vmatprep.subr.mxu0 0.0
      %5570 = vmatpush1.msra.mxu0 0.0
      %5571 = vmatprep.subr.mxu0 0.0
      %5572 = vmatpush1.msra.mxu0 0.0
      %5573 = vmatprep.subr.mxu0 0.0
      %5574 = vmatpush1.msra.mxu0 %v4519
      %5575 = vmatprep.subr.mxu0 0.0
      %5576 = vmatpush1.msra.mxu0 %v4518
      %5577 = vmatprep.subr.mxu0 0.0
      %5578 = vmatpush1.msra.mxu0 %v4517
      %5579 = vmatprep.subr.mxu0 0.0
      %5580 = vmatpush1.msra.mxu0 %v4516
      %5581 = vmatprep.subr.mxu0 0.0
      %5582 = vmatpush1.msra.mxu0 %v4515
      %5583 = vmatprep.subr.mxu0 0.0
      %5584 = vmatpush1.msra.mxu0 %v4514
      %5585 = vmatprep.subr.mxu0 0.0
      %5586 = vmatpush1.msra.mxu0 %v4513
      %5587 = vmatprep.subr.mxu0 0.0
      %5588 = vmatpush1.msra.mxu0 %v4512
      %5589 = vmatprep.subr.mxu0 0.0
      %5590 = vmatpush2.msra.mxu0 0.0
      %5591 = vmatprep.subr.mxu0 0.0
      %5592 = vmatpush2.msra.mxu0 0.0
      %5593 = vmatprep.subr.mxu0 0.0
      %5594 = vmatpush2.msra.mxu0 0.0
      %5595 = vmatprep.subr.mxu0 0.0
      %5596 = vmatpush2.msra.mxu0 0.0
      %5597 = vmatprep.subr.mxu0 0.0
      %5598 = vmatpush2.msra.mxu0 0.0
      %5599 = vmatprep.subr.mxu0 0.0
      %5600 = vmatpush2.msra.mxu0 0.0
      %5601 = vmatprep.subr.mxu0 0.0
      %5602 = vmatpush2.msra.mxu0 0.0
      %5603 = vmatprep.subr.mxu0 0.0
      %5604 = vmatpush2.msra.mxu0 0.0
      %5605 = vmatprep.subr.mxu0 0.0
      %5606 = vmatpush2.msra.mxu0 0.0
      %5607 = vmatprep.subr.mxu0 0.0
      %5608 = vmatpush2.msra.mxu0 0.0
      %5609 = vmatprep.subr.mxu0 0.0
      %5610 = vmatpush2.msra.mxu0 0.0
      %5611 = vmatprep.subr.mxu0 0.0
      %5612 = vmatpush2.msra.mxu0 0.0
      %5613 = vmatprep.subr.mxu0 0.0
      %5614 = vmatpush2.msra.mxu0 0.0
      %5615 = vmatprep.subr.mxu0 0.0
      %5616 = vmatpush2.msra.mxu0 0.0
      %5617 = vmatprep.subr.mxu0 0.0
      %5618 = vmatpush2.msra.mxu0 0.0
      %5619 = vmatprep.subr.mxu0 0.0
      %5620 = vmatpush2.msra.mxu0 0.0
      %5621 = vmatprep.mubr.f32.mxu0 0.0
      %5622 = vmatmul.mubr.f32.gmra.mxu0 %v5534
      %v5623 = vpop.f32.mrf.mxu0
      %v5624 = vadd.f32 0.0, %v5623
      %v5625 = vpop.f32.mrf.mxu0
      %5626 = vmatprep.mubr.f32.mxu0 0.0
      %5627 = vmatmul.mubr.f32.gmra.mxu0 %v5537
      %v5628 = vpop.f32.mrf.mxu0
      %v5629 = vadd.f32 0.0, %v5628
      %v5630 = vpop.f32.mrf.mxu0
      %5631 = vmatprep.mubr.f32.mxu0 0.0
      %5632 = vmatmul.mubr.f32.gmra.mxu0 %v5540
      %v5633 = vpop.f32.mrf.mxu0
      %v5634 = vadd.f32 0.0, %v5633
      %v5635 = vpop.f32.mrf.mxu0
      %5636 = vmatprep.mubr.f32.mxu0 0.0
      %5637 = vmatmul.mubr.f32.gmra.mxu0 %v5543
      %v5638 = vpop.f32.mrf.mxu0
      %v5639 = vadd.f32 0.0, %v5638
      %v5640 = vpop.f32.mrf.mxu0
      %5641 = vmatprep.mubr.f32.mxu0 0.0
      %5642 = vmatmul.mubr.f32.gmra.mxu0 %v5546
      %v5643 = vpop.f32.mrf.mxu0
      %v5644 = vadd.f32 0.0, %v5643
      %v5645 = vpop.f32.mrf.mxu0
      %5646 = vmatprep.mubr.f32.mxu0 0.0
      %5647 = vmatmul.mubr.f32.gmra.mxu0 %v5549
      %v5648 = vpop.f32.mrf.mxu0
      %v5649 = vadd.f32 0.0, %v5648
      %v5650 = vpop.f32.mrf.mxu0
      %5651 = vmatprep.mubr.f32.mxu0 0.0
      %5652 = vmatmul.mubr.f32.gmra.mxu0 %v5552
      %v5653 = vpop.f32.mrf.mxu0
      %v5654 = vadd.f32 0.0, %v5653
      %v5655 = vpop.f32.mrf.mxu0
      %5656 = vmatprep.mubr.f32.mxu0 0.0
      %5657 = vmatmul.mubr.f32.gmra.mxu0 %v5555
      %v5658 = vpop.f32.mrf.mxu0
      %v5659 = vadd.f32 0.0, %v5658
      %v5660 = vpop.f32.mrf.mxu0
      %5661 = vdwg.mxu0
      %v5663 = vsel %vm2145, %v5388, 0
      %v5666 = vsel %vm2145, %v5389, 0
      %v5669 = vsel %vm2145, %v5390, 0
      %v5672 = vsel %vm2145, %v5391, 0
      %v5675 = vsel %vm2145, %v5392, 0
      %v5678 = vsel %vm2145, %v5393, 0
      %v5681 = vsel %vm2145, %v5394, 0
      %v5684 = vsel %vm2145, %v5395, 0
      %5686 = vmatprep.subr.mxu0 0.0
      %5687 = vmatpush1.msra.mxu0 0.0
      %5688 = vmatprep.subr.mxu0 0.0
      %5689 = vmatpush1.msra.mxu0 0.0
      %5690 = vmatprep.subr.mxu0 0.0
      %5691 = vmatpush1.msra.mxu0 0.0
      %5692 = vmatprep.subr.mxu0 0.0
      %5693 = vmatpush1.msra.mxu0 0.0
      %5694 = vmatprep.subr.mxu0 0.0
      %5695 = vmatpush1.msra.mxu0 0.0
      %5696 = vmatprep.subr.mxu0 0.0
      %5697 = vmatpush1.msra.mxu0 0.0
      %5698 = vmatprep.subr.mxu0 0.0
      %5699 = vmatpush1.msra.mxu0 0.0
      %5700 = vmatprep.subr.mxu0 0.0
      %5701 = vmatpush1.msra.mxu0 0.0
      %5702 = vmatprep.subr.mxu0 0.0
      %5703 = vmatpush1.msra.mxu0 %v4527
      %5704 = vmatprep.subr.mxu0 0.0
      %5705 = vmatpush1.msra.mxu0 %v4526
      %5706 = vmatprep.subr.mxu0 0.0
      %5707 = vmatpush1.msra.mxu0 %v4525
      %5708 = vmatprep.subr.mxu0 0.0
      %5709 = vmatpush1.msra.mxu0 %v4524
      %5710 = vmatprep.subr.mxu0 0.0
      %5711 = vmatpush1.msra.mxu0 %v4523
      %5712 = vmatprep.subr.mxu0 0.0
      %5713 = vmatpush1.msra.mxu0 %v4522
      %5714 = vmatprep.subr.mxu0 0.0
      %5715 = vmatpush1.msra.mxu0 %v4521
      %5716 = vmatprep.subr.mxu0 0.0
      %5717 = vmatpush1.msra.mxu0 %v4520
      %5718 = vmatprep.subr.mxu0 0.0
      %5719 = vmatpush2.msra.mxu0 0.0
      %5720 = vmatprep.subr.mxu0 0.0
      %5721 = vmatpush2.msra.mxu0 0.0
      %5722 = vmatprep.subr.mxu0 0.0
      %5723 = vmatpush2.msra.mxu0 0.0
      %5724 = vmatprep.subr.mxu0 0.0
      %5725 = vmatpush2.msra.mxu0 0.0
      %5726 = vmatprep.subr.mxu0 0.0
      %5727 = vmatpush2.msra.mxu0 0.0
      %5728 = vmatprep.subr.mxu0 0.0
      %5729 = vmatpush2.msra.mxu0 0.0
      %5730 = vmatprep.subr.mxu0 0.0
      %5731 = vmatpush2.msra.mxu0 0.0
      %5732 = vmatprep.subr.mxu0 0.0
      %5733 = vmatpush2.msra.mxu0 0.0
      %5734 = vmatprep.subr.mxu0 0.0
      %5735 = vmatpush2.msra.mxu0 0.0
      %5736 = vmatprep.subr.mxu0 0.0
      %5737 = vmatpush2.msra.mxu0 0.0
      %5738 = vmatprep.subr.mxu0 0.0
      %5739 = vmatpush2.msra.mxu0 0.0
      %5740 = vmatprep.subr.mxu0 0.0
      %5741 = vmatpush2.msra.mxu0 0.0
      %5742 = vmatprep.subr.mxu0 0.0
      %5743 = vmatpush2.msra.mxu0 0.0
      %5744 = vmatprep.subr.mxu0 0.0
      %5745 = vmatpush2.msra.mxu0 0.0
      %5746 = vmatprep.subr.mxu0 0.0
      %5747 = vmatpush2.msra.mxu0 0.0
      %5748 = vmatprep.subr.mxu0 0.0
      %5749 = vmatpush2.msra.mxu0 0.0
      %5750 = vmatprep.mubr.f32.mxu0 0.0
      %5751 = vmatmul.mubr.f32.gmra.mxu0 %v5663
      %v5752 = vpop.f32.mrf.mxu0
      %v5753 = vadd.f32 0.0, %v5752
      %v5754 = vpop.f32.mrf.mxu0
      %5755 = vmatprep.mubr.f32.mxu0 0.0
      %5756 = vmatmul.mubr.f32.gmra.mxu0 %v5666
      %v5757 = vpop.f32.mrf.mxu0
      %v5758 = vadd.f32 0.0, %v5757
      %v5759 = vpop.f32.mrf.mxu0
      %5760 = vmatprep.mubr.f32.mxu0 0.0
      %5761 = vmatmul.mubr.f32.gmra.mxu0 %v5669
      %v5762 = vpop.f32.mrf.mxu0
      %v5763 = vadd.f32 0.0, %v5762
      %v5764 = vpop.f32.mrf.mxu0
      %5765 = vmatprep.mubr.f32.mxu0 0.0
      %5766 = vmatmul.mubr.f32.gmra.mxu0 %v5672
      %v5767 = vpop.f32.mrf.mxu0
      %v5768 = vadd.f32 0.0, %v5767
      %v5769 = vpop.f32.mrf.mxu0
      %5770 = vmatprep.mubr.f32.mxu0 0.0
      %5771 = vmatmul.mubr.f32.gmra.mxu0 %v5675
      %v5772 = vpop.f32.mrf.mxu0
      %v5773 = vadd.f32 0.0, %v5772
      %v5774 = vpop.f32.mrf.mxu0
      %5775 = vmatprep.mubr.f32.mxu0 0.0
      %5776 = vmatmul.mubr.f32.gmra.mxu0 %v5678
      %v5777 = vpop.f32.mrf.mxu0
      %v5778 = vadd.f32 0.0, %v5777
      %v5779 = vpop.f32.mrf.mxu0
      %5780 = vmatprep.mubr.f32.mxu0 0.0
      %5781 = vmatmul.mubr.f32.gmra.mxu0 %v5681
      %v5782 = vpop.f32.mrf.mxu0
      %v5783 = vadd.f32 0.0, %v5782
      %v5784 = vpop.f32.mrf.mxu0
      %5785 = vmatprep.mubr.f32.mxu0 0.0
      %5786 = vmatmul.mubr.f32.gmra.mxu0 %v5684
      %v5787 = vpop.f32.mrf.mxu0
      %v5788 = vadd.f32 0.0, %v5787
      %v5789 = vpop.f32.mrf.mxu0
      %5790 = vdwg.mxu0
      %v5792 = vsel %vm2145, %v5396, 0
      %v5795 = vsel %vm2145, %v5397, 0
      %v5798 = vsel %vm2145, %v5398, 0
      %v5801 = vsel %vm2145, %v5399, 0
      %v5804 = vsel %vm2145, %v5400, 0
      %v5807 = vsel %vm2145, %v5401, 0
      %v5810 = vsel %vm2145, %v5402, 0
      %v5813 = vsel %vm2145, %v5403, 0
      %5815 = vmatprep.subr.mxu0 0.0
      %5816 = vmatpush1.msra.mxu0 0.0
      %5817 = vmatprep.subr.mxu0 0.0
      %5818 = vmatpush1.msra.mxu0 0.0
      %5819 = vmatprep.subr.mxu0 0.0
      %5820 = vmatpush1.msra.mxu0 0.0
      %5821 = vmatprep.subr.mxu0 0.0
      %5822 = vmatpush1.msra.mxu0 0.0
      %5823 = vmatprep.subr.mxu0 0.0
      %5824 = vmatpush1.msra.mxu0 0.0
      %5825 = vmatprep.subr.mxu0 0.0
      %5826 = vmatpush1.msra.mxu0 0.0
      %5827 = vmatprep.subr.mxu0 0.0
      %5828 = vmatpush1.msra.mxu0 0.0
      %5829 = vmatprep.subr.mxu0 0.0
      %5830 = vmatpush1.msra.mxu0 0.0
      %5831 = vmatprep.subr.mxu0 0.0
      %5832 = vmatpush1.msra.mxu0 %v4535
      %5833 = vmatprep.subr.mxu0 0.0
      %5834 = vmatpush1.msra.mxu0 %v4534
      %5835 = vmatprep.subr.mxu0 0.0
      %5836 = vmatpush1.msra.mxu0 %v4533
      %5837 = vmatprep.subr.mxu0 0.0
      %5838 = vmatpush1.msra.mxu0 %v4532
      %5839 = vmatprep.subr.mxu0 0.0
      %5840 = vmatpush1.msra.mxu0 %v4531
      %5841 = vmatprep.subr.mxu0 0.0
      %5842 = vmatpush1.msra.mxu0 %v4530
      %5843 = vmatprep.subr.mxu0 0.0
      %5844 = vmatpush1.msra.mxu0 %v4529
      %5845 = vmatprep.subr.mxu0 0.0
      %5846 = vmatpush1.msra.mxu0 %v4528
      %5847 = vmatprep.subr.mxu0 0.0
      %5848 = vmatpush2.msra.mxu0 0.0
      %5849 = vmatprep.subr.mxu0 0.0
      %5850 = vmatpush2.msra.mxu0 0.0
      %5851 = vmatprep.subr.mxu0 0.0
      %5852 = vmatpush2.msra.mxu0 0.0
      %5853 = vmatprep.subr.mxu0 0.0
      %5854 = vmatpush2.msra.mxu0 0.0
      %5855 = vmatprep.subr.mxu0 0.0
      %5856 = vmatpush2.msra.mxu0 0.0
      %5857 = vmatprep.subr.mxu0 0.0
      %5858 = vmatpush2.msra.mxu0 0.0
      %5859 = vmatprep.subr.mxu0 0.0
      %5860 = vmatpush2.msra.mxu0 0.0
      %5861 = vmatprep.subr.mxu0 0.0
      %5862 = vmatpush2.msra.mxu0 0.0
      %5863 = vmatprep.subr.mxu0 0.0
      %5864 = vmatpush2.msra.mxu0 0.0
      %5865 = vmatprep.subr.mxu0 0.0
      %5866 = vmatpush2.msra.mxu0 0.0
      %5867 = vmatprep.subr.mxu0 0.0
      %5868 = vmatpush2.msra.mxu0 0.0
      %5869 = vmatprep.subr.mxu0 0.0
      %5870 = vmatpush2.msra.mxu0 0.0
      %5871 = vmatprep.subr.mxu0 0.0
      %5872 = vmatpush2.msra.mxu0 0.0
      %5873 = vmatprep.subr.mxu0 0.0
      %5874 = vmatpush2.msra.mxu0 0.0
      %5875 = vmatprep.subr.mxu0 0.0
      %5876 = vmatpush2.msra.mxu0 0.0
      %5877 = vmatprep.subr.mxu0 0.0
      %5878 = vmatpush2.msra.mxu0 0.0
      %5879 = vmatprep.mubr.f32.mxu0 0.0
      %5880 = vmatmul.mubr.f32.gmra.mxu0 %v5792
      %v5881 = vpop.f32.mrf.mxu0
      %v5882 = vadd.f32 0.0, %v5881
      %v5883 = vpop.f32.mrf.mxu0
      %5884 = vmatprep.mubr.f32.mxu0 0.0
      %5885 = vmatmul.mubr.f32.gmra.mxu0 %v5795
      %v5886 = vpop.f32.mrf.mxu0
      %v5887 = vadd.f32 0.0, %v5886
      %v5888 = vpop.f32.mrf.mxu0
      %5889 = vmatprep.mubr.f32.mxu0 0.0
      %5890 = vmatmul.mubr.f32.gmra.mxu0 %v5798
      %v5891 = vpop.f32.mrf.mxu0
      %v5892 = vadd.f32 0.0, %v5891
      %v5893 = vpop.f32.mrf.mxu0
      %5894 = vmatprep.mubr.f32.mxu0 0.0
      %5895 = vmatmul.mubr.f32.gmra.mxu0 %v5801
      %v5896 = vpop.f32.mrf.mxu0
      %v5897 = vadd.f32 0.0, %v5896
      %v5898 = vpop.f32.mrf.mxu0
      %5899 = vmatprep.mubr.f32.mxu0 0.0
      %5900 = vmatmul.mubr.f32.gmra.mxu0 %v5804
      %v5901 = vpop.f32.mrf.mxu0
      %v5902 = vadd.f32 0.0, %v5901
      %v5903 = vpop.f32.mrf.mxu0
      %5904 = vmatprep.mubr.f32.mxu0 0.0
      %5905 = vmatmul.mubr.f32.gmra.mxu0 %v5807
      %v5906 = vpop.f32.mrf.mxu0
      %v5907 = vadd.f32 0.0, %v5906
      %v5908 = vpop.f32.mrf.mxu0
      %5909 = vmatprep.mubr.f32.mxu0 0.0
      %5910 = vmatmul.mubr.f32.gmra.mxu0 %v5810
      %v5911 = vpop.f32.mrf.mxu0
      %v5912 = vadd.f32 0.0, %v5911
      %v5913 = vpop.f32.mrf.mxu0
      %5914 = vmatprep.mubr.f32.mxu0 0.0
      %5915 = vmatmul.mubr.f32.gmra.mxu0 %v5813
      %v5916 = vpop.f32.mrf.mxu0
      %v5917 = vadd.f32 0.0, %v5916
      %v5918 = vpop.f32.mrf.mxu0
      %5919 = vdwg.mxu0
      %v5920 = vadd.f32 %v4042, %v5495
      %v5921 = vadd.f32 %v4047, %v5500
      %v5922 = vadd.f32 %v4052, %v5505
      %v5923 = vadd.f32 %v4057, %v5510
      %v5924 = vadd.f32 %v4062, %v5515
      %v5925 = vadd.f32 %v4067, %v5520
      %v5926 = vadd.f32 %v4072, %v5525
      %v5927 = vadd.f32 %v4077, %v5530
      %v5928 = vadd.f32 %v4171, %v5624
      %v5929 = vadd.f32 %v4176, %v5629
      %v5930 = vadd.f32 %v4181, %v5634
      %v5931 = vadd.f32 %v4186, %v5639
      %v5932 = vadd.f32 %v4191, %v5644
      %v5933 = vadd.f32 %v4196, %v5649
      %v5934 = vadd.f32 %v4201, %v5654
      %v5935 = vadd.f32 %v4206, %v5659
      %v5936 = vadd.f32 %v4300, %v5753
      %v5937 = vadd.f32 %v4305, %v5758
      %v5938 = vadd.f32 %v4310, %v5763
      %v5939 = vadd.f32 %v4315, %v5768
      %v5940 = vadd.f32 %v4320, %v5773
      %v5941 = vadd.f32 %v4325, %v5778
      %v5942 = vadd.f32 %v4330, %v5783
      %v5943 = vadd.f32 %v4335, %v5788
      %v5944 = vadd.f32 %v4429, %v5882
      %v5945 = vadd.f32 %v4434, %v5887
      %v5946 = vadd.f32 %v4439, %v5892
      %v5947 = vadd.f32 %v4444, %v5897
      %v5948 = vadd.f32 %v4449, %v5902
      %v5949 = vadd.f32 %v4454, %v5907
      %v5950 = vadd.f32 %v4459, %v5912
      %v5951 = vadd.f32 %v4464, %v5917
      %vm5952 = vcmp.ge.s32.totalorder %v1239, 24
      %vm5953 = vcmp.lt.s32.totalorder %v1239, 32
      %vm5954 = vmand %vm5952, %vm5953
      %v5955 = vsel %vm5954, 1, 0
      %vm5956 = vcmp.eq.s32.totalorder %v5955, 1
      %v5957 = vsel %vm5956, %v1278, 0.0
      %v5958 = vsel %vm5956, %v1280, 0.0
      %v5959 = vsel %vm5956, %v1282, 0.0
      %v5960 = vsel %vm5956, %v1284, 0.0
      %v5961 = vsel %vm5956, %v1286, 0.0
      %v5962 = vsel %vm5956, %v1288, 0.0
      %v5963 = vsel %vm5956, %v1290, 0.0
      %v5964 = vsel %vm5956, %v1292, 0.0
      %v5965 = vsel %vm5956, %v1294, 0.0
      %v5966 = vsel %vm5956, %v1296, 0.0
      %v5967 = vsel %vm5956, %v1298, 0.0
      %v5968 = vsel %vm5956, %v1300, 0.0
      %v5969 = vsel %vm5956, %v1302, 0.0
      %v5970 = vsel %vm5956, %v1304, 0.0
      %v5971 = vsel %vm5956, %v1306, 0.0
      %v5972 = vsel %vm5956, %v1308, 0.0
      %v5973 = vsel %vm5956, %v1310, 0.0
      %v5974 = vsel %vm5956, %v1312, 0.0
      %v5975 = vsel %vm5956, %v1314, 0.0
      %v5976 = vsel %vm5956, %v1316, 0.0
      %v5977 = vsel %vm5956, %v1318, 0.0
      %v5978 = vsel %vm5956, %v1320, 0.0
      %v5979 = vsel %vm5956, %v1322, 0.0
      %v5980 = vsel %vm5956, %v1324, 0.0
      %v5981 = vsel %vm5956, %v1326, 0.0
      %v5982 = vsel %vm5956, %v1328, 0.0
      %v5983 = vsel %vm5956, %v1330, 0.0
      %v5984 = vsel %vm5956, %v1332, 0.0
      %v5985 = vsel %vm5956, %v1334, 0.0
      %v5986 = vsel %vm5956, %v1336, 0.0
      %v5987 = vsel %vm5956, %v1338, 0.0
      %v5988 = vsel %vm5956, %v1340, 0.0
      %v5989 = vsel %vm5956, %v1406, 0.0
      %v5990 = vsel %vm5956, %v1408, 0.0
      %v5991 = vsel %vm5956, %v1410, 0.0
      %v5992 = vsel %vm5956, %v1412, 0.0
      %v5993 = vsel %vm5956, %v1414, 0.0
      %v5994 = vsel %vm5956, %v1416, 0.0
      %v5995 = vsel %vm5956, %v1418, 0.0
      %v5996 = vsel %vm5956, %v1420, 0.0
      %v5997 = vsel %vm5956, %v1422, 0.0
      %v5998 = vsel %vm5956, %v1424, 0.0
      %v5999 = vsel %vm5956, %v1426, 0.0
      %v6000 = vsel %vm5956, %v1428, 0.0
      %v6001 = vsel %vm5956, %v1430, 0.0
      %v6002 = vsel %vm5956, %v1432, 0.0
      %v6003 = vsel %vm5956, %v1434, 0.0
      %v6004 = vsel %vm5956, %v1436, 0.0
      %v6005 = vsel %vm5956, %v1438, 0.0
      %v6006 = vsel %vm5956, %v1440, 0.0
      %v6007 = vsel %vm5956, %v1442, 0.0
      %v6008 = vsel %vm5956, %v1444, 0.0
      %v6009 = vsel %vm5956, %v1446, 0.0
      %v6010 = vsel %vm5956, %v1448, 0.0
      %v6011 = vsel %vm5956, %v1450, 0.0
      %v6012 = vsel %vm5956, %v1452, 0.0
      %v6013 = vsel %vm5956, %v1454, 0.0
      %v6014 = vsel %vm5956, %v1456, 0.0
      %v6015 = vsel %vm5956, %v1458, 0.0
      %v6016 = vsel %vm5956, %v1460, 0.0
      %v6017 = vsel %vm5956, %v1462, 0.0
      %v6018 = vsel %vm5956, %v1464, 0.0
      %v6019 = vsel %vm5956, %v1466, 0.0
      %v6020 = vsel %vm5956, %v1468, 0.0
      %v6022 = vsel %vm346, %v5957, 0
      %v6025 = vsel %vm346, %v5958, 0
      %v6028 = vsel %vm346, %v5959, 0
      %v6031 = vsel %vm346, %v5960, 0
      %v6034 = vsel %vm346, %v5961, 0
      %v6037 = vsel %vm346, %v5962, 0
      %v6040 = vsel %vm346, %v5963, 0
      %v6043 = vsel %vm346, %v5964, 0
      %6045 = vmatprep.subr.mxu0 0.0
      %6046 = vmatpush1.xpose.msra.mxu0 0.0
      %6047 = vmatprep.subr.mxu0 0.0
      %6048 = vmatpush1.xpose.msra.mxu0 0.0
      %6049 = vmatprep.subr.mxu0 0.0
      %6050 = vmatpush1.xpose.msra.mxu0 0.0
      %6051 = vmatprep.subr.mxu0 0.0
      %6052 = vmatpush1.xpose.msra.mxu0 0.0
      %6053 = vmatprep.subr.mxu0 0.0
      %6054 = vmatpush1.xpose.msra.mxu0 0.0
      %6055 = vmatprep.subr.mxu0 0.0
      %6056 = vmatpush1.xpose.msra.mxu0 0.0
      %6057 = vmatprep.subr.mxu0 0.0
      %6058 = vmatpush1.xpose.msra.mxu0 0.0
      %6059 = vmatprep.subr.mxu0 0.0
      %6060 = vmatpush1.xpose.msra.mxu0 0.0
      %6061 = vmatprep.subr.mxu0 0.0
      %6062 = vmatpush1.xpose.msra.mxu0 %v6043
      %6063 = vmatprep.subr.mxu0 0.0
      %6064 = vmatpush1.xpose.msra.mxu0 %v6040
      %6065 = vmatprep.subr.mxu0 0.0
      %6066 = vmatpush1.xpose.msra.mxu0 %v6037
      %6067 = vmatprep.subr.mxu0 0.0
      %6068 = vmatpush1.xpose.msra.mxu0 %v6034
      %6069 = vmatprep.subr.mxu0 0.0
      %6070 = vmatpush1.xpose.msra.mxu0 %v6031
      %6071 = vmatprep.subr.mxu0 0.0
      %6072 = vmatpush1.xpose.msra.mxu0 %v6028
      %6073 = vmatprep.subr.mxu0 0.0
      %6074 = vmatpush1.xpose.msra.mxu0 %v6025
      %6075 = vmatprep.subr.mxu0 0.0
      %6076 = vmatpush1.xpose.msra.mxu0 %v6022
      %6077 = vmatprep.subr.mxu0 0.0
      %6078 = vmatpush2.xpose.msra.mxu0 0.0
      %6079 = vmatprep.subr.mxu0 0.0
      %6080 = vmatpush2.xpose.msra.mxu0 0.0
      %6081 = vmatprep.subr.mxu0 0.0
      %6082 = vmatpush2.xpose.msra.mxu0 0.0
      %6083 = vmatprep.subr.mxu0 0.0
      %6084 = vmatpush2.xpose.msra.mxu0 0.0
      %6085 = vmatprep.subr.mxu0 0.0
      %6086 = vmatpush2.xpose.msra.mxu0 0.0
      %6087 = vmatprep.subr.mxu0 0.0
      %6088 = vmatpush2.xpose.msra.mxu0 0.0
      %6089 = vmatprep.subr.mxu0 0.0
      %6090 = vmatpush2.xpose.msra.mxu0 0.0
      %6091 = vmatprep.subr.mxu0 0.0
      %6092 = vmatpush2.xpose.msra.mxu0 0.0
      %6093 = vmatprep.subr.mxu0 0.0
      %6094 = vmatpush2.xpose.msra.mxu0 0.0
      %6095 = vmatprep.subr.mxu0 0.0
      %6096 = vmatpush2.xpose.msra.mxu0 0.0
      %6097 = vmatprep.subr.mxu0 0.0
      %6098 = vmatpush2.xpose.msra.mxu0 0.0
      %6099 = vmatprep.subr.mxu0 0.0
      %6100 = vmatpush2.xpose.msra.mxu0 0.0
      %6101 = vmatprep.subr.mxu0 0.0
      %6102 = vmatpush2.xpose.msra.mxu0 0.0
      %6103 = vmatprep.subr.mxu0 0.0
      %6104 = vmatpush2.xpose.msra.mxu0 0.0
      %6105 = vmatprep.subr.mxu0 0.0
      %6106 = vmatpush2.xpose.msra.mxu0 0.0
      %6107 = vmatprep.subr.mxu0 0.0
      %6108 = vmatpush2.xpose.msra.mxu0 0.0
      %6109 = vmatprep.mubr.f32.mxu0 0.0
      %6110 = vmatmul.mubr.f32.gmra.mxu0 %v1534
      %v6111 = vpop.f32.mrf.mxu0
      %v6112 = vadd.f32 %v1206, %v6111
      %v6113 = vpop.f32.mrf.mxu0
      %6114 = vmatprep.mubr.f32.mxu0 0.0
      %6115 = vmatmul.mubr.f32.gmra.mxu0 %v1537
      %v6116 = vpop.f32.mrf.mxu0
      %v6117 = vadd.f32 %v1207, %v6116
      %v6118 = vpop.f32.mrf.mxu0
      %6119 = vmatprep.mubr.f32.mxu0 0.0
      %6120 = vmatmul.mubr.f32.gmra.mxu0 %v1540
      %v6121 = vpop.f32.mrf.mxu0
      %v6122 = vadd.f32 %v1208, %v6121
      %v6123 = vpop.f32.mrf.mxu0
      %6124 = vmatprep.mubr.f32.mxu0 0.0
      %6125 = vmatmul.mubr.f32.gmra.mxu0 %v1543
      %v6126 = vpop.f32.mrf.mxu0
      %v6127 = vadd.f32 %v1209, %v6126
      %v6128 = vpop.f32.mrf.mxu0
      %6129 = vmatprep.mubr.f32.mxu0 0.0
      %6130 = vmatmul.mubr.f32.gmra.mxu0 %v1546
      %v6131 = vpop.f32.mrf.mxu0
      %v6132 = vadd.f32 %v1210, %v6131
      %v6133 = vpop.f32.mrf.mxu0
      %6134 = vmatprep.mubr.f32.mxu0 0.0
      %6135 = vmatmul.mubr.f32.gmra.mxu0 %v1549
      %v6136 = vpop.f32.mrf.mxu0
      %v6137 = vadd.f32 %v1211, %v6136
      %v6138 = vpop.f32.mrf.mxu0
      %6139 = vmatprep.mubr.f32.mxu0 0.0
      %6140 = vmatmul.mubr.f32.gmra.mxu0 %v1552
      %v6141 = vpop.f32.mrf.mxu0
      %v6142 = vadd.f32 %v1212, %v6141
      %v6143 = vpop.f32.mrf.mxu0
      %6144 = vmatprep.mubr.f32.mxu0 0.0
      %6145 = vmatmul.mubr.f32.gmra.mxu0 %v1555
      %v6146 = vpop.f32.mrf.mxu0
      %v6147 = vadd.f32 %v1213, %v6146
      %v6148 = vpop.f32.mrf.mxu0
      %6149 = vdwg.mxu0
      %v6151 = vsel %vm346, %v5965, 0
      %v6154 = vsel %vm346, %v5966, 0
      %v6157 = vsel %vm346, %v5967, 0
      %v6160 = vsel %vm346, %v5968, 0
      %v6163 = vsel %vm346, %v5969, 0
      %v6166 = vsel %vm346, %v5970, 0
      %v6169 = vsel %vm346, %v5971, 0
      %v6172 = vsel %vm346, %v5972, 0
      %6174 = vmatprep.subr.mxu0 0.0
      %6175 = vmatpush1.xpose.msra.mxu0 0.0
      %6176 = vmatprep.subr.mxu0 0.0
      %6177 = vmatpush1.xpose.msra.mxu0 0.0
      %6178 = vmatprep.subr.mxu0 0.0
      %6179 = vmatpush1.xpose.msra.mxu0 0.0
      %6180 = vmatprep.subr.mxu0 0.0
      %6181 = vmatpush1.xpose.msra.mxu0 0.0
      %6182 = vmatprep.subr.mxu0 0.0
      %6183 = vmatpush1.xpose.msra.mxu0 0.0
      %6184 = vmatprep.subr.mxu0 0.0
      %6185 = vmatpush1.xpose.msra.mxu0 0.0
      %6186 = vmatprep.subr.mxu0 0.0
      %6187 = vmatpush1.xpose.msra.mxu0 0.0
      %6188 = vmatprep.subr.mxu0 0.0
      %6189 = vmatpush1.xpose.msra.mxu0 0.0
      %6190 = vmatprep.subr.mxu0 0.0
      %6191 = vmatpush1.xpose.msra.mxu0 %v6172
      %6192 = vmatprep.subr.mxu0 0.0
      %6193 = vmatpush1.xpose.msra.mxu0 %v6169
      %6194 = vmatprep.subr.mxu0 0.0
      %6195 = vmatpush1.xpose.msra.mxu0 %v6166
      %6196 = vmatprep.subr.mxu0 0.0
      %6197 = vmatpush1.xpose.msra.mxu0 %v6163
      %6198 = vmatprep.subr.mxu0 0.0
      %6199 = vmatpush1.xpose.msra.mxu0 %v6160
      %6200 = vmatprep.subr.mxu0 0.0
      %6201 = vmatpush1.xpose.msra.mxu0 %v6157
      %6202 = vmatprep.subr.mxu0 0.0
      %6203 = vmatpush1.xpose.msra.mxu0 %v6154
      %6204 = vmatprep.subr.mxu0 0.0
      %6205 = vmatpush1.xpose.msra.mxu0 %v6151
      %6206 = vmatprep.subr.mxu0 0.0
      %6207 = vmatpush2.xpose.msra.mxu0 0.0
      %6208 = vmatprep.subr.mxu0 0.0
      %6209 = vmatpush2.xpose.msra.mxu0 0.0
      %6210 = vmatprep.subr.mxu0 0.0
      %6211 = vmatpush2.xpose.msra.mxu0 0.0
      %6212 = vmatprep.subr.mxu0 0.0
      %6213 = vmatpush2.xpose.msra.mxu0 0.0
      %6214 = vmatprep.subr.mxu0 0.0
      %6215 = vmatpush2.xpose.msra.mxu0 0.0
      %6216 = vmatprep.subr.mxu0 0.0
      %6217 = vmatpush2.xpose.msra.mxu0 0.0
      %6218 = vmatprep.subr.mxu0 0.0
      %6219 = vmatpush2.xpose.msra.mxu0 0.0
      %6220 = vmatprep.subr.mxu0 0.0
      %6221 = vmatpush2.xpose.msra.mxu0 0.0
      %6222 = vmatprep.subr.mxu0 0.0
      %6223 = vmatpush2.xpose.msra.mxu0 0.0
      %6224 = vmatprep.subr.mxu0 0.0
      %6225 = vmatpush2.xpose.msra.mxu0 0.0
      %6226 = vmatprep.subr.mxu0 0.0
      %6227 = vmatpush2.xpose.msra.mxu0 0.0
      %6228 = vmatprep.subr.mxu0 0.0
      %6229 = vmatpush2.xpose.msra.mxu0 0.0
      %6230 = vmatprep.subr.mxu0 0.0
      %6231 = vmatpush2.xpose.msra.mxu0 0.0
      %6232 = vmatprep.subr.mxu0 0.0
      %6233 = vmatpush2.xpose.msra.mxu0 0.0
      %6234 = vmatprep.subr.mxu0 0.0
      %6235 = vmatpush2.xpose.msra.mxu0 0.0
      %6236 = vmatprep.subr.mxu0 0.0
      %6237 = vmatpush2.xpose.msra.mxu0 0.0
      %6238 = vmatprep.mubr.f32.mxu0 0.0
      %6239 = vmatmul.mubr.f32.gmra.mxu0 %v1687
      %v6240 = vpop.f32.mrf.mxu0
      %v6241 = vadd.f32 %v1214, %v6240
      %v6242 = vpop.f32.mrf.mxu0
      %6243 = vmatprep.mubr.f32.mxu0 0.0
      %6244 = vmatmul.mubr.f32.gmra.mxu0 %v1690
      %v6245 = vpop.f32.mrf.mxu0
      %v6246 = vadd.f32 %v1215, %v6245
      %v6247 = vpop.f32.mrf.mxu0
      %6248 = vmatprep.mubr.f32.mxu0 0.0
      %6249 = vmatmul.mubr.f32.gmra.mxu0 %v1693
      %v6250 = vpop.f32.mrf.mxu0
      %v6251 = vadd.f32 %v1216, %v6250
      %v6252 = vpop.f32.mrf.mxu0
      %6253 = vmatprep.mubr.f32.mxu0 0.0
      %6254 = vmatmul.mubr.f32.gmra.mxu0 %v1696
      %v6255 = vpop.f32.mrf.mxu0
      %v6256 = vadd.f32 %v1217, %v6255
      %v6257 = vpop.f32.mrf.mxu0
      %6258 = vmatprep.mubr.f32.mxu0 0.0
      %6259 = vmatmul.mubr.f32.gmra.mxu0 %v1699
      %v6260 = vpop.f32.mrf.mxu0
      %v6261 = vadd.f32 %v1218, %v6260
      %v6262 = vpop.f32.mrf.mxu0
      %6263 = vmatprep.mubr.f32.mxu0 0.0
      %6264 = vmatmul.mubr.f32.gmra.mxu0 %v1702
      %v6265 = vpop.f32.mrf.mxu0
      %v6266 = vadd.f32 %v1219, %v6265
      %v6267 = vpop.f32.mrf.mxu0
      %6268 = vmatprep.mubr.f32.mxu0 0.0
      %6269 = vmatmul.mubr.f32.gmra.mxu0 %v1705
      %v6270 = vpop.f32.mrf.mxu0
      %v6271 = vadd.f32 %v1220, %v6270
      %v6272 = vpop.f32.mrf.mxu0
      %6273 = vmatprep.mubr.f32.mxu0 0.0
      %6274 = vmatmul.mubr.f32.gmra.mxu0 %v1708
      %v6275 = vpop.f32.mrf.mxu0
      %v6276 = vadd.f32 %v1221, %v6275
      %v6277 = vpop.f32.mrf.mxu0
      %6278 = vdwg.mxu0
      %v6280 = vsel %vm346, %v5973, 0
      %v6283 = vsel %vm346, %v5974, 0
      %v6286 = vsel %vm346, %v5975, 0
      %v6289 = vsel %vm346, %v5976, 0
      %v6292 = vsel %vm346, %v5977, 0
      %v6295 = vsel %vm346, %v5978, 0
      %v6298 = vsel %vm346, %v5979, 0
      %v6301 = vsel %vm346, %v5980, 0
      %6303 = vmatprep.subr.mxu0 0.0
      %6304 = vmatpush1.xpose.msra.mxu0 0.0
      %6305 = vmatprep.subr.mxu0 0.0
      %6306 = vmatpush1.xpose.msra.mxu0 0.0
      %6307 = vmatprep.subr.mxu0 0.0
      %6308 = vmatpush1.xpose.msra.mxu0 0.0
      %6309 = vmatprep.subr.mxu0 0.0
      %6310 = vmatpush1.xpose.msra.mxu0 0.0
      %6311 = vmatprep.subr.mxu0 0.0
      %6312 = vmatpush1.xpose.msra.mxu0 0.0
      %6313 = vmatprep.subr.mxu0 0.0
      %6314 = vmatpush1.xpose.msra.mxu0 0.0
      %6315 = vmatprep.subr.mxu0 0.0
      %6316 = vmatpush1.xpose.msra.mxu0 0.0
      %6317 = vmatprep.subr.mxu0 0.0
      %6318 = vmatpush1.xpose.msra.mxu0 0.0
      %6319 = vmatprep.subr.mxu0 0.0
      %6320 = vmatpush1.xpose.msra.mxu0 %v6301
      %6321 = vmatprep.subr.mxu0 0.0
      %6322 = vmatpush1.xpose.msra.mxu0 %v6298
      %6323 = vmatprep.subr.mxu0 0.0
      %6324 = vmatpush1.xpose.msra.mxu0 %v6295
      %6325 = vmatprep.subr.mxu0 0.0
      %6326 = vmatpush1.xpose.msra.mxu0 %v6292
      %6327 = vmatprep.subr.mxu0 0.0
      %6328 = vmatpush1.xpose.msra.mxu0 %v6289
      %6329 = vmatprep.subr.mxu0 0.0
      %6330 = vmatpush1.xpose.msra.mxu0 %v6286
      %6331 = vmatprep.subr.mxu0 0.0
      %6332 = vmatpush1.xpose.msra.mxu0 %v6283
      %6333 = vmatprep.subr.mxu0 0.0
      %6334 = vmatpush1.xpose.msra.mxu0 %v6280
      %6335 = vmatprep.subr.mxu0 0.0
      %6336 = vmatpush2.xpose.msra.mxu0 0.0
      %6337 = vmatprep.subr.mxu0 0.0
      %6338 = vmatpush2.xpose.msra.mxu0 0.0
      %6339 = vmatprep.subr.mxu0 0.0
      %6340 = vmatpush2.xpose.msra.mxu0 0.0
      %6341 = vmatprep.subr.mxu0 0.0
      %6342 = vmatpush2.xpose.msra.mxu0 0.0
      %6343 = vmatprep.subr.mxu0 0.0
      %6344 = vmatpush2.xpose.msra.mxu0 0.0
      %6345 = vmatprep.subr.mxu0 0.0
      %6346 = vmatpush2.xpose.msra.mxu0 0.0
      %6347 = vmatprep.subr.mxu0 0.0
      %6348 = vmatpush2.xpose.msra.mxu0 0.0
      %6349 = vmatprep.subr.mxu0 0.0
      %6350 = vmatpush2.xpose.msra.mxu0 0.0
      %6351 = vmatprep.subr.mxu0 0.0
      %6352 = vmatpush2.xpose.msra.mxu0 0.0
      %6353 = vmatprep.subr.mxu0 0.0
      %6354 = vmatpush2.xpose.msra.mxu0 0.0
      %6355 = vmatprep.subr.mxu0 0.0
      %6356 = vmatpush2.xpose.msra.mxu0 0.0
      %6357 = vmatprep.subr.mxu0 0.0
      %6358 = vmatpush2.xpose.msra.mxu0 0.0
      %6359 = vmatprep.subr.mxu0 0.0
      %6360 = vmatpush2.xpose.msra.mxu0 0.0
      %6361 = vmatprep.subr.mxu0 0.0
      %6362 = vmatpush2.xpose.msra.mxu0 0.0
      %6363 = vmatprep.subr.mxu0 0.0
      %6364 = vmatpush2.xpose.msra.mxu0 0.0
      %6365 = vmatprep.subr.mxu0 0.0
      %6366 = vmatpush2.xpose.msra.mxu0 0.0
      %6367 = vmatprep.mubr.f32.mxu0 0.0
      %6368 = vmatmul.mubr.f32.gmra.mxu0 %v1840
      %v6369 = vpop.f32.mrf.mxu0
      %v6370 = vadd.f32 %v1222, %v6369
      %v6371 = vpop.f32.mrf.mxu0
      %6372 = vmatprep.mubr.f32.mxu0 0.0
      %6373 = vmatmul.mubr.f32.gmra.mxu0 %v1843
      %v6374 = vpop.f32.mrf.mxu0
      %v6375 = vadd.f32 %v1223, %v6374
      %v6376 = vpop.f32.mrf.mxu0
      %6377 = vmatprep.mubr.f32.mxu0 0.0
      %6378 = vmatmul.mubr.f32.gmra.mxu0 %v1846
      %v6379 = vpop.f32.mrf.mxu0
      %v6380 = vadd.f32 %v1224, %v6379
      %v6381 = vpop.f32.mrf.mxu0
      %6382 = vmatprep.mubr.f32.mxu0 0.0
      %6383 = vmatmul.mubr.f32.gmra.mxu0 %v1849
      %v6384 = vpop.f32.mrf.mxu0
      %v6385 = vadd.f32 %v1225, %v6384
      %v6386 = vpop.f32.mrf.mxu0
      %6387 = vmatprep.mubr.f32.mxu0 0.0
      %6388 = vmatmul.mubr.f32.gmra.mxu0 %v1852
      %v6389 = vpop.f32.mrf.mxu0
      %v6390 = vadd.f32 %v1226, %v6389
      %v6391 = vpop.f32.mrf.mxu0
      %6392 = vmatprep.mubr.f32.mxu0 0.0
      %6393 = vmatmul.mubr.f32.gmra.mxu0 %v1855
      %v6394 = vpop.f32.mrf.mxu0
      %v6395 = vadd.f32 %v1227, %v6394
      %v6396 = vpop.f32.mrf.mxu0
      %6397 = vmatprep.mubr.f32.mxu0 0.0
      %6398 = vmatmul.mubr.f32.gmra.mxu0 %v1858
      %v6399 = vpop.f32.mrf.mxu0
      %v6400 = vadd.f32 %v1228, %v6399
      %v6401 = vpop.f32.mrf.mxu0
      %6402 = vmatprep.mubr.f32.mxu0 0.0
      %6403 = vmatmul.mubr.f32.gmra.mxu0 %v1861
      %v6404 = vpop.f32.mrf.mxu0
      %v6405 = vadd.f32 %v1229, %v6404
      %v6406 = vpop.f32.mrf.mxu0
      %6407 = vdwg.mxu0
      %v6409 = vsel %vm346, %v5981, 0
      %v6412 = vsel %vm346, %v5982, 0
      %v6415 = vsel %vm346, %v5983, 0
      %v6418 = vsel %vm346, %v5984, 0
      %v6421 = vsel %vm346, %v5985, 0
      %v6424 = vsel %vm346, %v5986, 0
      %v6427 = vsel %vm346, %v5987, 0
      %v6430 = vsel %vm346, %v5988, 0
      %6432 = vmatprep.subr.mxu0 0.0
      %6433 = vmatpush1.xpose.msra.mxu0 0.0
      %6434 = vmatprep.subr.mxu0 0.0
      %6435 = vmatpush1.xpose.msra.mxu0 0.0
      %6436 = vmatprep.subr.mxu0 0.0
      %6437 = vmatpush1.xpose.msra.mxu0 0.0
      %6438 = vmatprep.subr.mxu0 0.0
      %6439 = vmatpush1.xpose.msra.mxu0 0.0
      %6440 = vmatprep.subr.mxu0 0.0
      %6441 = vmatpush1.xpose.msra.mxu0 0.0
      %6442 = vmatprep.subr.mxu0 0.0
      %6443 = vmatpush1.xpose.msra.mxu0 0.0
      %6444 = vmatprep.subr.mxu0 0.0
      %6445 = vmatpush1.xpose.msra.mxu0 0.0
      %6446 = vmatprep.subr.mxu0 0.0
      %6447 = vmatpush1.xpose.msra.mxu0 0.0
      %6448 = vmatprep.subr.mxu0 0.0
      %6449 = vmatpush1.xpose.msra.mxu0 %v6430
      %6450 = vmatprep.subr.mxu0 0.0
      %6451 = vmatpush1.xpose.msra.mxu0 %v6427
      %6452 = vmatprep.subr.mxu0 0.0
      %6453 = vmatpush1.xpose.msra.mxu0 %v6424
      %6454 = vmatprep.subr.mxu0 0.0
      %6455 = vmatpush1.xpose.msra.mxu0 %v6421
      %6456 = vmatprep.subr.mxu0 0.0
      %6457 = vmatpush1.xpose.msra.mxu0 %v6418
      %6458 = vmatprep.subr.mxu0 0.0
      %6459 = vmatpush1.xpose.msra.mxu0 %v6415
      %6460 = vmatprep.subr.mxu0 0.0
      %6461 = vmatpush1.xpose.msra.mxu0 %v6412
      %6462 = vmatprep.subr.mxu0 0.0
      %6463 = vmatpush1.xpose.msra.mxu0 %v6409
      %6464 = vmatprep.subr.mxu0 0.0
      %6465 = vmatpush2.xpose.msra.mxu0 0.0
      %6466 = vmatprep.subr.mxu0 0.0
      %6467 = vmatpush2.xpose.msra.mxu0 0.0
      %6468 = vmatprep.subr.mxu0 0.0
      %6469 = vmatpush2.xpose.msra.mxu0 0.0
      %6470 = vmatprep.subr.mxu0 0.0
      %6471 = vmatpush2.xpose.msra.mxu0 0.0
      %6472 = vmatprep.subr.mxu0 0.0
      %6473 = vmatpush2.xpose.msra.mxu0 0.0
      %6474 = vmatprep.subr.mxu0 0.0
      %6475 = vmatpush2.xpose.msra.mxu0 0.0
      %6476 = vmatprep.subr.mxu0 0.0
      %6477 = vmatpush2.xpose.msra.mxu0 0.0
      %6478 = vmatprep.subr.mxu0 0.0
      %6479 = vmatpush2.xpose.msra.mxu0 0.0
      %6480 = vmatprep.subr.mxu0 0.0
      %6481 = vmatpush2.xpose.msra.mxu0 0.0
      %6482 = vmatprep.subr.mxu0 0.0
      %6483 = vmatpush2.xpose.msra.mxu0 0.0
      %6484 = vmatprep.subr.mxu0 0.0
      %6485 = vmatpush2.xpose.msra.mxu0 0.0
      %6486 = vmatprep.subr.mxu0 0.0
      %6487 = vmatpush2.xpose.msra.mxu0 0.0
      %6488 = vmatprep.subr.mxu0 0.0
      %6489 = vmatpush2.xpose.msra.mxu0 0.0
      %6490 = vmatprep.subr.mxu0 0.0
      %6491 = vmatpush2.xpose.msra.mxu0 0.0
      %6492 = vmatprep.subr.mxu0 0.0
      %6493 = vmatpush2.xpose.msra.mxu0 0.0
      %6494 = vmatprep.subr.mxu0 0.0
      %6495 = vmatpush2.xpose.msra.mxu0 0.0
      %6496 = vmatprep.mubr.f32.mxu0 0.0
      %6497 = vmatmul.mubr.f32.gmra.mxu0 %v1993
      %v6498 = vpop.f32.mrf.mxu0
      %v6499 = vadd.f32 %v1230, %v6498
      %v6500 = vpop.f32.mrf.mxu0
      %6501 = vmatprep.mubr.f32.mxu0 0.0
      %6502 = vmatmul.mubr.f32.gmra.mxu0 %v1996
      %v6503 = vpop.f32.mrf.mxu0
      %v6504 = vadd.f32 %v1231, %v6503
      %v6505 = vpop.f32.mrf.mxu0
      %6506 = vmatprep.mubr.f32.mxu0 0.0
      %6507 = vmatmul.mubr.f32.gmra.mxu0 %v1999
      %v6508 = vpop.f32.mrf.mxu0
      %v6509 = vadd.f32 %v1232, %v6508
      %v6510 = vpop.f32.mrf.mxu0
      %6511 = vmatprep.mubr.f32.mxu0 0.0
      %6512 = vmatmul.mubr.f32.gmra.mxu0 %v2002
      %v6513 = vpop.f32.mrf.mxu0
      %v6514 = vadd.f32 %v1233, %v6513
      %v6515 = vpop.f32.mrf.mxu0
      %6516 = vmatprep.mubr.f32.mxu0 0.0
      %6517 = vmatmul.mubr.f32.gmra.mxu0 %v2005
      %v6518 = vpop.f32.mrf.mxu0
      %v6519 = vadd.f32 %v1234, %v6518
      %v6520 = vpop.f32.mrf.mxu0
      %6521 = vmatprep.mubr.f32.mxu0 0.0
      %6522 = vmatmul.mubr.f32.gmra.mxu0 %v2008
      %v6523 = vpop.f32.mrf.mxu0
      %v6524 = vadd.f32 %v1235, %v6523
      %v6525 = vpop.f32.mrf.mxu0
      %6526 = vmatprep.mubr.f32.mxu0 0.0
      %6527 = vmatmul.mubr.f32.gmra.mxu0 %v2011
      %v6528 = vpop.f32.mrf.mxu0
      %v6529 = vadd.f32 %v1236, %v6528
      %v6530 = vpop.f32.mrf.mxu0
      %6531 = vmatprep.mubr.f32.mxu0 0.0
      %6532 = vmatmul.mubr.f32.gmra.mxu0 %v2014
      %v6533 = vpop.f32.mrf.mxu0
      %v6534 = vadd.f32 %v1237, %v6533
      %v6535 = vpop.f32.mrf.mxu0
      %6536 = vdwg.mxu0
      %v6537 = vsel %vm2145, %v6112, -inf
      %6538 = vmax.xlane.f32.xlu0 %v6537
      %v6539 = vpop.xlane.xlu0 %6538
      %v6540 = vsel %vm2145, %v6117, -inf
      %6541 = vmax.xlane.f32.xlu0 %v6540
      %v6542 = vpop.xlane.xlu0 %6541
      %v6543 = vsel %vm2145, %v6122, -inf
      %6544 = vmax.xlane.f32.xlu0 %v6543
      %v6545 = vpop.xlane.xlu0 %6544
      %v6546 = vsel %vm2145, %v6127, -inf
      %6547 = vmax.xlane.f32.xlu0 %v6546
      %v6548 = vpop.xlane.xlu0 %6547
      %v6549 = vsel %vm2145, %v6132, -inf
      %6550 = vmax.xlane.f32.xlu0 %v6549
      %v6551 = vpop.xlane.xlu0 %6550
      %v6552 = vsel %vm2145, %v6137, -inf
      %6553 = vmax.xlane.f32.xlu0 %v6552
      %v6554 = vpop.xlane.xlu0 %6553
      %v6555 = vsel %vm2145, %v6142, -inf
      %6556 = vmax.xlane.f32.xlu0 %v6555
      %v6557 = vpop.xlane.xlu0 %6556
      %v6558 = vsel %vm2145, %v6147, -inf
      %6559 = vmax.xlane.f32.xlu0 %v6558
      %v6560 = vpop.xlane.xlu0 %6559
      %v6561 = vsel %vm2145, %v6241, -inf
      %6562 = vmax.xlane.f32.xlu0 %v6561
      %v6563 = vpop.xlane.xlu0 %6562
      %v6564 = vsel %vm2145, %v6246, -inf
      %6565 = vmax.xlane.f32.xlu0 %v6564
      %v6566 = vpop.xlane.xlu0 %6565
      %v6567 = vsel %vm2145, %v6251, -inf
      %6568 = vmax.xlane.f32.xlu0 %v6567
      %v6569 = vpop.xlane.xlu0 %6568
      %v6570 = vsel %vm2145, %v6256, -inf
      %6571 = vmax.xlane.f32.xlu0 %v6570
      %v6572 = vpop.xlane.xlu0 %6571
      %v6573 = vsel %vm2145, %v6261, -inf
      %6574 = vmax.xlane.f32.xlu0 %v6573
      %v6575 = vpop.xlane.xlu0 %6574
      %v6576 = vsel %vm2145, %v6266, -inf
      %6577 = vmax.xlane.f32.xlu0 %v6576
      %v6578 = vpop.xlane.xlu0 %6577
      %v6579 = vsel %vm2145, %v6271, -inf
      %6580 = vmax.xlane.f32.xlu0 %v6579
      %v6581 = vpop.xlane.xlu0 %6580
      %v6582 = vsel %vm2145, %v6276, -inf
      %6583 = vmax.xlane.f32.xlu0 %v6582
      %v6584 = vpop.xlane.xlu0 %6583
      %v6585 = vsel %vm2145, %v6370, -inf
      %6586 = vmax.xlane.f32.xlu0 %v6585
      %v6587 = vpop.xlane.xlu0 %6586
      %v6588 = vsel %vm2145, %v6375, -inf
      %6589 = vmax.xlane.f32.xlu0 %v6588
      %v6590 = vpop.xlane.xlu0 %6589
      %v6591 = vsel %vm2145, %v6380, -inf
      %6592 = vmax.xlane.f32.xlu0 %v6591
      %v6593 = vpop.xlane.xlu0 %6592
      %v6594 = vsel %vm2145, %v6385, -inf
      %6595 = vmax.xlane.f32.xlu0 %v6594
      %v6596 = vpop.xlane.xlu0 %6595
      %v6597 = vsel %vm2145, %v6390, -inf
      %6598 = vmax.xlane.f32.xlu0 %v6597
      %v6599 = vpop.xlane.xlu0 %6598
      %v6600 = vsel %vm2145, %v6395, -inf
      %6601 = vmax.xlane.f32.xlu0 %v6600
      %v6602 = vpop.xlane.xlu0 %6601
      %v6603 = vsel %vm2145, %v6400, -inf
      %6604 = vmax.xlane.f32.xlu0 %v6603
      %v6605 = vpop.xlane.xlu0 %6604
      %v6606 = vsel %vm2145, %v6405, -inf
      %6607 = vmax.xlane.f32.xlu0 %v6606
      %v6608 = vpop.xlane.xlu0 %6607
      %v6609 = vsel %vm2145, %v6499, -inf
      %6610 = vmax.xlane.f32.xlu0 %v6609
      %v6611 = vpop.xlane.xlu0 %6610
      %v6612 = vsel %vm2145, %v6504, -inf
      %6613 = vmax.xlane.f32.xlu0 %v6612
      %v6614 = vpop.xlane.xlu0 %6613
      %v6615 = vsel %vm2145, %v6509, -inf
      %6616 = vmax.xlane.f32.xlu0 %v6615
      %v6617 = vpop.xlane.xlu0 %6616
      %v6618 = vsel %vm2145, %v6514, -inf
      %6619 = vmax.xlane.f32.xlu0 %v6618
      %v6620 = vpop.xlane.xlu0 %6619
      %v6621 = vsel %vm2145, %v6519, -inf
      %6622 = vmax.xlane.f32.xlu0 %v6621
      %v6623 = vpop.xlane.xlu0 %6622
      %v6624 = vsel %vm2145, %v6524, -inf
      %6625 = vmax.xlane.f32.xlu0 %v6624
      %v6626 = vpop.xlane.xlu0 %6625
      %v6627 = vsel %vm2145, %v6529, -inf
      %6628 = vmax.xlane.f32.xlu0 %v6627
      %v6629 = vpop.xlane.xlu0 %6628
      %v6630 = vsel %vm2145, %v6534, -inf
      %6631 = vmax.xlane.f32.xlu0 %v6630
      %v6632 = vpop.xlane.xlu0 %6631
      %v6633 = vsub.f32 %v6112, %v6539
      %v6634 = vsub.f32 %v6117, %v6542
      %v6635 = vsub.f32 %v6122, %v6545
      %v6636 = vsub.f32 %v6127, %v6548
      %v6637 = vsub.f32 %v6132, %v6551
      %v6638 = vsub.f32 %v6137, %v6554
      %v6639 = vsub.f32 %v6142, %v6557
      %v6640 = vsub.f32 %v6147, %v6560
      %v6641 = vsub.f32 %v6241, %v6563
      %v6642 = vsub.f32 %v6246, %v6566
      %v6643 = vsub.f32 %v6251, %v6569
      %v6644 = vsub.f32 %v6256, %v6572
      %v6645 = vsub.f32 %v6261, %v6575
      %v6646 = vsub.f32 %v6266, %v6578
      %v6647 = vsub.f32 %v6271, %v6581
      %v6648 = vsub.f32 %v6276, %v6584
      %v6649 = vsub.f32 %v6370, %v6587
      %v6650 = vsub.f32 %v6375, %v6590
      %v6651 = vsub.f32 %v6380, %v6593
      %v6652 = vsub.f32 %v6385, %v6596
      %v6653 = vsub.f32 %v6390, %v6599
      %v6654 = vsub.f32 %v6395, %v6602
      %v6655 = vsub.f32 %v6400, %v6605
      %v6656 = vsub.f32 %v6405, %v6608
      %v6657 = vsub.f32 %v6499, %v6611
      %v6658 = vsub.f32 %v6504, %v6614
      %v6659 = vsub.f32 %v6509, %v6617
      %v6660 = vsub.f32 %v6514, %v6620
      %v6661 = vsub.f32 %v6519, %v6623
      %v6662 = vsub.f32 %v6524, %v6626
      %v6663 = vsub.f32 %v6529, %v6629
      %v6664 = vsub.f32 %v6534, %v6632
      %v6665 = vmul.f32 %v6633, 1.442695
      %v6666 = vpow.pop %v6665
      %v6667 = vmul.f32 %v6634, 1.442695
      %v6668 = vpow.pop %v6667
      %v6669 = vmul.f32 %v6635, 1.442695
      %v6670 = vpow.pop %v6669
      %v6671 = vmul.f32 %v6636, 1.442695
      %v6672 = vpow.pop %v6671
      %v6673 = vmul.f32 %v6637, 1.442695
      %v6674 = vpow.pop %v6673
      %v6675 = vmul.f32 %v6638, 1.442695
      %v6676 = vpow.pop %v6675
      %v6677 = vmul.f32 %v6639, 1.442695
      %v6678 = vpow.pop %v6677
      %v6679 = vmul.f32 %v6640, 1.442695
      %v6680 = vpow.pop %v6679
      %v6681 = vmul.f32 %v6641, 1.442695
      %v6682 = vpow.pop %v6681
      %v6683 = vmul.f32 %v6642, 1.442695
      %v6684 = vpow.pop %v6683
      %v6685 = vmul.f32 %v6643, 1.442695
      %v6686 = vpow.pop %v6685
      %v6687 = vmul.f32 %v6644, 1.442695
      %v6688 = vpow.pop %v6687
      %v6689 = vmul.f32 %v6645, 1.442695
      %v6690 = vpow.pop %v6689
      %v6691 = vmul.f32 %v6646, 1.442695
      %v6692 = vpow.pop %v6691
      %v6693 = vmul.f32 %v6647, 1.442695
      %v6694 = vpow.pop %v6693
      %v6695 = vmul.f32 %v6648, 1.442695
      %v6696 = vpow.pop %v6695
      %v6697 = vmul.f32 %v6649, 1.442695
      %v6698 = vpow.pop %v6697
      %v6699 = vmul.f32 %v6650, 1.442695
      %v6700 = vpow.pop %v6699
      %v6701 = vmul.f32 %v6651, 1.442695
      %v6702 = vpow.pop %v6701
      %v6703 = vmul.f32 %v6652, 1.442695
      %v6704 = vpow.pop %v6703
      %v6705 = vmul.f32 %v6653, 1.442695
      %v6706 = vpow.pop %v6705
      %v6707 = vmul.f32 %v6654, 1.442695
      %v6708 = vpow.pop %v6707
      %v6709 = vmul.f32 %v6655, 1.442695
      %v6710 = vpow.pop %v6709
      %v6711 = vmul.f32 %v6656, 1.442695
      %v6712 = vpow.pop %v6711
      %v6713 = vmul.f32 %v6657, 1.442695
      %v6714 = vpow.pop %v6713
      %v6715 = vmul.f32 %v6658, 1.442695
      %v6716 = vpow.pop %v6715
      %v6717 = vmul.f32 %v6659, 1.442695
      %v6718 = vpow.pop %v6717
      %v6719 = vmul.f32 %v6660, 1.442695
      %v6720 = vpow.pop %v6719
      %v6721 = vmul.f32 %v6661, 1.442695
      %v6722 = vpow.pop %v6721
      %v6723 = vmul.f32 %v6662, 1.442695
      %v6724 = vpow.pop %v6723
      %v6725 = vmul.f32 %v6663, 1.442695
      %v6726 = vpow.pop %v6725
      %v6727 = vmul.f32 %v6664, 1.442695
      %v6728 = vpow.pop %v6727
      %v6729 = vsel %vm2145, %v6666, 0.0
      %6730 = vadd.xlane.f32.xlu0 %v6729
      %v6731 = vpop.xlane.xlu0 %6730
      %v6732 = vsel %vm2145, %v6668, 0.0
      %6733 = vadd.xlane.f32.xlu0 %v6732
      %v6734 = vpop.xlane.xlu0 %6733
      %v6735 = vsel %vm2145, %v6670, 0.0
      %6736 = vadd.xlane.f32.xlu0 %v6735
      %v6737 = vpop.xlane.xlu0 %6736
      %v6738 = vsel %vm2145, %v6672, 0.0
      %6739 = vadd.xlane.f32.xlu0 %v6738
      %v6740 = vpop.xlane.xlu0 %6739
      %v6741 = vsel %vm2145, %v6674, 0.0
      %6742 = vadd.xlane.f32.xlu0 %v6741
      %v6743 = vpop.xlane.xlu0 %6742
      %v6744 = vsel %vm2145, %v6676, 0.0
      %6745 = vadd.xlane.f32.xlu0 %v6744
      %v6746 = vpop.xlane.xlu0 %6745
      %v6747 = vsel %vm2145, %v6678, 0.0
      %6748 = vadd.xlane.f32.xlu0 %v6747
      %v6749 = vpop.xlane.xlu0 %6748
      %v6750 = vsel %vm2145, %v6680, 0.0
      %6751 = vadd.xlane.f32.xlu0 %v6750
      %v6752 = vpop.xlane.xlu0 %6751
      %v6753 = vsel %vm2145, %v6682, 0.0
      %6754 = vadd.xlane.f32.xlu0 %v6753
      %v6755 = vpop.xlane.xlu0 %6754
      %v6756 = vsel %vm2145, %v6684, 0.0
      %6757 = vadd.xlane.f32.xlu0 %v6756
      %v6758 = vpop.xlane.xlu0 %6757
      %v6759 = vsel %vm2145, %v6686, 0.0
      %6760 = vadd.xlane.f32.xlu0 %v6759
      %v6761 = vpop.xlane.xlu0 %6760
      %v6762 = vsel %vm2145, %v6688, 0.0
      %6763 = vadd.xlane.f32.xlu0 %v6762
      %v6764 = vpop.xlane.xlu0 %6763
      %v6765 = vsel %vm2145, %v6690, 0.0
      %6766 = vadd.xlane.f32.xlu0 %v6765
      %v6767 = vpop.xlane.xlu0 %6766
      %v6768 = vsel %vm2145, %v6692, 0.0
      %6769 = vadd.xlane.f32.xlu0 %v6768
      %v6770 = vpop.xlane.xlu0 %6769
      %v6771 = vsel %vm2145, %v6694, 0.0
      %6772 = vadd.xlane.f32.xlu0 %v6771
      %v6773 = vpop.xlane.xlu0 %6772
      %v6774 = vsel %vm2145, %v6696, 0.0
      %6775 = vadd.xlane.f32.xlu0 %v6774
      %v6776 = vpop.xlane.xlu0 %6775
      %v6777 = vsel %vm2145, %v6698, 0.0
      %6778 = vadd.xlane.f32.xlu0 %v6777
      %v6779 = vpop.xlane.xlu0 %6778
      %v6780 = vsel %vm2145, %v6700, 0.0
      %6781 = vadd.xlane.f32.xlu0 %v6780
      %v6782 = vpop.xlane.xlu0 %6781
      %v6783 = vsel %vm2145, %v6702, 0.0
      %6784 = vadd.xlane.f32.xlu0 %v6783
      %v6785 = vpop.xlane.xlu0 %6784
      %v6786 = vsel %vm2145, %v6704, 0.0
      %6787 = vadd.xlane.f32.xlu0 %v6786
      %v6788 = vpop.xlane.xlu0 %6787
      %v6789 = vsel %vm2145, %v6706, 0.0
      %6790 = vadd.xlane.f32.xlu0 %v6789
      %v6791 = vpop.xlane.xlu0 %6790
      %v6792 = vsel %vm2145, %v6708, 0.0
      %6793 = vadd.xlane.f32.xlu0 %v6792
      %v6794 = vpop.xlane.xlu0 %6793
      %v6795 = vsel %vm2145, %v6710, 0.0
      %6796 = vadd.xlane.f32.xlu0 %v6795
      %v6797 = vpop.xlane.xlu0 %6796
      %v6798 = vsel %vm2145, %v6712, 0.0
      %6799 = vadd.xlane.f32.xlu0 %v6798
      %v6800 = vpop.xlane.xlu0 %6799
      %v6801 = vsel %vm2145, %v6714, 0.0
      %6802 = vadd.xlane.f32.xlu0 %v6801
      %v6803 = vpop.xlane.xlu0 %6802
      %v6804 = vsel %vm2145, %v6716, 0.0
      %6805 = vadd.xlane.f32.xlu0 %v6804
      %v6806 = vpop.xlane.xlu0 %6805
      %v6807 = vsel %vm2145, %v6718, 0.0
      %6808 = vadd.xlane.f32.xlu0 %v6807
      %v6809 = vpop.xlane.xlu0 %6808
      %v6810 = vsel %vm2145, %v6720, 0.0
      %6811 = vadd.xlane.f32.xlu0 %v6810
      %v6812 = vpop.xlane.xlu0 %6811
      %v6813 = vsel %vm2145, %v6722, 0.0
      %6814 = vadd.xlane.f32.xlu0 %v6813
      %v6815 = vpop.xlane.xlu0 %6814
      %v6816 = vsel %vm2145, %v6724, 0.0
      %6817 = vadd.xlane.f32.xlu0 %v6816
      %v6818 = vpop.xlane.xlu0 %6817
      %v6819 = vsel %vm2145, %v6726, 0.0
      %6820 = vadd.xlane.f32.xlu0 %v6819
      %v6821 = vpop.xlane.xlu0 %6820
      %v6822 = vsel %vm2145, %v6728, 0.0
      %6823 = vadd.xlane.f32.xlu0 %v6822
      %v6824 = vpop.xlane.xlu0 %6823
      %v6825 = vrcp.pop %v6731
      %v6826 = vrcp.pop %v6734
      %v6827 = vrcp.pop %v6737
      %v6828 = vrcp.pop %v6740
      %v6829 = vrcp.pop %v6743
      %v6830 = vrcp.pop %v6746
      %v6831 = vrcp.pop %v6749
      %v6832 = vrcp.pop %v6752
      %v6833 = vrcp.pop %v6755
      %v6834 = vrcp.pop %v6758
      %v6835 = vrcp.pop %v6761
      %v6836 = vrcp.pop %v6764
      %v6837 = vrcp.pop %v6767
      %v6838 = vrcp.pop %v6770
      %v6839 = vrcp.pop %v6773
      %v6840 = vrcp.pop %v6776
      %v6841 = vrcp.pop %v6779
      %v6842 = vrcp.pop %v6782
      %v6843 = vrcp.pop %v6785
      %v6844 = vrcp.pop %v6788
      %v6845 = vrcp.pop %v6791
      %v6846 = vrcp.pop %v6794
      %v6847 = vrcp.pop %v6797
      %v6848 = vrcp.pop %v6800
      %v6849 = vrcp.pop %v6803
      %v6850 = vrcp.pop %v6806
      %v6851 = vrcp.pop %v6809
      %v6852 = vrcp.pop %v6812
      %v6853 = vrcp.pop %v6815
      %v6854 = vrcp.pop %v6818
      %v6855 = vrcp.pop %v6821
      %v6856 = vrcp.pop %v6824
      %v6857 = vmul.f32 %v6666, %v6825
      %v6858 = vmul.f32 %v6668, %v6826
      %v6859 = vmul.f32 %v6670, %v6827
      %v6860 = vmul.f32 %v6672, %v6828
      %v6861 = vmul.f32 %v6674, %v6829
      %v6862 = vmul.f32 %v6676, %v6830
      %v6863 = vmul.f32 %v6678, %v6831
      %v6864 = vmul.f32 %v6680, %v6832
      %v6865 = vmul.f32 %v6682, %v6833
      %v6866 = vmul.f32 %v6684, %v6834
      %v6867 = vmul.f32 %v6686, %v6835
      %v6868 = vmul.f32 %v6688, %v6836
      %v6869 = vmul.f32 %v6690, %v6837
      %v6870 = vmul.f32 %v6692, %v6838
      %v6871 = vmul.f32 %v6694, %v6839
      %v6872 = vmul.f32 %v6696, %v6840
      %v6873 = vmul.f32 %v6698, %v6841
      %v6874 = vmul.f32 %v6700, %v6842
      %v6875 = vmul.f32 %v6702, %v6843
      %v6876 = vmul.f32 %v6704, %v6844
      %v6877 = vmul.f32 %v6706, %v6845
      %v6878 = vmul.f32 %v6708, %v6846
      %v6879 = vmul.f32 %v6710, %v6847
      %v6880 = vmul.f32 %v6712, %v6848
      %v6881 = vmul.f32 %v6714, %v6849
      %v6882 = vmul.f32 %v6716, %v6850
      %v6883 = vmul.f32 %v6718, %v6851
      %v6884 = vmul.f32 %v6720, %v6852
      %v6885 = vmul.f32 %v6722, %v6853
      %v6886 = vmul.f32 %v6724, %v6854
      %v6887 = vmul.f32 %v6726, %v6855
      %v6888 = vmul.f32 %v6728, %v6856
      %v6890 = vsel %vm2145, %v6857, 0
      %v6893 = vsel %vm2145, %v6858, 0
      %v6896 = vsel %vm2145, %v6859, 0
      %v6899 = vsel %vm2145, %v6860, 0
      %v6902 = vsel %vm2145, %v6861, 0
      %v6905 = vsel %vm2145, %v6862, 0
      %v6908 = vsel %vm2145, %v6863, 0
      %v6911 = vsel %vm2145, %v6864, 0
      %6913 = vmatprep.subr.mxu0 0.0
      %6914 = vmatpush1.msra.mxu0 0.0
      %6915 = vmatprep.subr.mxu0 0.0
      %6916 = vmatpush1.msra.mxu0 0.0
      %6917 = vmatprep.subr.mxu0 0.0
      %6918 = vmatpush1.msra.mxu0 0.0
      %6919 = vmatprep.subr.mxu0 0.0
      %6920 = vmatpush1.msra.mxu0 0.0
      %6921 = vmatprep.subr.mxu0 0.0
      %6922 = vmatpush1.msra.mxu0 0.0
      %6923 = vmatprep.subr.mxu0 0.0
      %6924 = vmatpush1.msra.mxu0 0.0
      %6925 = vmatprep.subr.mxu0 0.0
      %6926 = vmatpush1.msra.mxu0 0.0
      %6927 = vmatprep.subr.mxu0 0.0
      %6928 = vmatpush1.msra.mxu0 0.0
      %6929 = vmatprep.subr.mxu0 0.0
      %6930 = vmatpush1.msra.mxu0 %v5996
      %6931 = vmatprep.subr.mxu0 0.0
      %6932 = vmatpush1.msra.mxu0 %v5995
      %6933 = vmatprep.subr.mxu0 0.0
      %6934 = vmatpush1.msra.mxu0 %v5994
      %6935 = vmatprep.subr.mxu0 0.0
      %6936 = vmatpush1.msra.mxu0 %v5993
      %6937 = vmatprep.subr.mxu0 0.0
      %6938 = vmatpush1.msra.mxu0 %v5992
      %6939 = vmatprep.subr.mxu0 0.0
      %6940 = vmatpush1.msra.mxu0 %v5991
      %6941 = vmatprep.subr.mxu0 0.0
      %6942 = vmatpush1.msra.mxu0 %v5990
      %6943 = vmatprep.subr.mxu0 0.0
      %6944 = vmatpush1.msra.mxu0 %v5989
      %6945 = vmatprep.subr.mxu0 0.0
      %6946 = vmatpush2.msra.mxu0 0.0
      %6947 = vmatprep.subr.mxu0 0.0
      %6948 = vmatpush2.msra.mxu0 0.0
      %6949 = vmatprep.subr.mxu0 0.0
      %6950 = vmatpush2.msra.mxu0 0.0
      %6951 = vmatprep.subr.mxu0 0.0
      %6952 = vmatpush2.msra.mxu0 0.0
      %6953 = vmatprep.subr.mxu0 0.0
      %6954 = vmatpush2.msra.mxu0 0.0
      %6955 = vmatprep.subr.mxu0 0.0
      %6956 = vmatpush2.msra.mxu0 0.0
      %6957 = vmatprep.subr.mxu0 0.0
      %6958 = vmatpush2.msra.mxu0 0.0
      %6959 = vmatprep.subr.mxu0 0.0
      %6960 = vmatpush2.msra.mxu0 0.0
      %6961 = vmatprep.subr.mxu0 0.0
      %6962 = vmatpush2.msra.mxu0 0.0
      %6963 = vmatprep.subr.mxu0 0.0
      %6964 = vmatpush2.msra.mxu0 0.0
      %6965 = vmatprep.subr.mxu0 0.0
      %6966 = vmatpush2.msra.mxu0 0.0
      %6967 = vmatprep.subr.mxu0 0.0
      %6968 = vmatpush2.msra.mxu0 0.0
      %6969 = vmatprep.subr.mxu0 0.0
      %6970 = vmatpush2.msra.mxu0 0.0
      %6971 = vmatprep.subr.mxu0 0.0
      %6972 = vmatpush2.msra.mxu0 0.0
      %6973 = vmatprep.subr.mxu0 0.0
      %6974 = vmatpush2.msra.mxu0 0.0
      %6975 = vmatprep.subr.mxu0 0.0
      %6976 = vmatpush2.msra.mxu0 0.0
      %6977 = vmatprep.mubr.f32.mxu0 0.0
      %6978 = vmatmul.mubr.f32.gmra.mxu0 %v6890
      %v6979 = vpop.f32.mrf.mxu0
      %v6980 = vadd.f32 0.0, %v6979
      %v6981 = vpop.f32.mrf.mxu0
      %6982 = vmatprep.mubr.f32.mxu0 0.0
      %6983 = vmatmul.mubr.f32.gmra.mxu0 %v6893
      %v6984 = vpop.f32.mrf.mxu0
      %v6985 = vadd.f32 0.0, %v6984
      %v6986 = vpop.f32.mrf.mxu0
      %6987 = vmatprep.mubr.f32.mxu0 0.0
      %6988 = vmatmul.mubr.f32.gmra.mxu0 %v6896
      %v6989 = vpop.f32.mrf.mxu0
      %v6990 = vadd.f32 0.0, %v6989
      %v6991 = vpop.f32.mrf.mxu0
      %6992 = vmatprep.mubr.f32.mxu0 0.0
      %6993 = vmatmul.mubr.f32.gmra.mxu0 %v6899
      %v6994 = vpop.f32.mrf.mxu0
      %v6995 = vadd.f32 0.0, %v6994
      %v6996 = vpop.f32.mrf.mxu0
      %6997 = vmatprep.mubr.f32.mxu0 0.0
      %6998 = vmatmul.mubr.f32.gmra.mxu0 %v6902
      %v6999 = vpop.f32.mrf.mxu0
      %v7000 = vadd.f32 0.0, %v6999
      %v7001 = vpop.f32.mrf.mxu0
      %7002 = vmatprep.mubr.f32.mxu0 0.0
      %7003 = vmatmul.mubr.f32.gmra.mxu0 %v6905
      %v7004 = vpop.f32.mrf.mxu0
      %v7005 = vadd.f32 0.0, %v7004
      %v7006 = vpop.f32.mrf.mxu0
      %7007 = vmatprep.mubr.f32.mxu0 0.0
      %7008 = vmatmul.mubr.f32.gmra.mxu0 %v6908
      %v7009 = vpop.f32.mrf.mxu0
      %v7010 = vadd.f32 0.0, %v7009
      %v7011 = vpop.f32.mrf.mxu0
      %7012 = vmatprep.mubr.f32.mxu0 0.0
      %7013 = vmatmul.mubr.f32.gmra.mxu0 %v6911
      %v7014 = vpop.f32.mrf.mxu0
      %v7015 = vadd.f32 0.0, %v7014
      %v7016 = vpop.f32.mrf.mxu0
      %7017 = vdwg.mxu0
      %v7019 = vsel %vm2145, %v6865, 0
      %v7022 = vsel %vm2145, %v6866, 0
      %v7025 = vsel %vm2145, %v6867, 0
      %v7028 = vsel %vm2145, %v6868, 0
      %v7031 = vsel %vm2145, %v6869, 0
      %v7034 = vsel %vm2145, %v6870, 0
      %v7037 = vsel %vm2145, %v6871, 0
      %v7040 = vsel %vm2145, %v6872, 0
      %7042 = vmatprep.subr.mxu0 0.0
      %7043 = vmatpush1.msra.mxu0 0.0
      %7044 = vmatprep.subr.mxu0 0.0
      %7045 = vmatpush1.msra.mxu0 0.0
      %7046 = vmatprep.subr.mxu0 0.0
      %7047 = vmatpush1.msra.mxu0 0.0
      %7048 = vmatprep.subr.mxu0 0.0
      %7049 = vmatpush1.msra.mxu0 0.0
      %7050 = vmatprep.subr.mxu0 0.0
      %7051 = vmatpush1.msra.mxu0 0.0
      %7052 = vmatprep.subr.mxu0 0.0
      %7053 = vmatpush1.msra.mxu0 0.0
      %7054 = vmatprep.subr.mxu0 0.0
      %7055 = vmatpush1.msra.mxu0 0.0
      %7056 = vmatprep.subr.mxu0 0.0
      %7057 = vmatpush1.msra.mxu0 0.0
      %7058 = vmatprep.subr.mxu0 0.0
      %7059 = vmatpush1.msra.mxu0 %v6004
      %7060 = vmatprep.subr.mxu0 0.0
      %7061 = vmatpush1.msra.mxu0 %v6003
      %7062 = vmatprep.subr.mxu0 0.0
      %7063 = vmatpush1.msra.mxu0 %v6002
      %7064 = vmatprep.subr.mxu0 0.0
      %7065 = vmatpush1.msra.mxu0 %v6001
      %7066 = vmatprep.subr.mxu0 0.0
      %7067 = vmatpush1.msra.mxu0 %v6000
      %7068 = vmatprep.subr.mxu0 0.0
      %7069 = vmatpush1.msra.mxu0 %v5999
      %7070 = vmatprep.subr.mxu0 0.0
      %7071 = vmatpush1.msra.mxu0 %v5998
      %7072 = vmatprep.subr.mxu0 0.0
      %7073 = vmatpush1.msra.mxu0 %v5997
      %7074 = vmatprep.subr.mxu0 0.0
      %7075 = vmatpush2.msra.mxu0 0.0
      %7076 = vmatprep.subr.mxu0 0.0
      %7077 = vmatpush2.msra.mxu0 0.0
      %7078 = vmatprep.subr.mxu0 0.0
      %7079 = vmatpush2.msra.mxu0 0.0
      %7080 = vmatprep.subr.mxu0 0.0
      %7081 = vmatpush2.msra.mxu0 0.0
      %7082 = vmatprep.subr.mxu0 0.0
      %7083 = vmatpush2.msra.mxu0 0.0
      %7084 = vmatprep.subr.mxu0 0.0
      %7085 = vmatpush2.msra.mxu0 0.0
      %7086 = vmatprep.subr.mxu0 0.0
      %7087 = vmatpush2.msra.mxu0 0.0
      %7088 = vmatprep.subr.mxu0 0.0
      %7089 = vmatpush2.msra.mxu0 0.0
      %7090 = vmatprep.subr.mxu0 0.0
      %7091 = vmatpush2.msra.mxu0 0.0
      %7092 = vmatprep.subr.mxu0 0.0
      %7093 = vmatpush2.msra.mxu0 0.0
      %7094 = vmatprep.subr.mxu0 0.0
      %7095 = vmatpush2.msra.mxu0 0.0
      %7096 = vmatprep.subr.mxu0 0.0
      %7097 = vmatpush2.msra.mxu0 0.0
      %7098 = vmatprep.subr.mxu0 0.0
      %7099 = vmatpush2.msra.mxu0 0.0
      %7100 = vmatprep.subr.mxu0 0.0
      %7101 = vmatpush2.msra.mxu0 0.0
      %7102 = vmatprep.subr.mxu0 0.0
      %7103 = vmatpush2.msra.mxu0 0.0
      %7104 = vmatprep.subr.mxu0 0.0
      %7105 = vmatpush2.msra.mxu0 0.0
      %7106 = vmatprep.mubr.f32.mxu0 0.0
      %7107 = vmatmul.mubr.f32.gmra.mxu0 %v7019
      %v7108 = vpop.f32.mrf.mxu0
      %v7109 = vadd.f32 0.0, %v7108
      %v7110 = vpop.f32.mrf.mxu0
      %7111 = vmatprep.mubr.f32.mxu0 0.0
      %7112 = vmatmul.mubr.f32.gmra.mxu0 %v7022
      %v7113 = vpop.f32.mrf.mxu0
      %v7114 = vadd.f32 0.0, %v7113
      %v7115 = vpop.f32.mrf.mxu0
      %7116 = vmatprep.mubr.f32.mxu0 0.0
      %7117 = vmatmul.mubr.f32.gmra.mxu0 %v7025
      %v7118 = vpop.f32.mrf.mxu0
      %v7119 = vadd.f32 0.0, %v7118
      %v7120 = vpop.f32.mrf.mxu0
      %7121 = vmatprep.mubr.f32.mxu0 0.0
      %7122 = vmatmul.mubr.f32.gmra.mxu0 %v7028
      %v7123 = vpop.f32.mrf.mxu0
      %v7124 = vadd.f32 0.0, %v7123
      %v7125 = vpop.f32.mrf.mxu0
      %7126 = vmatprep.mubr.f32.mxu0 0.0
      %7127 = vmatmul.mubr.f32.gmra.mxu0 %v7031
      %v7128 = vpop.f32.mrf.mxu0
      %v7129 = vadd.f32 0.0, %v7128
      %v7130 = vpop.f32.mrf.mxu0
      %7131 = vmatprep.mubr.f32.mxu0 0.0
      %7132 = vmatmul.mubr.f32.gmra.mxu0 %v7034
      %v7133 = vpop.f32.mrf.mxu0
      %v7134 = vadd.f32 0.0, %v7133
      %v7135 = vpop.f32.mrf.mxu0
      %7136 = vmatprep.mubr.f32.mxu0 0.0
      %7137 = vmatmul.mubr.f32.gmra.mxu0 %v7037
      %v7138 = vpop.f32.mrf.mxu0
      %v7139 = vadd.f32 0.0, %v7138
      %v7140 = vpop.f32.mrf.mxu0
      %7141 = vmatprep.mubr.f32.mxu0 0.0
      %7142 = vmatmul.mubr.f32.gmra.mxu0 %v7040
      %v7143 = vpop.f32.mrf.mxu0
      %v7144 = vadd.f32 0.0, %v7143
      %v7145 = vpop.f32.mrf.mxu0
      %7146 = vdwg.mxu0
      %v7148 = vsel %vm2145, %v6873, 0
      %v7151 = vsel %vm2145, %v6874, 0
      %v7154 = vsel %vm2145, %v6875, 0
      %v7157 = vsel %vm2145, %v6876, 0
      %v7160 = vsel %vm2145, %v6877, 0
      %v7163 = vsel %vm2145, %v6878, 0
      %v7166 = vsel %vm2145, %v6879, 0
      %v7169 = vsel %vm2145, %v6880, 0
      %7171 = vmatprep.subr.mxu0 0.0
      %7172 = vmatpush1.msra.mxu0 0.0
      %7173 = vmatprep.subr.mxu0 0.0
      %7174 = vmatpush1.msra.mxu0 0.0
      %7175 = vmatprep.subr.mxu0 0.0
      %7176 = vmatpush1.msra.mxu0 0.0
      %7177 = vmatprep.subr.mxu0 0.0
      %7178 = vmatpush1.msra.mxu0 0.0
      %7179 = vmatprep.subr.mxu0 0.0
      %7180 = vmatpush1.msra.mxu0 0.0
      %7181 = vmatprep.subr.mxu0 0.0
      %7182 = vmatpush1.msra.mxu0 0.0
      %7183 = vmatprep.subr.mxu0 0.0
      %7184 = vmatpush1.msra.mxu0 0.0
      %7185 = vmatprep.subr.mxu0 0.0
      %7186 = vmatpush1.msra.mxu0 0.0
      %7187 = vmatprep.subr.mxu0 0.0
      %7188 = vmatpush1.msra.mxu0 %v6012
      %7189 = vmatprep.subr.mxu0 0.0
      %7190 = vmatpush1.msra.mxu0 %v6011
      %7191 = vmatprep.subr.mxu0 0.0
      %7192 = vmatpush1.msra.mxu0 %v6010
      %7193 = vmatprep.subr.mxu0 0.0
      %7194 = vmatpush1.msra.mxu0 %v6009
      %7195 = vmatprep.subr.mxu0 0.0
      %7196 = vmatpush1.msra.mxu0 %v6008
      %7197 = vmatprep.subr.mxu0 0.0
      %7198 = vmatpush1.msra.mxu0 %v6007
      %7199 = vmatprep.subr.mxu0 0.0
      %7200 = vmatpush1.msra.mxu0 %v6006
      %7201 = vmatprep.subr.mxu0 0.0
      %7202 = vmatpush1.msra.mxu0 %v6005
      %7203 = vmatprep.subr.mxu0 0.0
      %7204 = vmatpush2.msra.mxu0 0.0
      %7205 = vmatprep.subr.mxu0 0.0
      %7206 = vmatpush2.msra.mxu0 0.0
      %7207 = vmatprep.subr.mxu0 0.0
      %7208 = vmatpush2.msra.mxu0 0.0
      %7209 = vmatprep.subr.mxu0 0.0
      %7210 = vmatpush2.msra.mxu0 0.0
      %7211 = vmatprep.subr.mxu0 0.0
      %7212 = vmatpush2.msra.mxu0 0.0
      %7213 = vmatprep.subr.mxu0 0.0
      %7214 = vmatpush2.msra.mxu0 0.0
      %7215 = vmatprep.subr.mxu0 0.0
      %7216 = vmatpush2.msra.mxu0 0.0
      %7217 = vmatprep.subr.mxu0 0.0
      %7218 = vmatpush2.msra.mxu0 0.0
      %7219 = vmatprep.subr.mxu0 0.0
      %7220 = vmatpush2.msra.mxu0 0.0
      %7221 = vmatprep.subr.mxu0 0.0
      %7222 = vmatpush2.msra.mxu0 0.0
      %7223 = vmatprep.subr.mxu0 0.0
      %7224 = vmatpush2.msra.mxu0 0.0
      %7225 = vmatprep.subr.mxu0 0.0
      %7226 = vmatpush2.msra.mxu0 0.0
      %7227 = vmatprep.subr.mxu0 0.0
      %7228 = vmatpush2.msra.mxu0 0.0
      %7229 = vmatprep.subr.mxu0 0.0
      %7230 = vmatpush2.msra.mxu0 0.0
      %7231 = vmatprep.subr.mxu0 0.0
      %7232 = vmatpush2.msra.mxu0 0.0
      %7233 = vmatprep.subr.mxu0 0.0
      %7234 = vmatpush2.msra.mxu0 0.0
      %7235 = vmatprep.mubr.f32.mxu0 0.0
      %7236 = vmatmul.mubr.f32.gmra.mxu0 %v7148
      %v7237 = vpop.f32.mrf.mxu0
      %v7238 = vadd.f32 0.0, %v7237
      %v7239 = vpop.f32.mrf.mxu0
      %7240 = vmatprep.mubr.f32.mxu0 0.0
      %7241 = vmatmul.mubr.f32.gmra.mxu0 %v7151
      %v7242 = vpop.f32.mrf.mxu0
      %v7243 = vadd.f32 0.0, %v7242
      %v7244 = vpop.f32.mrf.mxu0
      %7245 = vmatprep.mubr.f32.mxu0 0.0
      %7246 = vmatmul.mubr.f32.gmra.mxu0 %v7154
      %v7247 = vpop.f32.mrf.mxu0
      %v7248 = vadd.f32 0.0, %v7247
      %v7249 = vpop.f32.mrf.mxu0
      %7250 = vmatprep.mubr.f32.mxu0 0.0
      %7251 = vmatmul.mubr.f32.gmra.mxu0 %v7157
      %v7252 = vpop.f32.mrf.mxu0
      %v7253 = vadd.f32 0.0, %v7252
      %v7254 = vpop.f32.mrf.mxu0
      %7255 = vmatprep.mubr.f32.mxu0 0.0
      %7256 = vmatmul.mubr.f32.gmra.mxu0 %v7160
      %v7257 = vpop.f32.mrf.mxu0
      %v7258 = vadd.f32 0.0, %v7257
      %v7259 = vpop.f32.mrf.mxu0
      %7260 = vmatprep.mubr.f32.mxu0 0.0
      %7261 = vmatmul.mubr.f32.gmra.mxu0 %v7163
      %v7262 = vpop.f32.mrf.mxu0
      %v7263 = vadd.f32 0.0, %v7262
      %v7264 = vpop.f32.mrf.mxu0
      %7265 = vmatprep.mubr.f32.mxu0 0.0
      %7266 = vmatmul.mubr.f32.gmra.mxu0 %v7166
      %v7267 = vpop.f32.mrf.mxu0
      %v7268 = vadd.f32 0.0, %v7267
      %v7269 = vpop.f32.mrf.mxu0
      %7270 = vmatprep.mubr.f32.mxu0 0.0
      %7271 = vmatmul.mubr.f32.gmra.mxu0 %v7169
      %v7272 = vpop.f32.mrf.mxu0
      %v7273 = vadd.f32 0.0, %v7272
      %v7274 = vpop.f32.mrf.mxu0
      %7275 = vdwg.mxu0
      %v7277 = vsel %vm2145, %v6881, 0
      %v7280 = vsel %vm2145, %v6882, 0
      %v7283 = vsel %vm2145, %v6883, 0
      %v7286 = vsel %vm2145, %v6884, 0
      %v7289 = vsel %vm2145, %v6885, 0
      %v7292 = vsel %vm2145, %v6886, 0
      %v7295 = vsel %vm2145, %v6887, 0
      %v7298 = vsel %vm2145, %v6888, 0
      %7300 = vmatprep.subr.mxu0 0.0
      %7301 = vmatpush1.msra.mxu0 0.0
      %7302 = vmatprep.subr.mxu0 0.0
      %7303 = vmatpush1.msra.mxu0 0.0
      %7304 = vmatprep.subr.mxu0 0.0
      %7305 = vmatpush1.msra.mxu0 0.0
      %7306 = vmatprep.subr.mxu0 0.0
      %7307 = vmatpush1.msra.mxu0 0.0
      %7308 = vmatprep.subr.mxu0 0.0
      %7309 = vmatpush1.msra.mxu0 0.0
      %7310 = vmatprep.subr.mxu0 0.0
      %7311 = vmatpush1.msra.mxu0 0.0
      %7312 = vmatprep.subr.mxu0 0.0
      %7313 = vmatpush1.msra.mxu0 0.0
      %7314 = vmatprep.subr.mxu0 0.0
      %7315 = vmatpush1.msra.mxu0 0.0
      %7316 = vmatprep.subr.mxu0 0.0
      %7317 = vmatpush1.msra.mxu0 %v6020
      %7318 = vmatprep.subr.mxu0 0.0
      %7319 = vmatpush1.msra.mxu0 %v6019
      %7320 = vmatprep.subr.mxu0 0.0
      %7321 = vmatpush1.msra.mxu0 %v6018
      %7322 = vmatprep.subr.mxu0 0.0
      %7323 = vmatpush1.msra.mxu0 %v6017
      %7324 = vmatprep.subr.mxu0 0.0
      %7325 = vmatpush1.msra.mxu0 %v6016
      %7326 = vmatprep.subr.mxu0 0.0
      %7327 = vmatpush1.msra.mxu0 %v6015
      %7328 = vmatprep.subr.mxu0 0.0
      %7329 = vmatpush1.msra.mxu0 %v6014
      %7330 = vmatprep.subr.mxu0 0.0
      %7331 = vmatpush1.msra.mxu0 %v6013
      %7332 = vmatprep.subr.mxu0 0.0
      %7333 = vmatpush2.msra.mxu0 0.0
      %7334 = vmatprep.subr.mxu0 0.0
      %7335 = vmatpush2.msra.mxu0 0.0
      %7336 = vmatprep.subr.mxu0 0.0
      %7337 = vmatpush2.msra.mxu0 0.0
      %7338 = vmatprep.subr.mxu0 0.0
      %7339 = vmatpush2.msra.mxu0 0.0
      %7340 = vmatprep.subr.mxu0 0.0
      %7341 = vmatpush2.msra.mxu0 0.0
      %7342 = vmatprep.subr.mxu0 0.0
      %7343 = vmatpush2.msra.mxu0 0.0
      %7344 = vmatprep.subr.mxu0 0.0
      %7345 = vmatpush2.msra.mxu0 0.0
      %7346 = vmatprep.subr.mxu0 0.0
      %7347 = vmatpush2.msra.mxu0 0.0
      %7348 = vmatprep.subr.mxu0 0.0
      %7349 = vmatpush2.msra.mxu0 0.0
      %7350 = vmatprep.subr.mxu0 0.0
      %7351 = vmatpush2.msra.mxu0 0.0
      %7352 = vmatprep.subr.mxu0 0.0
      %7353 = vmatpush2.msra.mxu0 0.0
      %7354 = vmatprep.subr.mxu0 0.0
      %7355 = vmatpush2.msra.mxu0 0.0
      %7356 = vmatprep.subr.mxu0 0.0
      %7357 = vmatpush2.msra.mxu0 0.0
      %7358 = vmatprep.subr.mxu0 0.0
      %7359 = vmatpush2.msra.mxu0 0.0
      %7360 = vmatprep.subr.mxu0 0.0
      %7361 = vmatpush2.msra.mxu0 0.0
      %7362 = vmatprep.subr.mxu0 0.0
      %7363 = vmatpush2.msra.mxu0 0.0
      %7364 = vmatprep.mubr.f32.mxu0 0.0
      %7365 = vmatmul.mubr.f32.gmra.mxu0 %v7277
      %v7366 = vpop.f32.mrf.mxu0
      %v7367 = vadd.f32 0.0, %v7366
      %v7368 = vpop.f32.mrf.mxu0
      %7369 = vmatprep.mubr.f32.mxu0 0.0
      %7370 = vmatmul.mubr.f32.gmra.mxu0 %v7280
      %v7371 = vpop.f32.mrf.mxu0
      %v7372 = vadd.f32 0.0, %v7371
      %v7373 = vpop.f32.mrf.mxu0
      %7374 = vmatprep.mubr.f32.mxu0 0.0
      %7375 = vmatmul.mubr.f32.gmra.mxu0 %v7283
      %v7376 = vpop.f32.mrf.mxu0
      %v7377 = vadd.f32 0.0, %v7376
      %v7378 = vpop.f32.mrf.mxu0
      %7379 = vmatprep.mubr.f32.mxu0 0.0
      %7380 = vmatmul.mubr.f32.gmra.mxu0 %v7286
      %v7381 = vpop.f32.mrf.mxu0
      %v7382 = vadd.f32 0.0, %v7381
      %v7383 = vpop.f32.mrf.mxu0
      %7384 = vmatprep.mubr.f32.mxu0 0.0
      %7385 = vmatmul.mubr.f32.gmra.mxu0 %v7289
      %v7386 = vpop.f32.mrf.mxu0
      %v7387 = vadd.f32 0.0, %v7386
      %v7388 = vpop.f32.mrf.mxu0
      %7389 = vmatprep.mubr.f32.mxu0 0.0
      %7390 = vmatmul.mubr.f32.gmra.mxu0 %v7292
      %v7391 = vpop.f32.mrf.mxu0
      %v7392 = vadd.f32 0.0, %v7391
      %v7393 = vpop.f32.mrf.mxu0
      %7394 = vmatprep.mubr.f32.mxu0 0.0
      %7395 = vmatmul.mubr.f32.gmra.mxu0 %v7295
      %v7396 = vpop.f32.mrf.mxu0
      %v7397 = vadd.f32 0.0, %v7396
      %v7398 = vpop.f32.mrf.mxu0
      %7399 = vmatprep.mubr.f32.mxu0 0.0
      %7400 = vmatmul.mubr.f32.gmra.mxu0 %v7298
      %v7401 = vpop.f32.mrf.mxu0
      %v7402 = vadd.f32 0.0, %v7401
      %v7403 = vpop.f32.mrf.mxu0
      %7404 = vdwg.mxu0
      %v7405 = vadd.f32 %v5920, %v6980
      %v7406 = vadd.f32 %v5921, %v6985
      %v7407 = vadd.f32 %v5922, %v6990
      %v7408 = vadd.f32 %v5923, %v6995
      %v7409 = vadd.f32 %v5924, %v7000
      %v7410 = vadd.f32 %v5925, %v7005
      %v7411 = vadd.f32 %v5926, %v7010
      %v7412 = vadd.f32 %v5927, %v7015
      %v7413 = vadd.f32 %v5928, %v7109
      %v7414 = vadd.f32 %v5929, %v7114
      %v7415 = vadd.f32 %v5930, %v7119
      %v7416 = vadd.f32 %v5931, %v7124
      %v7417 = vadd.f32 %v5932, %v7129
      %v7418 = vadd.f32 %v5933, %v7134
      %v7419 = vadd.f32 %v5934, %v7139
      %v7420 = vadd.f32 %v5935, %v7144
      %v7421 = vadd.f32 %v5936, %v7238
      %v7422 = vadd.f32 %v5937, %v7243
      %v7423 = vadd.f32 %v5938, %v7248
      %v7424 = vadd.f32 %v5939, %v7253
      %v7425 = vadd.f32 %v5940, %v7258
      %v7426 = vadd.f32 %v5941, %v7263
      %v7427 = vadd.f32 %v5942, %v7268
      %v7428 = vadd.f32 %v5943, %v7273
      %v7429 = vadd.f32 %v5944, %v7367
      %v7430 = vadd.f32 %v5945, %v7372
      %v7431 = vadd.f32 %v5946, %v7377
      %v7432 = vadd.f32 %v5947, %v7382
      %v7433 = vadd.f32 %v5948, %v7387
      %v7434 = vadd.f32 %v5949, %v7392
      %v7435 = vadd.f32 %v5950, %v7397
      %v7436 = vadd.f32 %v5951, %v7402
      %v7437 = vld [vmem:[%s6] sm:$0xff]
      %v7438 = vld [vmem:[%s6 + $0x8] sm:$0xff]
      %v7439 = vld [vmem:[%s6 + $0x10] sm:$0xff]
      %v7440 = vld [vmem:[%s6 + $0x18] sm:$0xff]
      %v7441 = vld [vmem:[%s7] sm:$0x1]
      %v7443 = vlaneseq
      %v7444 = vshrl.u32 %v7443, 7
      %v7445 = vsub.s32 0, %v7444
      %v7446 = vrot.slane %v7441, %v7445
      %v7449 = vsel %vm346, %v7405, 0
      %v7452 = vsel %vm346, %v7406, 0
      %v7455 = vsel %vm346, %v7407, 0
      %v7458 = vsel %vm346, %v7408, 0
      %v7461 = vsel %vm346, %v7409, 0
      %v7464 = vsel %vm346, %v7410, 0
      %v7467 = vsel %vm346, %v7411, 0
      %v7470 = vsel %vm346, %v7412, 0
      %v7473 = vsel %vm346, %v7413, 0
      %v7476 = vsel %vm346, %v7414, 0
      %v7479 = vsel %vm346, %v7415, 0
      %v7482 = vsel %vm346, %v7416, 0
      %v7485 = vsel %vm346, %v7417, 0
      %v7488 = vsel %vm346, %v7418, 0
      %v7491 = vsel %vm346, %v7419, 0
      %v7494 = vsel %vm346, %v7420, 0
      %v7497 = vsel %vm346, %v7421, 0
      %v7500 = vsel %vm346, %v7422, 0
      %v7503 = vsel %vm346, %v7423, 0
      %v7506 = vsel %vm346, %v7424, 0
      %v7509 = vsel %vm346, %v7425, 0
      %v7512 = vsel %vm346, %v7426, 0
      %v7515 = vsel %vm346, %v7427, 0
      %v7518 = vsel %vm346, %v7428, 0
      %v7521 = vsel %vm346, %v7429, 0
      %v7524 = vsel %vm346, %v7430, 0
      %v7527 = vsel %vm346, %v7431, 0
      %v7530 = vsel %vm346, %v7432, 0
      %v7533 = vsel %vm346, %v7433, 0
      %v7536 = vsel %vm346, %v7434, 0
      %v7539 = vsel %vm346, %v7435, 0
      %v7542 = vsel %vm346, %v7436, 0
      %7544 = vmatprep.subr.mxu0 0.0
      %7545 = vmatpush1.msra.mxu0 0.0
      %7546 = vmatprep.subr.mxu0 0.0
      %7547 = vmatpush1.msra.mxu0 0.0
      %7548 = vmatprep.subr.mxu0 0.0
      %7549 = vmatpush1.msra.mxu0 0.0
      %7550 = vmatprep.subr.mxu0 0.0
      %7551 = vmatpush1.msra.mxu0 0.0
      %7552 = vmatprep.subr.mxu0 0.0
      %7553 = vmatpush1.msra.mxu0 0.0
      %7554 = vmatprep.subr.mxu0 0.0
      %7555 = vmatpush1.msra.mxu0 0.0
      %7556 = vmatprep.subr.mxu0 0.0
      %7557 = vmatpush1.msra.mxu0 0.0
      %7558 = vmatprep.subr.mxu0 0.0
      %7559 = vmatpush1.msra.mxu0 0.0
      %7560 = vmatprep.subr.mxu0 0.0
      %7561 = vmatpush1.msra.mxu0 0.0
      %7562 = vmatprep.subr.mxu0 0.0
      %7563 = vmatpush1.msra.mxu0 0.0
      %7564 = vmatprep.subr.mxu0 0.0
      %7565 = vmatpush1.msra.mxu0 0.0
      %7566 = vmatprep.subr.mxu0 0.0
      %7567 = vmatpush1.msra.mxu0 0.0
      %7568 = vmatprep.subr.mxu0 0.0
      %7569 = vmatpush1.msra.mxu0 %v7440
      %7570 = vmatprep.subr.mxu0 0.0
      %7571 = vmatpush1.msra.mxu0 %v7439
      %7572 = vmatprep.subr.mxu0 0.0
      %7573 = vmatpush1.msra.mxu0 %v7438
      %7574 = vmatprep.subr.mxu0 0.0
      %7575 = vmatpush1.msra.mxu0 %v7437
      %7576 = vmatprep.subr.mxu0 0.0
      %7577 = vmatpush2.msra.mxu0 0.0
      %7578 = vmatprep.subr.mxu0 0.0
      %7579 = vmatpush2.msra.mxu0 0.0
      %7580 = vmatprep.subr.mxu0 0.0
      %7581 = vmatpush2.msra.mxu0 0.0
      %7582 = vmatprep.subr.mxu0 0.0
      %7583 = vmatpush2.msra.mxu0 0.0
      %7584 = vmatprep.subr.mxu0 0.0
      %7585 = vmatpush2.msra.mxu0 0.0
      %7586 = vmatprep.subr.mxu0 0.0
      %7587 = vmatpush2.msra.mxu0 0.0
      %7588 = vmatprep.subr.mxu0 0.0
      %7589 = vmatpush2.msra.mxu0 0.0
      %7590 = vmatprep.subr.mxu0 0.0
      %7591 = vmatpush2.msra.mxu0 0.0
      %7592 = vmatprep.subr.mxu0 0.0
      %7593 = vmatpush2.msra.mxu0 0.0
      %7594 = vmatprep.subr.mxu0 0.0
      %7595 = vmatpush2.msra.mxu0 0.0
      %7596 = vmatprep.subr.mxu0 0.0
      %7597 = vmatpush2.msra.mxu0 0.0
      %7598 = vmatprep.subr.mxu0 0.0
      %7599 = vmatpush2.msra.mxu0 0.0
      %7600 = vmatprep.subr.mxu0 0.0
      %7601 = vmatpush2.msra.mxu0 0.0
      %7602 = vmatprep.subr.mxu0 0.0
      %7603 = vmatpush2.msra.mxu0 0.0
      %7604 = vmatprep.subr.mxu0 0.0
      %7605 = vmatpush2.msra.mxu0 0.0
      %7606 = vmatprep.subr.mxu0 0.0
      %7607 = vmatpush2.msra.mxu0 0.0
      %7608 = vmatprep.mubr.f32.mxu0 0.0
      %7609 = vmatmul.mubr.f32.gmra.mxu0 %v7449
      %v7610 = vpop.f32.mrf.mxu0
      %v7611 = vadd.f32 %v7446, %v7610
      %v7612 = vpop.f32.mrf.mxu0
      %7613 = vmatprep.mubr.f32.mxu0 0.0
      %7614 = vmatmul.mubr.f32.gmra.mxu0 %v7452
      %v7615 = vpop.f32.mrf.mxu0
      %v7616 = vadd.f32 %v7446, %v7615
      %v7617 = vpop.f32.mrf.mxu0
      %7618 = vmatprep.mubr.f32.mxu0 0.0
      %7619 = vmatmul.mubr.f32.gmra.mxu0 %v7455
      %v7620 = vpop.f32.mrf.mxu0
      %v7621 = vadd.f32 %v7446, %v7620
      %v7622 = vpop.f32.mrf.mxu0
      %7623 = vmatprep.mubr.f32.mxu0 0.0
      %7624 = vmatmul.mubr.f32.gmra.mxu0 %v7458
      %v7625 = vpop.f32.mrf.mxu0
      %v7626 = vadd.f32 %v7446, %v7625
      %v7627 = vpop.f32.mrf.mxu0
      %7628 = vmatprep.mubr.f32.mxu0 0.0
      %7629 = vmatmul.mubr.f32.gmra.mxu0 %v7461
      %v7630 = vpop.f32.mrf.mxu0
      %v7631 = vadd.f32 %v7446, %v7630
      %v7632 = vpop.f32.mrf.mxu0
      %7633 = vmatprep.mubr.f32.mxu0 0.0
      %7634 = vmatmul.mubr.f32.gmra.mxu0 %v7464
      %v7635 = vpop.f32.mrf.mxu0
      %v7636 = vadd.f32 %v7446, %v7635
      %v7637 = vpop.f32.mrf.mxu0
      %7638 = vmatprep.mubr.f32.mxu0 0.0
      %7639 = vmatmul.mubr.f32.gmra.mxu0 %v7467
      %v7640 = vpop.f32.mrf.mxu0
      %v7641 = vadd.f32 %v7446, %v7640
      %v7642 = vpop.f32.mrf.mxu0
      %7643 = vmatprep.mubr.f32.mxu0 0.0
      %7644 = vmatmul.mubr.f32.gmra.mxu0 %v7470
      %v7645 = vpop.f32.mrf.mxu0
      %v7646 = vadd.f32 %v7446, %v7645
      %v7647 = vpop.f32.mrf.mxu0
      %7648 = vmatprep.mubr.f32.mxu0 0.0
      %7649 = vmatmul.mubr.f32.gmra.mxu0 %v7473
      %v7650 = vpop.f32.mrf.mxu0
      %v7651 = vadd.f32 %v7446, %v7650
      %v7652 = vpop.f32.mrf.mxu0
      %7653 = vmatprep.mubr.f32.mxu0 0.0
      %7654 = vmatmul.mubr.f32.gmra.mxu0 %v7476
      %v7655 = vpop.f32.mrf.mxu0
      %v7656 = vadd.f32 %v7446, %v7655
      %v7657 = vpop.f32.mrf.mxu0
      %7658 = vmatprep.mubr.f32.mxu0 0.0
      %7659 = vmatmul.mubr.f32.gmra.mxu0 %v7479
      %v7660 = vpop.f32.mrf.mxu0
      %v7661 = vadd.f32 %v7446, %v7660
      %v7662 = vpop.f32.mrf.mxu0
      %7663 = vmatprep.mubr.f32.mxu0 0.0
      %7664 = vmatmul.mubr.f32.gmra.mxu0 %v7482
      %v7665 = vpop.f32.mrf.mxu0
      %v7666 = vadd.f32 %v7446, %v7665
      %v7667 = vpop.f32.mrf.mxu0
      %7668 = vmatprep.mubr.f32.mxu0 0.0
      %7669 = vmatmul.mubr.f32.gmra.mxu0 %v7485
      %v7670 = vpop.f32.mrf.mxu0
      %v7671 = vadd.f32 %v7446, %v7670
      %v7672 = vpop.f32.mrf.mxu0
      %7673 = vmatprep.mubr.f32.mxu0 0.0
      %7674 = vmatmul.mubr.f32.gmra.mxu0 %v7488
      %v7675 = vpop.f32.mrf.mxu0
      %v7676 = vadd.f32 %v7446, %v7675
      %v7677 = vpop.f32.mrf.mxu0
      %7678 = vmatprep.mubr.f32.mxu0 0.0
      %7679 = vmatmul.mubr.f32.gmra.mxu0 %v7491
      %v7680 = vpop.f32.mrf.mxu0
      %v7681 = vadd.f32 %v7446, %v7680
      %v7682 = vpop.f32.mrf.mxu0
      %7683 = vmatprep.mubr.f32.mxu0 0.0
      %7684 = vmatmul.mubr.f32.gmra.mxu0 %v7494
      %v7685 = vpop.f32.mrf.mxu0
      %v7686 = vadd.f32 %v7446, %v7685
      %v7687 = vpop.f32.mrf.mxu0
      %7688 = vmatprep.mubr.f32.mxu0 0.0
      %7689 = vmatmul.mubr.f32.gmra.mxu0 %v7497
      %v7690 = vpop.f32.mrf.mxu0
      %v7691 = vadd.f32 %v7446, %v7690
      %v7692 = vpop.f32.mrf.mxu0
      %7693 = vmatprep.mubr.f32.mxu0 0.0
      %7694 = vmatmul.mubr.f32.gmra.mxu0 %v7500
      %v7695 = vpop.f32.mrf.mxu0
      %v7696 = vadd.f32 %v7446, %v7695
      %v7697 = vpop.f32.mrf.mxu0
      %7698 = vmatprep.mubr.f32.mxu0 0.0
      %7699 = vmatmul.mubr.f32.gmra.mxu0 %v7503
      %v7700 = vpop.f32.mrf.mxu0
      %v7701 = vadd.f32 %v7446, %v7700
      %v7702 = vpop.f32.mrf.mxu0
      %7703 = vmatprep.mubr.f32.mxu0 0.0
      %7704 = vmatmul.mubr.f32.gmra.mxu0 %v7506
      %v7705 = vpop.f32.mrf.mxu0
      %v7706 = vadd.f32 %v7446, %v7705
      %v7707 = vpop.f32.mrf.mxu0
      %7708 = vmatprep.mubr.f32.mxu0 0.0
      %7709 = vmatmul.mubr.f32.gmra.mxu0 %v7509
      %v7710 = vpop.f32.mrf.mxu0
      %v7711 = vadd.f32 %v7446, %v7710
      %v7712 = vpop.f32.mrf.mxu0
      %7713 = vmatprep.mubr.f32.mxu0 0.0
      %7714 = vmatmul.mubr.f32.gmra.mxu0 %v7512
      %v7715 = vpop.f32.mrf.mxu0
      %v7716 = vadd.f32 %v7446, %v7715
      %v7717 = vpop.f32.mrf.mxu0
      %7718 = vmatprep.mubr.f32.mxu0 0.0
      %7719 = vmatmul.mubr.f32.gmra.mxu0 %v7515
      %v7720 = vpop.f32.mrf.mxu0
      %v7721 = vadd.f32 %v7446, %v7720
      %v7722 = vpop.f32.mrf.mxu0
      %7723 = vmatprep.mubr.f32.mxu0 0.0
      %7724 = vmatmul.mubr.f32.gmra.mxu0 %v7518
      %v7725 = vpop.f32.mrf.mxu0
      %v7726 = vadd.f32 %v7446, %v7725
      %v7727 = vpop.f32.mrf.mxu0
      %7728 = vmatprep.mubr.f32.mxu0 0.0
      %7729 = vmatmul.mubr.f32.gmra.mxu0 %v7521
      %v7730 = vpop.f32.mrf.mxu0
      %v7731 = vadd.f32 %v7446, %v7730
      %v7732 = vpop.f32.mrf.mxu0
      %7733 = vmatprep.mubr.f32.mxu0 0.0
      %7734 = vmatmul.mubr.f32.gmra.mxu0 %v7524
      %v7735 = vpop.f32.mrf.mxu0
      %v7736 = vadd.f32 %v7446, %v7735
      %v7737 = vpop.f32.mrf.mxu0
      %7738 = vmatprep.mubr.f32.mxu0 0.0
      %7739 = vmatmul.mubr.f32.gmra.mxu0 %v7527
      %v7740 = vpop.f32.mrf.mxu0
      %v7741 = vadd.f32 %v7446, %v7740
      %v7742 = vpop.f32.mrf.mxu0
      %7743 = vmatprep.mubr.f32.mxu0 0.0
      %7744 = vmatmul.mubr.f32.gmra.mxu0 %v7530
      %v7745 = vpop.f32.mrf.mxu0
      %v7746 = vadd.f32 %v7446, %v7745
      %v7747 = vpop.f32.mrf.mxu0
      %7748 = vmatprep.mubr.f32.mxu0 0.0
      %7749 = vmatmul.mubr.f32.gmra.mxu0 %v7533
      %v7750 = vpop.f32.mrf.mxu0
      %v7751 = vadd.f32 %v7446, %v7750
      %v7752 = vpop.f32.mrf.mxu0
      %7753 = vmatprep.mubr.f32.mxu0 0.0
      %7754 = vmatmul.mubr.f32.gmra.mxu0 %v7536
      %v7755 = vpop.f32.mrf.mxu0
      %v7756 = vadd.f32 %v7446, %v7755
      %v7757 = vpop.f32.mrf.mxu0
      %7758 = vmatprep.mubr.f32.mxu0 0.0
      %7759 = vmatmul.mubr.f32.gmra.mxu0 %v7539
      %v7760 = vpop.f32.mrf.mxu0
      %v7761 = vadd.f32 %v7446, %v7760
      %v7762 = vpop.f32.mrf.mxu0
      %7763 = vmatprep.mubr.f32.mxu0 0.0
      %7764 = vmatmul.mubr.f32.gmra.mxu0 %v7542
      %v7765 = vpop.f32.mrf.mxu0
      %v7766 = vadd.f32 %v7446, %v7765
      %v7767 = vpop.f32.mrf.mxu0
      %7768 = vdwg.mxu0
      %7769 = vst.msk [vmem:[%s312] sm:$0xff] %vm346, %v7611
      %7770 = vst.msk [vmem:[%s312 + $0x8] sm:$0xff] %vm346, %v7616
      %7771 = vst.msk [vmem:[%s312 + $0x10] sm:$0xff] %vm346, %v7621
      %7772 = vst.msk [vmem:[%s312 + $0x18] sm:$0xff] %vm346, %v7626
      %7773 = vst.msk [vmem:[%s312 + $0x20] sm:$0xff] %vm346, %v7631
      %7774 = vst.msk [vmem:[%s312 + $0x28] sm:$0xff] %vm346, %v7636
      %7775 = vst.msk [vmem:[%s312 + $0x30] sm:$0xff] %vm346, %v7641
      %7776 = vst.msk [vmem:[%s312 + $0x38] sm:$0xff] %vm346, %v7646
      %7777 = vst.msk [vmem:[%s312 + $0x40] sm:$0xff] %vm346, %v7651
      %7778 = vst.msk [vmem:[%s312 + $0x48] sm:$0xff] %vm346, %v7656
      %7779 = vst.msk [vmem:[%s312 + $0x50] sm:$0xff] %vm346, %v7661
      %7780 = vst.msk [vmem:[%s312 + $0x58] sm:$0xff] %vm346, %v7666
      %7781 = vst.msk [vmem:[%s312 + $0x60] sm:$0xff] %vm346, %v7671
      %7782 = vst.msk [vmem:[%s312 + $0x68] sm:$0xff] %vm346, %v7676
      %7783 = vst.msk [vmem:[%s312 + $0x70] sm:$0xff] %vm346, %v7681
      %7784 = vst.msk [vmem:[%s312 + $0x78] sm:$0xff] %vm346, %v7686
      %7785 = vst.msk [vmem:[%s312 + $0x80] sm:$0xff] %vm346, %v7691
      %7786 = vst.msk [vmem:[%s312 + $0x88] sm:$0xff] %vm346, %v7696
      %7787 = vst.msk [vmem:[%s312 + $0x90] sm:$0xff] %vm346, %v7701
      %7788 = vst.msk [vmem:[%s312 + $0x98] sm:$0xff] %vm346, %v7706
      %7789 = vst.msk [vmem:[%s312 + $0xa0] sm:$0xff] %vm346, %v7711
      %7790 = vst.msk [vmem:[%s312 + $0xa8] sm:$0xff] %vm346, %v7716
      %7791 = vst.msk [vmem:[%s312 + $0xb0] sm:$0xff] %vm346, %v7721
      %7792 = vst.msk [vmem:[%s312 + $0xb8] sm:$0xff] %vm346, %v7726
      %7793 = vst.msk [vmem:[%s312 + $0xc0] sm:$0xff] %vm346, %v7731
      %7794 = vst.msk [vmem:[%s312 + $0xc8] sm:$0xff] %vm346, %v7736
      %7795 = vst.msk [vmem:[%s312 + $0xd0] sm:$0xff] %vm346, %v7741
      %7796 = vst.msk [vmem:[%s312 + $0xd8] sm:$0xff] %vm346, %v7746
      %7797 = vst.msk [vmem:[%s312 + $0xe0] sm:$0xff] %vm346, %v7751
      %7798 = vst.msk [vmem:[%s312 + $0xe8] sm:$0xff] %vm346, %v7756
      %7799 = vst.msk [vmem:[%s312 + $0xf0] sm:$0xff] %vm346, %v7761
      %7800 = vst.msk [vmem:[%s312 + $0xf8] sm:$0xff] %vm346, %v7766
      %s7801 = smul.u32 4, %s19
      %p7802 = scmp.lt.s32.totalorder %s7801, 7
      %s7803 = scalar_select %p7802, %s7801, 7
      %s7804 = smul.addr %s7803, 8
      %s7805 = smul.addr %s7804, 8
      %s7806 = scalar_lea.vmem %s8, %s7805
      // Predicated region
      $region53: #{tpu_custom_call.1} parent=51 // pred_check
        %p7807 = pneg %p210
      $region54: #{tpu_custom_call.1} parent=51 // pred_check_branch
        %7809 = sbr.rel (%p7807) target = $region56
      $region55: #{tpu_custom_call.1} parent=51 // pred_region
        %s7810 = smul.u32 4, %s19
      $region56: #{tpu_custom_call.1} parent=51 // pred_fallthru
        _
    $region52: #{tpu_custom_call.1} parent=5 // pred_fallthru
      _
    %p7811 = scmp.le.s32.totalorder 2, %s14
    // Predicated region
    $region57: #{tpu_custom_call.1} parent=5 // pred_check
      %p7812 = pneg %p7811
    $region58: #{tpu_custom_call.1} parent=5 // pred_check_branch
      %7814 = sbr.rel (%p7812) target = $region60
    $region59: #{tpu_custom_call.1} parent=5 // pred_region
      %s7815 = ssub.s32 %s14, 2
      // Predicated region
      $region61: #{tpu_custom_call.1} parent=59 // pred_check
        %p7816 = pneg %p216
      $region62: #{tpu_custom_call.1} parent=59 // pred_check_branch
        %7818 = sbr.rel (%p7816) target = $region64
      $region63: #{tpu_custom_call.1} parent=59 // pred_region
        %s7819 = smul.u32 4, %s20
        %p7820 = scmp.lt.s32.totalorder %s7819, 7
        %s7821 = scalar_select %p7820, %s7819, 7
        %s7822 = smul.addr %s7821, 8
        %s7823 = smul.addr %s7822, 8
        %s7824 = scalar_lea.vmem %s8, %s7823
      $region64: #{tpu_custom_call.1} parent=59 // pred_fallthru
        _
    $region60: #{tpu_custom_call.1} parent=5 // pred_fallthru
      _
  $region6: #{tpu_custom_call.1} parent=0 // loop_footer
    %s18 = sadd.s32 1, %s14
  $region7: #{tpu_custom_call.1} parent=0 // loop_footer_branch
    %13 = sbr.rel target = $region3
  $region8: #{tpu_custom_call.1} parent=0 // loop_exit
    _

</llo_original>
